<compile_context>
chip_gen: v7x
topology: tpu7x:2x2x1
jax: 0.10.0
libtpu: 0.0.40
codegen_flags: <defaults>
</compile_context>

<pallas_src>
import math

import jax
import jax.numpy as jnp
from jax.experimental import pallas as pl
from jax.experimental.pallas import tpu as pltpu

# ----------------------------- configuration --------------------------------
NODE_NUM = 16      # node_num
SEQ_LEN = 12       # seq_len (matches hard-coded 12 of source/target embeds)
GRAPH_DIM = 16     # graph_dim
TCN_DIM = 10       # tcn_dim[-1]
HEADS_ATT = 2      # atten_head
BATCH = 1          # one graph (edge_index indexes nodes 0..NODE_NUM-1)
LANES = 128        # slab lane width (full vreg lane tile)
F32 = jnp.float32


# ----------------------------- slab layouts ----------------------------------
def _rup8(n):
    return -(-n // 8) * 8


def _layout(spec):
    """spec: list of (name, (rows, cols)). Every piece starts 8-row aligned."""
    lay, r = {}, 0
    for name, (rows, cols) in spec:
        lay[name] = (r, rows, cols)
        r += _rup8(rows)
    return lay, r


CT = TCN_DIM * SEQ_LEN

DATA_SPEC = [
    ('x',       (NODE_NUM, SEQ_LEN)),
    ('adj_sp',  (NODE_NUM, NODE_NUM)),    # additive mask: 0 or -1e30
    ('adj_dtw', (NODE_NUM, NODE_NUM)),
    ('lrn_sp',  (NODE_NUM, NODE_NUM)),    # softmax(relu(src@tgt)) precomputed
    ('lrn_dtw', (NODE_NUM, NODE_NUM)),
]

P0_SPEC = [
    ('in_wt',  (3 * NODE_NUM, NODE_NUM)),
    ('in_b',   (3 * NODE_NUM, SEQ_LEN)),        # pre-broadcast over lanes
    ('out_wt', (NODE_NUM, NODE_NUM)),
    ('out_b',  (NODE_NUM, SEQ_LEN)),
    ('seq_w1', (SEQ_LEN, SEQ_LEN)),             # seq_w + I
    ('seq_b1', (1, SEQ_LEN)),
    ('seq_w2', (SEQ_LEN, SEQ_LEN)),             # (seq_w + I)^2
    ('seq_b2', (1, SEQ_LEN)),
    ('w1fold', (SEQ_LEN, CT)),                  # conv1 fold
    ('wdfold', (SEQ_LEN, CT)),                  # downsample fold
    ('w2fold', (CT, CT)),                       # conv2 fold
    ('b1row',  (1, CT)),
    ('bdrow',  (1, CT)),
    ('b2row',  (1, CT)),
    ('tlin_w', (CT, GRAPH_DIM)),
    ('tlin_b', (1, GRAPH_DIM)),
]


def _branch_spec(heads4):
    G, T = GRAPH_DIM, SEQ_LEN
    return [
        ('big1',  (T, 3 * G + G + G)),          # [g1.w | origin_w | lin1_w]
        ('big2',  (G, 3 * G + G)),              # [g2.w | lin2_w]
        ('big3',  (G, 3 * G + G)),
        ('big4',  (G, heads4 * G + G)),
        ('adst1', (3 * G, 3)),
        ('asrc1', (3, 3 * G)),
        ('adst2', (3 * G, 3)),
        ('asrc2', (3, 3 * G)),
        ('adst3', (3 * G, 3)),
        ('asrc3', (3, 3 * G)),
        ('adst4', (heads4 * G, heads4)),
        ('asrc4', (heads4, heads4 * G)),
        ('bias',  (9, G)),                      # origin,g1..g4,lin1..lin4
    ]


DATA_LAYOUT, DATA_ROWS = _layout(DATA_SPEC)
P0_LAYOUT, P0_ROWS = _layout(P0_SPEC)
SP_SPEC = _branch_spec(1)
SP_LAYOUT, SP_ROWS = _layout(SP_SPEC)
DTW_SPEC = _branch_spec(3)
DTW_LAYOUT, DTW_ROWS = _layout(DTW_SPEC)


def _get(ref, layout, name):
    r0, nr, nc = layout[name]
    return ref[r0:r0 + nr, 0:nc]


# ----------------------------- fused kernel ----------------------------------
def _stcell_kernel(data_ref, p0_ref, sp_ref, dtw_ref, o_ref):
    f32 = jnp.float32
    N, T, G, H = NODE_NUM, SEQ_LEN, GRAPH_DIM, HEADS_ATT
    hd = N // H                                   # MHA per-head dim

    def gd(name):
        return _get(data_ref, DATA_LAYOUT, name)

    def gp(name):
        return _get(p0_ref, P0_LAYOUT, name)

    def softmax_rows(v):
        v = v - jnp.max(v, axis=-1, keepdims=True)
        e = jnp.exp(v)
        return e * pl.reciprocal(jnp.sum(e, axis=-1, keepdims=True), approx=True)

    x = gd('x')                                   # (N, T), rows=nodes(=embed)

    # ---------------- choice[0]: self-attention + TCN (transposed layout) ----
    qkv_t = jnp.dot(gp('in_wt'), x, preferred_element_type=f32) + gp('in_b')
    scale = 1.0 / math.sqrt(hd)
    q_t = qkv_t[0:N, :] * scale
    k_t = qkv_t[N:2 * N, :]
    v_t = qkv_t[2 * N:3 * N, :]
    heads_out = []
    for h in range(H):                            # H == 2, unrolled
        qh = q_t[h * hd:(h + 1) * hd, :]
        kh = k_t[h * hd:(h + 1) * hd, :]
        vh = v_t[h * hd:(h + 1) * hd, :]
        s = jax.lax.dot_general(qh, kh, (((0,), (0,)), ((), ())),
                                preferred_element_type=f32)          # (T, T)
        p = softmax_rows(s)
        heads_out.append(jax.lax.dot_general(vh, p, (((1,), (1,)), ((), ())),
                                             preferred_element_type=f32))
    o_t = jnp.concatenate(heads_out, axis=0)                          # (N, T)
    att_t = jnp.dot(gp('out_wt'), o_t, preferred_element_type=f32) + gp('out_b')
    y = jnp.tanh(att_t + x)                                           # (N, T)

    # TemporalBlock(1 -> C, k=2, causal); dropout = identity. Fully matmul-folded.
    h1 = jnp.maximum(jnp.dot(y, gp('w1fold'), preferred_element_type=f32)
                     + gp('b1row'), 0.0)                              # (N, C*T)
    h2 = jnp.maximum(jnp.dot(h1, gp('w2fold'), preferred_element_type=f32)
                     + gp('b2row'), 0.0)
    res = jnp.dot(y, gp('wdfold'), preferred_element_type=f32) + gp('bdrow')
    tcn_feat = jnp.maximum(h2 + res, 0.0)
    tcn_out = (jnp.dot(tcn_feat, gp('tlin_w'), preferred_element_type=f32)
               + gp('tlin_b'))                                        # (N, G)

    # ---------------- seq_linear folds (x1, x2 both straight from x) ---------
    x1 = jnp.dot(x, gp('seq_w1'), preferred_element_type=f32) + gp('seq_b1')
    x2 = jnp.dot(x, gp('seq_w2'), preferred_element_type=f32) + gp('seq_b2')

    # ---------------- GAT branches -------------------------------------------
    def gat_branch(xin, adj_bias, learned, bref, layout, heads4):
        def gb(name):
            return _get(bref, layout, name)

        bias = gb('bias')                                             # (9, G)

        def heads_aggregate(z_all, adname, asname, heads):
            # all heads' dst cols / src rows from two matmuls on z_all
            dst = jnp.dot(z_all, gb(adname), preferred_element_type=f32)   # (N,heads)
            src = jax.lax.dot_general(gb(asname), z_all, (((1,), (1,)), ((), ())),
                                      preferred_element_type=f32)          # (heads,N)
            acc = jnp.zeros((N, G), f32)
            for hh in range(heads):
                e = dst[:, hh:hh + 1] + src[hh:hh + 1, :]             # (N, N)
                e = jnp.where(e >= 0.0, e, 0.2 * e)                   # leaky_relu(0.2)
                p = softmax_rows(e + adj_bias)                        # additive mask
                acc = acc + jnp.dot(p, z_all[:, hh * G:(hh + 1) * G],
                                    preferred_element_type=f32)
            return acc * (1.0 / heads)

        def gate(g, adp, prev, act):
            if act == 'tanh':
                ga = jnp.tanh(g)
            elif act == 'leaky':
                ga = jnp.where(g >= 0.0, g, 0.01 * g)                 # F.leaky_relu
            else:
                ga = jnp.maximum(g, 0.0)
            sig = jax.nn.sigmoid(adp)
            return ga * sig + prev * (1.0 - sig)

        # layer 1 (input (N, T))
        big1 = jnp.dot(xin, gb('big1'), preferred_element_type=f32)   # (N, 5G)
        origin = big1[:, 3 * G:4 * G] + bias[0:1, :]
        adp1 = (jnp.dot(learned, big1[:, 4 * G:5 * G], preferred_element_type=f32)
                + bias[5:6, :])
        g1 = heads_aggregate(big1[:, 0:3 * G], 'adst1', 'asrc1', 3) + bias[1:2, :]
        out1 = gate(g1, adp1, origin, 'tanh')

        # layer 2
        in2 = jnp.tanh(out1)
        big2 = jnp.dot(in2, gb('big2'), preferred_element_type=f32)
        adp2 = (jnp.dot(learned, big2[:, 3 * G:4 * G], preferred_element_type=f32)
                + bias[6:7, :])
        g2 = heads_aggregate(big2[:, 0:3 * G], 'adst2', 'asrc2', 3) + bias[2:3, :]
        out2 = gate(g2, adp2, out1, 'leaky')

        # layer 3
        in3 = jnp.maximum(out2, 0.0)
        big3 = jnp.dot(in3, gb('big3'), preferred_element_type=f32)
        adp3 = (jnp.dot(learned, big3[:, 3 * G:4 * G], preferred_element_type=f32)
                + bias[7:8, :])
        g3 = heads_aggregate(big3[:, 0:3 * G], 'adst3', 'asrc3', 3) + bias[3:4, :]
        out3 = gate(g3, adp3, out2, 'relu')

        # layer 4
        in4 = jnp.maximum(out3, 0.0)
        big4 = jnp.dot(in4, gb('big4'), preferred_element_type=f32)
        adp4 = (jnp.dot(learned, big4[:, heads4 * G:heads4 * G + G],
                        preferred_element_type=f32) + bias[8:9, :])
        g4 = heads_aggregate(big4[:, 0:heads4 * G], 'adst4', 'asrc4', heads4) \
            + bias[4:5, :]
        out4 = gate(g4, adp4, out3, 'relu')
        return out4

    sp_out = gat_branch(x1, gd('adj_sp'), gd('lrn_sp'), sp_ref, SP_LAYOUT, 1)
    dtw_out = gat_branch(x2, gd('adj_dtw'), gd('lrn_dtw'), dtw_ref, DTW_LAYOUT, 3)

    # lane-dense (N, 128) full-tile store; wrapper slices to (N, 3G)
    pad = jnp.zeros((N, LANES - 3 * G), f32)
    o_ref[...] = jnp.concatenate([tcn_out, sp_out, dtw_out, pad], axis=1)


# ----------------------------- trace-time packing -----------------------------
def _pack_slab(spec, pieces):
    blocks = []
    for name, (rows, cols) in spec:
        m = pieces[name].astype(F32)
        blocks.append(jnp.pad(m, ((0, _rup8(rows) - rows), (0, LANES - cols))))
    return jnp.concatenate(blocks, axis=0)


def _build_adj(edge_index, n):
    src = edge_index[0]
    dst = edge_index[1]
    adj = jnp.zeros((n, n), F32).at[dst, src].set(1.0)   # edge j->i: adj[i,j]
    return jnp.maximum(adj, jnp.eye(n, dtype=F32))       # add self loops


def _learned(bp):
    # parameter-only: softmax(relu(src_emb @ tgt_emb), dim=1), hoisted out of kernel
    return jax.nn.softmax(jax.nn.relu(jnp.dot(bp['src_emb'], bp['tgt_emb'])), axis=1)


def _blockdiag_rows(a):
    """(H, G) -> (H, H*G): row h's values placed in the h-th G-block."""
    h, g = a.shape
    return (jnp.eye(h, dtype=F32)[:, :, None] * a[:, None, :]).reshape(h, h * g)


def _pack_data(x, adj_sp, adj_dtw, p):
    neg = jnp.float32(-1e30)
    pieces = {
        'x': x,
        'adj_sp': jnp.where(adj_sp > 0, 0.0, neg),
        'adj_dtw': jnp.where(adj_dtw > 0, 0.0, neg),
        'lrn_sp': _learned(p['sp']),
        'lrn_dtw': _learned(p['dtw']),
    }
    return _pack_slab(DATA_SPEC, pieces)


def _pack_p0(p):
    mha, tcn = p['mha'], p['tcn']
    T, N, G = SEQ_LEN, NODE_NUM, GRAPH_DIM
    eye_t = jnp.eye(T, dtype=F32)
    shift_t = jnp.eye(T, k=1, dtype=F32)          # shift_t[t-1, t] = 1
    # conv1 (kernel=2, causal) and downsample (kernel=1) folded into (T, C*T)
    w1fold = (jnp.kron(tcn['w1'][:, 0][None, :], shift_t)
              + jnp.kron(tcn['w1'][:, 1][None, :], eye_t))
    wdfold = jnp.kron(tcn['wd'][:, 0][None, :], eye_t)
    # conv2 (kernel=2, causal) folded with channel mix into (C*T, C*T)
    w2fold = jnp.kron(tcn['w2a'].T, shift_t) + jnp.kron(tcn['w2b'].T, eye_t)
    # seq_linear chain fold
    seq_w1 = p['seq_w'] + jnp.eye(T, dtype=F32)
    seq_b1 = p['seq_b'].reshape(1, T)
    seq_w2 = jnp.dot(seq_w1, seq_w1)
    seq_b2 = jnp.dot(seq_b1, seq_w1) + seq_b1
    pieces = {
        'in_wt': mha['in_w'].T,
        'in_b': jnp.broadcast_to(mha['in_b'].reshape(-1, 1), (3 * N, T)),
        'out_wt': mha['out_w'].T,
        'out_b': jnp.broadcast_to(mha['out_b'].reshape(-1, 1), (N, T)),
        'seq_w1': seq_w1, 'seq_b1': seq_b1,
        'seq_w2': seq_w2, 'seq_b2': seq_b2,
        'w1fold': w1fold, 'wdfold': wdfold, 'w2fold': w2fold,
        'b1row': jnp.repeat(tcn['b1'][:, 0], T).reshape(1, CT),
        'bdrow': jnp.repeat(tcn['bd'][:, 0], T).reshape(1, CT),
        'b2row': jnp.repeat(tcn['b2'][:, 0], T).reshape(1, CT),
        'tlin_w': p['tlinear_w'],
        'tlin_b': p['tlinear_b'].reshape(1, G),
    }
    return _pack_slab(P0_SPEC, pieces)


def _pack_branch(bp, spec):
    pieces = {
        'big1': jnp.concatenate([bp['g1']['w'], bp['origin_w'], bp['lin1_w']], axis=1),
        'big2': jnp.concatenate([bp['g2']['w'], bp['lin2_w']], axis=1),
        'big3': jnp.concatenate([bp['g3']['w'], bp['lin3_w']], axis=1),
        'big4': jnp.concatenate([bp['g4']['w'], bp['lin4_w']], axis=1),
        'bias': jnp.stack([bp['origin_b'], bp['g1']['bias'], bp['g2']['bias'],
                           bp['g3']['bias'], bp['g4']['bias'], bp['lin1_b'],
                           bp['lin2_b'], bp['lin3_b'], bp['lin4_b']], axis=0),
    }
    for i, g in enumerate(('g1', 'g2', 'g3', 'g4'), start=1):
        pieces[f'asrc{i}'] = _blockdiag_rows(bp[g]['att_src'])
        pieces[f'adst{i}'] = _blockdiag_rows(bp[g]['att_dst']).T
    return _pack_slab(spec, pieces)


@jax.jit
def stcell_forward(x, edge_index, dtw_edge_index, params):
    adj_sp = _build_adj(edge_index, NODE_NUM)
    adj_dtw = _build_adj(dtw_edge_index, NODE_NUM)
    data_slab = _pack_data(x, adj_sp, adj_dtw, params)
    p0_slab = _pack_p0(params)
    sp_slab = _pack_branch(params['sp'], SP_SPEC)
    dtw_slab = _pack_branch(params['dtw'], DTW_SPEC)
    vmem = pltpu.MemorySpace.VMEM
    out = pl.pallas_call(
        _stcell_kernel,
        out_shape=jax.ShapeDtypeStruct((BATCH * NODE_NUM, LANES), F32),
        in_specs=[pl.BlockSpec(memory_space=vmem)] * 4,
        out_specs=pl.BlockSpec(memory_space=vmem),
        compiler_params=pltpu.CompilerParams(),
    )(data_slab, p0_slab, sp_slab, dtw_slab)
    return out[:, :3 * GRAPH_DIM]


# ----------------------------- parameters ------------------------------------
def init_params(key):
    def nrm(k, shape, scale=0.1):
        return scale * jax.random.normal(k, shape, dtype=F32)

    keys = iter(jax.random.split(key, 128))
    p = {}
    p['seq_w'] = nrm(next(keys), (SEQ_LEN, SEQ_LEN))
    p['seq_b'] = nrm(next(keys), (SEQ_LEN,))
    p['mha'] = dict(in_w=nrm(next(keys), (NODE_NUM, 3 * NODE_NUM)),
                    in_b=nrm(next(keys), (3 * NODE_NUM,)),
                    out_w=nrm(next(keys), (NODE_NUM, NODE_NUM)),
                    out_b=nrm(next(keys), (NODE_NUM,)))
    p['tcn'] = dict(w1=nrm(next(keys), (TCN_DIM, 2)),        # Conv1d(1,C,2) taps
                    b1=nrm(next(keys), (TCN_DIM, 1)),
                    w2a=nrm(next(keys), (TCN_DIM, TCN_DIM)),  # Conv1d(C,C,2) t-1 tap
                    w2b=nrm(next(keys), (TCN_DIM, TCN_DIM)),  # Conv1d(C,C,2) t tap
                    b2=nrm(next(keys), (TCN_DIM, 1)),
                    wd=nrm(next(keys), (TCN_DIM, 1)),         # downsample Conv1d(1,C,1)
                    bd=nrm(next(keys), (TCN_DIM, 1)))
    p['tlinear_w'] = nrm(next(keys), (TCN_DIM * SEQ_LEN, GRAPH_DIM))
    p['tlinear_b'] = nrm(next(keys), (GRAPH_DIM,))

    def gat_params(kit, fin, fout, heads):
        return dict(w=nrm(next(kit), (fin, heads * fout)),
                    att_src=nrm(next(kit), (heads, fout)),
                    att_dst=nrm(next(kit), (heads, fout)),
                    bias=nrm(next(kit), (fout,)))

    def branch(kit, heads4):
        return dict(
            src_emb=nrm(next(kit), (NODE_NUM, 12)),
            tgt_emb=nrm(next(kit), (12, NODE_NUM)),
            origin_w=nrm(next(kit), (SEQ_LEN, GRAPH_DIM)),
            origin_b=nrm(next(kit), (GRAPH_DIM,)),
            g1=gat_params(kit, SEQ_LEN, GRAPH_DIM, 3),
            g2=gat_params(kit, GRAPH_DIM, GRAPH_DIM, 3),
            g3=gat_params(kit, GRAPH_DIM, GRAPH_DIM, 3),
            g4=gat_params(kit, GRAPH_DIM, GRAPH_DIM, heads4),
            lin1_w=nrm(next(kit), (SEQ_LEN, GRAPH_DIM)),
            lin1_b=nrm(next(kit), (GRAPH_DIM,)),
            lin2_w=nrm(next(kit), (GRAPH_DIM, GRAPH_DIM)),
            lin2_b=nrm(next(kit), (GRAPH_DIM,)),
            lin3_w=nrm(next(kit), (GRAPH_DIM, GRAPH_DIM)),
            lin3_b=nrm(next(kit), (GRAPH_DIM,)),
            lin4_w=nrm(next(kit), (GRAPH_DIM, GRAPH_DIM)),
            lin4_b=nrm(next(kit), (GRAPH_DIM,)),
        )

    p['sp'] = branch(keys, 1)    # sp_gconv4 has heads=1
    p['dtw'] = branch(keys, 3)   # dtw_gconv4 has heads=3
    return p


# --------------------------------- main ---------------------------------------
if __name__ == "__main__":
    key = jax.random.PRNGKey(0)
    kx, kp = jax.random.split(key)
    x = jax.random.normal(kx, (BATCH * NODE_NUM, SEQ_LEN), dtype=F32)
    params = init_params(kp)

    nodes = jnp.arange(NODE_NUM, dtype=jnp.int32)
    ring = jnp.stack([nodes, (nodes + 1) % NODE_NUM])
    edge_index = jnp.concatenate([ring, ring[::-1]], axis=1)          # (2, 2N)
    ring2 = jnp.stack([nodes, (nodes + 2) % NODE_NUM])
    dtw_edge_index = jnp.concatenate([ring2, ring2[::-1]], axis=1)    # (2, 2N)

    out = stcell_forward(x, edge_index, dtw_edge_index, params)
    out = jax.block_until_ready(out)
    assert out.shape == (BATCH * NODE_NUM, 3 * GRAPH_DIM)
    assert bool(jnp.all(jnp.isfinite(out)))
    print("KERNEL_OK")
</pallas_src>

<mosaic_0001>
module attributes {stable_mosaic.version = 11 : i64} {
  func.func @_stcell_kernel(%arg0: memref<80x128xf32, #tpu.memory_space<vmem>>, %arg1: memref<480x128xf32, #tpu.memory_space<vmem>>, %arg2: memref<272x128xf32, #tpu.memory_space<vmem>>, %arg3: memref<304x128xf32, #tpu.memory_space<vmem>>, %arg4: memref<16x128xf32, #tpu.memory_space<vmem>>) attributes {dimension_semantics = [], scalar_prefetch = 0 : i64, scratch_operands = 0 : i64, tpu.core_type = #tpu.core_type<tc>} {
    %c0 = arith.constant 0 : index
    %c0_0 = arith.constant 0 : index
    %0 = vector.load %arg0[%c0, %c0_0] : memref<80x128xf32, #tpu.memory_space<vmem>>, vector<16x12xf32>
    %c0_1 = arith.constant 0 : index
    %c0_2 = arith.constant 0 : index
    %1 = vector.load %arg1[%c0_1, %c0_2] : memref<480x128xf32, #tpu.memory_space<vmem>>, vector<48x16xf32>
    %cst = arith.constant dense<0.000000e+00> : vector<48x12xf32>
    %2 = tpu.matmul %1, %0, %cst {dimension_numbers = #tpu.dot_dimension_numbers<[1], [0], [0], [1], [0, 0, 1, 1], [], []>} : vector<48x16xf32>, vector<16x12xf32>, vector<48x12xf32> -> vector<48x12xf32>
    %c48 = arith.constant 48 : index
    %c0_3 = arith.constant 0 : index
    %3 = vector.load %arg1[%c48, %c0_3] : memref<480x128xf32, #tpu.memory_space<vmem>>, vector<48x12xf32>
    %4 = arith.addf %2, %3 : vector<48x12xf32>
    %5 = vector.extract_strided_slice %4 {offsets = [0, 0], sizes = [16, 12], strides = [1, 1]} : vector<48x12xf32> to vector<16x12xf32>
    %cst_4 = arith.constant 0.353553385 : f32
    %6 = vector.broadcast %cst_4 : f32 to vector<16x12xf32>
    %7 = arith.mulf %5, %6 : vector<16x12xf32>
    %8 = vector.extract_strided_slice %4 {offsets = [16, 0], sizes = [16, 12], strides = [1, 1]} : vector<48x12xf32> to vector<16x12xf32>
    %9 = vector.extract_strided_slice %4 {offsets = [32, 0], sizes = [16, 12], strides = [1, 1]} : vector<48x12xf32> to vector<16x12xf32>
    %10 = vector.extract_strided_slice %7 {offsets = [0, 0], sizes = [8, 12], strides = [1, 1]} : vector<16x12xf32> to vector<8x12xf32>
    %11 = vector.extract_strided_slice %8 {offsets = [0, 0], sizes = [8, 12], strides = [1, 1]} : vector<16x12xf32> to vector<8x12xf32>
    %12 = vector.extract_strided_slice %9 {offsets = [0, 0], sizes = [8, 12], strides = [1, 1]} : vector<16x12xf32> to vector<8x12xf32>
    %cst_5 = arith.constant dense<0.000000e+00> : vector<12x12xf32>
    %13 = tpu.matmul %10, %11, %cst_5 {dimension_numbers = #tpu.dot_dimension_numbers<[0], [0], [1], [1], [0, 1, 1, 1], [], []>} : vector<8x12xf32>, vector<8x12xf32>, vector<12x12xf32> -> vector<12x12xf32>
    %cst_6 = arith.constant dense<0xFF800000> : vector<12xf32>
    %14 = vector.multi_reduction <maximumf>, %13, %cst_6 [1] : vector<12x12xf32> to vector<12xf32>
    %15 = vector.shape_cast %14 : vector<12xf32> to vector<12x1xf32>
    %16 = vector.broadcast %15 : vector<12x1xf32> to vector<12x12xf32>
    %17 = arith.subf %13, %16 : vector<12x12xf32>
    %18 = math.exp %17 : vector<12x12xf32>
    %cst_7 = arith.constant dense<0.000000e+00> : vector<12xf32>
    %19 = vector.multi_reduction <add>, %18, %cst_7 [1] : vector<12x12xf32> to vector<12xf32>
    %20 = vector.shape_cast %19 : vector<12xf32> to vector<12x1xf32>
    %21 = tpu.reciprocal %20 {approx = true} : vector<12x1xf32> -> vector<12x1xf32>
    %22 = vector.broadcast %21 : vector<12x1xf32> to vector<12x12xf32>
    %23 = arith.mulf %18, %22 : vector<12x12xf32>
    %cst_8 = arith.constant dense<0.000000e+00> : vector<8x12xf32>
    %24 = tpu.matmul %12, %23, %cst_8 {dimension_numbers = #tpu.dot_dimension_numbers<[1], [1], [0], [0], [0, 0, 1, 0], [], []>} : vector<8x12xf32>, vector<12x12xf32>, vector<8x12xf32> -> vector<8x12xf32>
    %25 = vector.extract_strided_slice %7 {offsets = [8, 0], sizes = [8, 12], strides = [1, 1]} : vector<16x12xf32> to vector<8x12xf32>
    %26 = vector.extract_strided_slice %8 {offsets = [8, 0], sizes = [8, 12], strides = [1, 1]} : vector<16x12xf32> to vector<8x12xf32>
    %27 = vector.extract_strided_slice %9 {offsets = [8, 0], sizes = [8, 12], strides = [1, 1]} : vector<16x12xf32> to vector<8x12xf32>
    %cst_9 = arith.constant dense<0.000000e+00> : vector<12x12xf32>
    %28 = tpu.matmul %25, %26, %cst_9 {dimension_numbers = #tpu.dot_dimension_numbers<[0], [0], [1], [1], [0, 1, 1, 1], [], []>} : vector<8x12xf32>, vector<8x12xf32>, vector<12x12xf32> -> vector<12x12xf32>
    %cst_10 = arith.constant dense<0xFF800000> : vector<12xf32>
    %29 = vector.multi_reduction <maximumf>, %28, %cst_10 [1] : vector<12x12xf32> to vector<12xf32>
    %30 = vector.shape_cast %29 : vector<12xf32> to vector<12x1xf32>
    %31 = vector.broadcast %30 : vector<12x1xf32> to vector<12x12xf32>
    %32 = arith.subf %28, %31 : vector<12x12xf32>
    %33 = math.exp %32 : vector<12x12xf32>
    %cst_11 = arith.constant dense<0.000000e+00> : vector<12xf32>
    %34 = vector.multi_reduction <add>, %33, %cst_11 [1] : vector<12x12xf32> to vector<12xf32>
    %35 = vector.shape_cast %34 : vector<12xf32> to vector<12x1xf32>
    %36 = tpu.reciprocal %35 {approx = true} : vector<12x1xf32> -> vector<12x1xf32>
    %37 = vector.broadcast %36 : vector<12x1xf32> to vector<12x12xf32>
    %38 = arith.mulf %33, %37 : vector<12x12xf32>
    %cst_12 = arith.constant dense<0.000000e+00> : vector<8x12xf32>
    %39 = tpu.matmul %27, %38, %cst_12 {dimension_numbers = #tpu.dot_dimension_numbers<[1], [1], [0], [0], [0, 0, 1, 0], [], []>} : vector<8x12xf32>, vector<12x12xf32>, vector<8x12xf32> -> vector<8x12xf32>
    %40 = tpu.concatenate %24, %39 in 0 : vector<8x12xf32>, vector<8x12xf32> -> vector<16x12xf32>
    %c96 = arith.constant 96 : index
    %c0_13 = arith.constant 0 : index
    %41 = vector.load %arg1[%c96, %c0_13] : memref<480x128xf32, #tpu.memory_space<vmem>>, vector<16x16xf32>
    %cst_14 = arith.constant dense<0.000000e+00> : vector<16x12xf32>
    %42 = tpu.matmul %41, %40, %cst_14 {dimension_numbers = #tpu.dot_dimension_numbers<[1], [0], [0], [1], [0, 0, 1, 1], [], []>} : vector<16x16xf32>, vector<16x12xf32>, vector<16x12xf32> -> vector<16x12xf32>
    %c112 = arith.constant 112 : index
    %c0_15 = arith.constant 0 : index
    %43 = vector.load %arg1[%c112, %c0_15] : memref<480x128xf32, #tpu.memory_space<vmem>>, vector<16x12xf32>
    %44 = arith.addf %42, %43 : vector<16x12xf32>
    %45 = arith.addf %44, %0 : vector<16x12xf32>
    %46 = math.tanh %45 : vector<16x12xf32>
    %c176 = arith.constant 176 : index
    %c0_16 = arith.constant 0 : index
    %47 = vector.load %arg1[%c176, %c0_16] : memref<480x128xf32, #tpu.memory_space<vmem>>, vector<12x120xf32>
    %cst_17 = arith.constant dense<0.000000e+00> : vector<16x120xf32>
    %48 = tpu.matmul %46, %47, %cst_17 {dimension_numbers = #tpu.dot_dimension_numbers<[1], [0], [0], [1], [0, 0, 1, 1], [], []>} : vector<16x12xf32>, vector<12x120xf32>, vector<16x120xf32> -> vector<16x120xf32>
    %c328 = arith.constant 328 : index
    %c0_18 = arith.constant 0 : index
    %49 = vector.load %arg1[%c328, %c0_18] : memref<480x128xf32, #tpu.memory_space<vmem>>, vector<1x120xf32>
    %50 = vector.broadcast %49 : vector<1x120xf32> to vector<16x120xf32>
    %51 = arith.addf %48, %50 : vector<16x120xf32>
    %cst_19 = arith.constant 0.000000e+00 : f32
    %52 = vector.broadcast %cst_19 : f32 to vector<16x120xf32>
    %53 = arith.maximumf %51, %52 : vector<16x120xf32>
    %c208 = arith.constant 208 : index
    %c0_20 = arith.constant 0 : index
    %54 = vector.load %arg1[%c208, %c0_20] : memref<480x128xf32, #tpu.memory_space<vmem>>, vector<120x120xf32>
    %cst_21 = arith.constant dense<0.000000e+00> : vector<16x120xf32>
    %55 = tpu.matmul %53, %54, %cst_21 {dimension_numbers = #tpu.dot_dimension_numbers<[1], [0], [0], [1], [0, 0, 1, 1], [], []>} : vector<16x120xf32>, vector<120x120xf32>, vector<16x120xf32> -> vector<16x120xf32>
    %c344 = arith.constant 344 : index
    %c0_22 = arith.constant 0 : index
    %56 = vector.load %arg1[%c344, %c0_22] : memref<480x128xf32, #tpu.memory_space<vmem>>, vector<1x120xf32>
    %57 = vector.broadcast %56 : vector<1x120xf32> to vector<16x120xf32>
    %58 = arith.addf %55, %57 : vector<16x120xf32>
    %cst_23 = arith.constant 0.000000e+00 : f32
    %59 = vector.broadcast %cst_23 : f32 to vector<16x120xf32>
    %60 = arith.maximumf %58, %59 : vector<16x120xf32>
    %c192 = arith.constant 192 : index
    %c0_24 = arith.constant 0 : index
    %61 = vector.load %arg1[%c192, %c0_24] : memref<480x128xf32, #tpu.memory_space<vmem>>, vector<12x120xf32>
    %cst_25 = arith.constant dense<0.000000e+00> : vector<16x120xf32>
    %62 = tpu.matmul %46, %61, %cst_25 {dimension_numbers = #tpu.dot_dimension_numbers<[1], [0], [0], [1], [0, 0, 1, 1], [], []>} : vector<16x12xf32>, vector<12x120xf32>, vector<16x120xf32> -> vector<16x120xf32>
    %c336 = arith.constant 336 : index
    %c0_26 = arith.constant 0 : index
    %63 = vector.load %arg1[%c336, %c0_26] : memref<480x128xf32, #tpu.memory_space<vmem>>, vector<1x120xf32>
    %64 = vector.broadcast %63 : vector<1x120xf32> to vector<16x120xf32>
    %65 = arith.addf %62, %64 : vector<16x120xf32>
    %66 = arith.addf %60, %65 : vector<16x120xf32>
    %cst_27 = arith.constant 0.000000e+00 : f32
    %67 = vector.broadcast %cst_27 : f32 to vector<16x120xf32>
    %68 = arith.maximumf %66, %67 : vector<16x120xf32>
    %c352 = arith.constant 352 : index
    %c0_28 = arith.constant 0 : index
    %69 = vector.load %arg1[%c352, %c0_28] : memref<480x128xf32, #tpu.memory_space<vmem>>, vector<120x16xf32>
    %cst_29 = arith.constant dense<0.000000e+00> : vector<16x16xf32>
    %70 = tpu.matmul %68, %69, %cst_29 {dimension_numbers = #tpu.dot_dimension_numbers<[1], [0], [0], [1], [0, 0, 1, 1], [], []>} : vector<16x120xf32>, vector<120x16xf32>, vector<16x16xf32> -> vector<16x16xf32>
    %c472 = arith.constant 472 : index
    %c0_30 = arith.constant 0 : index
    %71 = vector.load %arg1[%c472, %c0_30] : memref<480x128xf32, #tpu.memory_space<vmem>>, vector<1x16xf32>
    %72 = vector.broadcast %71 : vector<1x16xf32> to vector<16x16xf32>
    %73 = arith.addf %70, %72 : vector<16x16xf32>
    %c128 = arith.constant 128 : index
    %c0_31 = arith.constant 0 : index
    %74 = vector.load %arg1[%c128, %c0_31] : memref<480x128xf32, #tpu.memory_space<vmem>>, vector<12x12xf32>
    %cst_32 = arith.constant dense<0.000000e+00> : vector<16x12xf32>
    %75 = tpu.matmul %0, %74, %cst_32 {dimension_numbers = #tpu.dot_dimension_numbers<[1], [0], [0], [1], [0, 0, 1, 1], [], []>} : vector<16x12xf32>, vector<12x12xf32>, vector<16x12xf32> -> vector<16x12xf32>
    %c144 = arith.constant 144 : index
    %c0_33 = arith.constant 0 : index
    %76 = vector.load %arg1[%c144, %c0_33] : memref<480x128xf32, #tpu.memory_space<vmem>>, vector<1x12xf32>
    %77 = vector.broadcast %76 : vector<1x12xf32> to vector<16x12xf32>
    %78 = arith.addf %75, %77 : vector<16x12xf32>
    %c152 = arith.constant 152 : index
    %c0_34 = arith.constant 0 : index
    %79 = vector.load %arg1[%c152, %c0_34] : memref<480x128xf32, #tpu.memory_space<vmem>>, vector<12x12xf32>
    %cst_35 = arith.constant dense<0.000000e+00> : vector<16x12xf32>
    %80 = tpu.matmul %0, %79, %cst_35 {dimension_numbers = #tpu.dot_dimension_numbers<[1], [0], [0], [1], [0, 0, 1, 1], [], []>} : vector<16x12xf32>, vector<12x12xf32>, vector<16x12xf32> -> vector<16x12xf32>
    %c168 = arith.constant 168 : index
    %c0_36 = arith.constant 0 : index
    %81 = vector.load %arg1[%c168, %c0_36] : memref<480x128xf32, #tpu.memory_space<vmem>>, vector<1x12xf32>
    %82 = vector.broadcast %81 : vector<1x12xf32> to vector<16x12xf32>
    %83 = arith.addf %80, %82 : vector<16x12xf32>
    %c16 = arith.constant 16 : index
    %c0_37 = arith.constant 0 : index
    %84 = vector.load %arg0[%c16, %c0_37] : memref<80x128xf32, #tpu.memory_space<vmem>>, vector<16x16xf32>
    %c48_38 = arith.constant 48 : index
    %c0_39 = arith.constant 0 : index
    %85 = vector.load %arg0[%c48_38, %c0_39] : memref<80x128xf32, #tpu.memory_space<vmem>>, vector<16x16xf32>
    %c256 = arith.constant 256 : index
    %c0_40 = arith.constant 0 : index
    %86 = vector.load %arg2[%c256, %c0_40] : memref<272x128xf32, #tpu.memory_space<vmem>>, vector<9x16xf32>
    %c0_41 = arith.constant 0 : index
    %c0_42 = arith.constant 0 : index
    %87 = vector.load %arg2[%c0_41, %c0_42] : memref<272x128xf32, #tpu.memory_space<vmem>>, vector<12x80xf32>
    %cst_43 = arith.constant dense<0.000000e+00> : vector<16x80xf32>
    %88 = tpu.matmul %78, %87, %cst_43 {dimension_numbers = #tpu.dot_dimension_numbers<[1], [0], [0], [1], [0, 0, 1, 1], [], []>} : vector<16x12xf32>, vector<12x80xf32>, vector<16x80xf32> -> vector<16x80xf32>
    %89 = vector.extract_strided_slice %88 {offsets = [0, 48], sizes = [16, 16], strides = [1, 1]} : vector<16x80xf32> to vector<16x16xf32>
    %90 = vector.extract_strided_slice %86 {offsets = [0, 0], sizes = [1, 16], strides = [1, 1]} : vector<9x16xf32> to vector<1x16xf32>
    %91 = vector.broadcast %90 : vector<1x16xf32> to vector<16x16xf32>
    %92 = arith.addf %89, %91 : vector<16x16xf32>
    %93 = vector.extract_strided_slice %88 {offsets = [0, 64], sizes = [16, 16], strides = [1, 1]} : vector<16x80xf32> to vector<16x16xf32>
    %cst_44 = arith.constant dense<0.000000e+00> : vector<16x16xf32>
    %94 = tpu.matmul %85, %93, %cst_44 {dimension_numbers = #tpu.dot_dimension_numbers<[1], [0], [0], [1], [0, 0, 1, 1], [], []>} : vector<16x16xf32>, vector<16x16xf32>, vector<16x16xf32> -> vector<16x16xf32>
    %95 = vector.extract_strided_slice %86 {offsets = [5, 0], sizes = [1, 16], strides = [1, 1]} : vector<9x16xf32> to vector<1x16xf32>
    %96 = vector.broadcast %95 : vector<1x16xf32> to vector<16x16xf32>
    %97 = arith.addf %94, %96 : vector<16x16xf32>
    %98 = vector.extract_strided_slice %88 {offsets = [0, 0], sizes = [16, 48], strides = [1, 1]} : vector<16x80xf32> to vector<16x48xf32>
    %c64 = arith.constant 64 : index
    %c0_45 = arith.constant 0 : index
    %99 = vector.load %arg2[%c64, %c0_45] : memref<272x128xf32, #tpu.memory_space<vmem>>, vector<48x3xf32>
    %cst_46 = arith.constant dense<0.000000e+00> : vector<16x3xf32>
    %100 = tpu.matmul %98, %99, %cst_46 {dimension_numbers = #tpu.dot_dimension_numbers<[1], [0], [0], [1], [0, 0, 1, 1], [], []>} : vector<16x48xf32>, vector<48x3xf32>, vector<16x3xf32> -> vector<16x3xf32>
    %c112_47 = arith.constant 112 : index
    %c0_48 = arith.constant 0 : index
    %101 = vector.load %arg2[%c112_47, %c0_48] : memref<272x128xf32, #tpu.memory_space<vmem>>, vector<3x48xf32>
    %cst_49 = arith.constant dense<0.000000e+00> : vector<3x16xf32>
    %102 = tpu.matmul %101, %98, %cst_49 {dimension_numbers = #tpu.dot_dimension_numbers<[1], [1], [0], [0], [0, 0, 1, 0], [], []>} : vector<3x48xf32>, vector<16x48xf32>, vector<3x16xf32> -> vector<3x16xf32>
    %cst_50 = arith.constant 0.000000e+00 : f32
    %103 = vector.broadcast %cst_50 : f32 to vector<16x16xf32>
    %104 = vector.extract_strided_slice %100 {offsets = [0, 0], sizes = [16, 1], strides = [1, 1]} : vector<16x3xf32> to vector<16x1xf32>
    %105 = vector.extract_strided_slice %102 {offsets = [0, 0], sizes = [1, 16], strides = [1, 1]} : vector<3x16xf32> to vector<1x16xf32>
    %106 = vector.broadcast %104 : vector<16x1xf32> to vector<16x16xf32>
    %107 = vector.broadcast %105 : vector<1x16xf32> to vector<16x16xf32>
    %108 = arith.addf %106, %107 : vector<16x16xf32>
    %cst_51 = arith.constant 0.000000e+00 : f32
    %109 = vector.broadcast %cst_51 : f32 to vector<16x16xf32>
    %110 = arith.cmpf oge, %108, %109 : vector<16x16xf32>
    %cst_52 = arith.constant 2.000000e-01 : f32
    %111 = vector.broadcast %cst_52 : f32 to vector<16x16xf32>
    %112 = arith.mulf %111, %108 : vector<16x16xf32>
    %113 = arith.select %110, %108, %112 : vector<16x16xi1>, vector<16x16xf32>
    %114 = arith.addf %113, %84 : vector<16x16xf32>
    %cst_53 = arith.constant dense<0xFF800000> : vector<16xf32>
    %115 = vector.multi_reduction <maximumf>, %114, %cst_53 [1] : vector<16x16xf32> to vector<16xf32>
    %116 = vector.shape_cast %115 : vector<16xf32> to vector<16x1xf32>
    %117 = vector.broadcast %116 : vector<16x1xf32> to vector<16x16xf32>
    %118 = arith.subf %114, %117 : vector<16x16xf32>
    %119 = math.exp %118 : vector<16x16xf32>
    %cst_54 = arith.constant dense<0.000000e+00> : vector<16xf32>
    %120 = vector.multi_reduction <add>, %119, %cst_54 [1] : vector<16x16xf32> to vector<16xf32>
    %121 = vector.shape_cast %120 : vector<16xf32> to vector<16x1xf32>
    %122 = tpu.reciprocal %121 {approx = true} : vector<16x1xf32> -> vector<16x1xf32>
    %123 = vector.broadcast %122 : vector<16x1xf32> to vector<16x16xf32>
    %124 = arith.mulf %119, %123 : vector<16x16xf32>
    %125 = vector.extract_strided_slice %98 {offsets = [0, 0], sizes = [16, 16], strides = [1, 1]} : vector<16x48xf32> to vector<16x16xf32>
    %cst_55 = arith.constant dense<0.000000e+00> : vector<16x16xf32>
    %126 = tpu.matmul %124, %125, %cst_55 {dimension_numbers = #tpu.dot_dimension_numbers<[1], [0], [0], [1], [0, 0, 1, 1], [], []>} : vector<16x16xf32>, vector<16x16xf32>, vector<16x16xf32> -> vector<16x16xf32>
    %127 = arith.addf %103, %126 : vector<16x16xf32>
    %128 = vector.extract_strided_slice %100 {offsets = [0, 1], sizes = [16, 1], strides = [1, 1]} : vector<16x3xf32> to vector<16x1xf32>
    %129 = vector.extract_strided_slice %102 {offsets = [1, 0], sizes = [1, 16], strides = [1, 1]} : vector<3x16xf32> to vector<1x16xf32>
    %130 = vector.broadcast %128 : vector<16x1xf32> to vector<16x16xf32>
    %131 = vector.broadcast %129 : vector<1x16xf32> to vector<16x16xf32>
    %132 = arith.addf %130, %131 : vector<16x16xf32>
    %cst_56 = arith.constant 0.000000e+00 : f32
    %133 = vector.broadcast %cst_56 : f32 to vector<16x16xf32>
    %134 = arith.cmpf oge, %132, %133 : vector<16x16xf32>
    %cst_57 = arith.constant 2.000000e-01 : f32
    %135 = vector.broadcast %cst_57 : f32 to vector<16x16xf32>
    %136 = arith.mulf %135, %132 : vector<16x16xf32>
    %137 = arith.select %134, %132, %136 : vector<16x16xi1>, vector<16x16xf32>
    %138 = arith.addf %137, %84 : vector<16x16xf32>
    %cst_58 = arith.constant dense<0xFF800000> : vector<16xf32>
    %139 = vector.multi_reduction <maximumf>, %138, %cst_58 [1] : vector<16x16xf32> to vector<16xf32>
    %140 = vector.shape_cast %139 : vector<16xf32> to vector<16x1xf32>
    %141 = vector.broadcast %140 : vector<16x1xf32> to vector<16x16xf32>
    %142 = arith.subf %138, %141 : vector<16x16xf32>
    %143 = math.exp %142 : vector<16x16xf32>
    %cst_59 = arith.constant dense<0.000000e+00> : vector<16xf32>
    %144 = vector.multi_reduction <add>, %143, %cst_59 [1] : vector<16x16xf32> to vector<16xf32>
    %145 = vector.shape_cast %144 : vector<16xf32> to vector<16x1xf32>
    %146 = tpu.reciprocal %145 {approx = true} : vector<16x1xf32> -> vector<16x1xf32>
    %147 = vector.broadcast %146 : vector<16x1xf32> to vector<16x16xf32>
    %148 = arith.mulf %143, %147 : vector<16x16xf32>
    %149 = vector.extract_strided_slice %98 {offsets = [0, 16], sizes = [16, 16], strides = [1, 1]} : vector<16x48xf32> to vector<16x16xf32>
    %cst_60 = arith.constant dense<0.000000e+00> : vector<16x16xf32>
    %150 = tpu.matmul %148, %149, %cst_60 {dimension_numbers = #tpu.dot_dimension_numbers<[1], [0], [0], [1], [0, 0, 1, 1], [], []>} : vector<16x16xf32>, vector<16x16xf32>, vector<16x16xf32> -> vector<16x16xf32>
    %151 = arith.addf %127, %150 : vector<16x16xf32>
    %152 = vector.extract_strided_slice %100 {offsets = [0, 2], sizes = [16, 1], strides = [1, 1]} : vector<16x3xf32> to vector<16x1xf32>
    %153 = vector.extract_strided_slice %102 {offsets = [2, 0], sizes = [1, 16], strides = [1, 1]} : vector<3x16xf32> to vector<1x16xf32>
    %154 = vector.broadcast %152 : vector<16x1xf32> to vector<16x16xf32>
    %155 = vector.broadcast %153 : vector<1x16xf32> to vector<16x16xf32>
    %156 = arith.addf %154, %155 : vector<16x16xf32>
    %cst_61 = arith.constant 0.000000e+00 : f32
    %157 = vector.broadcast %cst_61 : f32 to vector<16x16xf32>
    %158 = arith.cmpf oge, %156, %157 : vector<16x16xf32>
    %cst_62 = arith.constant 2.000000e-01 : f32
    %159 = vector.broadcast %cst_62 : f32 to vector<16x16xf32>
    %160 = arith.mulf %159, %156 : vector<16x16xf32>
    %161 = arith.select %158, %156, %160 : vector<16x16xi1>, vector<16x16xf32>
    %162 = arith.addf %161, %84 : vector<16x16xf32>
    %cst_63 = arith.constant dense<0xFF800000> : vector<16xf32>
    %163 = vector.multi_reduction <maximumf>, %162, %cst_63 [1] : vector<16x16xf32> to vector<16xf32>
    %164 = vector.shape_cast %163 : vector<16xf32> to vector<16x1xf32>
    %165 = vector.broadcast %164 : vector<16x1xf32> to vector<16x16xf32>
    %166 = arith.subf %162, %165 : vector<16x16xf32>
    %167 = math.exp %166 : vector<16x16xf32>
    %cst_64 = arith.constant dense<0.000000e+00> : vector<16xf32>
    %168 = vector.multi_reduction <add>, %167, %cst_64 [1] : vector<16x16xf32> to vector<16xf32>
    %169 = vector.shape_cast %168 : vector<16xf32> to vector<16x1xf32>
    %170 = tpu.reciprocal %169 {approx = true} : vector<16x1xf32> -> vector<16x1xf32>
    %171 = vector.broadcast %170 : vector<16x1xf32> to vector<16x16xf32>
    %172 = arith.mulf %167, %171 : vector<16x16xf32>
    %173 = vector.extract_strided_slice %98 {offsets = [0, 32], sizes = [16, 16], strides = [1, 1]} : vector<16x48xf32> to vector<16x16xf32>
    %cst_65 = arith.constant dense<0.000000e+00> : vector<16x16xf32>
    %174 = tpu.matmul %172, %173, %cst_65 {dimension_numbers = #tpu.dot_dimension_numbers<[1], [0], [0], [1], [0, 0, 1, 1], [], []>} : vector<16x16xf32>, vector<16x16xf32>, vector<16x16xf32> -> vector<16x16xf32>
    %175 = arith.addf %151, %174 : vector<16x16xf32>
    %cst_66 = arith.constant 0.333333343 : f32
    %176 = vector.broadcast %cst_66 : f32 to vector<16x16xf32>
    %177 = arith.mulf %175, %176 : vector<16x16xf32>
    %178 = vector.extract_strided_slice %86 {offsets = [1, 0], sizes = [1, 16], strides = [1, 1]} : vector<9x16xf32> to vector<1x16xf32>
    %179 = vector.broadcast %178 : vector<1x16xf32> to vector<16x16xf32>
    %180 = arith.addf %177, %179 : vector<16x16xf32>
    %181 = math.tanh %180 : vector<16x16xf32>
    %182 = arith.negf %97 : vector<16x16xf32>
    %183 = math.exp %182 : vector<16x16xf32>
    %cst_67 = arith.constant 1.000000e+00 : f32
    %184 = vector.broadcast %cst_67 : f32 to vector<16x16xf32>
    %185 = arith.addf %184, %183 : vector<16x16xf32>
    %186 = arith.divf %184, %185 : vector<16x16xf32>
    %187 = arith.mulf %181, %186 : vector<16x16xf32>
    %cst_68 = arith.constant 1.000000e+00 : f32
    %188 = vector.broadcast %cst_68 : f32 to vector<16x16xf32>
    %189 = arith.subf %188, %186 : vector<16x16xf32>
    %190 = arith.mulf %92, %189 : vector<16x16xf32>
    %191 = arith.addf %187, %190 : vector<16x16xf32>
    %192 = math.tanh %191 : vector<16x16xf32>
    %c16_69 = arith.constant 16 : index
    %c0_70 = arith.constant 0 : index
    %193 = vector.load %arg2[%c16_69, %c0_70] : memref<272x128xf32, #tpu.memory_space<vmem>>, vector<16x64xf32>
    %cst_71 = arith.constant dense<0.000000e+00> : vector<16x64xf32>
    %194 = tpu.matmul %192, %193, %cst_71 {dimension_numbers = #tpu.dot_dimension_numbers<[1], [0], [0], [1], [0, 0, 1, 1], [], []>} : vector<16x16xf32>, vector<16x64xf32>, vector<16x64xf32> -> vector<16x64xf32>
    %195 = vector.extract_strided_slice %194 {offsets = [0, 48], sizes = [16, 16], strides = [1, 1]} : vector<16x64xf32> to vector<16x16xf32>
    %cst_72 = arith.constant dense<0.000000e+00> : vector<16x16xf32>
    %196 = tpu.matmul %85, %195, %cst_72 {dimension_numbers = #tpu.dot_dimension_numbers<[1], [0], [0], [1], [0, 0, 1, 1], [], []>} : vector<16x16xf32>, vector<16x16xf32>, vector<16x16xf32> -> vector<16x16xf32>
    %197 = vector.extract_strided_slice %86 {offsets = [6, 0], sizes = [1, 16], strides = [1, 1]} : vector<9x16xf32> to vector<1x16xf32>
    %198 = vector.broadcast %197 : vector<1x16xf32> to vector<16x16xf32>
    %199 = arith.addf %196, %198 : vector<16x16xf32>
    %200 = vector.extract_strided_slice %194 {offsets = [0, 0], sizes = [16, 48], strides = [1, 1]} : vector<16x64xf32> to vector<16x48xf32>
    %c120 = arith.constant 120 : index
    %c0_73 = arith.constant 0 : index
    %201 = vector.load %arg2[%c120, %c0_73] : memref<272x128xf32, #tpu.memory_space<vmem>>, vector<48x3xf32>
    %cst_74 = arith.constant dense<0.000000e+00> : vector<16x3xf32>
    %202 = tpu.matmul %200, %201, %cst_74 {dimension_numbers = #tpu.dot_dimension_numbers<[1], [0], [0], [1], [0, 0, 1, 1], [], []>} : vector<16x48xf32>, vector<48x3xf32>, vector<16x3xf32> -> vector<16x3xf32>
    %c168_75 = arith.constant 168 : index
    %c0_76 = arith.constant 0 : index
    %203 = vector.load %arg2[%c168_75, %c0_76] : memref<272x128xf32, #tpu.memory_space<vmem>>, vector<3x48xf32>
    %cst_77 = arith.constant dense<0.000000e+00> : vector<3x16xf32>
    %204 = tpu.matmul %203, %200, %cst_77 {dimension_numbers = #tpu.dot_dimension_numbers<[1], [1], [0], [0], [0, 0, 1, 0], [], []>} : vector<3x48xf32>, vector<16x48xf32>, vector<3x16xf32> -> vector<3x16xf32>
    %cst_78 = arith.constant 0.000000e+00 : f32
    %205 = vector.broadcast %cst_78 : f32 to vector<16x16xf32>
    %206 = vector.extract_strided_slice %202 {offsets = [0, 0], sizes = [16, 1], strides = [1, 1]} : vector<16x3xf32> to vector<16x1xf32>
    %207 = vector.extract_strided_slice %204 {offsets = [0, 0], sizes = [1, 16], strides = [1, 1]} : vector<3x16xf32> to vector<1x16xf32>
    %208 = vector.broadcast %206 : vector<16x1xf32> to vector<16x16xf32>
    %209 = vector.broadcast %207 : vector<1x16xf32> to vector<16x16xf32>
    %210 = arith.addf %208, %209 : vector<16x16xf32>
    %cst_79 = arith.constant 0.000000e+00 : f32
    %211 = vector.broadcast %cst_79 : f32 to vector<16x16xf32>
    %212 = arith.cmpf oge, %210, %211 : vector<16x16xf32>
    %cst_80 = arith.constant 2.000000e-01 : f32
    %213 = vector.broadcast %cst_80 : f32 to vector<16x16xf32>
    %214 = arith.mulf %213, %210 : vector<16x16xf32>
    %215 = arith.select %212, %210, %214 : vector<16x16xi1>, vector<16x16xf32>
    %216 = arith.addf %215, %84 : vector<16x16xf32>
    %cst_81 = arith.constant dense<0xFF800000> : vector<16xf32>
    %217 = vector.multi_reduction <maximumf>, %216, %cst_81 [1] : vector<16x16xf32> to vector<16xf32>
    %218 = vector.shape_cast %217 : vector<16xf32> to vector<16x1xf32>
    %219 = vector.broadcast %218 : vector<16x1xf32> to vector<16x16xf32>
    %220 = arith.subf %216, %219 : vector<16x16xf32>
    %221 = math.exp %220 : vector<16x16xf32>
    %cst_82 = arith.constant dense<0.000000e+00> : vector<16xf32>
    %222 = vector.multi_reduction <add>, %221, %cst_82 [1] : vector<16x16xf32> to vector<16xf32>
    %223 = vector.shape_cast %222 : vector<16xf32> to vector<16x1xf32>
    %224 = tpu.reciprocal %223 {approx = true} : vector<16x1xf32> -> vector<16x1xf32>
    %225 = vector.broadcast %224 : vector<16x1xf32> to vector<16x16xf32>
    %226 = arith.mulf %221, %225 : vector<16x16xf32>
    %227 = vector.extract_strided_slice %200 {offsets = [0, 0], sizes = [16, 16], strides = [1, 1]} : vector<16x48xf32> to vector<16x16xf32>
    %cst_83 = arith.constant dense<0.000000e+00> : vector<16x16xf32>
    %228 = tpu.matmul %226, %227, %cst_83 {dimension_numbers = #tpu.dot_dimension_numbers<[1], [0], [0], [1], [0, 0, 1, 1], [], []>} : vector<16x16xf32>, vector<16x16xf32>, vector<16x16xf32> -> vector<16x16xf32>
    %229 = arith.addf %205, %228 : vector<16x16xf32>
    %230 = vector.extract_strided_slice %202 {offsets = [0, 1], sizes = [16, 1], strides = [1, 1]} : vector<16x3xf32> to vector<16x1xf32>
    %231 = vector.extract_strided_slice %204 {offsets = [1, 0], sizes = [1, 16], strides = [1, 1]} : vector<3x16xf32> to vector<1x16xf32>
    %232 = vector.broadcast %230 : vector<16x1xf32> to vector<16x16xf32>
    %233 = vector.broadcast %231 : vector<1x16xf32> to vector<16x16xf32>
    %234 = arith.addf %232, %233 : vector<16x16xf32>
    %cst_84 = arith.constant 0.000000e+00 : f32
    %235 = vector.broadcast %cst_84 : f32 to vector<16x16xf32>
    %236 = arith.cmpf oge, %234, %235 : vector<16x16xf32>
    %cst_85 = arith.constant 2.000000e-01 : f32
    %237 = vector.broadcast %cst_85 : f32 to vector<16x16xf32>
    %238 = arith.mulf %237, %234 : vector<16x16xf32>
    %239 = arith.select %236, %234, %238 : vector<16x16xi1>, vector<16x16xf32>
    %240 = arith.addf %239, %84 : vector<16x16xf32>
    %cst_86 = arith.constant dense<0xFF800000> : vector<16xf32>
    %241 = vector.multi_reduction <maximumf>, %240, %cst_86 [1] : vector<16x16xf32> to vector<16xf32>
    %242 = vector.shape_cast %241 : vector<16xf32> to vector<16x1xf32>
    %243 = vector.broadcast %242 : vector<16x1xf32> to vector<16x16xf32>
    %244 = arith.subf %240, %243 : vector<16x16xf32>
    %245 = math.exp %244 : vector<16x16xf32>
    %cst_87 = arith.constant dense<0.000000e+00> : vector<16xf32>
    %246 = vector.multi_reduction <add>, %245, %cst_87 [1] : vector<16x16xf32> to vector<16xf32>
    %247 = vector.shape_cast %246 : vector<16xf32> to vector<16x1xf32>
    %248 = tpu.reciprocal %247 {approx = true} : vector<16x1xf32> -> vector<16x1xf32>
    %249 = vector.broadcast %248 : vector<16x1xf32> to vector<16x16xf32>
    %250 = arith.mulf %245, %249 : vector<16x16xf32>
    %251 = vector.extract_strided_slice %200 {offsets = [0, 16], sizes = [16, 16], strides = [1, 1]} : vector<16x48xf32> to vector<16x16xf32>
    %cst_88 = arith.constant dense<0.000000e+00> : vector<16x16xf32>
    %252 = tpu.matmul %250, %251, %cst_88 {dimension_numbers = #tpu.dot_dimension_numbers<[1], [0], [0], [1], [0, 0, 1, 1], [], []>} : vector<16x16xf32>, vector<16x16xf32>, vector<16x16xf32> -> vector<16x16xf32>
    %253 = arith.addf %229, %252 : vector<16x16xf32>
    %254 = vector.extract_strided_slice %202 {offsets = [0, 2], sizes = [16, 1], strides = [1, 1]} : vector<16x3xf32> to vector<16x1xf32>
    %255 = vector.extract_strided_slice %204 {offsets = [2, 0], sizes = [1, 16], strides = [1, 1]} : vector<3x16xf32> to vector<1x16xf32>
    %256 = vector.broadcast %254 : vector<16x1xf32> to vector<16x16xf32>
    %257 = vector.broadcast %255 : vector<1x16xf32> to vector<16x16xf32>
    %258 = arith.addf %256, %257 : vector<16x16xf32>
    %cst_89 = arith.constant 0.000000e+00 : f32
    %259 = vector.broadcast %cst_89 : f32 to vector<16x16xf32>
    %260 = arith.cmpf oge, %258, %259 : vector<16x16xf32>
    %cst_90 = arith.constant 2.000000e-01 : f32
    %261 = vector.broadcast %cst_90 : f32 to vector<16x16xf32>
    %262 = arith.mulf %261, %258 : vector<16x16xf32>
    %263 = arith.select %260, %258, %262 : vector<16x16xi1>, vector<16x16xf32>
    %264 = arith.addf %263, %84 : vector<16x16xf32>
    %cst_91 = arith.constant dense<0xFF800000> : vector<16xf32>
    %265 = vector.multi_reduction <maximumf>, %264, %cst_91 [1] : vector<16x16xf32> to vector<16xf32>
    %266 = vector.shape_cast %265 : vector<16xf32> to vector<16x1xf32>
    %267 = vector.broadcast %266 : vector<16x1xf32> to vector<16x16xf32>
    %268 = arith.subf %264, %267 : vector<16x16xf32>
    %269 = math.exp %268 : vector<16x16xf32>
    %cst_92 = arith.constant dense<0.000000e+00> : vector<16xf32>
    %270 = vector.multi_reduction <add>, %269, %cst_92 [1] : vector<16x16xf32> to vector<16xf32>
    %271 = vector.shape_cast %270 : vector<16xf32> to vector<16x1xf32>
    %272 = tpu.reciprocal %271 {approx = true} : vector<16x1xf32> -> vector<16x1xf32>
    %273 = vector.broadcast %272 : vector<16x1xf32> to vector<16x16xf32>
    %274 = arith.mulf %269, %273 : vector<16x16xf32>
    %275 = vector.extract_strided_slice %200 {offsets = [0, 32], sizes = [16, 16], strides = [1, 1]} : vector<16x48xf32> to vector<16x16xf32>
    %cst_93 = arith.constant dense<0.000000e+00> : vector<16x16xf32>
    %276 = tpu.matmul %274, %275, %cst_93 {dimension_numbers = #tpu.dot_dimension_numbers<[1], [0], [0], [1], [0, 0, 1, 1], [], []>} : vector<16x16xf32>, vector<16x16xf32>, vector<16x16xf32> -> vector<16x16xf32>
    %277 = arith.addf %253, %276 : vector<16x16xf32>
    %cst_94 = arith.constant 0.333333343 : f32
    %278 = vector.broadcast %cst_94 : f32 to vector<16x16xf32>
    %279 = arith.mulf %277, %278 : vector<16x16xf32>
    %280 = vector.extract_strided_slice %86 {offsets = [2, 0], sizes = [1, 16], strides = [1, 1]} : vector<9x16xf32> to vector<1x16xf32>
    %281 = vector.broadcast %280 : vector<1x16xf32> to vector<16x16xf32>
    %282 = arith.addf %279, %281 : vector<16x16xf32>
    %cst_95 = arith.constant 0.000000e+00 : f32
    %283 = vector.broadcast %cst_95 : f32 to vector<16x16xf32>
    %284 = arith.cmpf oge, %282, %283 : vector<16x16xf32>
    %cst_96 = arith.constant 0.00999999977 : f32
    %285 = vector.broadcast %cst_96 : f32 to vector<16x16xf32>
    %286 = arith.mulf %285, %282 : vector<16x16xf32>
    %287 = arith.select %284, %282, %286 : vector<16x16xi1>, vector<16x16xf32>
    %288 = arith.negf %199 : vector<16x16xf32>
    %289 = math.exp %288 : vector<16x16xf32>
    %cst_97 = arith.constant 1.000000e+00 : f32
    %290 = vector.broadcast %cst_97 : f32 to vector<16x16xf32>
    %291 = arith.addf %290, %289 : vector<16x16xf32>
    %292 = arith.divf %290, %291 : vector<16x16xf32>
    %293 = arith.mulf %287, %292 : vector<16x16xf32>
    %cst_98 = arith.constant 1.000000e+00 : f32
    %294 = vector.broadcast %cst_98 : f32 to vector<16x16xf32>
    %295 = arith.subf %294, %292 : vector<16x16xf32>
    %296 = arith.mulf %191, %295 : vector<16x16xf32>
    %297 = arith.addf %293, %296 : vector<16x16xf32>
    %cst_99 = arith.constant 0.000000e+00 : f32
    %298 = vector.broadcast %cst_99 : f32 to vector<16x16xf32>
    %299 = arith.maximumf %297, %298 : vector<16x16xf32>
    %c32 = arith.constant 32 : index
    %c0_100 = arith.constant 0 : index
    %300 = vector.load %arg2[%c32, %c0_100] : memref<272x128xf32, #tpu.memory_space<vmem>>, vector<16x64xf32>
    %cst_101 = arith.constant dense<0.000000e+00> : vector<16x64xf32>
    %301 = tpu.matmul %299, %300, %cst_101 {dimension_numbers = #tpu.dot_dimension_numbers<[1], [0], [0], [1], [0, 0, 1, 1], [], []>} : vector<16x16xf32>, vector<16x64xf32>, vector<16x64xf32> -> vector<16x64xf32>
    %302 = vector.extract_strided_slice %301 {offsets = [0, 48], sizes = [16, 16], strides = [1, 1]} : vector<16x64xf32> to vector<16x16xf32>
    %cst_102 = arith.constant dense<0.000000e+00> : vector<16x16xf32>
    %303 = tpu.matmul %85, %302, %cst_102 {dimension_numbers = #tpu.dot_dimension_numbers<[1], [0], [0], [1], [0, 0, 1, 1], [], []>} : vector<16x16xf32>, vector<16x16xf32>, vector<16x16xf32> -> vector<16x16xf32>
    %304 = vector.extract_strided_slice %86 {offsets = [7, 0], sizes = [1, 16], strides = [1, 1]} : vector<9x16xf32> to vector<1x16xf32>
    %305 = vector.broadcast %304 : vector<1x16xf32> to vector<16x16xf32>
    %306 = arith.addf %303, %305 : vector<16x16xf32>
    %307 = vector.extract_strided_slice %301 {offsets = [0, 0], sizes = [16, 48], strides = [1, 1]} : vector<16x64xf32> to vector<16x48xf32>
    %c176_103 = arith.constant 176 : index
    %c0_104 = arith.constant 0 : index
    %308 = vector.load %arg2[%c176_103, %c0_104] : memref<272x128xf32, #tpu.memory_space<vmem>>, vector<48x3xf32>
    %cst_105 = arith.constant dense<0.000000e+00> : vector<16x3xf32>
    %309 = tpu.matmul %307, %308, %cst_105 {dimension_numbers = #tpu.dot_dimension_numbers<[1], [0], [0], [1], [0, 0, 1, 1], [], []>} : vector<16x48xf32>, vector<48x3xf32>, vector<16x3xf32> -> vector<16x3xf32>
    %c224 = arith.constant 224 : index
    %c0_106 = arith.constant 0 : index
    %310 = vector.load %arg2[%c224, %c0_106] : memref<272x128xf32, #tpu.memory_space<vmem>>, vector<3x48xf32>
    %cst_107 = arith.constant dense<0.000000e+00> : vector<3x16xf32>
    %311 = tpu.matmul %310, %307, %cst_107 {dimension_numbers = #tpu.dot_dimension_numbers<[1], [1], [0], [0], [0, 0, 1, 0], [], []>} : vector<3x48xf32>, vector<16x48xf32>, vector<3x16xf32> -> vector<3x16xf32>
    %cst_108 = arith.constant 0.000000e+00 : f32
    %312 = vector.broadcast %cst_108 : f32 to vector<16x16xf32>
    %313 = vector.extract_strided_slice %309 {offsets = [0, 0], sizes = [16, 1], strides = [1, 1]} : vector<16x3xf32> to vector<16x1xf32>
    %314 = vector.extract_strided_slice %311 {offsets = [0, 0], sizes = [1, 16], strides = [1, 1]} : vector<3x16xf32> to vector<1x16xf32>
    %315 = vector.broadcast %313 : vector<16x1xf32> to vector<16x16xf32>
    %316 = vector.broadcast %314 : vector<1x16xf32> to vector<16x16xf32>
    %317 = arith.addf %315, %316 : vector<16x16xf32>
    %cst_109 = arith.constant 0.000000e+00 : f32
    %318 = vector.broadcast %cst_109 : f32 to vector<16x16xf32>
    %319 = arith.cmpf oge, %317, %318 : vector<16x16xf32>
    %cst_110 = arith.constant 2.000000e-01 : f32
    %320 = vector.broadcast %cst_110 : f32 to vector<16x16xf32>
    %321 = arith.mulf %320, %317 : vector<16x16xf32>
    %322 = arith.select %319, %317, %321 : vector<16x16xi1>, vector<16x16xf32>
    %323 = arith.addf %322, %84 : vector<16x16xf32>
    %cst_111 = arith.constant dense<0xFF800000> : vector<16xf32>
    %324 = vector.multi_reduction <maximumf>, %323, %cst_111 [1] : vector<16x16xf32> to vector<16xf32>
    %325 = vector.shape_cast %324 : vector<16xf32> to vector<16x1xf32>
    %326 = vector.broadcast %325 : vector<16x1xf32> to vector<16x16xf32>
    %327 = arith.subf %323, %326 : vector<16x16xf32>
    %328 = math.exp %327 : vector<16x16xf32>
    %cst_112 = arith.constant dense<0.000000e+00> : vector<16xf32>
    %329 = vector.multi_reduction <add>, %328, %cst_112 [1] : vector<16x16xf32> to vector<16xf32>
    %330 = vector.shape_cast %329 : vector<16xf32> to vector<16x1xf32>
    %331 = tpu.reciprocal %330 {approx = true} : vector<16x1xf32> -> vector<16x1xf32>
    %332 = vector.broadcast %331 : vector<16x1xf32> to vector<16x16xf32>
    %333 = arith.mulf %328, %332 : vector<16x16xf32>
    %334 = vector.extract_strided_slice %307 {offsets = [0, 0], sizes = [16, 16], strides = [1, 1]} : vector<16x48xf32> to vector<16x16xf32>
    %cst_113 = arith.constant dense<0.000000e+00> : vector<16x16xf32>
    %335 = tpu.matmul %333, %334, %cst_113 {dimension_numbers = #tpu.dot_dimension_numbers<[1], [0], [0], [1], [0, 0, 1, 1], [], []>} : vector<16x16xf32>, vector<16x16xf32>, vector<16x16xf32> -> vector<16x16xf32>
    %336 = arith.addf %312, %335 : vector<16x16xf32>
    %337 = vector.extract_strided_slice %309 {offsets = [0, 1], sizes = [16, 1], strides = [1, 1]} : vector<16x3xf32> to vector<16x1xf32>
    %338 = vector.extract_strided_slice %311 {offsets = [1, 0], sizes = [1, 16], strides = [1, 1]} : vector<3x16xf32> to vector<1x16xf32>
    %339 = vector.broadcast %337 : vector<16x1xf32> to vector<16x16xf32>
    %340 = vector.broadcast %338 : vector<1x16xf32> to vector<16x16xf32>
    %341 = arith.addf %339, %340 : vector<16x16xf32>
    %cst_114 = arith.constant 0.000000e+00 : f32
    %342 = vector.broadcast %cst_114 : f32 to vector<16x16xf32>
    %343 = arith.cmpf oge, %341, %342 : vector<16x16xf32>
    %cst_115 = arith.constant 2.000000e-01 : f32
    %344 = vector.broadcast %cst_115 : f32 to vector<16x16xf32>
    %345 = arith.mulf %344, %341 : vector<16x16xf32>
    %346 = arith.select %343, %341, %345 : vector<16x16xi1>, vector<16x16xf32>
    %347 = arith.addf %346, %84 : vector<16x16xf32>
    %cst_116 = arith.constant dense<0xFF800000> : vector<16xf32>
    %348 = vector.multi_reduction <maximumf>, %347, %cst_116 [1] : vector<16x16xf32> to vector<16xf32>
    %349 = vector.shape_cast %348 : vector<16xf32> to vector<16x1xf32>
    %350 = vector.broadcast %349 : vector<16x1xf32> to vector<16x16xf32>
    %351 = arith.subf %347, %350 : vector<16x16xf32>
    %352 = math.exp %351 : vector<16x16xf32>
    %cst_117 = arith.constant dense<0.000000e+00> : vector<16xf32>
    %353 = vector.multi_reduction <add>, %352, %cst_117 [1] : vector<16x16xf32> to vector<16xf32>
    %354 = vector.shape_cast %353 : vector<16xf32> to vector<16x1xf32>
    %355 = tpu.reciprocal %354 {approx = true} : vector<16x1xf32> -> vector<16x1xf32>
    %356 = vector.broadcast %355 : vector<16x1xf32> to vector<16x16xf32>
    %357 = arith.mulf %352, %356 : vector<16x16xf32>
    %358 = vector.extract_strided_slice %307 {offsets = [0, 16], sizes = [16, 16], strides = [1, 1]} : vector<16x48xf32> to vector<16x16xf32>
    %cst_118 = arith.constant dense<0.000000e+00> : vector<16x16xf32>
    %359 = tpu.matmul %357, %358, %cst_118 {dimension_numbers = #tpu.dot_dimension_numbers<[1], [0], [0], [1], [0, 0, 1, 1], [], []>} : vector<16x16xf32>, vector<16x16xf32>, vector<16x16xf32> -> vector<16x16xf32>
    %360 = arith.addf %336, %359 : vector<16x16xf32>
    %361 = vector.extract_strided_slice %309 {offsets = [0, 2], sizes = [16, 1], strides = [1, 1]} : vector<16x3xf32> to vector<16x1xf32>
    %362 = vector.extract_strided_slice %311 {offsets = [2, 0], sizes = [1, 16], strides = [1, 1]} : vector<3x16xf32> to vector<1x16xf32>
    %363 = vector.broadcast %361 : vector<16x1xf32> to vector<16x16xf32>
    %364 = vector.broadcast %362 : vector<1x16xf32> to vector<16x16xf32>
    %365 = arith.addf %363, %364 : vector<16x16xf32>
    %cst_119 = arith.constant 0.000000e+00 : f32
    %366 = vector.broadcast %cst_119 : f32 to vector<16x16xf32>
    %367 = arith.cmpf oge, %365, %366 : vector<16x16xf32>
    %cst_120 = arith.constant 2.000000e-01 : f32
    %368 = vector.broadcast %cst_120 : f32 to vector<16x16xf32>
    %369 = arith.mulf %368, %365 : vector<16x16xf32>
    %370 = arith.select %367, %365, %369 : vector<16x16xi1>, vector<16x16xf32>
    %371 = arith.addf %370, %84 : vector<16x16xf32>
    %cst_121 = arith.constant dense<0xFF800000> : vector<16xf32>
    %372 = vector.multi_reduction <maximumf>, %371, %cst_121 [1] : vector<16x16xf32> to vector<16xf32>
    %373 = vector.shape_cast %372 : vector<16xf32> to vector<16x1xf32>
    %374 = vector.broadcast %373 : vector<16x1xf32> to vector<16x16xf32>
    %375 = arith.subf %371, %374 : vector<16x16xf32>
    %376 = math.exp %375 : vector<16x16xf32>
    %cst_122 = arith.constant dense<0.000000e+00> : vector<16xf32>
    %377 = vector.multi_reduction <add>, %376, %cst_122 [1] : vector<16x16xf32> to vector<16xf32>
    %378 = vector.shape_cast %377 : vector<16xf32> to vector<16x1xf32>
    %379 = tpu.reciprocal %378 {approx = true} : vector<16x1xf32> -> vector<16x1xf32>
    %380 = vector.broadcast %379 : vector<16x1xf32> to vector<16x16xf32>
    %381 = arith.mulf %376, %380 : vector<16x16xf32>
    %382 = vector.extract_strided_slice %307 {offsets = [0, 32], sizes = [16, 16], strides = [1, 1]} : vector<16x48xf32> to vector<16x16xf32>
    %cst_123 = arith.constant dense<0.000000e+00> : vector<16x16xf32>
    %383 = tpu.matmul %381, %382, %cst_123 {dimension_numbers = #tpu.dot_dimension_numbers<[1], [0], [0], [1], [0, 0, 1, 1], [], []>} : vector<16x16xf32>, vector<16x16xf32>, vector<16x16xf32> -> vector<16x16xf32>
    %384 = arith.addf %360, %383 : vector<16x16xf32>
    %cst_124 = arith.constant 0.333333343 : f32
    %385 = vector.broadcast %cst_124 : f32 to vector<16x16xf32>
    %386 = arith.mulf %384, %385 : vector<16x16xf32>
    %387 = vector.extract_strided_slice %86 {offsets = [3, 0], sizes = [1, 16], strides = [1, 1]} : vector<9x16xf32> to vector<1x16xf32>
    %388 = vector.broadcast %387 : vector<1x16xf32> to vector<16x16xf32>
    %389 = arith.addf %386, %388 : vector<16x16xf32>
    %cst_125 = arith.constant 0.000000e+00 : f32
    %390 = vector.broadcast %cst_125 : f32 to vector<16x16xf32>
    %391 = arith.maximumf %389, %390 : vector<16x16xf32>
    %392 = arith.negf %306 : vector<16x16xf32>
    %393 = math.exp %392 : vector<16x16xf32>
    %cst_126 = arith.constant 1.000000e+00 : f32
    %394 = vector.broadcast %cst_126 : f32 to vector<16x16xf32>
    %395 = arith.addf %394, %393 : vector<16x16xf32>
    %396 = arith.divf %394, %395 : vector<16x16xf32>
    %397 = arith.mulf %391, %396 : vector<16x16xf32>
    %cst_127 = arith.constant 1.000000e+00 : f32
    %398 = vector.broadcast %cst_127 : f32 to vector<16x16xf32>
    %399 = arith.subf %398, %396 : vector<16x16xf32>
    %400 = arith.mulf %297, %399 : vector<16x16xf32>
    %401 = arith.addf %397, %400 : vector<16x16xf32>
    %cst_128 = arith.constant 0.000000e+00 : f32
    %402 = vector.broadcast %cst_128 : f32 to vector<16x16xf32>
    %403 = arith.maximumf %401, %402 : vector<16x16xf32>
    %c48_129 = arith.constant 48 : index
    %c0_130 = arith.constant 0 : index
    %404 = vector.load %arg2[%c48_129, %c0_130] : memref<272x128xf32, #tpu.memory_space<vmem>>, vector<16x32xf32>
    %cst_131 = arith.constant dense<0.000000e+00> : vector<16x32xf32>
    %405 = tpu.matmul %403, %404, %cst_131 {dimension_numbers = #tpu.dot_dimension_numbers<[1], [0], [0], [1], [0, 0, 1, 1], [], []>} : vector<16x16xf32>, vector<16x32xf32>, vector<16x32xf32> -> vector<16x32xf32>
    %406 = vector.extract_strided_slice %405 {offsets = [0, 16], sizes = [16, 16], strides = [1, 1]} : vector<16x32xf32> to vector<16x16xf32>
    %cst_132 = arith.constant dense<0.000000e+00> : vector<16x16xf32>
    %407 = tpu.matmul %85, %406, %cst_132 {dimension_numbers = #tpu.dot_dimension_numbers<[1], [0], [0], [1], [0, 0, 1, 1], [], []>} : vector<16x16xf32>, vector<16x16xf32>, vector<16x16xf32> -> vector<16x16xf32>
    %408 = vector.extract_strided_slice %86 {offsets = [8, 0], sizes = [1, 16], strides = [1, 1]} : vector<9x16xf32> to vector<1x16xf32>
    %409 = vector.broadcast %408 : vector<1x16xf32> to vector<16x16xf32>
    %410 = arith.addf %407, %409 : vector<16x16xf32>
    %411 = vector.extract_strided_slice %405 {offsets = [0, 0], sizes = [16, 16], strides = [1, 1]} : vector<16x32xf32> to vector<16x16xf32>
    %c232 = arith.constant 232 : index
    %c0_133 = arith.constant 0 : index
    %412 = vector.load %arg2[%c232, %c0_133] : memref<272x128xf32, #tpu.memory_space<vmem>>, vector<16x1xf32>
    %cst_134 = arith.constant dense<0.000000e+00> : vector<16x1xf32>
    %413 = tpu.matmul %411, %412, %cst_134 {dimension_numbers = #tpu.dot_dimension_numbers<[1], [0], [0], [1], [0, 0, 1, 1], [], []>} : vector<16x16xf32>, vector<16x1xf32>, vector<16x1xf32> -> vector<16x1xf32>
    %c248 = arith.constant 248 : index
    %c0_135 = arith.constant 0 : index
    %414 = vector.load %arg2[%c248, %c0_135] : memref<272x128xf32, #tpu.memory_space<vmem>>, vector<1x16xf32>
    %cst_136 = arith.constant dense<0.000000e+00> : vector<1x16xf32>
    %415 = tpu.matmul %414, %411, %cst_136 {dimension_numbers = #tpu.dot_dimension_numbers<[1], [1], [0], [0], [0, 0, 1, 0], [], []>} : vector<1x16xf32>, vector<16x16xf32>, vector<1x16xf32> -> vector<1x16xf32>
    %cst_137 = arith.constant 0.000000e+00 : f32
    %416 = vector.broadcast %cst_137 : f32 to vector<16x16xf32>
    %417 = vector.broadcast %413 : vector<16x1xf32> to vector<16x16xf32>
    %418 = vector.broadcast %415 : vector<1x16xf32> to vector<16x16xf32>
    %419 = arith.addf %417, %418 : vector<16x16xf32>
    %cst_138 = arith.constant 0.000000e+00 : f32
    %420 = vector.broadcast %cst_138 : f32 to vector<16x16xf32>
    %421 = arith.cmpf oge, %419, %420 : vector<16x16xf32>
    %cst_139 = arith.constant 2.000000e-01 : f32
    %422 = vector.broadcast %cst_139 : f32 to vector<16x16xf32>
    %423 = arith.mulf %422, %419 : vector<16x16xf32>
    %424 = arith.select %421, %419, %423 : vector<16x16xi1>, vector<16x16xf32>
    %425 = arith.addf %424, %84 : vector<16x16xf32>
    %cst_140 = arith.constant dense<0xFF800000> : vector<16xf32>
    %426 = vector.multi_reduction <maximumf>, %425, %cst_140 [1] : vector<16x16xf32> to vector<16xf32>
    %427 = vector.shape_cast %426 : vector<16xf32> to vector<16x1xf32>
    %428 = vector.broadcast %427 : vector<16x1xf32> to vector<16x16xf32>
    %429 = arith.subf %425, %428 : vector<16x16xf32>
    %430 = math.exp %429 : vector<16x16xf32>
    %cst_141 = arith.constant dense<0.000000e+00> : vector<16xf32>
    %431 = vector.multi_reduction <add>, %430, %cst_141 [1] : vector<16x16xf32> to vector<16xf32>
    %432 = vector.shape_cast %431 : vector<16xf32> to vector<16x1xf32>
    %433 = tpu.reciprocal %432 {approx = true} : vector<16x1xf32> -> vector<16x1xf32>
    %434 = vector.broadcast %433 : vector<16x1xf32> to vector<16x16xf32>
    %435 = arith.mulf %430, %434 : vector<16x16xf32>
    %cst_142 = arith.constant dense<0.000000e+00> : vector<16x16xf32>
    %436 = tpu.matmul %435, %411, %cst_142 {dimension_numbers = #tpu.dot_dimension_numbers<[1], [0], [0], [1], [0, 0, 1, 1], [], []>} : vector<16x16xf32>, vector<16x16xf32>, vector<16x16xf32> -> vector<16x16xf32>
    %437 = arith.addf %416, %436 : vector<16x16xf32>
    %cst_143 = arith.constant 1.000000e+00 : f32
    %438 = vector.broadcast %cst_143 : f32 to vector<16x16xf32>
    %439 = arith.mulf %437, %438 : vector<16x16xf32>
    %440 = vector.extract_strided_slice %86 {offsets = [4, 0], sizes = [1, 16], strides = [1, 1]} : vector<9x16xf32> to vector<1x16xf32>
    %441 = vector.broadcast %440 : vector<1x16xf32> to vector<16x16xf32>
    %442 = arith.addf %439, %441 : vector<16x16xf32>
    %cst_144 = arith.constant 0.000000e+00 : f32
    %443 = vector.broadcast %cst_144 : f32 to vector<16x16xf32>
    %444 = arith.maximumf %442, %443 : vector<16x16xf32>
    %445 = arith.negf %410 : vector<16x16xf32>
    %446 = math.exp %445 : vector<16x16xf32>
    %cst_145 = arith.constant 1.000000e+00 : f32
    %447 = vector.broadcast %cst_145 : f32 to vector<16x16xf32>
    %448 = arith.addf %447, %446 : vector<16x16xf32>
    %449 = arith.divf %447, %448 : vector<16x16xf32>
    %450 = arith.mulf %444, %449 : vector<16x16xf32>
    %cst_146 = arith.constant 1.000000e+00 : f32
    %451 = vector.broadcast %cst_146 : f32 to vector<16x16xf32>
    %452 = arith.subf %451, %449 : vector<16x16xf32>
    %453 = arith.mulf %401, %452 : vector<16x16xf32>
    %454 = arith.addf %450, %453 : vector<16x16xf32>
    %c32_147 = arith.constant 32 : index
    %c0_148 = arith.constant 0 : index
    %455 = vector.load %arg0[%c32_147, %c0_148] : memref<80x128xf32, #tpu.memory_space<vmem>>, vector<16x16xf32>
    %c64_149 = arith.constant 64 : index
    %c0_150 = arith.constant 0 : index
    %456 = vector.load %arg0[%c64_149, %c0_150] : memref<80x128xf32, #tpu.memory_space<vmem>>, vector<16x16xf32>
    %c288 = arith.constant 288 : index
    %c0_151 = arith.constant 0 : index
    %457 = vector.load %arg3[%c288, %c0_151] : memref<304x128xf32, #tpu.memory_space<vmem>>, vector<9x16xf32>
    %c0_152 = arith.constant 0 : index
    %c0_153 = arith.constant 0 : index
    %458 = vector.load %arg3[%c0_152, %c0_153] : memref<304x128xf32, #tpu.memory_space<vmem>>, vector<12x80xf32>
    %cst_154 = arith.constant dense<0.000000e+00> : vector<16x80xf32>
    %459 = tpu.matmul %83, %458, %cst_154 {dimension_numbers = #tpu.dot_dimension_numbers<[1], [0], [0], [1], [0, 0, 1, 1], [], []>} : vector<16x12xf32>, vector<12x80xf32>, vector<16x80xf32> -> vector<16x80xf32>
    %460 = vector.extract_strided_slice %459 {offsets = [0, 48], sizes = [16, 16], strides = [1, 1]} : vector<16x80xf32> to vector<16x16xf32>
    %461 = vector.extract_strided_slice %457 {offsets = [0, 0], sizes = [1, 16], strides = [1, 1]} : vector<9x16xf32> to vector<1x16xf32>
    %462 = vector.broadcast %461 : vector<1x16xf32> to vector<16x16xf32>
    %463 = arith.addf %460, %462 : vector<16x16xf32>
    %464 = vector.extract_strided_slice %459 {offsets = [0, 64], sizes = [16, 16], strides = [1, 1]} : vector<16x80xf32> to vector<16x16xf32>
    %cst_155 = arith.constant dense<0.000000e+00> : vector<16x16xf32>
    %465 = tpu.matmul %456, %464, %cst_155 {dimension_numbers = #tpu.dot_dimension_numbers<[1], [0], [0], [1], [0, 0, 1, 1], [], []>} : vector<16x16xf32>, vector<16x16xf32>, vector<16x16xf32> -> vector<16x16xf32>
    %466 = vector.extract_strided_slice %457 {offsets = [5, 0], sizes = [1, 16], strides = [1, 1]} : vector<9x16xf32> to vector<1x16xf32>
    %467 = vector.broadcast %466 : vector<1x16xf32> to vector<16x16xf32>
    %468 = arith.addf %465, %467 : vector<16x16xf32>
    %469 = vector.extract_strided_slice %459 {offsets = [0, 0], sizes = [16, 48], strides = [1, 1]} : vector<16x80xf32> to vector<16x48xf32>
    %c64_156 = arith.constant 64 : index
    %c0_157 = arith.constant 0 : index
    %470 = vector.load %arg3[%c64_156, %c0_157] : memref<304x128xf32, #tpu.memory_space<vmem>>, vector<48x3xf32>
    %cst_158 = arith.constant dense<0.000000e+00> : vector<16x3xf32>
    %471 = tpu.matmul %469, %470, %cst_158 {dimension_numbers = #tpu.dot_dimension_numbers<[1], [0], [0], [1], [0, 0, 1, 1], [], []>} : vector<16x48xf32>, vector<48x3xf32>, vector<16x3xf32> -> vector<16x3xf32>
    %c112_159 = arith.constant 112 : index
    %c0_160 = arith.constant 0 : index
    %472 = vector.load %arg3[%c112_159, %c0_160] : memref<304x128xf32, #tpu.memory_space<vmem>>, vector<3x48xf32>
    %cst_161 = arith.constant dense<0.000000e+00> : vector<3x16xf32>
    %473 = tpu.matmul %472, %469, %cst_161 {dimension_numbers = #tpu.dot_dimension_numbers<[1], [1], [0], [0], [0, 0, 1, 0], [], []>} : vector<3x48xf32>, vector<16x48xf32>, vector<3x16xf32> -> vector<3x16xf32>
    %cst_162 = arith.constant 0.000000e+00 : f32
    %474 = vector.broadcast %cst_162 : f32 to vector<16x16xf32>
    %475 = vector.extract_strided_slice %471 {offsets = [0, 0], sizes = [16, 1], strides = [1, 1]} : vector<16x3xf32> to vector<16x1xf32>
    %476 = vector.extract_strided_slice %473 {offsets = [0, 0], sizes = [1, 16], strides = [1, 1]} : vector<3x16xf32> to vector<1x16xf32>
    %477 = vector.broadcast %475 : vector<16x1xf32> to vector<16x16xf32>
    %478 = vector.broadcast %476 : vector<1x16xf32> to vector<16x16xf32>
    %479 = arith.addf %477, %478 : vector<16x16xf32>
    %cst_163 = arith.constant 0.000000e+00 : f32
    %480 = vector.broadcast %cst_163 : f32 to vector<16x16xf32>
    %481 = arith.cmpf oge, %479, %480 : vector<16x16xf32>
    %cst_164 = arith.constant 2.000000e-01 : f32
    %482 = vector.broadcast %cst_164 : f32 to vector<16x16xf32>
    %483 = arith.mulf %482, %479 : vector<16x16xf32>
    %484 = arith.select %481, %479, %483 : vector<16x16xi1>, vector<16x16xf32>
    %485 = arith.addf %484, %455 : vector<16x16xf32>
    %cst_165 = arith.constant dense<0xFF800000> : vector<16xf32>
    %486 = vector.multi_reduction <maximumf>, %485, %cst_165 [1] : vector<16x16xf32> to vector<16xf32>
    %487 = vector.shape_cast %486 : vector<16xf32> to vector<16x1xf32>
    %488 = vector.broadcast %487 : vector<16x1xf32> to vector<16x16xf32>
    %489 = arith.subf %485, %488 : vector<16x16xf32>
    %490 = math.exp %489 : vector<16x16xf32>
    %cst_166 = arith.constant dense<0.000000e+00> : vector<16xf32>
    %491 = vector.multi_reduction <add>, %490, %cst_166 [1] : vector<16x16xf32> to vector<16xf32>
    %492 = vector.shape_cast %491 : vector<16xf32> to vector<16x1xf32>
    %493 = tpu.reciprocal %492 {approx = true} : vector<16x1xf32> -> vector<16x1xf32>
    %494 = vector.broadcast %493 : vector<16x1xf32> to vector<16x16xf32>
    %495 = arith.mulf %490, %494 : vector<16x16xf32>
    %496 = vector.extract_strided_slice %469 {offsets = [0, 0], sizes = [16, 16], strides = [1, 1]} : vector<16x48xf32> to vector<16x16xf32>
    %cst_167 = arith.constant dense<0.000000e+00> : vector<16x16xf32>
    %497 = tpu.matmul %495, %496, %cst_167 {dimension_numbers = #tpu.dot_dimension_numbers<[1], [0], [0], [1], [0, 0, 1, 1], [], []>} : vector<16x16xf32>, vector<16x16xf32>, vector<16x16xf32> -> vector<16x16xf32>
    %498 = arith.addf %474, %497 : vector<16x16xf32>
    %499 = vector.extract_strided_slice %471 {offsets = [0, 1], sizes = [16, 1], strides = [1, 1]} : vector<16x3xf32> to vector<16x1xf32>
    %500 = vector.extract_strided_slice %473 {offsets = [1, 0], sizes = [1, 16], strides = [1, 1]} : vector<3x16xf32> to vector<1x16xf32>
    %501 = vector.broadcast %499 : vector<16x1xf32> to vector<16x16xf32>
    %502 = vector.broadcast %500 : vector<1x16xf32> to vector<16x16xf32>
    %503 = arith.addf %501, %502 : vector<16x16xf32>
    %cst_168 = arith.constant 0.000000e+00 : f32
    %504 = vector.broadcast %cst_168 : f32 to vector<16x16xf32>
    %505 = arith.cmpf oge, %503, %504 : vector<16x16xf32>
    %cst_169 = arith.constant 2.000000e-01 : f32
    %506 = vector.broadcast %cst_169 : f32 to vector<16x16xf32>
    %507 = arith.mulf %506, %503 : vector<16x16xf32>
    %508 = arith.select %505, %503, %507 : vector<16x16xi1>, vector<16x16xf32>
    %509 = arith.addf %508, %455 : vector<16x16xf32>
    %cst_170 = arith.constant dense<0xFF800000> : vector<16xf32>
    %510 = vector.multi_reduction <maximumf>, %509, %cst_170 [1] : vector<16x16xf32> to vector<16xf32>
    %511 = vector.shape_cast %510 : vector<16xf32> to vector<16x1xf32>
    %512 = vector.broadcast %511 : vector<16x1xf32> to vector<16x16xf32>
    %513 = arith.subf %509, %512 : vector<16x16xf32>
    %514 = math.exp %513 : vector<16x16xf32>
    %cst_171 = arith.constant dense<0.000000e+00> : vector<16xf32>
    %515 = vector.multi_reduction <add>, %514, %cst_171 [1] : vector<16x16xf32> to vector<16xf32>
    %516 = vector.shape_cast %515 : vector<16xf32> to vector<16x1xf32>
    %517 = tpu.reciprocal %516 {approx = true} : vector<16x1xf32> -> vector<16x1xf32>
    %518 = vector.broadcast %517 : vector<16x1xf32> to vector<16x16xf32>
    %519 = arith.mulf %514, %518 : vector<16x16xf32>
    %520 = vector.extract_strided_slice %469 {offsets = [0, 16], sizes = [16, 16], strides = [1, 1]} : vector<16x48xf32> to vector<16x16xf32>
    %cst_172 = arith.constant dense<0.000000e+00> : vector<16x16xf32>
    %521 = tpu.matmul %519, %520, %cst_172 {dimension_numbers = #tpu.dot_dimension_numbers<[1], [0], [0], [1], [0, 0, 1, 1], [], []>} : vector<16x16xf32>, vector<16x16xf32>, vector<16x16xf32> -> vector<16x16xf32>
    %522 = arith.addf %498, %521 : vector<16x16xf32>
    %523 = vector.extract_strided_slice %471 {offsets = [0, 2], sizes = [16, 1], strides = [1, 1]} : vector<16x3xf32> to vector<16x1xf32>
    %524 = vector.extract_strided_slice %473 {offsets = [2, 0], sizes = [1, 16], strides = [1, 1]} : vector<3x16xf32> to vector<1x16xf32>
    %525 = vector.broadcast %523 : vector<16x1xf32> to vector<16x16xf32>
    %526 = vector.broadcast %524 : vector<1x16xf32> to vector<16x16xf32>
    %527 = arith.addf %525, %526 : vector<16x16xf32>
    %cst_173 = arith.constant 0.000000e+00 : f32
    %528 = vector.broadcast %cst_173 : f32 to vector<16x16xf32>
    %529 = arith.cmpf oge, %527, %528 : vector<16x16xf32>
    %cst_174 = arith.constant 2.000000e-01 : f32
    %530 = vector.broadcast %cst_174 : f32 to vector<16x16xf32>
    %531 = arith.mulf %530, %527 : vector<16x16xf32>
    %532 = arith.select %529, %527, %531 : vector<16x16xi1>, vector<16x16xf32>
    %533 = arith.addf %532, %455 : vector<16x16xf32>
    %cst_175 = arith.constant dense<0xFF800000> : vector<16xf32>
    %534 = vector.multi_reduction <maximumf>, %533, %cst_175 [1] : vector<16x16xf32> to vector<16xf32>
    %535 = vector.shape_cast %534 : vector<16xf32> to vector<16x1xf32>
    %536 = vector.broadcast %535 : vector<16x1xf32> to vector<16x16xf32>
    %537 = arith.subf %533, %536 : vector<16x16xf32>
    %538 = math.exp %537 : vector<16x16xf32>
    %cst_176 = arith.constant dense<0.000000e+00> : vector<16xf32>
    %539 = vector.multi_reduction <add>, %538, %cst_176 [1] : vector<16x16xf32> to vector<16xf32>
    %540 = vector.shape_cast %539 : vector<16xf32> to vector<16x1xf32>
    %541 = tpu.reciprocal %540 {approx = true} : vector<16x1xf32> -> vector<16x1xf32>
    %542 = vector.broadcast %541 : vector<16x1xf32> to vector<16x16xf32>
    %543 = arith.mulf %538, %542 : vector<16x16xf32>
    %544 = vector.extract_strided_slice %469 {offsets = [0, 32], sizes = [16, 16], strides = [1, 1]} : vector<16x48xf32> to vector<16x16xf32>
    %cst_177 = arith.constant dense<0.000000e+00> : vector<16x16xf32>
    %545 = tpu.matmul %543, %544, %cst_177 {dimension_numbers = #tpu.dot_dimension_numbers<[1], [0], [0], [1], [0, 0, 1, 1], [], []>} : vector<16x16xf32>, vector<16x16xf32>, vector<16x16xf32> -> vector<16x16xf32>
    %546 = arith.addf %522, %545 : vector<16x16xf32>
    %cst_178 = arith.constant 0.333333343 : f32
    %547 = vector.broadcast %cst_178 : f32 to vector<16x16xf32>
    %548 = arith.mulf %546, %547 : vector<16x16xf32>
    %549 = vector.extract_strided_slice %457 {offsets = [1, 0], sizes = [1, 16], strides = [1, 1]} : vector<9x16xf32> to vector<1x16xf32>
    %550 = vector.broadcast %549 : vector<1x16xf32> to vector<16x16xf32>
    %551 = arith.addf %548, %550 : vector<16x16xf32>
    %552 = math.tanh %551 : vector<16x16xf32>
    %553 = arith.negf %468 : vector<16x16xf32>
    %554 = math.exp %553 : vector<16x16xf32>
    %cst_179 = arith.constant 1.000000e+00 : f32
    %555 = vector.broadcast %cst_179 : f32 to vector<16x16xf32>
    %556 = arith.addf %555, %554 : vector<16x16xf32>
    %557 = arith.divf %555, %556 : vector<16x16xf32>
    %558 = arith.mulf %552, %557 : vector<16x16xf32>
    %cst_180 = arith.constant 1.000000e+00 : f32
    %559 = vector.broadcast %cst_180 : f32 to vector<16x16xf32>
    %560 = arith.subf %559, %557 : vector<16x16xf32>
    %561 = arith.mulf %463, %560 : vector<16x16xf32>
    %562 = arith.addf %558, %561 : vector<16x16xf32>
    %563 = math.tanh %562 : vector<16x16xf32>
    %c16_181 = arith.constant 16 : index
    %c0_182 = arith.constant 0 : index
    %564 = vector.load %arg3[%c16_181, %c0_182] : memref<304x128xf32, #tpu.memory_space<vmem>>, vector<16x64xf32>
    %cst_183 = arith.constant dense<0.000000e+00> : vector<16x64xf32>
    %565 = tpu.matmul %563, %564, %cst_183 {dimension_numbers = #tpu.dot_dimension_numbers<[1], [0], [0], [1], [0, 0, 1, 1], [], []>} : vector<16x16xf32>, vector<16x64xf32>, vector<16x64xf32> -> vector<16x64xf32>
    %566 = vector.extract_strided_slice %565 {offsets = [0, 48], sizes = [16, 16], strides = [1, 1]} : vector<16x64xf32> to vector<16x16xf32>
    %cst_184 = arith.constant dense<0.000000e+00> : vector<16x16xf32>
    %567 = tpu.matmul %456, %566, %cst_184 {dimension_numbers = #tpu.dot_dimension_numbers<[1], [0], [0], [1], [0, 0, 1, 1], [], []>} : vector<16x16xf32>, vector<16x16xf32>, vector<16x16xf32> -> vector<16x16xf32>
    %568 = vector.extract_strided_slice %457 {offsets = [6, 0], sizes = [1, 16], strides = [1, 1]} : vector<9x16xf32> to vector<1x16xf32>
    %569 = vector.broadcast %568 : vector<1x16xf32> to vector<16x16xf32>
    %570 = arith.addf %567, %569 : vector<16x16xf32>
    %571 = vector.extract_strided_slice %565 {offsets = [0, 0], sizes = [16, 48], strides = [1, 1]} : vector<16x64xf32> to vector<16x48xf32>
    %c120_185 = arith.constant 120 : index
    %c0_186 = arith.constant 0 : index
    %572 = vector.load %arg3[%c120_185, %c0_186] : memref<304x128xf32, #tpu.memory_space<vmem>>, vector<48x3xf32>
    %cst_187 = arith.constant dense<0.000000e+00> : vector<16x3xf32>
    %573 = tpu.matmul %571, %572, %cst_187 {dimension_numbers = #tpu.dot_dimension_numbers<[1], [0], [0], [1], [0, 0, 1, 1], [], []>} : vector<16x48xf32>, vector<48x3xf32>, vector<16x3xf32> -> vector<16x3xf32>
    %c168_188 = arith.constant 168 : index
    %c0_189 = arith.constant 0 : index
    %574 = vector.load %arg3[%c168_188, %c0_189] : memref<304x128xf32, #tpu.memory_space<vmem>>, vector<3x48xf32>
    %cst_190 = arith.constant dense<0.000000e+00> : vector<3x16xf32>
    %575 = tpu.matmul %574, %571, %cst_190 {dimension_numbers = #tpu.dot_dimension_numbers<[1], [1], [0], [0], [0, 0, 1, 0], [], []>} : vector<3x48xf32>, vector<16x48xf32>, vector<3x16xf32> -> vector<3x16xf32>
    %cst_191 = arith.constant 0.000000e+00 : f32
    %576 = vector.broadcast %cst_191 : f32 to vector<16x16xf32>
    %577 = vector.extract_strided_slice %573 {offsets = [0, 0], sizes = [16, 1], strides = [1, 1]} : vector<16x3xf32> to vector<16x1xf32>
    %578 = vector.extract_strided_slice %575 {offsets = [0, 0], sizes = [1, 16], strides = [1, 1]} : vector<3x16xf32> to vector<1x16xf32>
    %579 = vector.broadcast %577 : vector<16x1xf32> to vector<16x16xf32>
    %580 = vector.broadcast %578 : vector<1x16xf32> to vector<16x16xf32>
    %581 = arith.addf %579, %580 : vector<16x16xf32>
    %cst_192 = arith.constant 0.000000e+00 : f32
    %582 = vector.broadcast %cst_192 : f32 to vector<16x16xf32>
    %583 = arith.cmpf oge, %581, %582 : vector<16x16xf32>
    %cst_193 = arith.constant 2.000000e-01 : f32
    %584 = vector.broadcast %cst_193 : f32 to vector<16x16xf32>
    %585 = arith.mulf %584, %581 : vector<16x16xf32>
    %586 = arith.select %583, %581, %585 : vector<16x16xi1>, vector<16x16xf32>
    %587 = arith.addf %586, %455 : vector<16x16xf32>
    %cst_194 = arith.constant dense<0xFF800000> : vector<16xf32>
    %588 = vector.multi_reduction <maximumf>, %587, %cst_194 [1] : vector<16x16xf32> to vector<16xf32>
    %589 = vector.shape_cast %588 : vector<16xf32> to vector<16x1xf32>
    %590 = vector.broadcast %589 : vector<16x1xf32> to vector<16x16xf32>
    %591 = arith.subf %587, %590 : vector<16x16xf32>
    %592 = math.exp %591 : vector<16x16xf32>
    %cst_195 = arith.constant dense<0.000000e+00> : vector<16xf32>
    %593 = vector.multi_reduction <add>, %592, %cst_195 [1] : vector<16x16xf32> to vector<16xf32>
    %594 = vector.shape_cast %593 : vector<16xf32> to vector<16x1xf32>
    %595 = tpu.reciprocal %594 {approx = true} : vector<16x1xf32> -> vector<16x1xf32>
    %596 = vector.broadcast %595 : vector<16x1xf32> to vector<16x16xf32>
    %597 = arith.mulf %592, %596 : vector<16x16xf32>
    %598 = vector.extract_strided_slice %571 {offsets = [0, 0], sizes = [16, 16], strides = [1, 1]} : vector<16x48xf32> to vector<16x16xf32>
    %cst_196 = arith.constant dense<0.000000e+00> : vector<16x16xf32>
    %599 = tpu.matmul %597, %598, %cst_196 {dimension_numbers = #tpu.dot_dimension_numbers<[1], [0], [0], [1], [0, 0, 1, 1], [], []>} : vector<16x16xf32>, vector<16x16xf32>, vector<16x16xf32> -> vector<16x16xf32>
    %600 = arith.addf %576, %599 : vector<16x16xf32>
    %601 = vector.extract_strided_slice %573 {offsets = [0, 1], sizes = [16, 1], strides = [1, 1]} : vector<16x3xf32> to vector<16x1xf32>
    %602 = vector.extract_strided_slice %575 {offsets = [1, 0], sizes = [1, 16], strides = [1, 1]} : vector<3x16xf32> to vector<1x16xf32>
    %603 = vector.broadcast %601 : vector<16x1xf32> to vector<16x16xf32>
    %604 = vector.broadcast %602 : vector<1x16xf32> to vector<16x16xf32>
    %605 = arith.addf %603, %604 : vector<16x16xf32>
    %cst_197 = arith.constant 0.000000e+00 : f32
    %606 = vector.broadcast %cst_197 : f32 to vector<16x16xf32>
    %607 = arith.cmpf oge, %605, %606 : vector<16x16xf32>
    %cst_198 = arith.constant 2.000000e-01 : f32
    %608 = vector.broadcast %cst_198 : f32 to vector<16x16xf32>
    %609 = arith.mulf %608, %605 : vector<16x16xf32>
    %610 = arith.select %607, %605, %609 : vector<16x16xi1>, vector<16x16xf32>
    %611 = arith.addf %610, %455 : vector<16x16xf32>
    %cst_199 = arith.constant dense<0xFF800000> : vector<16xf32>
    %612 = vector.multi_reduction <maximumf>, %611, %cst_199 [1] : vector<16x16xf32> to vector<16xf32>
    %613 = vector.shape_cast %612 : vector<16xf32> to vector<16x1xf32>
    %614 = vector.broadcast %613 : vector<16x1xf32> to vector<16x16xf32>
    %615 = arith.subf %611, %614 : vector<16x16xf32>
    %616 = math.exp %615 : vector<16x16xf32>
    %cst_200 = arith.constant dense<0.000000e+00> : vector<16xf32>
    %617 = vector.multi_reduction <add>, %616, %cst_200 [1] : vector<16x16xf32> to vector<16xf32>
    %618 = vector.shape_cast %617 : vector<16xf32> to vector<16x1xf32>
    %619 = tpu.reciprocal %618 {approx = true} : vector<16x1xf32> -> vector<16x1xf32>
    %620 = vector.broadcast %619 : vector<16x1xf32> to vector<16x16xf32>
    %621 = arith.mulf %616, %620 : vector<16x16xf32>
    %622 = vector.extract_strided_slice %571 {offsets = [0, 16], sizes = [16, 16], strides = [1, 1]} : vector<16x48xf32> to vector<16x16xf32>
    %cst_201 = arith.constant dense<0.000000e+00> : vector<16x16xf32>
    %623 = tpu.matmul %621, %622, %cst_201 {dimension_numbers = #tpu.dot_dimension_numbers<[1], [0], [0], [1], [0, 0, 1, 1], [], []>} : vector<16x16xf32>, vector<16x16xf32>, vector<16x16xf32> -> vector<16x16xf32>
    %624 = arith.addf %600, %623 : vector<16x16xf32>
    %625 = vector.extract_strided_slice %573 {offsets = [0, 2], sizes = [16, 1], strides = [1, 1]} : vector<16x3xf32> to vector<16x1xf32>
    %626 = vector.extract_strided_slice %575 {offsets = [2, 0], sizes = [1, 16], strides = [1, 1]} : vector<3x16xf32> to vector<1x16xf32>
    %627 = vector.broadcast %625 : vector<16x1xf32> to vector<16x16xf32>
    %628 = vector.broadcast %626 : vector<1x16xf32> to vector<16x16xf32>
    %629 = arith.addf %627, %628 : vector<16x16xf32>
    %cst_202 = arith.constant 0.000000e+00 : f32
    %630 = vector.broadcast %cst_202 : f32 to vector<16x16xf32>
    %631 = arith.cmpf oge, %629, %630 : vector<16x16xf32>
    %cst_203 = arith.constant 2.000000e-01 : f32
    %632 = vector.broadcast %cst_203 : f32 to vector<16x16xf32>
    %633 = arith.mulf %632, %629 : vector<16x16xf32>
    %634 = arith.select %631, %629, %633 : vector<16x16xi1>, vector<16x16xf32>
    %635 = arith.addf %634, %455 : vector<16x16xf32>
    %cst_204 = arith.constant dense<0xFF800000> : vector<16xf32>
    %636 = vector.multi_reduction <maximumf>, %635, %cst_204 [1] : vector<16x16xf32> to vector<16xf32>
    %637 = vector.shape_cast %636 : vector<16xf32> to vector<16x1xf32>
    %638 = vector.broadcast %637 : vector<16x1xf32> to vector<16x16xf32>
    %639 = arith.subf %635, %638 : vector<16x16xf32>
    %640 = math.exp %639 : vector<16x16xf32>
    %cst_205 = arith.constant dense<0.000000e+00> : vector<16xf32>
    %641 = vector.multi_reduction <add>, %640, %cst_205 [1] : vector<16x16xf32> to vector<16xf32>
    %642 = vector.shape_cast %641 : vector<16xf32> to vector<16x1xf32>
    %643 = tpu.reciprocal %642 {approx = true} : vector<16x1xf32> -> vector<16x1xf32>
    %644 = vector.broadcast %643 : vector<16x1xf32> to vector<16x16xf32>
    %645 = arith.mulf %640, %644 : vector<16x16xf32>
    %646 = vector.extract_strided_slice %571 {offsets = [0, 32], sizes = [16, 16], strides = [1, 1]} : vector<16x48xf32> to vector<16x16xf32>
    %cst_206 = arith.constant dense<0.000000e+00> : vector<16x16xf32>
    %647 = tpu.matmul %645, %646, %cst_206 {dimension_numbers = #tpu.dot_dimension_numbers<[1], [0], [0], [1], [0, 0, 1, 1], [], []>} : vector<16x16xf32>, vector<16x16xf32>, vector<16x16xf32> -> vector<16x16xf32>
    %648 = arith.addf %624, %647 : vector<16x16xf32>
    %cst_207 = arith.constant 0.333333343 : f32
    %649 = vector.broadcast %cst_207 : f32 to vector<16x16xf32>
    %650 = arith.mulf %648, %649 : vector<16x16xf32>
    %651 = vector.extract_strided_slice %457 {offsets = [2, 0], sizes = [1, 16], strides = [1, 1]} : vector<9x16xf32> to vector<1x16xf32>
    %652 = vector.broadcast %651 : vector<1x16xf32> to vector<16x16xf32>
    %653 = arith.addf %650, %652 : vector<16x16xf32>
    %cst_208 = arith.constant 0.000000e+00 : f32
    %654 = vector.broadcast %cst_208 : f32 to vector<16x16xf32>
    %655 = arith.cmpf oge, %653, %654 : vector<16x16xf32>
    %cst_209 = arith.constant 0.00999999977 : f32
    %656 = vector.broadcast %cst_209 : f32 to vector<16x16xf32>
    %657 = arith.mulf %656, %653 : vector<16x16xf32>
    %658 = arith.select %655, %653, %657 : vector<16x16xi1>, vector<16x16xf32>
    %659 = arith.negf %570 : vector<16x16xf32>
    %660 = math.exp %659 : vector<16x16xf32>
    %cst_210 = arith.constant 1.000000e+00 : f32
    %661 = vector.broadcast %cst_210 : f32 to vector<16x16xf32>
    %662 = arith.addf %661, %660 : vector<16x16xf32>
    %663 = arith.divf %661, %662 : vector<16x16xf32>
    %664 = arith.mulf %658, %663 : vector<16x16xf32>
    %cst_211 = arith.constant 1.000000e+00 : f32
    %665 = vector.broadcast %cst_211 : f32 to vector<16x16xf32>
    %666 = arith.subf %665, %663 : vector<16x16xf32>
    %667 = arith.mulf %562, %666 : vector<16x16xf32>
    %668 = arith.addf %664, %667 : vector<16x16xf32>
    %cst_212 = arith.constant 0.000000e+00 : f32
    %669 = vector.broadcast %cst_212 : f32 to vector<16x16xf32>
    %670 = arith.maximumf %668, %669 : vector<16x16xf32>
    %c32_213 = arith.constant 32 : index
    %c0_214 = arith.constant 0 : index
    %671 = vector.load %arg3[%c32_213, %c0_214] : memref<304x128xf32, #tpu.memory_space<vmem>>, vector<16x64xf32>
    %cst_215 = arith.constant dense<0.000000e+00> : vector<16x64xf32>
    %672 = tpu.matmul %670, %671, %cst_215 {dimension_numbers = #tpu.dot_dimension_numbers<[1], [0], [0], [1], [0, 0, 1, 1], [], []>} : vector<16x16xf32>, vector<16x64xf32>, vector<16x64xf32> -> vector<16x64xf32>
    %673 = vector.extract_strided_slice %672 {offsets = [0, 48], sizes = [16, 16], strides = [1, 1]} : vector<16x64xf32> to vector<16x16xf32>
    %cst_216 = arith.constant dense<0.000000e+00> : vector<16x16xf32>
    %674 = tpu.matmul %456, %673, %cst_216 {dimension_numbers = #tpu.dot_dimension_numbers<[1], [0], [0], [1], [0, 0, 1, 1], [], []>} : vector<16x16xf32>, vector<16x16xf32>, vector<16x16xf32> -> vector<16x16xf32>
    %675 = vector.extract_strided_slice %457 {offsets = [7, 0], sizes = [1, 16], strides = [1, 1]} : vector<9x16xf32> to vector<1x16xf32>
    %676 = vector.broadcast %675 : vector<1x16xf32> to vector<16x16xf32>
    %677 = arith.addf %674, %676 : vector<16x16xf32>
    %678 = vector.extract_strided_slice %672 {offsets = [0, 0], sizes = [16, 48], strides = [1, 1]} : vector<16x64xf32> to vector<16x48xf32>
    %c176_217 = arith.constant 176 : index
    %c0_218 = arith.constant 0 : index
    %679 = vector.load %arg3[%c176_217, %c0_218] : memref<304x128xf32, #tpu.memory_space<vmem>>, vector<48x3xf32>
    %cst_219 = arith.constant dense<0.000000e+00> : vector<16x3xf32>
    %680 = tpu.matmul %678, %679, %cst_219 {dimension_numbers = #tpu.dot_dimension_numbers<[1], [0], [0], [1], [0, 0, 1, 1], [], []>} : vector<16x48xf32>, vector<48x3xf32>, vector<16x3xf32> -> vector<16x3xf32>
    %c224_220 = arith.constant 224 : index
    %c0_221 = arith.constant 0 : index
    %681 = vector.load %arg3[%c224_220, %c0_221] : memref<304x128xf32, #tpu.memory_space<vmem>>, vector<3x48xf32>
    %cst_222 = arith.constant dense<0.000000e+00> : vector<3x16xf32>
    %682 = tpu.matmul %681, %678, %cst_222 {dimension_numbers = #tpu.dot_dimension_numbers<[1], [1], [0], [0], [0, 0, 1, 0], [], []>} : vector<3x48xf32>, vector<16x48xf32>, vector<3x16xf32> -> vector<3x16xf32>
    %cst_223 = arith.constant 0.000000e+00 : f32
    %683 = vector.broadcast %cst_223 : f32 to vector<16x16xf32>
    %684 = vector.extract_strided_slice %680 {offsets = [0, 0], sizes = [16, 1], strides = [1, 1]} : vector<16x3xf32> to vector<16x1xf32>
    %685 = vector.extract_strided_slice %682 {offsets = [0, 0], sizes = [1, 16], strides = [1, 1]} : vector<3x16xf32> to vector<1x16xf32>
    %686 = vector.broadcast %684 : vector<16x1xf32> to vector<16x16xf32>
    %687 = vector.broadcast %685 : vector<1x16xf32> to vector<16x16xf32>
    %688 = arith.addf %686, %687 : vector<16x16xf32>
    %cst_224 = arith.constant 0.000000e+00 : f32
    %689 = vector.broadcast %cst_224 : f32 to vector<16x16xf32>
    %690 = arith.cmpf oge, %688, %689 : vector<16x16xf32>
    %cst_225 = arith.constant 2.000000e-01 : f32
    %691 = vector.broadcast %cst_225 : f32 to vector<16x16xf32>
    %692 = arith.mulf %691, %688 : vector<16x16xf32>
    %693 = arith.select %690, %688, %692 : vector<16x16xi1>, vector<16x16xf32>
    %694 = arith.addf %693, %455 : vector<16x16xf32>
    %cst_226 = arith.constant dense<0xFF800000> : vector<16xf32>
    %695 = vector.multi_reduction <maximumf>, %694, %cst_226 [1] : vector<16x16xf32> to vector<16xf32>
    %696 = vector.shape_cast %695 : vector<16xf32> to vector<16x1xf32>
    %697 = vector.broadcast %696 : vector<16x1xf32> to vector<16x16xf32>
    %698 = arith.subf %694, %697 : vector<16x16xf32>
    %699 = math.exp %698 : vector<16x16xf32>
    %cst_227 = arith.constant dense<0.000000e+00> : vector<16xf32>
    %700 = vector.multi_reduction <add>, %699, %cst_227 [1] : vector<16x16xf32> to vector<16xf32>
    %701 = vector.shape_cast %700 : vector<16xf32> to vector<16x1xf32>
    %702 = tpu.reciprocal %701 {approx = true} : vector<16x1xf32> -> vector<16x1xf32>
    %703 = vector.broadcast %702 : vector<16x1xf32> to vector<16x16xf32>
    %704 = arith.mulf %699, %703 : vector<16x16xf32>
    %705 = vector.extract_strided_slice %678 {offsets = [0, 0], sizes = [16, 16], strides = [1, 1]} : vector<16x48xf32> to vector<16x16xf32>
    %cst_228 = arith.constant dense<0.000000e+00> : vector<16x16xf32>
    %706 = tpu.matmul %704, %705, %cst_228 {dimension_numbers = #tpu.dot_dimension_numbers<[1], [0], [0], [1], [0, 0, 1, 1], [], []>} : vector<16x16xf32>, vector<16x16xf32>, vector<16x16xf32> -> vector<16x16xf32>
    %707 = arith.addf %683, %706 : vector<16x16xf32>
    %708 = vector.extract_strided_slice %680 {offsets = [0, 1], sizes = [16, 1], strides = [1, 1]} : vector<16x3xf32> to vector<16x1xf32>
    %709 = vector.extract_strided_slice %682 {offsets = [1, 0], sizes = [1, 16], strides = [1, 1]} : vector<3x16xf32> to vector<1x16xf32>
    %710 = vector.broadcast %708 : vector<16x1xf32> to vector<16x16xf32>
    %711 = vector.broadcast %709 : vector<1x16xf32> to vector<16x16xf32>
    %712 = arith.addf %710, %711 : vector<16x16xf32>
    %cst_229 = arith.constant 0.000000e+00 : f32
    %713 = vector.broadcast %cst_229 : f32 to vector<16x16xf32>
    %714 = arith.cmpf oge, %712, %713 : vector<16x16xf32>
    %cst_230 = arith.constant 2.000000e-01 : f32
    %715 = vector.broadcast %cst_230 : f32 to vector<16x16xf32>
    %716 = arith.mulf %715, %712 : vector<16x16xf32>
    %717 = arith.select %714, %712, %716 : vector<16x16xi1>, vector<16x16xf32>
    %718 = arith.addf %717, %455 : vector<16x16xf32>
    %cst_231 = arith.constant dense<0xFF800000> : vector<16xf32>
    %719 = vector.multi_reduction <maximumf>, %718, %cst_231 [1] : vector<16x16xf32> to vector<16xf32>
    %720 = vector.shape_cast %719 : vector<16xf32> to vector<16x1xf32>
    %721 = vector.broadcast %720 : vector<16x1xf32> to vector<16x16xf32>
    %722 = arith.subf %718, %721 : vector<16x16xf32>
    %723 = math.exp %722 : vector<16x16xf32>
    %cst_232 = arith.constant dense<0.000000e+00> : vector<16xf32>
    %724 = vector.multi_reduction <add>, %723, %cst_232 [1] : vector<16x16xf32> to vector<16xf32>
    %725 = vector.shape_cast %724 : vector<16xf32> to vector<16x1xf32>
    %726 = tpu.reciprocal %725 {approx = true} : vector<16x1xf32> -> vector<16x1xf32>
    %727 = vector.broadcast %726 : vector<16x1xf32> to vector<16x16xf32>
    %728 = arith.mulf %723, %727 : vector<16x16xf32>
    %729 = vector.extract_strided_slice %678 {offsets = [0, 16], sizes = [16, 16], strides = [1, 1]} : vector<16x48xf32> to vector<16x16xf32>
    %cst_233 = arith.constant dense<0.000000e+00> : vector<16x16xf32>
    %730 = tpu.matmul %728, %729, %cst_233 {dimension_numbers = #tpu.dot_dimension_numbers<[1], [0], [0], [1], [0, 0, 1, 1], [], []>} : vector<16x16xf32>, vector<16x16xf32>, vector<16x16xf32> -> vector<16x16xf32>
    %731 = arith.addf %707, %730 : vector<16x16xf32>
    %732 = vector.extract_strided_slice %680 {offsets = [0, 2], sizes = [16, 1], strides = [1, 1]} : vector<16x3xf32> to vector<16x1xf32>
    %733 = vector.extract_strided_slice %682 {offsets = [2, 0], sizes = [1, 16], strides = [1, 1]} : vector<3x16xf32> to vector<1x16xf32>
    %734 = vector.broadcast %732 : vector<16x1xf32> to vector<16x16xf32>
    %735 = vector.broadcast %733 : vector<1x16xf32> to vector<16x16xf32>
    %736 = arith.addf %734, %735 : vector<16x16xf32>
    %cst_234 = arith.constant 0.000000e+00 : f32
    %737 = vector.broadcast %cst_234 : f32 to vector<16x16xf32>
    %738 = arith.cmpf oge, %736, %737 : vector<16x16xf32>
    %cst_235 = arith.constant 2.000000e-01 : f32
    %739 = vector.broadcast %cst_235 : f32 to vector<16x16xf32>
    %740 = arith.mulf %739, %736 : vector<16x16xf32>
    %741 = arith.select %738, %736, %740 : vector<16x16xi1>, vector<16x16xf32>
    %742 = arith.addf %741, %455 : vector<16x16xf32>
    %cst_236 = arith.constant dense<0xFF800000> : vector<16xf32>
    %743 = vector.multi_reduction <maximumf>, %742, %cst_236 [1] : vector<16x16xf32> to vector<16xf32>
    %744 = vector.shape_cast %743 : vector<16xf32> to vector<16x1xf32>
    %745 = vector.broadcast %744 : vector<16x1xf32> to vector<16x16xf32>
    %746 = arith.subf %742, %745 : vector<16x16xf32>
    %747 = math.exp %746 : vector<16x16xf32>
    %cst_237 = arith.constant dense<0.000000e+00> : vector<16xf32>
    %748 = vector.multi_reduction <add>, %747, %cst_237 [1] : vector<16x16xf32> to vector<16xf32>
    %749 = vector.shape_cast %748 : vector<16xf32> to vector<16x1xf32>
    %750 = tpu.reciprocal %749 {approx = true} : vector<16x1xf32> -> vector<16x1xf32>
    %751 = vector.broadcast %750 : vector<16x1xf32> to vector<16x16xf32>
    %752 = arith.mulf %747, %751 : vector<16x16xf32>
    %753 = vector.extract_strided_slice %678 {offsets = [0, 32], sizes = [16, 16], strides = [1, 1]} : vector<16x48xf32> to vector<16x16xf32>
    %cst_238 = arith.constant dense<0.000000e+00> : vector<16x16xf32>
    %754 = tpu.matmul %752, %753, %cst_238 {dimension_numbers = #tpu.dot_dimension_numbers<[1], [0], [0], [1], [0, 0, 1, 1], [], []>} : vector<16x16xf32>, vector<16x16xf32>, vector<16x16xf32> -> vector<16x16xf32>
    %755 = arith.addf %731, %754 : vector<16x16xf32>
    %cst_239 = arith.constant 0.333333343 : f32
    %756 = vector.broadcast %cst_239 : f32 to vector<16x16xf32>
    %757 = arith.mulf %755, %756 : vector<16x16xf32>
    %758 = vector.extract_strided_slice %457 {offsets = [3, 0], sizes = [1, 16], strides = [1, 1]} : vector<9x16xf32> to vector<1x16xf32>
    %759 = vector.broadcast %758 : vector<1x16xf32> to vector<16x16xf32>
    %760 = arith.addf %757, %759 : vector<16x16xf32>
    %cst_240 = arith.constant 0.000000e+00 : f32
    %761 = vector.broadcast %cst_240 : f32 to vector<16x16xf32>
    %762 = arith.maximumf %760, %761 : vector<16x16xf32>
    %763 = arith.negf %677 : vector<16x16xf32>
    %764 = math.exp %763 : vector<16x16xf32>
    %cst_241 = arith.constant 1.000000e+00 : f32
    %765 = vector.broadcast %cst_241 : f32 to vector<16x16xf32>
    %766 = arith.addf %765, %764 : vector<16x16xf32>
    %767 = arith.divf %765, %766 : vector<16x16xf32>
    %768 = arith.mulf %762, %767 : vector<16x16xf32>
    %cst_242 = arith.constant 1.000000e+00 : f32
    %769 = vector.broadcast %cst_242 : f32 to vector<16x16xf32>
    %770 = arith.subf %769, %767 : vector<16x16xf32>
    %771 = arith.mulf %668, %770 : vector<16x16xf32>
    %772 = arith.addf %768, %771 : vector<16x16xf32>
    %cst_243 = arith.constant 0.000000e+00 : f32
    %773 = vector.broadcast %cst_243 : f32 to vector<16x16xf32>
    %774 = arith.maximumf %772, %773 : vector<16x16xf32>
    %c48_244 = arith.constant 48 : index
    %c0_245 = arith.constant 0 : index
    %775 = vector.load %arg3[%c48_244, %c0_245] : memref<304x128xf32, #tpu.memory_space<vmem>>, vector<16x64xf32>
    %cst_246 = arith.constant dense<0.000000e+00> : vector<16x64xf32>
    %776 = tpu.matmul %774, %775, %cst_246 {dimension_numbers = #tpu.dot_dimension_numbers<[1], [0], [0], [1], [0, 0, 1, 1], [], []>} : vector<16x16xf32>, vector<16x64xf32>, vector<16x64xf32> -> vector<16x64xf32>
    %777 = vector.extract_strided_slice %776 {offsets = [0, 48], sizes = [16, 16], strides = [1, 1]} : vector<16x64xf32> to vector<16x16xf32>
    %cst_247 = arith.constant dense<0.000000e+00> : vector<16x16xf32>
    %778 = tpu.matmul %456, %777, %cst_247 {dimension_numbers = #tpu.dot_dimension_numbers<[1], [0], [0], [1], [0, 0, 1, 1], [], []>} : vector<16x16xf32>, vector<16x16xf32>, vector<16x16xf32> -> vector<16x16xf32>
    %779 = vector.extract_strided_slice %457 {offsets = [8, 0], sizes = [1, 16], strides = [1, 1]} : vector<9x16xf32> to vector<1x16xf32>
    %780 = vector.broadcast %779 : vector<1x16xf32> to vector<16x16xf32>
    %781 = arith.addf %778, %780 : vector<16x16xf32>
    %782 = vector.extract_strided_slice %776 {offsets = [0, 0], sizes = [16, 48], strides = [1, 1]} : vector<16x64xf32> to vector<16x48xf32>
    %c232_248 = arith.constant 232 : index
    %c0_249 = arith.constant 0 : index
    %783 = vector.load %arg3[%c232_248, %c0_249] : memref<304x128xf32, #tpu.memory_space<vmem>>, vector<48x3xf32>
    %cst_250 = arith.constant dense<0.000000e+00> : vector<16x3xf32>
    %784 = tpu.matmul %782, %783, %cst_250 {dimension_numbers = #tpu.dot_dimension_numbers<[1], [0], [0], [1], [0, 0, 1, 1], [], []>} : vector<16x48xf32>, vector<48x3xf32>, vector<16x3xf32> -> vector<16x3xf32>
    %c280 = arith.constant 280 : index
    %c0_251 = arith.constant 0 : index
    %785 = vector.load %arg3[%c280, %c0_251] : memref<304x128xf32, #tpu.memory_space<vmem>>, vector<3x48xf32>
    %cst_252 = arith.constant dense<0.000000e+00> : vector<3x16xf32>
    %786 = tpu.matmul %785, %782, %cst_252 {dimension_numbers = #tpu.dot_dimension_numbers<[1], [1], [0], [0], [0, 0, 1, 0], [], []>} : vector<3x48xf32>, vector<16x48xf32>, vector<3x16xf32> -> vector<3x16xf32>
    %cst_253 = arith.constant 0.000000e+00 : f32
    %787 = vector.broadcast %cst_253 : f32 to vector<16x16xf32>
    %788 = vector.extract_strided_slice %784 {offsets = [0, 0], sizes = [16, 1], strides = [1, 1]} : vector<16x3xf32> to vector<16x1xf32>
    %789 = vector.extract_strided_slice %786 {offsets = [0, 0], sizes = [1, 16], strides = [1, 1]} : vector<3x16xf32> to vector<1x16xf32>
    %790 = vector.broadcast %788 : vector<16x1xf32> to vector<16x16xf32>
    %791 = vector.broadcast %789 : vector<1x16xf32> to vector<16x16xf32>
    %792 = arith.addf %790, %791 : vector<16x16xf32>
    %cst_254 = arith.constant 0.000000e+00 : f32
    %793 = vector.broadcast %cst_254 : f32 to vector<16x16xf32>
    %794 = arith.cmpf oge, %792, %793 : vector<16x16xf32>
    %cst_255 = arith.constant 2.000000e-01 : f32
    %795 = vector.broadcast %cst_255 : f32 to vector<16x16xf32>
    %796 = arith.mulf %795, %792 : vector<16x16xf32>
    %797 = arith.select %794, %792, %796 : vector<16x16xi1>, vector<16x16xf32>
    %798 = arith.addf %797, %455 : vector<16x16xf32>
    %cst_256 = arith.constant dense<0xFF800000> : vector<16xf32>
    %799 = vector.multi_reduction <maximumf>, %798, %cst_256 [1] : vector<16x16xf32> to vector<16xf32>
    %800 = vector.shape_cast %799 : vector<16xf32> to vector<16x1xf32>
    %801 = vector.broadcast %800 : vector<16x1xf32> to vector<16x16xf32>
    %802 = arith.subf %798, %801 : vector<16x16xf32>
    %803 = math.exp %802 : vector<16x16xf32>
    %cst_257 = arith.constant dense<0.000000e+00> : vector<16xf32>
    %804 = vector.multi_reduction <add>, %803, %cst_257 [1] : vector<16x16xf32> to vector<16xf32>
    %805 = vector.shape_cast %804 : vector<16xf32> to vector<16x1xf32>
    %806 = tpu.reciprocal %805 {approx = true} : vector<16x1xf32> -> vector<16x1xf32>
    %807 = vector.broadcast %806 : vector<16x1xf32> to vector<16x16xf32>
    %808 = arith.mulf %803, %807 : vector<16x16xf32>
    %809 = vector.extract_strided_slice %782 {offsets = [0, 0], sizes = [16, 16], strides = [1, 1]} : vector<16x48xf32> to vector<16x16xf32>
    %cst_258 = arith.constant dense<0.000000e+00> : vector<16x16xf32>
    %810 = tpu.matmul %808, %809, %cst_258 {dimension_numbers = #tpu.dot_dimension_numbers<[1], [0], [0], [1], [0, 0, 1, 1], [], []>} : vector<16x16xf32>, vector<16x16xf32>, vector<16x16xf32> -> vector<16x16xf32>
    %811 = arith.addf %787, %810 : vector<16x16xf32>
    %812 = vector.extract_strided_slice %784 {offsets = [0, 1], sizes = [16, 1], strides = [1, 1]} : vector<16x3xf32> to vector<16x1xf32>
    %813 = vector.extract_strided_slice %786 {offsets = [1, 0], sizes = [1, 16], strides = [1, 1]} : vector<3x16xf32> to vector<1x16xf32>
    %814 = vector.broadcast %812 : vector<16x1xf32> to vector<16x16xf32>
    %815 = vector.broadcast %813 : vector<1x16xf32> to vector<16x16xf32>
    %816 = arith.addf %814, %815 : vector<16x16xf32>
    %cst_259 = arith.constant 0.000000e+00 : f32
    %817 = vector.broadcast %cst_259 : f32 to vector<16x16xf32>
    %818 = arith.cmpf oge, %816, %817 : vector<16x16xf32>
    %cst_260 = arith.constant 2.000000e-01 : f32
    %819 = vector.broadcast %cst_260 : f32 to vector<16x16xf32>
    %820 = arith.mulf %819, %816 : vector<16x16xf32>
    %821 = arith.select %818, %816, %820 : vector<16x16xi1>, vector<16x16xf32>
    %822 = arith.addf %821, %455 : vector<16x16xf32>
    %cst_261 = arith.constant dense<0xFF800000> : vector<16xf32>
    %823 = vector.multi_reduction <maximumf>, %822, %cst_261 [1] : vector<16x16xf32> to vector<16xf32>
    %824 = vector.shape_cast %823 : vector<16xf32> to vector<16x1xf32>
    %825 = vector.broadcast %824 : vector<16x1xf32> to vector<16x16xf32>
    %826 = arith.subf %822, %825 : vector<16x16xf32>
    %827 = math.exp %826 : vector<16x16xf32>
    %cst_262 = arith.constant dense<0.000000e+00> : vector<16xf32>
    %828 = vector.multi_reduction <add>, %827, %cst_262 [1] : vector<16x16xf32> to vector<16xf32>
    %829 = vector.shape_cast %828 : vector<16xf32> to vector<16x1xf32>
    %830 = tpu.reciprocal %829 {approx = true} : vector<16x1xf32> -> vector<16x1xf32>
    %831 = vector.broadcast %830 : vector<16x1xf32> to vector<16x16xf32>
    %832 = arith.mulf %827, %831 : vector<16x16xf32>
    %833 = vector.extract_strided_slice %782 {offsets = [0, 16], sizes = [16, 16], strides = [1, 1]} : vector<16x48xf32> to vector<16x16xf32>
    %cst_263 = arith.constant dense<0.000000e+00> : vector<16x16xf32>
    %834 = tpu.matmul %832, %833, %cst_263 {dimension_numbers = #tpu.dot_dimension_numbers<[1], [0], [0], [1], [0, 0, 1, 1], [], []>} : vector<16x16xf32>, vector<16x16xf32>, vector<16x16xf32> -> vector<16x16xf32>
    %835 = arith.addf %811, %834 : vector<16x16xf32>
    %836 = vector.extract_strided_slice %784 {offsets = [0, 2], sizes = [16, 1], strides = [1, 1]} : vector<16x3xf32> to vector<16x1xf32>
    %837 = vector.extract_strided_slice %786 {offsets = [2, 0], sizes = [1, 16], strides = [1, 1]} : vector<3x16xf32> to vector<1x16xf32>
    %838 = vector.broadcast %836 : vector<16x1xf32> to vector<16x16xf32>
    %839 = vector.broadcast %837 : vector<1x16xf32> to vector<16x16xf32>
    %840 = arith.addf %838, %839 : vector<16x16xf32>
    %cst_264 = arith.constant 0.000000e+00 : f32
    %841 = vector.broadcast %cst_264 : f32 to vector<16x16xf32>
    %842 = arith.cmpf oge, %840, %841 : vector<16x16xf32>
    %cst_265 = arith.constant 2.000000e-01 : f32
    %843 = vector.broadcast %cst_265 : f32 to vector<16x16xf32>
    %844 = arith.mulf %843, %840 : vector<16x16xf32>
    %845 = arith.select %842, %840, %844 : vector<16x16xi1>, vector<16x16xf32>
    %846 = arith.addf %845, %455 : vector<16x16xf32>
    %cst_266 = arith.constant dense<0xFF800000> : vector<16xf32>
    %847 = vector.multi_reduction <maximumf>, %846, %cst_266 [1] : vector<16x16xf32> to vector<16xf32>
    %848 = vector.shape_cast %847 : vector<16xf32> to vector<16x1xf32>
    %849 = vector.broadcast %848 : vector<16x1xf32> to vector<16x16xf32>
    %850 = arith.subf %846, %849 : vector<16x16xf32>
    %851 = math.exp %850 : vector<16x16xf32>
    %cst_267 = arith.constant dense<0.000000e+00> : vector<16xf32>
    %852 = vector.multi_reduction <add>, %851, %cst_267 [1] : vector<16x16xf32> to vector<16xf32>
    %853 = vector.shape_cast %852 : vector<16xf32> to vector<16x1xf32>
    %854 = tpu.reciprocal %853 {approx = true} : vector<16x1xf32> -> vector<16x1xf32>
    %855 = vector.broadcast %854 : vector<16x1xf32> to vector<16x16xf32>
    %856 = arith.mulf %851, %855 : vector<16x16xf32>
    %857 = vector.extract_strided_slice %782 {offsets = [0, 32], sizes = [16, 16], strides = [1, 1]} : vector<16x48xf32> to vector<16x16xf32>
    %cst_268 = arith.constant dense<0.000000e+00> : vector<16x16xf32>
    %858 = tpu.matmul %856, %857, %cst_268 {dimension_numbers = #tpu.dot_dimension_numbers<[1], [0], [0], [1], [0, 0, 1, 1], [], []>} : vector<16x16xf32>, vector<16x16xf32>, vector<16x16xf32> -> vector<16x16xf32>
    %859 = arith.addf %835, %858 : vector<16x16xf32>
    %cst_269 = arith.constant 0.333333343 : f32
    %860 = vector.broadcast %cst_269 : f32 to vector<16x16xf32>
    %861 = arith.mulf %859, %860 : vector<16x16xf32>
    %862 = vector.extract_strided_slice %457 {offsets = [4, 0], sizes = [1, 16], strides = [1, 1]} : vector<9x16xf32> to vector<1x16xf32>
    %863 = vector.broadcast %862 : vector<1x16xf32> to vector<16x16xf32>
    %864 = arith.addf %861, %863 : vector<16x16xf32>
    %cst_270 = arith.constant 0.000000e+00 : f32
    %865 = vector.broadcast %cst_270 : f32 to vector<16x16xf32>
    %866 = arith.maximumf %864, %865 : vector<16x16xf32>
    %867 = arith.negf %781 : vector<16x16xf32>
    %868 = math.exp %867 : vector<16x16xf32>
    %cst_271 = arith.constant 1.000000e+00 : f32
    %869 = vector.broadcast %cst_271 : f32 to vector<16x16xf32>
    %870 = arith.addf %869, %868 : vector<16x16xf32>
    %871 = arith.divf %869, %870 : vector<16x16xf32>
    %872 = arith.mulf %866, %871 : vector<16x16xf32>
    %cst_272 = arith.constant 1.000000e+00 : f32
    %873 = vector.broadcast %cst_272 : f32 to vector<16x16xf32>
    %874 = arith.subf %873, %871 : vector<16x16xf32>
    %875 = arith.mulf %772, %874 : vector<16x16xf32>
    %876 = arith.addf %872, %875 : vector<16x16xf32>
    %cst_273 = arith.constant 0.000000e+00 : f32
    %877 = vector.broadcast %cst_273 : f32 to vector<16x80xf32>
    %878 = tpu.concatenate %73, %454, %876, %877 in 1 : vector<16x16xf32>, vector<16x16xf32>, vector<16x16xf32>, vector<16x80xf32> -> vector<16x128xf32>
    %c0_274 = arith.constant 0 : index
    %c0_275 = arith.constant 0 : index
    %879 = vector.load %arg4[%c0_274, %c0_275] : memref<16x128xf32, #tpu.memory_space<vmem>>, vector<16x128xf32>
    tpu.vector_store %arg4[%c0_274, %c0_275], %878 {strides = array<i32>} : memref<16x128xf32, #tpu.memory_space<vmem>>, vector<16x128xf32>,
    return
  }
}

</mosaic_0001>

<llo_original>
// kernel: stcell_forward.1
$region0: #{stcell_forward.1}
  #allocation0 [shape = 'u32[]', space=smem, size = 0x4, offset = 0x4, fixed_abs, tag = 'smem constant byte address 0x4 - core index']
  #allocation1 [shape = 'u32[144,128]{1,0:T(1,128)}', space=vmem, size = 0x12000, scoped, tag = 'internal scratch']
  %s0 = inlined_call_operand.vmem [shape: f32[80,128], index: 0, kind: input, shape index: {}]
  %s1 = inlined_call_operand.vmem [shape: f32[480,128], index: 1, kind: input, shape index: {}]
  %s2 = inlined_call_operand.vmem [shape: f32[272,128], index: 2, kind: input, shape index: {}]
  %s3 = inlined_call_operand.vmem [shape: f32[304,128], index: 3, kind: input, shape index: {}]
  %s4 = inlined_call_operand.hbm [shape: f32[16,128], index: 4, kind: output, shape index: {}]
  %s5 = sld [smem:[#allocation0]]
  $region26: #{stcell_forward.1} parent=0
    _
  %s7 = ssub.s32 1, %s5
  %s8 = scalar_select 0, %s7, %s5
  $region1: #{stcell_forward.1} parent=0
    #allocation2 [shape = 'u8[8192]{0}', space=vmem, size = 0x2000, scoped, tag = 'output window, operand 0, single buffered']
    #allocation3 [shape = 's32[1]{0}', space=sflag, size = 0x4, scoped, tag = 'scoped memory for stcell_forward.1']
    %9 = vsyncpa [#allocation3], 0
    // Predicated region
    $region2: #{stcell_forward.1} parent=1 // pred_check
      _
    $region3: #{stcell_forward.1} parent=1 // pred_check_branch
      %11 = sbr.rel (0) target = $region5
    $region4: #{stcell_forward.1} parent=1 // pred_region
      _
    $region5: #{stcell_forward.1} parent=1 // pred_fallthru
      _
    // Predicated region
    $region6: #{stcell_forward.1} parent=1 // pred_check
      _
    $region7: #{stcell_forward.1} parent=1 // pred_check_branch
      %13 = sbr.rel (0) target = $region9
    $region8: #{stcell_forward.1} parent=1 // pred_region
      _
    $region9: #{stcell_forward.1} parent=1 // pred_fallthru
      _
    // Predicated region
    $region10: #{stcell_forward.1} parent=1 // pred_check
      _
    $region11: #{stcell_forward.1} parent=1 // pred_check_branch
      %15 = sbr.rel (0) target = $region13
    $region12: #{stcell_forward.1} parent=1 // pred_region
      _
    $region13: #{stcell_forward.1} parent=1 // pred_fallthru
      _
    // Predicated region
    $region14: #{stcell_forward.1} parent=1 // pred_check
      _
    $region15: #{stcell_forward.1} parent=1 // pred_check_branch
      %17 = sbr.rel (0) target = $region17
    $region16: #{stcell_forward.1} parent=1 // pred_region
      _
    $region17: #{stcell_forward.1} parent=1 // pred_fallthru
      _
    %v18 = vld [vmem:[%s0] sm:$0xff]
    %v19 = vld [vmem:[%s0 + $0x8] sm:$0xff]
    %v20 = vld [vmem:[%s1] sm:$0xff]
    %v21 = vld [vmem:[%s1 + $0x8] sm:$0xff]
    %v22 = vld [vmem:[%s1 + $0x10] sm:$0xff]
    %v23 = vld [vmem:[%s1 + $0x18] sm:$0xff]
    %v24 = vld [vmem:[%s1 + $0x20] sm:$0xff]
    %v25 = vld [vmem:[%s1 + $0x28] sm:$0xff]
    %v26 = vld [vmem:[%s1 + $0x30] sm:$0xff]
    %v27 = vld [vmem:[%s1 + $0x38] sm:$0xff]
    %v28 = vld [vmem:[%s1 + $0x40] sm:$0xff]
    %v29 = vld [vmem:[%s1 + $0x48] sm:$0xff]
    %v30 = vld [vmem:[%s1 + $0x50] sm:$0xff]
    %v31 = vld [vmem:[%s1 + $0x58] sm:$0xff]
    %vm32 = vcmask 130048
    %v34 = vsel %vm32, %v20, 0
    %v37 = vsel %vm32, %v21, 0
    %v40 = vsel %vm32, %v22, 0
    %v43 = vsel %vm32, %v23, 0
    %v46 = vsel %vm32, %v24, 0
    %v49 = vsel %vm32, %v25, 0
    %51 = vmatprep.subr.mxu0 0.0
    %52 = vmatpush1.msra.mxu0 %v18
    %53 = vmatprep.subr.mxu0 0.0
    %54 = vmatpush1.msra.mxu0 %v19
    %55 = vmatprep.subr.mxu0 0.0
    %56 = vmatpush1.msra.mxu0 0.0
    %57 = vmatprep.subr.mxu0 0.0
    %58 = vmatpush1.msra.mxu0 0.0
    %59 = vmatprep.subr.mxu0 0.0
    %60 = vmatpush1.msra.mxu0 0.0
    %61 = vmatprep.subr.mxu0 0.0
    %62 = vmatpush1.msra.mxu0 0.0
    %63 = vmatprep.subr.mxu0 0.0
    %64 = vmatpush1.msra.mxu0 0.0
    %65 = vmatprep.subr.mxu0 0.0
    %66 = vmatpush1.msra.mxu0 0.0
    %67 = vmatprep.subr.mxu0 0.0
    %68 = vmatpush1.msra.mxu0 0.0
    %69 = vmatprep.subr.mxu0 0.0
    %70 = vmatpush1.msra.mxu0 0.0
    %71 = vmatprep.subr.mxu0 0.0
    %72 = vmatpush1.msra.mxu0 0.0
    %73 = vmatprep.subr.mxu0 0.0
    %74 = vmatpush1.msra.mxu0 0.0
    %75 = vmatprep.subr.mxu0 0.0
    %76 = vmatpush1.msra.mxu0 0.0
    %77 = vmatprep.subr.mxu0 0.0
    %78 = vmatpush1.msra.mxu0 0.0
    %79 = vmatprep.subr.mxu0 0.0
    %80 = vmatpush1.msra.mxu0 0.0
    %81 = vmatprep.subr.mxu0 0.0
    %82 = vmatpush1.msra.mxu0 0.0
    %83 = vmatprep.subr.mxu0 0.0
    %84 = vmatpush1.msra.mxu0 0.0
    %85 = vmatprep.subr.mxu0 0.0
    %86 = vmatpush1.msra.mxu0 0.0
    %87 = vmatprep.subr.mxu0 0.0
    %88 = vmatpush1.msra.mxu0 0.0
    %89 = vmatprep.subr.mxu0 0.0
    %90 = vmatpush1.msra.mxu0 0.0
    %91 = vmatprep.subr.mxu0 0.0
    %92 = vmatpush1.msra.mxu0 0.0
    %93 = vmatprep.subr.mxu0 0.0
    %94 = vmatpush1.msra.mxu0 0.0
    %95 = vmatprep.subr.mxu0 0.0
    %96 = vmatpush1.msra.mxu0 0.0
    %97 = vmatprep.subr.mxu0 0.0
    %98 = vmatpush1.msra.mxu0 0.0
    %99 = vmatprep.subr.mxu0 0.0
    %100 = vmatpush1.msra.mxu0 0.0
    %101 = vmatprep.subr.mxu0 0.0
    %102 = vmatpush1.msra.mxu0 0.0
    %103 = vmatprep.subr.mxu0 0.0
    %104 = vmatpush1.msra.mxu0 0.0
    %105 = vmatprep.subr.mxu0 0.0
    %106 = vmatpush1.msra.mxu0 0.0
    %107 = vmatprep.subr.mxu0 0.0
    %108 = vmatpush1.msra.mxu0 0.0
    %109 = vmatprep.subr.mxu0 0.0
    %110 = vmatpush1.msra.mxu0 0.0
    %111 = vmatprep.subr.mxu0 0.0
    %112 = vmatpush1.msra.mxu0 0.0
    %113 = vmatprep.subr.mxu0 0.0
    %114 = vmatpush1.msra.mxu0 0.0
    %115 = vmatprep.mubr.f32.mxu0 0.0
    %116 = vmatmul.mubr.f32.gmra.mrb[0].mxu0 %v34
    %v117 = vpop.f32.mrb[0].mxu0
    %v118 = vadd.f32 %v26, %v117
    %v119 = vpop.f32.mrb[0].mxu0
    %120 = vmatprep.mubr.f32.mxu0 0.0
    %121 = vmatmul.mubr.f32.gmra.mrb[0].mxu0 %v37
    %v122 = vpop.f32.mrb[0].mxu0
    %v123 = vadd.f32 %v27, %v122
    %v124 = vpop.f32.mrb[0].mxu0
    %125 = vmatprep.mubr.f32.mxu0 0.0
    %126 = vmatmul.mubr.f32.gmra.mrb[0].mxu0 %v40
    %v127 = vpop.f32.mrb[0].mxu0
    %v128 = vadd.f32 %v28, %v127
    %v129 = vpop.f32.mrb[0].mxu0
    %130 = vmatprep.mubr.f32.mxu0 0.0
    %131 = vmatmul.mubr.f32.gmra.mrb[0].mxu0 %v43
    %v132 = vpop.f32.mrb[0].mxu0
    %v133 = vadd.f32 %v29, %v132
    %v134 = vpop.f32.mrb[0].mxu0
    %135 = vmatprep.mubr.f32.mxu0 0.0
    %136 = vmatmul.mubr.f32.gmra.mrb[0].mxu0 %v46
    %v137 = vpop.f32.mrb[0].mxu0
    %v138 = vadd.f32 %v30, %v137
    %v139 = vpop.f32.mrb[0].mxu0
    %140 = vmatprep.mubr.f32.mxu0 0.0
    %141 = vmatmul.mubr.f32.gmra.mrb[0].mxu0 %v49
    %v142 = vpop.f32.mrb[0].mxu0
    %v143 = vadd.f32 %v31, %v142
    %v144 = vpop.f32.mrb[0].mxu0
    %145 = vdwg.mxu0
    %v146 = vmul.f32 %v118, 0.35355338
    %v147 = vmul.f32 %v123, 0.35355338
    %148 = vxpose.xlu0.b32.start [1/16] %v146, 128
    %149 = vxpose.xlu0.b32.cont [2/16] 0.0, 128
    %150 = vxpose.xlu0.b32.cont [3/16] 0.0, 128
    %151 = vxpose.xlu0.b32.cont [4/16] 0.0, 128
    %152 = vxpose.xlu0.b32.cont [5/16] 0.0, 128
    %153 = vxpose.xlu0.b32.cont [6/16] 0.0, 128
    %154 = vxpose.xlu0.b32.cont [7/16] 0.0, 128
    %155 = vxpose.xlu0.b32.cont [8/16] 0.0, 128
    %156 = vxpose.xlu0.b32.cont [9/16] 0.0, 128
    %157 = vxpose.xlu0.b32.cont [10/16] 0.0, 128
    %158 = vxpose.xlu0.b32.cont [11/16] 0.0, 128
    %159 = vxpose.xlu0.b32.cont [12/16] 0.0, 128
    %160 = vxpose.xlu0.b32.cont [13/16] 0.0, 128
    %161 = vxpose.xlu0.b32.cont [14/16] 0.0, 128
    %162 = vxpose.xlu0.b32.cont [15/16] 0.0, 128
    %163 = vxpose.xlu0.b32.end [16/16] 0.0, 128
    %v164 = vpop.trf.xlu0
    %v165 = vpop.trf.xlu0
    %v166 = vpop.trf.xlu0
    %v167 = vpop.trf.xlu0
    %v168 = vpop.trf.xlu0
    %v169 = vpop.trf.xlu0
    %v170 = vpop.trf.xlu0
    %v171 = vpop.trf.xlu0
    %v172 = vpop.trf.xlu0
    %v173 = vpop.trf.xlu0
    %v174 = vpop.trf.xlu0
    %v175 = vpop.trf.xlu0
    %v176 = vpop.trf.xlu0
    %v177 = vpop.trf.xlu0
    %v178 = vpop.trf.xlu0
    %v179 = vpop.trf.xlu0
    %vm180 = vcmask 64512
    %v182 = vsel %vm180, %v164, 0
    %v185 = vsel %vm180, %v165, 0
    %187 = vmatprep.subr.mxu0 0.0
    %188 = vmatpush1.msra.mxu0 %v128
    %189 = vmatprep.subr.mxu0 0.0
    %190 = vmatpush1.msra.mxu0 0.0
    %191 = vmatprep.subr.mxu0 0.0
    %192 = vmatpush1.msra.mxu0 0.0
    %193 = vmatprep.subr.mxu0 0.0
    %194 = vmatpush1.msra.mxu0 0.0
    %195 = vmatprep.subr.mxu0 0.0
    %196 = vmatpush1.msra.mxu0 0.0
    %197 = vmatprep.subr.mxu0 0.0
    %198 = vmatpush1.msra.mxu0 0.0
    %199 = vmatprep.subr.mxu0 0.0
    %200 = vmatpush1.msra.mxu0 0.0
    %201 = vmatprep.subr.mxu0 0.0
    %202 = vmatpush1.msra.mxu0 0.0
    %203 = vmatprep.subr.mxu0 0.0
    %204 = vmatpush1.msra.mxu0 0.0
    %205 = vmatprep.subr.mxu0 0.0
    %206 = vmatpush1.msra.mxu0 0.0
    %207 = vmatprep.subr.mxu0 0.0
    %208 = vmatpush1.msra.mxu0 0.0
    %209 = vmatprep.subr.mxu0 0.0
    %210 = vmatpush1.msra.mxu0 0.0
    %211 = vmatprep.subr.mxu0 0.0
    %212 = vmatpush1.msra.mxu0 0.0
    %213 = vmatprep.subr.mxu0 0.0
    %214 = vmatpush1.msra.mxu0 0.0
    %215 = vmatprep.subr.mxu0 0.0
    %216 = vmatpush1.msra.mxu0 0.0
    %217 = vmatprep.subr.mxu0 0.0
    %218 = vmatpush1.msra.mxu0 0.0
    %219 = vmatprep.subr.mxu0 0.0
    %220 = vmatpush1.msra.mxu0 0.0
    %221 = vmatprep.subr.mxu0 0.0
    %222 = vmatpush1.msra.mxu0 0.0
    %223 = vmatprep.subr.mxu0 0.0
    %224 = vmatpush1.msra.mxu0 0.0
    %225 = vmatprep.subr.mxu0 0.0
    %226 = vmatpush1.msra.mxu0 0.0
    %227 = vmatprep.subr.mxu0 0.0
    %228 = vmatpush1.msra.mxu0 0.0
    %229 = vmatprep.subr.mxu0 0.0
    %230 = vmatpush1.msra.mxu0 0.0
    %231 = vmatprep.subr.mxu0 0.0
    %232 = vmatpush1.msra.mxu0 0.0
    %233 = vmatprep.subr.mxu0 0.0
    %234 = vmatpush1.msra.mxu0 0.0
    %235 = vmatprep.subr.mxu0 0.0
    %236 = vmatpush1.msra.mxu0 0.0
    %237 = vmatprep.subr.mxu0 0.0
    %238 = vmatpush1.msra.mxu0 0.0
    %239 = vmatprep.subr.mxu0 0.0
    %240 = vmatpush1.msra.mxu0 0.0
    %241 = vmatprep.subr.mxu0 0.0
    %242 = vmatpush1.msra.mxu0 0.0
    %243 = vmatprep.subr.mxu0 0.0
    %244 = vmatpush1.msra.mxu0 0.0
    %245 = vmatprep.subr.mxu0 0.0
    %246 = vmatpush1.msra.mxu0 0.0
    %247 = vmatprep.subr.mxu0 0.0
    %248 = vmatpush1.msra.mxu0 0.0
    %249 = vmatprep.subr.mxu0 0.0
    %250 = vmatpush1.msra.mxu0 0.0
    %251 = vmatprep.mubr.f32.mxu0 0.0
    %252 = vmatmul.mubr.f32.gmra.mrb[0].mxu0 %v182
    %v253 = vpop.f32.mrb[0].mxu0
    %v254 = vadd.f32 0.0, %v253
    %v255 = vpop.f32.mrb[0].mxu0
    %256 = vmatprep.mubr.f32.mxu0 0.0
    %257 = vmatmul.mubr.f32.gmra.mrb[0].mxu0 %v185
    %v258 = vpop.f32.mrb[0].mxu0
    %v259 = vadd.f32 0.0, %v258
    %v260 = vpop.f32.mrb[0].mxu0
    %261 = vdwg.mxu0
    %vm262 = vcmask 97280
    %v263 = vsel %vm262, %v254, -inf
    %264 = vmax.xlane.f32.xlu0 %v263
    %v265 = vpop.xlane.xlu0 %264
    %vm266 = vcmask 93184
    %v267 = vsel %vm266, %v259, -inf
    %268 = vmax.xlane.f32.xlu0 %v267
    %v269 = vpop.xlane.xlu0 %268
    %v270 = vsub.f32 %v254, %v265
    %v271 = vsub.f32 %v259, %v269
    %v272 = vmul.f32 %v270, 1.442695
    %v273 = vpow.pop %v272
    %v274 = vmul.f32 %v271, 1.442695
    %v275 = vpow.pop %v274
    %v276 = vsel %vm262, %v273, 0.0
    %277 = vadd.xlane.f32.xlu0 %v276
    %v278 = vpop.xlane.xlu0 %277
    %v279 = vsel %vm266, %v275, 0.0
    %280 = vadd.xlane.f32.xlu0 %v279
    %v281 = vpop.xlane.xlu0 %280
    %v282 = vrcp.pop %v278
    %v283 = vrcp.pop %v281
    %v284 = vmul.f32 %v273, %v282
    %v285 = vmul.f32 %v275, %v283
    %v287 = vsel %vm262, %v138, 0
    %v290 = vsel %vm262, %v284, 0
    %v293 = vsel %vm262, %v285, 0
    %295 = vmatprep.subr.mxu0 0.0
    %296 = vmatpush1.xpose.msra.mxu0 %v290
    %297 = vmatprep.subr.mxu0 0.0
    %298 = vmatpush1.xpose.msra.mxu0 %v293
    %299 = vmatprep.subr.mxu0 0.0
    %300 = vmatpush1.xpose.msra.mxu0 0.0
    %301 = vmatprep.subr.mxu0 0.0
    %302 = vmatpush1.xpose.msra.mxu0 0.0
    %303 = vmatprep.subr.mxu0 0.0
    %304 = vmatpush1.xpose.msra.mxu0 0.0
    %305 = vmatprep.subr.mxu0 0.0
    %306 = vmatpush1.xpose.msra.mxu0 0.0
    %307 = vmatprep.subr.mxu0 0.0
    %308 = vmatpush1.xpose.msra.mxu0 0.0
    %309 = vmatprep.subr.mxu0 0.0
    %310 = vmatpush1.xpose.msra.mxu0 0.0
    %311 = vmatprep.subr.mxu0 0.0
    %312 = vmatpush1.xpose.msra.mxu0 0.0
    %313 = vmatprep.subr.mxu0 0.0
    %314 = vmatpush1.xpose.msra.mxu0 0.0
    %315 = vmatprep.subr.mxu0 0.0
    %316 = vmatpush1.xpose.msra.mxu0 0.0
    %317 = vmatprep.subr.mxu0 0.0
    %318 = vmatpush1.xpose.msra.mxu0 0.0
    %319 = vmatprep.subr.mxu0 0.0
    %320 = vmatpush1.xpose.msra.mxu0 0.0
    %321 = vmatprep.subr.mxu0 0.0
    %322 = vmatpush1.xpose.msra.mxu0 0.0
    %323 = vmatprep.subr.mxu0 0.0
    %324 = vmatpush1.xpose.msra.mxu0 0.0
    %325 = vmatprep.subr.mxu0 0.0
    %326 = vmatpush1.xpose.msra.mxu0 0.0
    %327 = vmatprep.subr.mxu0 0.0
    %328 = vmatpush1.xpose.msra.mxu0 0.0
    %329 = vmatprep.subr.mxu0 0.0
    %330 = vmatpush1.xpose.msra.mxu0 0.0
    %331 = vmatprep.subr.mxu0 0.0
    %332 = vmatpush1.xpose.msra.mxu0 0.0
    %333 = vmatprep.subr.mxu0 0.0
    %334 = vmatpush1.xpose.msra.mxu0 0.0
    %335 = vmatprep.subr.mxu0 0.0
    %336 = vmatpush1.xpose.msra.mxu0 0.0
    %337 = vmatprep.subr.mxu0 0.0
    %338 = vmatpush1.xpose.msra.mxu0 0.0
    %339 = vmatprep.subr.mxu0 0.0
    %340 = vmatpush1.xpose.msra.mxu0 0.0
    %341 = vmatprep.subr.mxu0 0.0
    %342 = vmatpush1.xpose.msra.mxu0 0.0
    %343 = vmatprep.subr.mxu0 0.0
    %344 = vmatpush1.xpose.msra.mxu0 0.0
    %345 = vmatprep.subr.mxu0 0.0
    %346 = vmatpush1.xpose.msra.mxu0 0.0
    %347 = vmatprep.subr.mxu0 0.0
    %348 = vmatpush1.xpose.msra.mxu0 0.0
    %349 = vmatprep.subr.mxu0 0.0
    %350 = vmatpush1.xpose.msra.mxu0 0.0
    %351 = vmatprep.subr.mxu0 0.0
    %352 = vmatpush1.xpose.msra.mxu0 0.0
    %353 = vmatprep.subr.mxu0 0.0
    %354 = vmatpush1.xpose.msra.mxu0 0.0
    %355 = vmatprep.subr.mxu0 0.0
    %356 = vmatpush1.xpose.msra.mxu0 0.0
    %357 = vmatprep.subr.mxu0 0.0
    %358 = vmatpush1.xpose.msra.mxu0 0.0
    %359 = vmatprep.mubr.f32.mxu0 0.0
    %360 = vmatmul.mubr.f32.gmra.mrb[0].mxu0 %v287
    %v361 = vpop.f32.mrb[0].mxu0
    %v362 = vadd.f32 0.0, %v361
    %v363 = vpop.f32.mrb[0].mxu0
    %364 = vdwg.mxu0
    %365 = vxpose.xlu0.b32.start [1/16] %v147, 128
    %366 = vxpose.xlu0.b32.cont [2/16] 0.0, 128
    %367 = vxpose.xlu0.b32.cont [3/16] 0.0, 128
    %368 = vxpose.xlu0.b32.cont [4/16] 0.0, 128
    %369 = vxpose.xlu0.b32.cont [5/16] 0.0, 128
    %370 = vxpose.xlu0.b32.cont [6/16] 0.0, 128
    %371 = vxpose.xlu0.b32.cont [7/16] 0.0, 128
    %372 = vxpose.xlu0.b32.cont [8/16] 0.0, 128
    %373 = vxpose.xlu0.b32.cont [9/16] 0.0, 128
    %374 = vxpose.xlu0.b32.cont [10/16] 0.0, 128
    %375 = vxpose.xlu0.b32.cont [11/16] 0.0, 128
    %376 = vxpose.xlu0.b32.cont [12/16] 0.0, 128
    %377 = vxpose.xlu0.b32.cont [13/16] 0.0, 128
    %378 = vxpose.xlu0.b32.cont [14/16] 0.0, 128
    %379 = vxpose.xlu0.b32.cont [15/16] 0.0, 128
    %380 = vxpose.xlu0.b32.end [16/16] 0.0, 128
    %v381 = vpop.trf.xlu0
    %v382 = vpop.trf.xlu0
    %v383 = vpop.trf.xlu0
    %v384 = vpop.trf.xlu0
    %v385 = vpop.trf.xlu0
    %v386 = vpop.trf.xlu0
    %v387 = vpop.trf.xlu0
    %v388 = vpop.trf.xlu0
    %v389 = vpop.trf.xlu0
    %v390 = vpop.trf.xlu0
    %v391 = vpop.trf.xlu0
    %v392 = vpop.trf.xlu0
    %v393 = vpop.trf.xlu0
    %v394 = vpop.trf.xlu0
    %v395 = vpop.trf.xlu0
    %v396 = vpop.trf.xlu0
    %v398 = vsel %vm180, %v381, 0
    %v401 = vsel %vm180, %v382, 0
    %403 = vmatprep.subr.mxu0 0.0
    %404 = vmatpush1.msra.mxu0 %v133
    %405 = vmatprep.subr.mxu0 0.0
    %406 = vmatpush1.msra.mxu0 0.0
    %407 = vmatprep.subr.mxu0 0.0
    %408 = vmatpush1.msra.mxu0 0.0
    %409 = vmatprep.subr.mxu0 0.0
    %410 = vmatpush1.msra.mxu0 0.0
    %411 = vmatprep.subr.mxu0 0.0
    %412 = vmatpush1.msra.mxu0 0.0
    %413 = vmatprep.subr.mxu0 0.0
    %414 = vmatpush1.msra.mxu0 0.0
    %415 = vmatprep.subr.mxu0 0.0
    %416 = vmatpush1.msra.mxu0 0.0
    %417 = vmatprep.subr.mxu0 0.0
    %418 = vmatpush1.msra.mxu0 0.0
    %419 = vmatprep.subr.mxu0 0.0
    %420 = vmatpush1.msra.mxu0 0.0
    %421 = vmatprep.subr.mxu0 0.0
    %422 = vmatpush1.msra.mxu0 0.0
    %423 = vmatprep.subr.mxu0 0.0
    %424 = vmatpush1.msra.mxu0 0.0
    %425 = vmatprep.subr.mxu0 0.0
    %426 = vmatpush1.msra.mxu0 0.0
    %427 = vmatprep.subr.mxu0 0.0
    %428 = vmatpush1.msra.mxu0 0.0
    %429 = vmatprep.subr.mxu0 0.0
    %430 = vmatpush1.msra.mxu0 0.0
    %431 = vmatprep.subr.mxu0 0.0
    %432 = vmatpush1.msra.mxu0 0.0
    %433 = vmatprep.subr.mxu0 0.0
    %434 = vmatpush1.msra.mxu0 0.0
    %435 = vmatprep.subr.mxu0 0.0
    %436 = vmatpush1.msra.mxu0 0.0
    %437 = vmatprep.subr.mxu0 0.0
    %438 = vmatpush1.msra.mxu0 0.0
    %439 = vmatprep.subr.mxu0 0.0
    %440 = vmatpush1.msra.mxu0 0.0
    %441 = vmatprep.subr.mxu0 0.0
    %442 = vmatpush1.msra.mxu0 0.0
    %443 = vmatprep.subr.mxu0 0.0
    %444 = vmatpush1.msra.mxu0 0.0
    %445 = vmatprep.subr.mxu0 0.0
    %446 = vmatpush1.msra.mxu0 0.0
    %447 = vmatprep.subr.mxu0 0.0
    %448 = vmatpush1.msra.mxu0 0.0
    %449 = vmatprep.subr.mxu0 0.0
    %450 = vmatpush1.msra.mxu0 0.0
    %451 = vmatprep.subr.mxu0 0.0
    %452 = vmatpush1.msra.mxu0 0.0
    %453 = vmatprep.subr.mxu0 0.0
    %454 = vmatpush1.msra.mxu0 0.0
    %455 = vmatprep.subr.mxu0 0.0
    %456 = vmatpush1.msra.mxu0 0.0
    %457 = vmatprep.subr.mxu0 0.0
    %458 = vmatpush1.msra.mxu0 0.0
    %459 = vmatprep.subr.mxu0 0.0
    %460 = vmatpush1.msra.mxu0 0.0
    %461 = vmatprep.subr.mxu0 0.0
    %462 = vmatpush1.msra.mxu0 0.0
    %463 = vmatprep.subr.mxu0 0.0
    %464 = vmatpush1.msra.mxu0 0.0
    %465 = vmatprep.subr.mxu0 0.0
    %466 = vmatpush1.msra.mxu0 0.0
    %467 = vmatprep.mubr.f32.mxu0 0.0
    %468 = vmatmul.mubr.f32.gmra.mrb[0].mxu0 %v398
    %v469 = vpop.f32.mrb[0].mxu0
    %v470 = vadd.f32 0.0, %v469
    %v471 = vpop.f32.mrb[0].mxu0
    %472 = vmatprep.mubr.f32.mxu0 0.0
    %473 = vmatmul.mubr.f32.gmra.mrb[0].mxu0 %v401
    %v474 = vpop.f32.mrb[0].mxu0
    %v475 = vadd.f32 0.0, %v474
    %v476 = vpop.f32.mrb[0].mxu0
    %477 = vdwg.mxu0
    %v478 = vsel %vm262, %v470, -inf
    %479 = vmax.xlane.f32.xlu0 %v478
    %v480 = vpop.xlane.xlu0 %479
    %v481 = vsel %vm266, %v475, -inf
    %482 = vmax.xlane.f32.xlu0 %v481
    %v483 = vpop.xlane.xlu0 %482
    %v484 = vsub.f32 %v470, %v480
    %v485 = vsub.f32 %v475, %v483
    %v486 = vmul.f32 %v484, 1.442695
    %v487 = vpow.pop %v486
    %v488 = vmul.f32 %v485, 1.442695
    %v489 = vpow.pop %v488
    %v490 = vsel %vm262, %v487, 0.0
    %491 = vadd.xlane.f32.xlu0 %v490
    %v492 = vpop.xlane.xlu0 %491
    %v493 = vsel %vm266, %v489, 0.0
    %494 = vadd.xlane.f32.xlu0 %v493
    %v495 = vpop.xlane.xlu0 %494
    %v496 = vrcp.pop %v492
    %v497 = vrcp.pop %v495
    %v498 = vmul.f32 %v487, %v496
    %v499 = vmul.f32 %v489, %v497
    %v501 = vsel %vm262, %v143, 0
    %v504 = vsel %vm262, %v498, 0
    %v507 = vsel %vm262, %v499, 0
    %509 = vmatprep.subr.mxu0 0.0
    %510 = vmatpush1.xpose.msra.mxu0 %v504
    %511 = vmatprep.subr.mxu0 0.0
    %512 = vmatpush1.xpose.msra.mxu0 %v507
    %513 = vmatprep.subr.mxu0 0.0
    %514 = vmatpush1.xpose.msra.mxu0 0.0
    %515 = vmatprep.subr.mxu0 0.0
    %516 = vmatpush1.xpose.msra.mxu0 0.0
    %517 = vmatprep.subr.mxu0 0.0
    %518 = vmatpush1.xpose.msra.mxu0 0.0
    %519 = vmatprep.subr.mxu0 0.0
    %520 = vmatpush1.xpose.msra.mxu0 0.0
    %521 = vmatprep.subr.mxu0 0.0
    %522 = vmatpush1.xpose.msra.mxu0 0.0
    %523 = vmatprep.subr.mxu0 0.0
    %524 = vmatpush1.xpose.msra.mxu0 0.0
    %525 = vmatprep.subr.mxu0 0.0
    %526 = vmatpush1.xpose.msra.mxu0 0.0
    %527 = vmatprep.subr.mxu0 0.0
    %528 = vmatpush1.xpose.msra.mxu0 0.0
    %529 = vmatprep.subr.mxu0 0.0
    %530 = vmatpush1.xpose.msra.mxu0 0.0
    %531 = vmatprep.subr.mxu0 0.0
    %532 = vmatpush1.xpose.msra.mxu0 0.0
    %533 = vmatprep.subr.mxu0 0.0
    %534 = vmatpush1.xpose.msra.mxu0 0.0
    %535 = vmatprep.subr.mxu0 0.0
    %536 = vmatpush1.xpose.msra.mxu0 0.0
    %537 = vmatprep.subr.mxu0 0.0
    %538 = vmatpush1.xpose.msra.mxu0 0.0
    %539 = vmatprep.subr.mxu0 0.0
    %540 = vmatpush1.xpose.msra.mxu0 0.0
    %541 = vmatprep.subr.mxu0 0.0
    %542 = vmatpush1.xpose.msra.mxu0 0.0
    %543 = vmatprep.subr.mxu0 0.0
    %544 = vmatpush1.xpose.msra.mxu0 0.0
    %545 = vmatprep.subr.mxu0 0.0
    %546 = vmatpush1.xpose.msra.mxu0 0.0
    %547 = vmatprep.subr.mxu0 0.0
    %548 = vmatpush1.xpose.msra.mxu0 0.0
    %549 = vmatprep.subr.mxu0 0.0
    %550 = vmatpush1.xpose.msra.mxu0 0.0
    %551 = vmatprep.subr.mxu0 0.0
    %552 = vmatpush1.xpose.msra.mxu0 0.0
    %553 = vmatprep.subr.mxu0 0.0
    %554 = vmatpush1.xpose.msra.mxu0 0.0
    %555 = vmatprep.subr.mxu0 0.0
    %556 = vmatpush1.xpose.msra.mxu0 0.0
    %557 = vmatprep.subr.mxu0 0.0
    %558 = vmatpush1.xpose.msra.mxu0 0.0
    %559 = vmatprep.subr.mxu0 0.0
    %560 = vmatpush1.xpose.msra.mxu0 0.0
    %561 = vmatprep.subr.mxu0 0.0
    %562 = vmatpush1.xpose.msra.mxu0 0.0
    %563 = vmatprep.subr.mxu0 0.0
    %564 = vmatpush1.xpose.msra.mxu0 0.0
    %565 = vmatprep.subr.mxu0 0.0
    %566 = vmatpush1.xpose.msra.mxu0 0.0
    %567 = vmatprep.subr.mxu0 0.0
    %568 = vmatpush1.xpose.msra.mxu0 0.0
    %569 = vmatprep.subr.mxu0 0.0
    %570 = vmatpush1.xpose.msra.mxu0 0.0
    %571 = vmatprep.subr.mxu0 0.0
    %572 = vmatpush1.xpose.msra.mxu0 0.0
    %573 = vmatprep.mubr.f32.mxu0 0.0
    %574 = vmatmul.mubr.f32.gmra.mrb[0].mxu0 %v501
    %v575 = vpop.f32.mrb[0].mxu0
    %v576 = vadd.f32 0.0, %v575
    %v577 = vpop.f32.mrb[0].mxu0
    %578 = vdwg.mxu0
    %v579 = vld [vmem:[%s1 + $0x60] sm:$0xff]
    %v580 = vld [vmem:[%s1 + $0x68] sm:$0xff]
    %v581 = vld [vmem:[%s1 + $0x70] sm:$0xff]
    %v582 = vld [vmem:[%s1 + $0x78] sm:$0xff]
    %v584 = vsel %vm32, %v579, 0
    %v587 = vsel %vm32, %v580, 0
    %589 = vmatprep.subr.mxu0 0.0
    %590 = vmatpush1.msra.mxu0 %v362
    %591 = vmatprep.subr.mxu0 0.0
    %592 = vmatpush1.msra.mxu0 %v576
    %593 = vmatprep.subr.mxu0 0.0
    %594 = vmatpush1.msra.mxu0 0.0
    %595 = vmatprep.subr.mxu0 0.0
    %596 = vmatpush1.msra.mxu0 0.0
    %597 = vmatprep.subr.mxu0 0.0
    %598 = vmatpush1.msra.mxu0 0.0
    %599 = vmatprep.subr.mxu0 0.0
    %600 = vmatpush1.msra.mxu0 0.0
    %601 = vmatprep.subr.mxu0 0.0
    %602 = vmatpush1.msra.mxu0 0.0
    %603 = vmatprep.subr.mxu0 0.0
    %604 = vmatpush1.msra.mxu0 0.0
    %605 = vmatprep.subr.mxu0 0.0
    %606 = vmatpush1.msra.mxu0 0.0
    %607 = vmatprep.subr.mxu0 0.0
    %608 = vmatpush1.msra.mxu0 0.0
    %609 = vmatprep.subr.mxu0 0.0
    %610 = vmatpush1.msra.mxu0 0.0
    %611 = vmatprep.subr.mxu0 0.0
    %612 = vmatpush1.msra.mxu0 0.0
    %613 = vmatprep.subr.mxu0 0.0
    %614 = vmatpush1.msra.mxu0 0.0
    %615 = vmatprep.subr.mxu0 0.0
    %616 = vmatpush1.msra.mxu0 0.0
    %617 = vmatprep.subr.mxu0 0.0
    %618 = vmatpush1.msra.mxu0 0.0
    %619 = vmatprep.subr.mxu0 0.0
    %620 = vmatpush1.msra.mxu0 0.0
    %621 = vmatprep.subr.mxu0 0.0
    %622 = vmatpush1.msra.mxu0 0.0
    %623 = vmatprep.subr.mxu0 0.0
    %624 = vmatpush1.msra.mxu0 0.0
    %625 = vmatprep.subr.mxu0 0.0
    %626 = vmatpush1.msra.mxu0 0.0
    %627 = vmatprep.subr.mxu0 0.0
    %628 = vmatpush1.msra.mxu0 0.0
    %629 = vmatprep.subr.mxu0 0.0
    %630 = vmatpush1.msra.mxu0 0.0
    %631 = vmatprep.subr.mxu0 0.0
    %632 = vmatpush1.msra.mxu0 0.0
    %633 = vmatprep.subr.mxu0 0.0
    %634 = vmatpush1.msra.mxu0 0.0
    %635 = vmatprep.subr.mxu0 0.0
    %636 = vmatpush1.msra.mxu0 0.0
    %637 = vmatprep.subr.mxu0 0.0
    %638 = vmatpush1.msra.mxu0 0.0
    %639 = vmatprep.subr.mxu0 0.0
    %640 = vmatpush1.msra.mxu0 0.0
    %641 = vmatprep.subr.mxu0 0.0
    %642 = vmatpush1.msra.mxu0 0.0
    %643 = vmatprep.subr.mxu0 0.0
    %644 = vmatpush1.msra.mxu0 0.0
    %645 = vmatprep.subr.mxu0 0.0
    %646 = vmatpush1.msra.mxu0 0.0
    %647 = vmatprep.subr.mxu0 0.0
    %648 = vmatpush1.msra.mxu0 0.0
    %649 = vmatprep.subr.mxu0 0.0
    %650 = vmatpush1.msra.mxu0 0.0
    %651 = vmatprep.subr.mxu0 0.0
    %652 = vmatpush1.msra.mxu0 0.0
    %653 = vmatprep.mubr.f32.mxu0 0.0
    %654 = vmatmul.mubr.f32.gmra.mrb[0].mxu0 %v584
    %v655 = vpop.f32.mrb[0].mxu0
    %v656 = vadd.f32 %v581, %v655
    %v657 = vpop.f32.mrb[0].mxu0
    %658 = vmatprep.mubr.f32.mxu0 0.0
    %659 = vmatmul.mubr.f32.gmra.mrb[0].mxu0 %v587
    %v660 = vpop.f32.mrb[0].mxu0
    %v661 = vadd.f32 %v582, %v660
    %v662 = vpop.f32.mrb[0].mxu0
    %663 = vdwg.mxu0
    %v664 = vadd.f32 %v656, %v18
    %v665 = vadd.f32 %v661, %v19
    %v666 = vtanh.pop %v664
    %v667 = vtanh.pop %v665
    %v668 = vld [vmem:[%s1 + $0xb0] sm:$0xff]
    %v669 = vld [vmem:[%s1 + $0xb8] sm:$0xf]
    %v670 = vld [vmem:[%s1 + $0x148] sm:$0x1]
    %v671 = vlaneseq
    %v672 = vshrl.u32 %v671, 7
    %v673 = vsub.s32 0, %v672
    %v674 = vrot.slane %v670, %v673
    %v676 = vsel %vm262, %v666, 0
    %v679 = vsel %vm262, %v667, 0
    %vm681 = vcmask 1043456
    %v683 = vsel %vm681, %v669, 0
    %685 = vmatprep.subr.mxu0 0.0
    %686 = vmatpush1.msra.mxu0 %v668
    %687 = vmatprep.subr.mxu0 0.0
    %688 = vmatpush1.msra.mxu0 %v683
    %689 = vmatprep.subr.mxu0 0.0
    %690 = vmatpush1.msra.mxu0 0.0
    %691 = vmatprep.subr.mxu0 0.0
    %692 = vmatpush1.msra.mxu0 0.0
    %693 = vmatprep.subr.mxu0 0.0
    %694 = vmatpush1.msra.mxu0 0.0
    %695 = vmatprep.subr.mxu0 0.0
    %696 = vmatpush1.msra.mxu0 0.0
    %697 = vmatprep.subr.mxu0 0.0
    %698 = vmatpush1.msra.mxu0 0.0
    %699 = vmatprep.subr.mxu0 0.0
    %700 = vmatpush1.msra.mxu0 0.0
    %701 = vmatprep.subr.mxu0 0.0
    %702 = vmatpush1.msra.mxu0 0.0
    %703 = vmatprep.subr.mxu0 0.0
    %704 = vmatpush1.msra.mxu0 0.0
    %705 = vmatprep.subr.mxu0 0.0
    %706 = vmatpush1.msra.mxu0 0.0
    %707 = vmatprep.subr.mxu0 0.0
    %708 = vmatpush1.msra.mxu0 0.0
    %709 = vmatprep.subr.mxu0 0.0
    %710 = vmatpush1.msra.mxu0 0.0
    %711 = vmatprep.subr.mxu0 0.0
    %712 = vmatpush1.msra.mxu0 0.0
    %713 = vmatprep.subr.mxu0 0.0
    %714 = vmatpush1.msra.mxu0 0.0
    %715 = vmatprep.subr.mxu0 0.0
    %716 = vmatpush1.msra.mxu0 0.0
    %717 = vmatprep.subr.mxu0 0.0
    %718 = vmatpush1.msra.mxu0 0.0
    %719 = vmatprep.subr.mxu0 0.0
    %720 = vmatpush1.msra.mxu0 0.0
    %721 = vmatprep.subr.mxu0 0.0
    %722 = vmatpush1.msra.mxu0 0.0
    %723 = vmatprep.subr.mxu0 0.0
    %724 = vmatpush1.msra.mxu0 0.0
    %725 = vmatprep.subr.mxu0 0.0
    %726 = vmatpush1.msra.mxu0 0.0
    %727 = vmatprep.subr.mxu0 0.0
    %728 = vmatpush1.msra.mxu0 0.0
    %729 = vmatprep.subr.mxu0 0.0
    %730 = vmatpush1.msra.mxu0 0.0
    %731 = vmatprep.subr.mxu0 0.0
    %732 = vmatpush1.msra.mxu0 0.0
    %733 = vmatprep.subr.mxu0 0.0
    %734 = vmatpush1.msra.mxu0 0.0
    %735 = vmatprep.subr.mxu0 0.0
    %736 = vmatpush1.msra.mxu0 0.0
    %737 = vmatprep.subr.mxu0 0.0
    %738 = vmatpush1.msra.mxu0 0.0
    %739 = vmatprep.subr.mxu0 0.0
    %740 = vmatpush1.msra.mxu0 0.0
    %741 = vmatprep.subr.mxu0 0.0
    %742 = vmatpush1.msra.mxu0 0.0
    %743 = vmatprep.subr.mxu0 0.0
    %744 = vmatpush1.msra.mxu0 0.0
    %745 = vmatprep.subr.mxu0 0.0
    %746 = vmatpush1.msra.mxu0 0.0
    %747 = vmatprep.subr.mxu0 0.0
    %748 = vmatpush1.msra.mxu0 0.0
    %749 = vmatprep.mubr.f32.mxu0 0.0
    %750 = vmatmul.mubr.f32.gmra.mrb[0].mxu0 %v676
    %v751 = vpop.f32.mrb[0].mxu0
    %v752 = vadd.f32 %v674, %v751
    %v753 = vpop.f32.mrb[0].mxu0
    %754 = vmatprep.mubr.f32.mxu0 0.0
    %755 = vmatmul.mubr.f32.gmra.mrb[0].mxu0 %v679
    %v756 = vpop.f32.mrb[0].mxu0
    %v757 = vadd.f32 %v674, %v756
    %v758 = vpop.f32.mrb[0].mxu0
    %759 = vdwg.mxu0
    %v760 = vmax.f32 %v752, 0.0
    %v761 = vmax.f32 %v757, 0.0
    %v762 = vld [vmem:[%s1 + $0xd0] sm:$0xff]
    %v763 = vld [vmem:[%s1 + $0xd8] sm:$0xff]
    %v764 = vld [vmem:[%s1 + $0xe0] sm:$0xff]
    %v765 = vld [vmem:[%s1 + $0xe8] sm:$0xff]
    %v766 = vld [vmem:[%s1 + $0xf0] sm:$0xff]
    %v767 = vld [vmem:[%s1 + $0xf8] sm:$0xff]
    %v768 = vld [vmem:[%s1 + $0x100] sm:$0xff]
    %v769 = vld [vmem:[%s1 + $0x108] sm:$0xff]
    %v770 = vld [vmem:[%s1 + $0x110] sm:$0xff]
    %v771 = vld [vmem:[%s1 + $0x118] sm:$0xff]
    %v772 = vld [vmem:[%s1 + $0x120] sm:$0xff]
    %v773 = vld [vmem:[%s1 + $0x128] sm:$0xff]
    %v774 = vld [vmem:[%s1 + $0x130] sm:$0xff]
    %v775 = vld [vmem:[%s1 + $0x138] sm:$0xff]
    %v776 = vld [vmem:[%s1 + $0x140] sm:$0xff]
    %v777 = vld [vmem:[%s1 + $0x158] sm:$0x1]
    %v778 = vlaneseq
    %v779 = vshrl.u32 %v778, 7
    %v780 = vsub.s32 0, %v779
    %v781 = vrot.slane %v777, %v780
    %vm782 = vcmask 982016
    %v784 = vsel %vm782, %v760, 0
    %v787 = vsel %vm782, %v761, 0
    %789 = vmatprep.subr.mxu0 0.0
    %790 = vmatpush1.msra.mxu0 %v762
    %791 = vmatprep.subr.mxu0 0.0
    %792 = vmatpush1.msra.mxu0 %v763
    %793 = vmatprep.subr.mxu0 0.0
    %794 = vmatpush1.msra.mxu0 %v764
    %795 = vmatprep.subr.mxu0 0.0
    %796 = vmatpush1.msra.mxu0 %v765
    %797 = vmatprep.subr.mxu0 0.0
    %798 = vmatpush1.msra.mxu0 %v766
    %799 = vmatprep.subr.mxu0 0.0
    %800 = vmatpush1.msra.mxu0 %v767
    %801 = vmatprep.subr.mxu0 0.0
    %802 = vmatpush1.msra.mxu0 %v768
    %803 = vmatprep.subr.mxu0 0.0
    %804 = vmatpush1.msra.mxu0 %v769
    %805 = vmatprep.subr.mxu0 0.0
    %806 = vmatpush1.msra.mxu0 %v770
    %807 = vmatprep.subr.mxu0 0.0
    %808 = vmatpush1.msra.mxu0 %v771
    %809 = vmatprep.subr.mxu0 0.0
    %810 = vmatpush1.msra.mxu0 %v772
    %811 = vmatprep.subr.mxu0 0.0
    %812 = vmatpush1.msra.mxu0 %v773
    %813 = vmatprep.subr.mxu0 0.0
    %814 = vmatpush1.msra.mxu0 %v774
    %815 = vmatprep.subr.mxu0 0.0
    %816 = vmatpush1.msra.mxu0 %v775
    %817 = vmatprep.subr.mxu0 0.0
    %818 = vmatpush1.msra.mxu0 %v776
    %819 = vmatprep.subr.mxu0 0.0
    %820 = vmatpush1.msra.mxu0 0.0
    %821 = vmatprep.subr.mxu0 0.0
    %822 = vmatpush1.msra.mxu0 0.0
    %823 = vmatprep.subr.mxu0 0.0
    %824 = vmatpush1.msra.mxu0 0.0
    %825 = vmatprep.subr.mxu0 0.0
    %826 = vmatpush1.msra.mxu0 0.0
    %827 = vmatprep.subr.mxu0 0.0
    %828 = vmatpush1.msra.mxu0 0.0
    %829 = vmatprep.subr.mxu0 0.0
    %830 = vmatpush1.msra.mxu0 0.0
    %831 = vmatprep.subr.mxu0 0.0
    %832 = vmatpush1.msra.mxu0 0.0
    %833 = vmatprep.subr.mxu0 0.0
    %834 = vmatpush1.msra.mxu0 0.0
    %835 = vmatprep.subr.mxu0 0.0
    %836 = vmatpush1.msra.mxu0 0.0
    %837 = vmatprep.subr.mxu0 0.0
    %838 = vmatpush1.msra.mxu0 0.0
    %839 = vmatprep.subr.mxu0 0.0
    %840 = vmatpush1.msra.mxu0 0.0
    %841 = vmatprep.subr.mxu0 0.0
    %842 = vmatpush1.msra.mxu0 0.0
    %843 = vmatprep.subr.mxu0 0.0
    %844 = vmatpush1.msra.mxu0 0.0
    %845 = vmatprep.subr.mxu0 0.0
    %846 = vmatpush1.msra.mxu0 0.0
    %847 = vmatprep.subr.mxu0 0.0
    %848 = vmatpush1.msra.mxu0 0.0
    %849 = vmatprep.subr.mxu0 0.0
    %850 = vmatpush1.msra.mxu0 0.0
    %851 = vmatprep.subr.mxu0 0.0
    %852 = vmatpush1.msra.mxu0 0.0
    %853 = vmatprep.mubr.f32.mxu0 0.0
    %854 = vmatmul.mubr.f32.gmra.mrb[0].mxu0 %v784
    %v855 = vpop.f32.mrb[0].mxu0
    %v856 = vadd.f32 %v781, %v855
    %v857 = vpop.f32.mrb[0].mxu0
    %858 = vmatprep.mubr.f32.mxu0 0.0
    %859 = vmatmul.mubr.f32.gmra.mrb[0].mxu0 %v787
    %v860 = vpop.f32.mrb[0].mxu0
    %v861 = vadd.f32 %v781, %v860
    %v862 = vpop.f32.mrb[0].mxu0
    %863 = vdwg.mxu0
    %v864 = vmax.f32 %v856, 0.0
    %v865 = vmax.f32 %v861, 0.0
    %v866 = vld [vmem:[%s1 + $0xc0] sm:$0xff]
    %v867 = vld [vmem:[%s1 + $0xc8] sm:$0xf]
    %v868 = vld [vmem:[%s1 + $0x150] sm:$0x1]
    %v869 = vlaneseq
    %v870 = vshrl.u32 %v869, 7
    %v871 = vsub.s32 0, %v870
    %v872 = vrot.slane %v868, %v871
    %v874 = vsel %vm681, %v867, 0
    %876 = vmatprep.subr.mxu0 0.0
    %877 = vmatpush1.msra.mxu0 %v866
    %878 = vmatprep.subr.mxu0 0.0
    %879 = vmatpush1.msra.mxu0 %v874
    %880 = vmatprep.subr.mxu0 0.0
    %881 = vmatpush1.msra.mxu0 0.0
    %882 = vmatprep.subr.mxu0 0.0
    %883 = vmatpush1.msra.mxu0 0.0
    %884 = vmatprep.subr.mxu0 0.0
    %885 = vmatpush1.msra.mxu0 0.0
    %886 = vmatprep.subr.mxu0 0.0
    %887 = vmatpush1.msra.mxu0 0.0
    %888 = vmatprep.subr.mxu0 0.0
    %889 = vmatpush1.msra.mxu0 0.0
    %890 = vmatprep.subr.mxu0 0.0
    %891 = vmatpush1.msra.mxu0 0.0
    %892 = vmatprep.subr.mxu0 0.0
    %893 = vmatpush1.msra.mxu0 0.0
    %894 = vmatprep.subr.mxu0 0.0
    %895 = vmatpush1.msra.mxu0 0.0
    %896 = vmatprep.subr.mxu0 0.0
    %897 = vmatpush1.msra.mxu0 0.0
    %898 = vmatprep.subr.mxu0 0.0
    %899 = vmatpush1.msra.mxu0 0.0
    %900 = vmatprep.subr.mxu0 0.0
    %901 = vmatpush1.msra.mxu0 0.0
    %902 = vmatprep.subr.mxu0 0.0
    %903 = vmatpush1.msra.mxu0 0.0
    %904 = vmatprep.subr.mxu0 0.0
    %905 = vmatpush1.msra.mxu0 0.0
    %906 = vmatprep.subr.mxu0 0.0
    %907 = vmatpush1.msra.mxu0 0.0
    %908 = vmatprep.subr.mxu0 0.0
    %909 = vmatpush1.msra.mxu0 0.0
    %910 = vmatprep.subr.mxu0 0.0
    %911 = vmatpush1.msra.mxu0 0.0
    %912 = vmatprep.subr.mxu0 0.0
    %913 = vmatpush1.msra.mxu0 0.0
    %914 = vmatprep.subr.mxu0 0.0
    %915 = vmatpush1.msra.mxu0 0.0
    %916 = vmatprep.subr.mxu0 0.0
    %917 = vmatpush1.msra.mxu0 0.0
    %918 = vmatprep.subr.mxu0 0.0
    %919 = vmatpush1.msra.mxu0 0.0
    %920 = vmatprep.subr.mxu0 0.0
    %921 = vmatpush1.msra.mxu0 0.0
    %922 = vmatprep.subr.mxu0 0.0
    %923 = vmatpush1.msra.mxu0 0.0
    %924 = vmatprep.subr.mxu0 0.0
    %925 = vmatpush1.msra.mxu0 0.0
    %926 = vmatprep.subr.mxu0 0.0
    %927 = vmatpush1.msra.mxu0 0.0
    %928 = vmatprep.subr.mxu0 0.0
    %929 = vmatpush1.msra.mxu0 0.0
    %930 = vmatprep.subr.mxu0 0.0
    %931 = vmatpush1.msra.mxu0 0.0
    %932 = vmatprep.subr.mxu0 0.0
    %933 = vmatpush1.msra.mxu0 0.0
    %934 = vmatprep.subr.mxu0 0.0
    %935 = vmatpush1.msra.mxu0 0.0
    %936 = vmatprep.subr.mxu0 0.0
    %937 = vmatpush1.msra.mxu0 0.0
    %938 = vmatprep.subr.mxu0 0.0
    %939 = vmatpush1.msra.mxu0 0.0
    %940 = vmatprep.mubr.f32.mxu0 0.0
    %941 = vmatmul.mubr.f32.gmra.mrb[0].mxu0 %v676
    %v942 = vpop.f32.mrb[0].mxu0
    %v943 = vadd.f32 %v872, %v942
    %v944 = vpop.f32.mrb[0].mxu0
    %945 = vmatprep.mubr.f32.mxu0 0.0
    %946 = vmatmul.mubr.f32.gmra.mrb[0].mxu0 %v679
    %v947 = vpop.f32.mrb[0].mxu0
    %v948 = vadd.f32 %v872, %v947
    %v949 = vpop.f32.mrb[0].mxu0
    %950 = vdwg.mxu0
    %v951 = vadd.f32 %v864, %v943
    %v952 = vadd.f32 %v865, %v948
    %v953 = vmax.f32 %v951, 0.0
    %v954 = vmax.f32 %v952, 0.0
    %v955 = vld [vmem:[%s1 + $0x160] sm:$0xff]
    %v956 = vld [vmem:[%s1 + $0x168] sm:$0xff]
    %v957 = vld [vmem:[%s1 + $0x170] sm:$0xff]
    %v958 = vld [vmem:[%s1 + $0x178] sm:$0xff]
    %v959 = vld [vmem:[%s1 + $0x180] sm:$0xff]
    %v960 = vld [vmem:[%s1 + $0x188] sm:$0xff]
    %v961 = vld [vmem:[%s1 + $0x190] sm:$0xff]
    %v962 = vld [vmem:[%s1 + $0x198] sm:$0xff]
    %v963 = vld [vmem:[%s1 + $0x1a0] sm:$0xff]
    %v964 = vld [vmem:[%s1 + $0x1a8] sm:$0xff]
    %v965 = vld [vmem:[%s1 + $0x1b0] sm:$0xff]
    %v966 = vld [vmem:[%s1 + $0x1b8] sm:$0xff]
    %v967 = vld [vmem:[%s1 + $0x1c0] sm:$0xff]
    %v968 = vld [vmem:[%s1 + $0x1c8] sm:$0xff]
    %v969 = vld [vmem:[%s1 + $0x1d0] sm:$0xff]
    %v970 = vld [vmem:[%s1 + $0x1d8] sm:$0x1]
    %v971 = vlaneseq
    %v972 = vshrl.u32 %v971, 7
    %v973 = vsub.s32 0, %v972
    %v974 = vrot.slane %v970, %v973
    %v976 = vsel %vm782, %v953, 0
    %v979 = vsel %vm782, %v954, 0
    %981 = vmatprep.subr.mxu0 0.0
    %982 = vmatpush1.msra.mxu0 %v955
    %983 = vmatprep.subr.mxu0 0.0
    %984 = vmatpush1.msra.mxu0 %v956
    %985 = vmatprep.subr.mxu0 0.0
    %986 = vmatpush1.msra.mxu0 %v957
    %987 = vmatprep.subr.mxu0 0.0
    %988 = vmatpush1.msra.mxu0 %v958
    %989 = vmatprep.subr.mxu0 0.0
    %990 = vmatpush1.msra.mxu0 %v959
    %991 = vmatprep.subr.mxu0 0.0
    %992 = vmatpush1.msra.mxu0 %v960
    %993 = vmatprep.subr.mxu0 0.0
    %994 = vmatpush1.msra.mxu0 %v961
    %995 = vmatprep.subr.mxu0 0.0
    %996 = vmatpush1.msra.mxu0 %v962
    %997 = vmatprep.subr.mxu0 0.0
    %998 = vmatpush1.msra.mxu0 %v963
    %999 = vmatprep.subr.mxu0 0.0
    %1000 = vmatpush1.msra.mxu0 %v964
    %1001 = vmatprep.subr.mxu0 0.0
    %1002 = vmatpush1.msra.mxu0 %v965
    %1003 = vmatprep.subr.mxu0 0.0
    %1004 = vmatpush1.msra.mxu0 %v966
    %1005 = vmatprep.subr.mxu0 0.0
    %1006 = vmatpush1.msra.mxu0 %v967
    %1007 = vmatprep.subr.mxu0 0.0
    %1008 = vmatpush1.msra.mxu0 %v968
    %1009 = vmatprep.subr.mxu0 0.0
    %1010 = vmatpush1.msra.mxu0 %v969
    %1011 = vmatprep.subr.mxu0 0.0
    %1012 = vmatpush1.msra.mxu0 0.0
    %1013 = vmatprep.subr.mxu0 0.0
    %1014 = vmatpush1.msra.mxu0 0.0
    %1015 = vmatprep.subr.mxu0 0.0
    %1016 = vmatpush1.msra.mxu0 0.0
    %1017 = vmatprep.subr.mxu0 0.0
    %1018 = vmatpush1.msra.mxu0 0.0
    %1019 = vmatprep.subr.mxu0 0.0
    %1020 = vmatpush1.msra.mxu0 0.0
    %1021 = vmatprep.subr.mxu0 0.0
    %1022 = vmatpush1.msra.mxu0 0.0
    %1023 = vmatprep.subr.mxu0 0.0
    %1024 = vmatpush1.msra.mxu0 0.0
    %1025 = vmatprep.subr.mxu0 0.0
    %1026 = vmatpush1.msra.mxu0 0.0
    %1027 = vmatprep.subr.mxu0 0.0
    %1028 = vmatpush1.msra.mxu0 0.0
    %1029 = vmatprep.subr.mxu0 0.0
    %1030 = vmatpush1.msra.mxu0 0.0
    %1031 = vmatprep.subr.mxu0 0.0
    %1032 = vmatpush1.msra.mxu0 0.0
    %1033 = vmatprep.subr.mxu0 0.0
    %1034 = vmatpush1.msra.mxu0 0.0
    %1035 = vmatprep.subr.mxu0 0.0
    %1036 = vmatpush1.msra.mxu0 0.0
    %1037 = vmatprep.subr.mxu0 0.0
    %1038 = vmatpush1.msra.mxu0 0.0
    %1039 = vmatprep.subr.mxu0 0.0
    %1040 = vmatpush1.msra.mxu0 0.0
    %1041 = vmatprep.subr.mxu0 0.0
    %1042 = vmatpush1.msra.mxu0 0.0
    %1043 = vmatprep.subr.mxu0 0.0
    %1044 = vmatpush1.msra.mxu0 0.0
    %1045 = vmatprep.mubr.f32.mxu0 0.0
    %1046 = vmatmul.mubr.f32.gmra.mrb[0].mxu0 %v976
    %v1047 = vpop.f32.mrb[0].mxu0
    %v1048 = vadd.f32 %v974, %v1047
    %v1049 = vpop.f32.mrb[0].mxu0
    %1050 = vmatprep.mubr.f32.mxu0 0.0
    %1051 = vmatmul.mubr.f32.gmra.mrb[0].mxu0 %v979
    %v1052 = vpop.f32.mrb[0].mxu0
    %v1053 = vadd.f32 %v974, %v1052
    %v1054 = vpop.f32.mrb[0].mxu0
    %1055 = vdwg.mxu0
    %v1056 = vld [vmem:[%s1 + $0x80] sm:$0xff]
    %v1057 = vld [vmem:[%s1 + $0x88] sm:$0xf]
    %v1058 = vld [vmem:[%s1 + $0x90] sm:$0x1]
    %v1059 = vlaneseq
    %v1060 = vshrl.u32 %v1059, 7
    %v1061 = vsub.s32 0, %v1060
    %v1062 = vrot.slane %v1058, %v1061
    %v1064 = vsel %vm262, %v18, 0
    %v1067 = vsel %vm262, %v19, 0
    %v1070 = vsel %vm681, %v1057, 0
    %1072 = vmatprep.subr.mxu0 0.0
    %1073 = vmatpush1.msra.mxu0 %v1056
    %1074 = vmatprep.subr.mxu0 0.0
    %1075 = vmatpush1.msra.mxu0 %v1070
    %1076 = vmatprep.subr.mxu0 0.0
    %1077 = vmatpush1.msra.mxu0 0.0
    %1078 = vmatprep.subr.mxu0 0.0
    %1079 = vmatpush1.msra.mxu0 0.0
    %1080 = vmatprep.subr.mxu0 0.0
    %1081 = vmatpush1.msra.mxu0 0.0
    %1082 = vmatprep.subr.mxu0 0.0
    %1083 = vmatpush1.msra.mxu0 0.0
    %1084 = vmatprep.subr.mxu0 0.0
    %1085 = vmatpush1.msra.mxu0 0.0
    %1086 = vmatprep.subr.mxu0 0.0
    %1087 = vmatpush1.msra.mxu0 0.0
    %1088 = vmatprep.subr.mxu0 0.0
    %1089 = vmatpush1.msra.mxu0 0.0
    %1090 = vmatprep.subr.mxu0 0.0
    %1091 = vmatpush1.msra.mxu0 0.0
    %1092 = vmatprep.subr.mxu0 0.0
    %1093 = vmatpush1.msra.mxu0 0.0
    %1094 = vmatprep.subr.mxu0 0.0
    %1095 = vmatpush1.msra.mxu0 0.0
    %1096 = vmatprep.subr.mxu0 0.0
    %1097 = vmatpush1.msra.mxu0 0.0
    %1098 = vmatprep.subr.mxu0 0.0
    %1099 = vmatpush1.msra.mxu0 0.0
    %1100 = vmatprep.subr.mxu0 0.0
    %1101 = vmatpush1.msra.mxu0 0.0
    %1102 = vmatprep.subr.mxu0 0.0
    %1103 = vmatpush1.msra.mxu0 0.0
    %1104 = vmatprep.subr.mxu0 0.0
    %1105 = vmatpush1.msra.mxu0 0.0
    %1106 = vmatprep.subr.mxu0 0.0
    %1107 = vmatpush1.msra.mxu0 0.0
    %1108 = vmatprep.subr.mxu0 0.0
    %1109 = vmatpush1.msra.mxu0 0.0
    %1110 = vmatprep.subr.mxu0 0.0
    %1111 = vmatpush1.msra.mxu0 0.0
    %1112 = vmatprep.subr.mxu0 0.0
    %1113 = vmatpush1.msra.mxu0 0.0
    %1114 = vmatprep.subr.mxu0 0.0
    %1115 = vmatpush1.msra.mxu0 0.0
    %1116 = vmatprep.subr.mxu0 0.0
    %1117 = vmatpush1.msra.mxu0 0.0
    %1118 = vmatprep.subr.mxu0 0.0
    %1119 = vmatpush1.msra.mxu0 0.0
    %1120 = vmatprep.subr.mxu0 0.0
    %1121 = vmatpush1.msra.mxu0 0.0
    %1122 = vmatprep.subr.mxu0 0.0
    %1123 = vmatpush1.msra.mxu0 0.0
    %1124 = vmatprep.subr.mxu0 0.0
    %1125 = vmatpush1.msra.mxu0 0.0
    %1126 = vmatprep.subr.mxu0 0.0
    %1127 = vmatpush1.msra.mxu0 0.0
    %1128 = vmatprep.subr.mxu0 0.0
    %1129 = vmatpush1.msra.mxu0 0.0
    %1130 = vmatprep.subr.mxu0 0.0
    %1131 = vmatpush1.msra.mxu0 0.0
    %1132 = vmatprep.subr.mxu0 0.0
    %1133 = vmatpush1.msra.mxu0 0.0
    %1134 = vmatprep.subr.mxu0 0.0
    %1135 = vmatpush1.msra.mxu0 0.0
    %1136 = vmatprep.mubr.f32.mxu0 0.0
    %1137 = vmatmul.mubr.f32.gmra.mrb[0].mxu0 %v1064
    %v1138 = vpop.f32.mrb[0].mxu0
    %v1139 = vadd.f32 %v1062, %v1138
    %v1140 = vpop.f32.mrb[0].mxu0
    %1141 = vmatprep.mubr.f32.mxu0 0.0
    %1142 = vmatmul.mubr.f32.gmra.mrb[0].mxu0 %v1067
    %v1143 = vpop.f32.mrb[0].mxu0
    %v1144 = vadd.f32 %v1062, %v1143
    %v1145 = vpop.f32.mrb[0].mxu0
    %1146 = vdwg.mxu0
    %v1147 = vld [vmem:[%s1 + $0x98] sm:$0xff]
    %v1148 = vld [vmem:[%s1 + $0xa0] sm:$0xf]
    %v1149 = vld [vmem:[%s1 + $0xa8] sm:$0x1]
    %v1150 = vlaneseq
    %v1151 = vshrl.u32 %v1150, 7
    %v1152 = vsub.s32 0, %v1151
    %v1153 = vrot.slane %v1149, %v1152
    %v1155 = vsel %vm681, %v1148, 0
    %1157 = vmatprep.subr.mxu0 0.0
    %1158 = vmatpush1.msra.mxu0 %v1147
    %1159 = vmatprep.subr.mxu0 0.0
    %1160 = vmatpush1.msra.mxu0 %v1155
    %1161 = vmatprep.subr.mxu0 0.0
    %1162 = vmatpush1.msra.mxu0 0.0
    %1163 = vmatprep.subr.mxu0 0.0
    %1164 = vmatpush1.msra.mxu0 0.0
    %1165 = vmatprep.subr.mxu0 0.0
    %1166 = vmatpush1.msra.mxu0 0.0
    %1167 = vmatprep.subr.mxu0 0.0
    %1168 = vmatpush1.msra.mxu0 0.0
    %1169 = vmatprep.subr.mxu0 0.0
    %1170 = vmatpush1.msra.mxu0 0.0
    %1171 = vmatprep.subr.mxu0 0.0
    %1172 = vmatpush1.msra.mxu0 0.0
    %1173 = vmatprep.subr.mxu0 0.0
    %1174 = vmatpush1.msra.mxu0 0.0
    %1175 = vmatprep.subr.mxu0 0.0
    %1176 = vmatpush1.msra.mxu0 0.0
    %1177 = vmatprep.subr.mxu0 0.0
    %1178 = vmatpush1.msra.mxu0 0.0
    %1179 = vmatprep.subr.mxu0 0.0
    %1180 = vmatpush1.msra.mxu0 0.0
    %1181 = vmatprep.subr.mxu0 0.0
    %1182 = vmatpush1.msra.mxu0 0.0
    %1183 = vmatprep.subr.mxu0 0.0
    %1184 = vmatpush1.msra.mxu0 0.0
    %1185 = vmatprep.subr.mxu0 0.0
    %1186 = vmatpush1.msra.mxu0 0.0
    %1187 = vmatprep.subr.mxu0 0.0
    %1188 = vmatpush1.msra.mxu0 0.0
    %1189 = vmatprep.subr.mxu0 0.0
    %1190 = vmatpush1.msra.mxu0 0.0
    %1191 = vmatprep.subr.mxu0 0.0
    %1192 = vmatpush1.msra.mxu0 0.0
    %1193 = vmatprep.subr.mxu0 0.0
    %1194 = vmatpush1.msra.mxu0 0.0
    %1195 = vmatprep.subr.mxu0 0.0
    %1196 = vmatpush1.msra.mxu0 0.0
    %1197 = vmatprep.subr.mxu0 0.0
    %1198 = vmatpush1.msra.mxu0 0.0
    %1199 = vmatprep.subr.mxu0 0.0
    %1200 = vmatpush1.msra.mxu0 0.0
    %1201 = vmatprep.subr.mxu0 0.0
    %1202 = vmatpush1.msra.mxu0 0.0
    %1203 = vmatprep.subr.mxu0 0.0
    %1204 = vmatpush1.msra.mxu0 0.0
    %1205 = vmatprep.subr.mxu0 0.0
    %1206 = vmatpush1.msra.mxu0 0.0
    %1207 = vmatprep.subr.mxu0 0.0
    %1208 = vmatpush1.msra.mxu0 0.0
    %1209 = vmatprep.subr.mxu0 0.0
    %1210 = vmatpush1.msra.mxu0 0.0
    %1211 = vmatprep.subr.mxu0 0.0
    %1212 = vmatpush1.msra.mxu0 0.0
    %1213 = vmatprep.subr.mxu0 0.0
    %1214 = vmatpush1.msra.mxu0 0.0
    %1215 = vmatprep.subr.mxu0 0.0
    %1216 = vmatpush1.msra.mxu0 0.0
    %1217 = vmatprep.subr.mxu0 0.0
    %1218 = vmatpush1.msra.mxu0 0.0
    %1219 = vmatprep.subr.mxu0 0.0
    %1220 = vmatpush1.msra.mxu0 0.0
    %1221 = vmatprep.mubr.f32.mxu0 0.0
    %1222 = vmatmul.mubr.f32.gmra.mrb[0].mxu0 %v1064
    %v1223 = vpop.f32.mrb[0].mxu0
    %v1224 = vadd.f32 %v1153, %v1223
    %v1225 = vpop.f32.mrb[0].mxu0
    %1226 = vmatprep.mubr.f32.mxu0 0.0
    %1227 = vmatmul.mubr.f32.gmra.mrb[0].mxu0 %v1067
    %v1228 = vpop.f32.mrb[0].mxu0
    %v1229 = vadd.f32 %v1153, %v1228
    %v1230 = vpop.f32.mrb[0].mxu0
    %1231 = vdwg.mxu0
    %v1232 = vld [vmem:[%s0 + $0x10] sm:$0xff]
    %v1233 = vld [vmem:[%s0 + $0x18] sm:$0xff]
    %v1234 = vld [vmem:[%s0 + $0x30] sm:$0xff]
    %v1235 = vld [vmem:[%s0 + $0x38] sm:$0xff]
    %v1236 = vld [vmem:[%s2 + $0x100] sm:$0xff]
    %v1237 = vld [vmem:[%s2 + $0x108] sm:$0x1]
    %v1238 = vld [vmem:[%s2] sm:$0xff]
    %v1239 = vld [vmem:[%s2 + $0x8] sm:$0xf]
    %v1241 = vsel %vm262, %v1139, 0
    %v1244 = vsel %vm262, %v1144, 0
    %v1247 = vsel %vm681, %v1239, 0
    %1249 = vmatprep.subr.mxu0 0.0
    %1250 = vmatpush1.msra.mxu0 %v1238
    %1251 = vmatprep.subr.mxu0 0.0
    %1252 = vmatpush1.msra.mxu0 %v1247
    %1253 = vmatprep.subr.mxu0 0.0
    %1254 = vmatpush1.msra.mxu0 0.0
    %1255 = vmatprep.subr.mxu0 0.0
    %1256 = vmatpush1.msra.mxu0 0.0
    %1257 = vmatprep.subr.mxu0 0.0
    %1258 = vmatpush1.msra.mxu0 0.0
    %1259 = vmatprep.subr.mxu0 0.0
    %1260 = vmatpush1.msra.mxu0 0.0
    %1261 = vmatprep.subr.mxu0 0.0
    %1262 = vmatpush1.msra.mxu0 0.0
    %1263 = vmatprep.subr.mxu0 0.0
    %1264 = vmatpush1.msra.mxu0 0.0
    %1265 = vmatprep.subr.mxu0 0.0
    %1266 = vmatpush1.msra.mxu0 0.0
    %1267 = vmatprep.subr.mxu0 0.0
    %1268 = vmatpush1.msra.mxu0 0.0
    %1269 = vmatprep.subr.mxu0 0.0
    %1270 = vmatpush1.msra.mxu0 0.0
    %1271 = vmatprep.subr.mxu0 0.0
    %1272 = vmatpush1.msra.mxu0 0.0
    %1273 = vmatprep.subr.mxu0 0.0
    %1274 = vmatpush1.msra.mxu0 0.0
    %1275 = vmatprep.subr.mxu0 0.0
    %1276 = vmatpush1.msra.mxu0 0.0
    %1277 = vmatprep.subr.mxu0 0.0
    %1278 = vmatpush1.msra.mxu0 0.0
    %1279 = vmatprep.subr.mxu0 0.0
    %1280 = vmatpush1.msra.mxu0 0.0
    %1281 = vmatprep.subr.mxu0 0.0
    %1282 = vmatpush1.msra.mxu0 0.0
    %1283 = vmatprep.subr.mxu0 0.0
    %1284 = vmatpush1.msra.mxu0 0.0
    %1285 = vmatprep.subr.mxu0 0.0
    %1286 = vmatpush1.msra.mxu0 0.0
    %1287 = vmatprep.subr.mxu0 0.0
    %1288 = vmatpush1.msra.mxu0 0.0
    %1289 = vmatprep.subr.mxu0 0.0
    %1290 = vmatpush1.msra.mxu0 0.0
    %1291 = vmatprep.subr.mxu0 0.0
    %1292 = vmatpush1.msra.mxu0 0.0
    %1293 = vmatprep.subr.mxu0 0.0
    %1294 = vmatpush1.msra.mxu0 0.0
    %1295 = vmatprep.subr.mxu0 0.0
    %1296 = vmatpush1.msra.mxu0 0.0
    %1297 = vmatprep.subr.mxu0 0.0
    %1298 = vmatpush1.msra.mxu0 0.0
    %1299 = vmatprep.subr.mxu0 0.0
    %1300 = vmatpush1.msra.mxu0 0.0
    %1301 = vmatprep.subr.mxu0 0.0
    %1302 = vmatpush1.msra.mxu0 0.0
    %1303 = vmatprep.subr.mxu0 0.0
    %1304 = vmatpush1.msra.mxu0 0.0
    %1305 = vmatprep.subr.mxu0 0.0
    %1306 = vmatpush1.msra.mxu0 0.0
    %1307 = vmatprep.subr.mxu0 0.0
    %1308 = vmatpush1.msra.mxu0 0.0
    %1309 = vmatprep.subr.mxu0 0.0
    %1310 = vmatpush1.msra.mxu0 0.0
    %1311 = vmatprep.subr.mxu0 0.0
    %1312 = vmatpush1.msra.mxu0 0.0
    %1313 = vmatprep.mubr.f32.mxu0 0.0
    %1314 = vmatmul.mubr.f32.gmra.mrb[0].mxu0 %v1241
    %v1315 = vpop.f32.mrb[0].mxu0
    %v1316 = vadd.f32 0.0, %v1315
    %v1317 = vpop.f32.mrb[0].mxu0
    %1318 = vmatprep.mubr.f32.mxu0 0.0
    %1319 = vmatmul.mubr.f32.gmra.mrb[0].mxu0 %v1244
    %v1320 = vpop.f32.mrb[0].mxu0
    %v1321 = vadd.f32 0.0, %v1320
    %v1322 = vpop.f32.mrb[0].mxu0
    %1323 = vdwg.mxu0
    %v1324 = vlaneseq
    %v1325 = vshrl.u32 %v1324, 7
    %v1326 = vsub.s32 0, %v1325
    %v1327 = vrot.slane %v1236, %v1326
    %1329 = vrot.lane.b32.xlu0 %v1327, 48
    %v1330 = vpop.permute.xlu0 %1329
    %v1332 = vadd.f32 %v1316, %v1330
    %v1333 = vadd.f32 %v1321, %v1330
    %v1334 = vlaneseq
    %v1335 = vshrl.u32 %v1334, 7
    %v1336 = vsub.s32 5, %v1335
    %v1337 = vrot.slane %v1236, %v1336
    %1340 = vrot.lane.b32.xlu0 %v1316, 64
    %v1341 = vpop.permute.xlu0 %1340
    %1342 = vrot.lane.b32.xlu0 %v1321, 64
    %v1343 = vpop.permute.xlu0 %1342
    %v1347 = vsel %vm32, %v1234, 0
    %v1350 = vsel %vm32, %v1235, 0
    %1352 = vmatprep.subr.mxu0 0.0
    %1353 = vmatpush1.msra.mxu0 %v1341
    %1354 = vmatprep.subr.mxu0 0.0
    %1355 = vmatpush1.msra.mxu0 %v1343
    %1356 = vmatprep.subr.mxu0 0.0
    %1357 = vmatpush1.msra.mxu0 0.0
    %1358 = vmatprep.subr.mxu0 0.0
    %1359 = vmatpush1.msra.mxu0 0.0
    %1360 = vmatprep.subr.mxu0 0.0
    %1361 = vmatpush1.msra.mxu0 0.0
    %1362 = vmatprep.subr.mxu0 0.0
    %1363 = vmatpush1.msra.mxu0 0.0
    %1364 = vmatprep.subr.mxu0 0.0
    %1365 = vmatpush1.msra.mxu0 0.0
    %1366 = vmatprep.subr.mxu0 0.0
    %1367 = vmatpush1.msra.mxu0 0.0
    %1368 = vmatprep.subr.mxu0 0.0
    %1369 = vmatpush1.msra.mxu0 0.0
    %1370 = vmatprep.subr.mxu0 0.0
    %1371 = vmatpush1.msra.mxu0 0.0
    %1372 = vmatprep.subr.mxu0 0.0
    %1373 = vmatpush1.msra.mxu0 0.0
    %1374 = vmatprep.subr.mxu0 0.0
    %1375 = vmatpush1.msra.mxu0 0.0
    %1376 = vmatprep.subr.mxu0 0.0
    %1377 = vmatpush1.msra.mxu0 0.0
    %1378 = vmatprep.subr.mxu0 0.0
    %1379 = vmatpush1.msra.mxu0 0.0
    %1380 = vmatprep.subr.mxu0 0.0
    %1381 = vmatpush1.msra.mxu0 0.0
    %1382 = vmatprep.subr.mxu0 0.0
    %1383 = vmatpush1.msra.mxu0 0.0
    %1384 = vmatprep.subr.mxu0 0.0
    %1385 = vmatpush1.msra.mxu0 0.0
    %1386 = vmatprep.subr.mxu0 0.0
    %1387 = vmatpush1.msra.mxu0 0.0
    %1388 = vmatprep.subr.mxu0 0.0
    %1389 = vmatpush1.msra.mxu0 0.0
    %1390 = vmatprep.subr.mxu0 0.0
    %1391 = vmatpush1.msra.mxu0 0.0
    %1392 = vmatprep.subr.mxu0 0.0
    %1393 = vmatpush1.msra.mxu0 0.0
    %1394 = vmatprep.subr.mxu0 0.0
    %1395 = vmatpush1.msra.mxu0 0.0
    %1396 = vmatprep.subr.mxu0 0.0
    %1397 = vmatpush1.msra.mxu0 0.0
    %1398 = vmatprep.subr.mxu0 0.0
    %1399 = vmatpush1.msra.mxu0 0.0
    %1400 = vmatprep.subr.mxu0 0.0
    %1401 = vmatpush1.msra.mxu0 0.0
    %1402 = vmatprep.subr.mxu0 0.0
    %1403 = vmatpush1.msra.mxu0 0.0
    %1404 = vmatprep.subr.mxu0 0.0
    %1405 = vmatpush1.msra.mxu0 0.0
    %1406 = vmatprep.subr.mxu0 0.0
    %1407 = vmatpush1.msra.mxu0 0.0
    %1408 = vmatprep.subr.mxu0 0.0
    %1409 = vmatpush1.msra.mxu0 0.0
    %1410 = vmatprep.subr.mxu0 0.0
    %1411 = vmatpush1.msra.mxu0 0.0
    %1412 = vmatprep.subr.mxu0 0.0
    %1413 = vmatpush1.msra.mxu0 0.0
    %1414 = vmatprep.subr.mxu0 0.0
    %1415 = vmatpush1.msra.mxu0 0.0
    %1416 = vmatprep.mubr.f32.mxu0 0.0
    %1417 = vmatmul.mubr.f32.gmra.mrb[0].mxu0 %v1347
    %v1418 = vpop.f32.mrb[0].mxu0
    %v1419 = vadd.f32 %v1337, %v1418
    %v1420 = vpop.f32.mrb[0].mxu0
    %1421 = vmatprep.mubr.f32.mxu0 0.0
    %1422 = vmatmul.mubr.f32.gmra.mrb[0].mxu0 %v1350
    %v1423 = vpop.f32.mrb[0].mxu0
    %v1424 = vadd.f32 %v1337, %v1423
    %v1425 = vpop.f32.mrb[0].mxu0
    %1426 = vdwg.mxu0
    %v1427 = vld [vmem:[%s2 + $0x40] sm:$0xff]
    %v1428 = vld [vmem:[%s2 + $0x48] sm:$0xff]
    %v1429 = vld [vmem:[%s2 + $0x50] sm:$0xff]
    %v1430 = vld [vmem:[%s2 + $0x58] sm:$0xff]
    %v1431 = vld [vmem:[%s2 + $0x60] sm:$0xff]
    %v1432 = vld [vmem:[%s2 + $0x68] sm:$0xff]
    %vm1433 = vcmask 392192
    %v1434 = vsel %vm1433, %v1316, 0
    %v1436 = vsel %vm1433, %v1321, 0
    %1438 = vmatprep.subr.mxu0 0.0
    %1439 = vmatpush1.msra.mxu0 %v1427
    %1440 = vmatprep.subr.mxu0 0.0
    %1441 = vmatpush1.msra.mxu0 %v1428
    %1442 = vmatprep.subr.mxu0 0.0
    %1443 = vmatpush1.msra.mxu0 %v1429
    %1444 = vmatprep.subr.mxu0 0.0
    %1445 = vmatpush1.msra.mxu0 %v1430
    %1446 = vmatprep.subr.mxu0 0.0
    %1447 = vmatpush1.msra.mxu0 %v1431
    %1448 = vmatprep.subr.mxu0 0.0
    %1449 = vmatpush1.msra.mxu0 %v1432
    %1450 = vmatprep.subr.mxu0 0.0
    %1451 = vmatpush1.msra.mxu0 0.0
    %1452 = vmatprep.subr.mxu0 0.0
    %1453 = vmatpush1.msra.mxu0 0.0
    %1454 = vmatprep.subr.mxu0 0.0
    %1455 = vmatpush1.msra.mxu0 0.0
    %1456 = vmatprep.subr.mxu0 0.0
    %1457 = vmatpush1.msra.mxu0 0.0
    %1458 = vmatprep.subr.mxu0 0.0
    %1459 = vmatpush1.msra.mxu0 0.0
    %1460 = vmatprep.subr.mxu0 0.0
    %1461 = vmatpush1.msra.mxu0 0.0
    %1462 = vmatprep.subr.mxu0 0.0
    %1463 = vmatpush1.msra.mxu0 0.0
    %1464 = vmatprep.subr.mxu0 0.0
    %1465 = vmatpush1.msra.mxu0 0.0
    %1466 = vmatprep.subr.mxu0 0.0
    %1467 = vmatpush1.msra.mxu0 0.0
    %1468 = vmatprep.subr.mxu0 0.0
    %1469 = vmatpush1.msra.mxu0 0.0
    %1470 = vmatprep.subr.mxu0 0.0
    %1471 = vmatpush1.msra.mxu0 0.0
    %1472 = vmatprep.subr.mxu0 0.0
    %1473 = vmatpush1.msra.mxu0 0.0
    %1474 = vmatprep.subr.mxu0 0.0
    %1475 = vmatpush1.msra.mxu0 0.0
    %1476 = vmatprep.subr.mxu0 0.0
    %1477 = vmatpush1.msra.mxu0 0.0
    %1478 = vmatprep.subr.mxu0 0.0
    %1479 = vmatpush1.msra.mxu0 0.0
    %1480 = vmatprep.subr.mxu0 0.0
    %1481 = vmatpush1.msra.mxu0 0.0
    %1482 = vmatprep.subr.mxu0 0.0
    %1483 = vmatpush1.msra.mxu0 0.0
    %1484 = vmatprep.subr.mxu0 0.0
    %1485 = vmatpush1.msra.mxu0 0.0
    %1486 = vmatprep.subr.mxu0 0.0
    %1487 = vmatpush1.msra.mxu0 0.0
    %1488 = vmatprep.subr.mxu0 0.0
    %1489 = vmatpush1.msra.mxu0 0.0
    %1490 = vmatprep.subr.mxu0 0.0
    %1491 = vmatpush1.msra.mxu0 0.0
    %1492 = vmatprep.subr.mxu0 0.0
    %1493 = vmatpush1.msra.mxu0 0.0
    %1494 = vmatprep.subr.mxu0 0.0
    %1495 = vmatpush1.msra.mxu0 0.0
    %1496 = vmatprep.subr.mxu0 0.0
    %1497 = vmatpush1.msra.mxu0 0.0
    %1498 = vmatprep.subr.mxu0 0.0
    %1499 = vmatpush1.msra.mxu0 0.0
    %1500 = vmatprep.subr.mxu0 0.0
    %1501 = vmatpush1.msra.mxu0 0.0
    %1502 = vmatprep.mubr.f32.mxu0 0.0
    %1503 = vmatmul.mubr.f32.gmra.mrb[0].mxu0 %v1434
    %v1504 = vpop.f32.mrb[0].mxu0
    %v1505 = vadd.f32 0.0, %v1504
    %v1506 = vpop.f32.mrb[0].mxu0
    %1507 = vmatprep.mubr.f32.mxu0 0.0
    %1508 = vmatmul.mubr.f32.gmra.mrb[0].mxu0 %v1436
    %v1509 = vpop.f32.mrb[0].mxu0
    %v1510 = vadd.f32 0.0, %v1509
    %v1511 = vpop.f32.mrb[0].mxu0
    %1512 = vdwg.mxu0
    %v1513 = vld [vmem:[%s2 + $0x70] sm:$0x7]
    %v1515 = vsel %vm1433, %v1513, 0
    %1517 = vmatprep.subr.mxu0 0.0
    %1518 = vmatpush1.xpose.msra.mxu0 %v1434
    %1519 = vmatprep.subr.mxu0 0.0
    %1520 = vmatpush1.xpose.msra.mxu0 %v1436
    %1521 = vmatprep.subr.mxu0 0.0
    %1522 = vmatpush1.xpose.msra.mxu0 0.0
    %1523 = vmatprep.subr.mxu0 0.0
    %1524 = vmatpush1.xpose.msra.mxu0 0.0
    %1525 = vmatprep.subr.mxu0 0.0
    %1526 = vmatpush1.xpose.msra.mxu0 0.0
    %1527 = vmatprep.subr.mxu0 0.0
    %1528 = vmatpush1.xpose.msra.mxu0 0.0
    %1529 = vmatprep.subr.mxu0 0.0
    %1530 = vmatpush1.xpose.msra.mxu0 0.0
    %1531 = vmatprep.subr.mxu0 0.0
    %1532 = vmatpush1.xpose.msra.mxu0 0.0
    %1533 = vmatprep.subr.mxu0 0.0
    %1534 = vmatpush1.xpose.msra.mxu0 0.0
    %1535 = vmatprep.subr.mxu0 0.0
    %1536 = vmatpush1.xpose.msra.mxu0 0.0
    %1537 = vmatprep.subr.mxu0 0.0
    %1538 = vmatpush1.xpose.msra.mxu0 0.0
    %1539 = vmatprep.subr.mxu0 0.0
    %1540 = vmatpush1.xpose.msra.mxu0 0.0
    %1541 = vmatprep.subr.mxu0 0.0
    %1542 = vmatpush1.xpose.msra.mxu0 0.0
    %1543 = vmatprep.subr.mxu0 0.0
    %1544 = vmatpush1.xpose.msra.mxu0 0.0
    %1545 = vmatprep.subr.mxu0 0.0
    %1546 = vmatpush1.xpose.msra.mxu0 0.0
    %1547 = vmatprep.subr.mxu0 0.0
    %1548 = vmatpush1.xpose.msra.mxu0 0.0
    %1549 = vmatprep.subr.mxu0 0.0
    %1550 = vmatpush1.xpose.msra.mxu0 0.0
    %1551 = vmatprep.subr.mxu0 0.0
    %1552 = vmatpush1.xpose.msra.mxu0 0.0
    %1553 = vmatprep.subr.mxu0 0.0
    %1554 = vmatpush1.xpose.msra.mxu0 0.0
    %1555 = vmatprep.subr.mxu0 0.0
    %1556 = vmatpush1.xpose.msra.mxu0 0.0
    %1557 = vmatprep.subr.mxu0 0.0
    %1558 = vmatpush1.xpose.msra.mxu0 0.0
    %1559 = vmatprep.subr.mxu0 0.0
    %1560 = vmatpush1.xpose.msra.mxu0 0.0
    %1561 = vmatprep.subr.mxu0 0.0
    %1562 = vmatpush1.xpose.msra.mxu0 0.0
    %1563 = vmatprep.subr.mxu0 0.0
    %1564 = vmatpush1.xpose.msra.mxu0 0.0
    %1565 = vmatprep.subr.mxu0 0.0
    %1566 = vmatpush1.xpose.msra.mxu0 0.0
    %1567 = vmatprep.subr.mxu0 0.0
    %1568 = vmatpush1.xpose.msra.mxu0 0.0
    %1569 = vmatprep.subr.mxu0 0.0
    %1570 = vmatpush1.xpose.msra.mxu0 0.0
    %1571 = vmatprep.subr.mxu0 0.0
    %1572 = vmatpush1.xpose.msra.mxu0 0.0
    %1573 = vmatprep.subr.mxu0 0.0
    %1574 = vmatpush1.xpose.msra.mxu0 0.0
    %1575 = vmatprep.subr.mxu0 0.0
    %1576 = vmatpush1.xpose.msra.mxu0 0.0
    %1577 = vmatprep.subr.mxu0 0.0
    %1578 = vmatpush1.xpose.msra.mxu0 0.0
    %1579 = vmatprep.subr.mxu0 0.0
    %1580 = vmatpush1.xpose.msra.mxu0 0.0
    %1581 = vmatprep.mubr.f32.mxu0 0.0
    %1582 = vmatmul.mubr.f32.gmra.mrb[0].mxu0 %v1515
    %v1583 = vpop.f32.mrb[0].mxu0
    %v1584 = vadd.f32 0.0, %v1583
    %v1585 = vpop.f32.mrb[0].mxu0
    %1586 = vdwg.mxu0
    %1588 = vset.pattern.permute.xlu0 0
    %1589 = vperm.xlu0 %1588, %v1505
    %v1590 = vpop.permute.xlu0 %1589
    %1593 = vset.pattern.permute.xlu0 0
    %1594 = vperm.xlu0 %1593, %v1510
    %v1595 = vpop.permute.xlu0 %1594
    %v1597 = vlaneseq
    %v1598 = vshrl.u32 %v1597, 7
    %v1599 = vsub.s32 0, %v1598
    %v1600 = vrot.slane %v1584, %v1599
    %v1601 = vadd.f32 %v1590, %v1600
    %v1602 = vadd.f32 %v1595, %v1600
    %vm1603 = vcmp.ge.f32.partialorder %v1601, 0.0
    %vm1604 = vcmp.ge.f32.partialorder %v1602, 0.0
    %v1605 = vmul.f32 %v1601, 0.2
    %v1606 = vmul.f32 %v1602, 0.2
    %v1607 = vsel %vm1603, %v1601, %v1605
    %v1608 = vsel %vm1604, %v1602, %v1606
    %v1609 = vadd.f32 %v1607, %v1232
    %v1610 = vadd.f32 %v1608, %v1233
    %v1611 = vsel %vm32, %v1609, -inf
    %1612 = vmax.xlane.f32.xlu0 %v1611
    %v1613 = vpop.xlane.xlu0 %1612
    %v1614 = vsel %vm32, %v1610, -inf
    %1615 = vmax.xlane.f32.xlu0 %v1614
    %v1616 = vpop.xlane.xlu0 %1615
    %v1617 = vsub.f32 %v1609, %v1613
    %v1618 = vsub.f32 %v1610, %v1616
    %v1619 = vmul.f32 %v1617, 1.442695
    %v1620 = vpow.pop %v1619
    %v1621 = vmul.f32 %v1618, 1.442695
    %v1622 = vpow.pop %v1621
    %v1623 = vsel %vm32, %v1620, 0.0
    %1624 = vadd.xlane.f32.xlu0 %v1623
    %v1625 = vpop.xlane.xlu0 %1624
    %v1626 = vsel %vm32, %v1622, 0.0
    %1627 = vadd.xlane.f32.xlu0 %v1626
    %v1628 = vpop.xlane.xlu0 %1627
    %v1629 = vrcp.pop %v1625
    %v1630 = vrcp.pop %v1628
    %v1631 = vmul.f32 %v1620, %v1629
    %v1632 = vmul.f32 %v1622, %v1630
    %1633 = vset.pattern.permute.xlu0 1
    %1634 = vperm.xlu0 %1633, %v1505
    %v1635 = vpop.permute.xlu0 %1634
    %1637 = vset.pattern.permute.xlu0 1
    %1638 = vperm.xlu0 %1637, %v1510
    %v1639 = vpop.permute.xlu0 %1638
    %v1641 = vlaneseq
    %v1642 = vshrl.u32 %v1641, 7
    %v1643 = vsub.s32 1, %v1642
    %v1644 = vrot.slane %v1584, %v1643
    %v1645 = vadd.f32 %v1635, %v1644
    %v1646 = vadd.f32 %v1639, %v1644
    %vm1647 = vcmp.ge.f32.partialorder %v1645, 0.0
    %vm1648 = vcmp.ge.f32.partialorder %v1646, 0.0
    %v1649 = vmul.f32 %v1645, 0.2
    %v1650 = vmul.f32 %v1646, 0.2
    %v1651 = vsel %vm1647, %v1645, %v1649
    %v1652 = vsel %vm1648, %v1646, %v1650
    %v1653 = vadd.f32 %v1651, %v1232
    %v1654 = vadd.f32 %v1652, %v1233
    %v1655 = vsel %vm32, %v1653, -inf
    %1656 = vmax.xlane.f32.xlu0 %v1655
    %v1657 = vpop.xlane.xlu0 %1656
    %v1658 = vsel %vm32, %v1654, -inf
    %1659 = vmax.xlane.f32.xlu0 %v1658
    %v1660 = vpop.xlane.xlu0 %1659
    %v1661 = vsub.f32 %v1653, %v1657
    %v1662 = vsub.f32 %v1654, %v1660
    %v1663 = vmul.f32 %v1661, 1.442695
    %v1664 = vpow.pop %v1663
    %v1665 = vmul.f32 %v1662, 1.442695
    %v1666 = vpow.pop %v1665
    %v1667 = vsel %vm32, %v1664, 0.0
    %1668 = vadd.xlane.f32.xlu0 %v1667
    %v1669 = vpop.xlane.xlu0 %1668
    %v1670 = vsel %vm32, %v1666, 0.0
    %1671 = vadd.xlane.f32.xlu0 %v1670
    %v1672 = vpop.xlane.xlu0 %1671
    %v1673 = vrcp.pop %v1669
    %v1674 = vrcp.pop %v1672
    %v1675 = vmul.f32 %v1664, %v1673
    %v1676 = vmul.f32 %v1666, %v1674
    %1677 = vrot.lane.b32.xlu0 %v1316, 112
    %v1678 = vpop.permute.xlu0 %1677
    %1679 = vrot.lane.b32.xlu0 %v1321, 112
    %v1680 = vpop.permute.xlu0 %1679
    %v1684 = vsel %vm32, %v1675, 0
    %v1687 = vsel %vm32, %v1676, 0
    %1689 = vmatprep.subr.mxu0 0.0
    %1690 = vmatpush1.msra.mxu0 %v1678
    %1691 = vmatprep.subr.mxu0 0.0
    %1692 = vmatpush1.msra.mxu0 %v1680
    %1693 = vmatprep.subr.mxu0 0.0
    %1694 = vmatpush1.msra.mxu0 0.0
    %1695 = vmatprep.subr.mxu0 0.0
    %1696 = vmatpush1.msra.mxu0 0.0
    %1697 = vmatprep.subr.mxu0 0.0
    %1698 = vmatpush1.msra.mxu0 0.0
    %1699 = vmatprep.subr.mxu0 0.0
    %1700 = vmatpush1.msra.mxu0 0.0
    %1701 = vmatprep.subr.mxu0 0.0
    %1702 = vmatpush1.msra.mxu0 0.0
    %1703 = vmatprep.subr.mxu0 0.0
    %1704 = vmatpush1.msra.mxu0 0.0
    %1705 = vmatprep.subr.mxu0 0.0
    %1706 = vmatpush1.msra.mxu0 0.0
    %1707 = vmatprep.subr.mxu0 0.0
    %1708 = vmatpush1.msra.mxu0 0.0
    %1709 = vmatprep.subr.mxu0 0.0
    %1710 = vmatpush1.msra.mxu0 0.0
    %1711 = vmatprep.subr.mxu0 0.0
    %1712 = vmatpush1.msra.mxu0 0.0
    %1713 = vmatprep.subr.mxu0 0.0
    %1714 = vmatpush1.msra.mxu0 0.0
    %1715 = vmatprep.subr.mxu0 0.0
    %1716 = vmatpush1.msra.mxu0 0.0
    %1717 = vmatprep.subr.mxu0 0.0
    %1718 = vmatpush1.msra.mxu0 0.0
    %1719 = vmatprep.subr.mxu0 0.0
    %1720 = vmatpush1.msra.mxu0 0.0
    %1721 = vmatprep.subr.mxu0 0.0
    %1722 = vmatpush1.msra.mxu0 0.0
    %1723 = vmatprep.subr.mxu0 0.0
    %1724 = vmatpush1.msra.mxu0 0.0
    %1725 = vmatprep.subr.mxu0 0.0
    %1726 = vmatpush1.msra.mxu0 0.0
    %1727 = vmatprep.subr.mxu0 0.0
    %1728 = vmatpush1.msra.mxu0 0.0
    %1729 = vmatprep.subr.mxu0 0.0
    %1730 = vmatpush1.msra.mxu0 0.0
    %1731 = vmatprep.subr.mxu0 0.0
    %1732 = vmatpush1.msra.mxu0 0.0
    %1733 = vmatprep.subr.mxu0 0.0
    %1734 = vmatpush1.msra.mxu0 0.0
    %1735 = vmatprep.subr.mxu0 0.0
    %1736 = vmatpush1.msra.mxu0 0.0
    %1737 = vmatprep.subr.mxu0 0.0
    %1738 = vmatpush1.msra.mxu0 0.0
    %1739 = vmatprep.subr.mxu0 0.0
    %1740 = vmatpush1.msra.mxu0 0.0
    %1741 = vmatprep.subr.mxu0 0.0
    %1742 = vmatpush1.msra.mxu0 0.0
    %1743 = vmatprep.subr.mxu0 0.0
    %1744 = vmatpush1.msra.mxu0 0.0
    %1745 = vmatprep.subr.mxu0 0.0
    %1746 = vmatpush1.msra.mxu0 0.0
    %1747 = vmatprep.subr.mxu0 0.0
    %1748 = vmatpush1.msra.mxu0 0.0
    %1749 = vmatprep.subr.mxu0 0.0
    %1750 = vmatpush1.msra.mxu0 0.0
    %1751 = vmatprep.subr.mxu0 0.0
    %1752 = vmatpush1.msra.mxu0 0.0
    %1753 = vmatprep.mubr.f32.mxu0 0.0
    %1754 = vmatmul.mubr.f32.gmra.mrb[0].mxu0 %v1684
    %v1755 = vpop.f32.mrb[0].mxu0
    %v1756 = vadd.f32 0.0, %v1755
    %v1757 = vpop.f32.mrb[0].mxu0
    %1758 = vmatprep.mubr.f32.mxu0 0.0
    %1759 = vmatmul.mubr.f32.gmra.mrb[0].mxu0 %v1687
    %v1760 = vpop.f32.mrb[0].mxu0
    %v1761 = vadd.f32 0.0, %v1760
    %v1762 = vpop.f32.mrb[0].mxu0
    %1763 = vdwg.mxu0
    %v1765 = vsel %vm32, %v1631, 0
    %v1768 = vsel %vm32, %v1632, 0
    %1770 = vmatprep.subr.mxu0 0.0
    %1771 = vmatpush1.msra.mxu0 %v1316
    %1772 = vmatprep.subr.mxu0 0.0
    %1773 = vmatpush1.msra.mxu0 %v1321
    %1774 = vmatprep.subr.mxu0 0.0
    %1775 = vmatpush1.msra.mxu0 0.0
    %1776 = vmatprep.subr.mxu0 0.0
    %1777 = vmatpush1.msra.mxu0 0.0
    %1778 = vmatprep.subr.mxu0 0.0
    %1779 = vmatpush1.msra.mxu0 0.0
    %1780 = vmatprep.subr.mxu0 0.0
    %1781 = vmatpush1.msra.mxu0 0.0
    %1782 = vmatprep.subr.mxu0 0.0
    %1783 = vmatpush1.msra.mxu0 0.0
    %1784 = vmatprep.subr.mxu0 0.0
    %1785 = vmatpush1.msra.mxu0 0.0
    %1786 = vmatprep.subr.mxu0 0.0
    %1787 = vmatpush1.msra.mxu0 0.0
    %1788 = vmatprep.subr.mxu0 0.0
    %1789 = vmatpush1.msra.mxu0 0.0
    %1790 = vmatprep.subr.mxu0 0.0
    %1791 = vmatpush1.msra.mxu0 0.0
    %1792 = vmatprep.subr.mxu0 0.0
    %1793 = vmatpush1.msra.mxu0 0.0
    %1794 = vmatprep.subr.mxu0 0.0
    %1795 = vmatpush1.msra.mxu0 0.0
    %1796 = vmatprep.subr.mxu0 0.0
    %1797 = vmatpush1.msra.mxu0 0.0
    %1798 = vmatprep.subr.mxu0 0.0
    %1799 = vmatpush1.msra.mxu0 0.0
    %1800 = vmatprep.subr.mxu0 0.0
    %1801 = vmatpush1.msra.mxu0 0.0
    %1802 = vmatprep.subr.mxu0 0.0
    %1803 = vmatpush1.msra.mxu0 0.0
    %1804 = vmatprep.subr.mxu0 0.0
    %1805 = vmatpush1.msra.mxu0 0.0
    %1806 = vmatprep.subr.mxu0 0.0
    %1807 = vmatpush1.msra.mxu0 0.0
    %1808 = vmatprep.subr.mxu0 0.0
    %1809 = vmatpush1.msra.mxu0 0.0
    %1810 = vmatprep.subr.mxu0 0.0
    %1811 = vmatpush1.msra.mxu0 0.0
    %1812 = vmatprep.subr.mxu0 0.0
    %1813 = vmatpush1.msra.mxu0 0.0
    %1814 = vmatprep.subr.mxu0 0.0
    %1815 = vmatpush1.msra.mxu0 0.0
    %1816 = vmatprep.subr.mxu0 0.0
    %1817 = vmatpush1.msra.mxu0 0.0
    %1818 = vmatprep.subr.mxu0 0.0
    %1819 = vmatpush1.msra.mxu0 0.0
    %1820 = vmatprep.subr.mxu0 0.0
    %1821 = vmatpush1.msra.mxu0 0.0
    %1822 = vmatprep.subr.mxu0 0.0
    %1823 = vmatpush1.msra.mxu0 0.0
    %1824 = vmatprep.subr.mxu0 0.0
    %1825 = vmatpush1.msra.mxu0 0.0
    %1826 = vmatprep.subr.mxu0 0.0
    %1827 = vmatpush1.msra.mxu0 0.0
    %1828 = vmatprep.subr.mxu0 0.0
    %1829 = vmatpush1.msra.mxu0 0.0
    %1830 = vmatprep.subr.mxu0 0.0
    %1831 = vmatpush1.msra.mxu0 0.0
    %1832 = vmatprep.subr.mxu0 0.0
    %1833 = vmatpush1.msra.mxu0 0.0
    %1834 = vmatprep.mubr.f32.mxu0 0.0
    %1835 = vmatmul.mubr.f32.gmra.mrb[0].mxu0 %v1765
    %v1836 = vpop.f32.mrb[0].mxu0
    %v1837 = vadd.f32 %v1756, %v1836
    %v1838 = vpop.f32.mrb[0].mxu0
    %1839 = vmatprep.mubr.f32.mxu0 0.0
    %1840 = vmatmul.mubr.f32.gmra.mrb[0].mxu0 %v1768
    %v1841 = vpop.f32.mrb[0].mxu0
    %v1842 = vadd.f32 %v1761, %v1841
    %v1843 = vpop.f32.mrb[0].mxu0
    %1844 = vdwg.mxu0
    %1845 = vset.pattern.permute.xlu0 2
    %1846 = vperm.xlu0 %1845, %v1505
    %v1847 = vpop.permute.xlu0 %1846
    %1849 = vset.pattern.permute.xlu0 2
    %1850 = vperm.xlu0 %1849, %v1510
    %v1851 = vpop.permute.xlu0 %1850
    %v1853 = vlaneseq
    %v1854 = vshrl.u32 %v1853, 7
    %v1855 = vsub.s32 2, %v1854
    %v1856 = vrot.slane %v1584, %v1855
    %v1857 = vadd.f32 %v1847, %v1856
    %v1858 = vadd.f32 %v1851, %v1856
    %vm1859 = vcmp.ge.f32.partialorder %v1857, 0.0
    %vm1860 = vcmp.ge.f32.partialorder %v1858, 0.0
    %v1861 = vmul.f32 %v1857, 0.2
    %v1862 = vmul.f32 %v1858, 0.2
    %v1863 = vsel %vm1859, %v1857, %v1861
    %v1864 = vsel %vm1860, %v1858, %v1862
    %v1865 = vadd.f32 %v1863, %v1232
    %v1866 = vadd.f32 %v1864, %v1233
    %v1867 = vsel %vm32, %v1865, -inf
    %1868 = vmax.xlane.f32.xlu0 %v1867
    %v1869 = vpop.xlane.xlu0 %1868
    %v1870 = vsel %vm32, %v1866, -inf
    %1871 = vmax.xlane.f32.xlu0 %v1870
    %v1872 = vpop.xlane.xlu0 %1871
    %v1873 = vsub.f32 %v1865, %v1869
    %v1874 = vsub.f32 %v1866, %v1872
    %v1875 = vmul.f32 %v1873, 1.442695
    %v1876 = vpow.pop %v1875
    %v1877 = vmul.f32 %v1874, 1.442695
    %v1878 = vpow.pop %v1877
    %v1879 = vsel %vm32, %v1876, 0.0
    %1880 = vadd.xlane.f32.xlu0 %v1879
    %v1881 = vpop.xlane.xlu0 %1880
    %v1882 = vsel %vm32, %v1878, 0.0
    %1883 = vadd.xlane.f32.xlu0 %v1882
    %v1884 = vpop.xlane.xlu0 %1883
    %v1885 = vrcp.pop %v1881
    %v1886 = vrcp.pop %v1884
    %v1887 = vmul.f32 %v1876, %v1885
    %v1888 = vmul.f32 %v1878, %v1886
    %1889 = vrot.lane.b32.xlu0 %v1316, 96
    %v1890 = vpop.permute.xlu0 %1889
    %1891 = vrot.lane.b32.xlu0 %v1321, 96
    %v1892 = vpop.permute.xlu0 %1891
    %v1896 = vsel %vm32, %v1887, 0
    %v1899 = vsel %vm32, %v1888, 0
    %1901 = vmatprep.subr.mxu0 0.0
    %1902 = vmatpush1.msra.mxu0 %v1890
    %1903 = vmatprep.subr.mxu0 0.0
    %1904 = vmatpush1.msra.mxu0 %v1892
    %1905 = vmatprep.subr.mxu0 0.0
    %1906 = vmatpush1.msra.mxu0 0.0
    %1907 = vmatprep.subr.mxu0 0.0
    %1908 = vmatpush1.msra.mxu0 0.0
    %1909 = vmatprep.subr.mxu0 0.0
    %1910 = vmatpush1.msra.mxu0 0.0
    %1911 = vmatprep.subr.mxu0 0.0
    %1912 = vmatpush1.msra.mxu0 0.0
    %1913 = vmatprep.subr.mxu0 0.0
    %1914 = vmatpush1.msra.mxu0 0.0
    %1915 = vmatprep.subr.mxu0 0.0
    %1916 = vmatpush1.msra.mxu0 0.0
    %1917 = vmatprep.subr.mxu0 0.0
    %1918 = vmatpush1.msra.mxu0 0.0
    %1919 = vmatprep.subr.mxu0 0.0
    %1920 = vmatpush1.msra.mxu0 0.0
    %1921 = vmatprep.subr.mxu0 0.0
    %1922 = vmatpush1.msra.mxu0 0.0
    %1923 = vmatprep.subr.mxu0 0.0
    %1924 = vmatpush1.msra.mxu0 0.0
    %1925 = vmatprep.subr.mxu0 0.0
    %1926 = vmatpush1.msra.mxu0 0.0
    %1927 = vmatprep.subr.mxu0 0.0
    %1928 = vmatpush1.msra.mxu0 0.0
    %1929 = vmatprep.subr.mxu0 0.0
    %1930 = vmatpush1.msra.mxu0 0.0
    %1931 = vmatprep.subr.mxu0 0.0
    %1932 = vmatpush1.msra.mxu0 0.0
    %1933 = vmatprep.subr.mxu0 0.0
    %1934 = vmatpush1.msra.mxu0 0.0
    %1935 = vmatprep.subr.mxu0 0.0
    %1936 = vmatpush1.msra.mxu0 0.0
    %1937 = vmatprep.subr.mxu0 0.0
    %1938 = vmatpush1.msra.mxu0 0.0
    %1939 = vmatprep.subr.mxu0 0.0
    %1940 = vmatpush1.msra.mxu0 0.0
    %1941 = vmatprep.subr.mxu0 0.0
    %1942 = vmatpush1.msra.mxu0 0.0
    %1943 = vmatprep.subr.mxu0 0.0
    %1944 = vmatpush1.msra.mxu0 0.0
    %1945 = vmatprep.subr.mxu0 0.0
    %1946 = vmatpush1.msra.mxu0 0.0
    %1947 = vmatprep.subr.mxu0 0.0
    %1948 = vmatpush1.msra.mxu0 0.0
    %1949 = vmatprep.subr.mxu0 0.0
    %1950 = vmatpush1.msra.mxu0 0.0
    %1951 = vmatprep.subr.mxu0 0.0
    %1952 = vmatpush1.msra.mxu0 0.0
    %1953 = vmatprep.subr.mxu0 0.0
    %1954 = vmatpush1.msra.mxu0 0.0
    %1955 = vmatprep.subr.mxu0 0.0
    %1956 = vmatpush1.msra.mxu0 0.0
    %1957 = vmatprep.subr.mxu0 0.0
    %1958 = vmatpush1.msra.mxu0 0.0
    %1959 = vmatprep.subr.mxu0 0.0
    %1960 = vmatpush1.msra.mxu0 0.0
    %1961 = vmatprep.subr.mxu0 0.0
    %1962 = vmatpush1.msra.mxu0 0.0
    %1963 = vmatprep.subr.mxu0 0.0
    %1964 = vmatpush1.msra.mxu0 0.0
    %1965 = vmatprep.mubr.f32.mxu0 0.0
    %1966 = vmatmul.mubr.f32.gmra.mrb[0].mxu0 %v1896
    %v1967 = vpop.f32.mrb[0].mxu0
    %v1968 = vadd.f32 0.0, %v1967
    %v1969 = vpop.f32.mrb[0].mxu0
    %1970 = vmatprep.mubr.f32.mxu0 0.0
    %1971 = vmatmul.mubr.f32.gmra.mrb[0].mxu0 %v1899
    %v1972 = vpop.f32.mrb[0].mxu0
    %v1973 = vadd.f32 0.0, %v1972
    %v1974 = vpop.f32.mrb[0].mxu0
    %1975 = vdwg.mxu0
    %v1976 = vadd.f32 %v1837, %v1968
    %v1977 = vadd.f32 %v1842, %v1973
    %v1978 = vmul.f32 %v1976, 0.33333334
    %v1979 = vmul.f32 %v1977, 0.33333334
    %v1980 = vlaneseq
    %v1981 = vshrl.u32 %v1980, 7
    %v1982 = vsub.s32 1, %v1981
    %v1983 = vrot.slane %v1236, %v1982
    %v1984 = vadd.f32 %v1978, %v1983
    %v1985 = vadd.f32 %v1979, %v1983
    %v1986 = vtanh.pop %v1984
    %v1987 = vtanh.pop %v1985
    %v1988 = vxor.u32 %v1419, 2147483648
    %v1989 = vxor.u32 %v1424, 2147483648
    %v1990 = vmul.f32 %v1988, 1.442695
    %v1991 = vpow.pop %v1990
    %v1992 = vmul.f32 %v1989, 1.442695
    %v1993 = vpow.pop %v1992
    %v1994 = vadd.f32 %v1991, 1.0
    %v1995 = vadd.f32 %v1993, 1.0
    %v1996 = vrcp.pop %v1994
    %v1997 = vmul.f32 1.0, %v1996
    %v1998 = vrcp.pop %v1995
    %v1999 = vmul.f32 1.0, %v1998
    %v2000 = vmul.f32 %v1986, %v1997
    %v2001 = vmul.f32 %v1987, %v1999
    %v2002 = vsub.f32 1.0, %v1997
    %v2003 = vsub.f32 1.0, %v1999
    %2006 = vrot.lane.b32.xlu0 %v2002, 48
    %v2007 = vpop.permute.xlu0 %2006
    %2008 = vrot.lane.b32.xlu0 %v2003, 48
    %v2009 = vpop.permute.xlu0 %2008
    %v2012 = vmul.f32 %v1332, %v2007
    %v2013 = vmul.f32 %v1333, %v2009
    %2016 = vrot.lane.b32.xlu0 %v2012, 80
    %v2017 = vpop.permute.xlu0 %2016
    %2018 = vrot.lane.b32.xlu0 %v2013, 80
    %v2019 = vpop.permute.xlu0 %2018
    %v2022 = vadd.f32 %v2000, %v2017
    %v2023 = vadd.f32 %v2001, %v2019
    %v2024 = vtanh.pop %v2022
    %v2025 = vtanh.pop %v2023
    %v2026 = vld [vmem:[%s2 + $0x10] sm:$0xff]
    %v2027 = vld [vmem:[%s2 + $0x18] sm:$0xff]
    %v2029 = vsel %vm32, %v2024, 0
    %v2032 = vsel %vm32, %v2025, 0
    %2034 = vmatprep.subr.mxu0 0.0
    %2035 = vmatpush1.msra.mxu0 %v2026
    %2036 = vmatprep.subr.mxu0 0.0
    %2037 = vmatpush1.msra.mxu0 %v2027
    %2038 = vmatprep.subr.mxu0 0.0
    %2039 = vmatpush1.msra.mxu0 0.0
    %2040 = vmatprep.subr.mxu0 0.0
    %2041 = vmatpush1.msra.mxu0 0.0
    %2042 = vmatprep.subr.mxu0 0.0
    %2043 = vmatpush1.msra.mxu0 0.0
    %2044 = vmatprep.subr.mxu0 0.0
    %2045 = vmatpush1.msra.mxu0 0.0
    %2046 = vmatprep.subr.mxu0 0.0
    %2047 = vmatpush1.msra.mxu0 0.0
    %2048 = vmatprep.subr.mxu0 0.0
    %2049 = vmatpush1.msra.mxu0 0.0
    %2050 = vmatprep.subr.mxu0 0.0
    %2051 = vmatpush1.msra.mxu0 0.0
    %2052 = vmatprep.subr.mxu0 0.0
    %2053 = vmatpush1.msra.mxu0 0.0
    %2054 = vmatprep.subr.mxu0 0.0
    %2055 = vmatpush1.msra.mxu0 0.0
    %2056 = vmatprep.subr.mxu0 0.0
    %2057 = vmatpush1.msra.mxu0 0.0
    %2058 = vmatprep.subr.mxu0 0.0
    %2059 = vmatpush1.msra.mxu0 0.0
    %2060 = vmatprep.subr.mxu0 0.0
    %2061 = vmatpush1.msra.mxu0 0.0
    %2062 = vmatprep.subr.mxu0 0.0
    %2063 = vmatpush1.msra.mxu0 0.0
    %2064 = vmatprep.subr.mxu0 0.0
    %2065 = vmatpush1.msra.mxu0 0.0
    %2066 = vmatprep.subr.mxu0 0.0
    %2067 = vmatpush1.msra.mxu0 0.0
    %2068 = vmatprep.subr.mxu0 0.0
    %2069 = vmatpush1.msra.mxu0 0.0
    %2070 = vmatprep.subr.mxu0 0.0
    %2071 = vmatpush1.msra.mxu0 0.0
    %2072 = vmatprep.subr.mxu0 0.0
    %2073 = vmatpush1.msra.mxu0 0.0
    %2074 = vmatprep.subr.mxu0 0.0
    %2075 = vmatpush1.msra.mxu0 0.0
    %2076 = vmatprep.subr.mxu0 0.0
    %2077 = vmatpush1.msra.mxu0 0.0
    %2078 = vmatprep.subr.mxu0 0.0
    %2079 = vmatpush1.msra.mxu0 0.0
    %2080 = vmatprep.subr.mxu0 0.0
    %2081 = vmatpush1.msra.mxu0 0.0
    %2082 = vmatprep.subr.mxu0 0.0
    %2083 = vmatpush1.msra.mxu0 0.0
    %2084 = vmatprep.subr.mxu0 0.0
    %2085 = vmatpush1.msra.mxu0 0.0
    %2086 = vmatprep.subr.mxu0 0.0
    %2087 = vmatpush1.msra.mxu0 0.0
    %2088 = vmatprep.subr.mxu0 0.0
    %2089 = vmatpush1.msra.mxu0 0.0
    %2090 = vmatprep.subr.mxu0 0.0
    %2091 = vmatpush1.msra.mxu0 0.0
    %2092 = vmatprep.subr.mxu0 0.0
    %2093 = vmatpush1.msra.mxu0 0.0
    %2094 = vmatprep.subr.mxu0 0.0
    %2095 = vmatpush1.msra.mxu0 0.0
    %2096 = vmatprep.subr.mxu0 0.0
    %2097 = vmatpush1.msra.mxu0 0.0
    %2098 = vmatprep.mubr.f32.mxu0 0.0
    %2099 = vmatmul.mubr.f32.gmra.mrb[0].mxu0 %v2029
    %v2100 = vpop.f32.mrb[0].mxu0
    %v2101 = vadd.f32 0.0, %v2100
    %v2102 = vpop.f32.mrb[0].mxu0
    %2103 = vmatprep.mubr.f32.mxu0 0.0
    %2104 = vmatmul.mubr.f32.gmra.mrb[0].mxu0 %v2032
    %v2105 = vpop.f32.mrb[0].mxu0
    %v2106 = vadd.f32 0.0, %v2105
    %v2107 = vpop.f32.mrb[0].mxu0
    %2108 = vdwg.mxu0
    %v2109 = vlaneseq
    %v2110 = vshrl.u32 %v2109, 7
    %v2111 = vsub.s32 6, %v2110
    %v2112 = vrot.slane %v1236, %v2111
    %2115 = vrot.lane.b32.xlu0 %v2101, 80
    %v2116 = vpop.permute.xlu0 %2115
    %2117 = vrot.lane.b32.xlu0 %v2106, 80
    %v2118 = vpop.permute.xlu0 %2117
    %2121 = vmatprep.subr.mxu0 0.0
    %2122 = vmatpush1.msra.mxu0 %v2116
    %2123 = vmatprep.subr.mxu0 0.0
    %2124 = vmatpush1.msra.mxu0 %v2118
    %2125 = vmatprep.subr.mxu0 0.0
    %2126 = vmatpush1.msra.mxu0 0.0
    %2127 = vmatprep.subr.mxu0 0.0
    %2128 = vmatpush1.msra.mxu0 0.0
    %2129 = vmatprep.subr.mxu0 0.0
    %2130 = vmatpush1.msra.mxu0 0.0
    %2131 = vmatprep.subr.mxu0 0.0
    %2132 = vmatpush1.msra.mxu0 0.0
    %2133 = vmatprep.subr.mxu0 0.0
    %2134 = vmatpush1.msra.mxu0 0.0
    %2135 = vmatprep.subr.mxu0 0.0
    %2136 = vmatpush1.msra.mxu0 0.0
    %2137 = vmatprep.subr.mxu0 0.0
    %2138 = vmatpush1.msra.mxu0 0.0
    %2139 = vmatprep.subr.mxu0 0.0
    %2140 = vmatpush1.msra.mxu0 0.0
    %2141 = vmatprep.subr.mxu0 0.0
    %2142 = vmatpush1.msra.mxu0 0.0
    %2143 = vmatprep.subr.mxu0 0.0
    %2144 = vmatpush1.msra.mxu0 0.0
    %2145 = vmatprep.subr.mxu0 0.0
    %2146 = vmatpush1.msra.mxu0 0.0
    %2147 = vmatprep.subr.mxu0 0.0
    %2148 = vmatpush1.msra.mxu0 0.0
    %2149 = vmatprep.subr.mxu0 0.0
    %2150 = vmatpush1.msra.mxu0 0.0
    %2151 = vmatprep.subr.mxu0 0.0
    %2152 = vmatpush1.msra.mxu0 0.0
    %2153 = vmatprep.subr.mxu0 0.0
    %2154 = vmatpush1.msra.mxu0 0.0
    %2155 = vmatprep.subr.mxu0 0.0
    %2156 = vmatpush1.msra.mxu0 0.0
    %2157 = vmatprep.subr.mxu0 0.0
    %2158 = vmatpush1.msra.mxu0 0.0
    %2159 = vmatprep.subr.mxu0 0.0
    %2160 = vmatpush1.msra.mxu0 0.0
    %2161 = vmatprep.subr.mxu0 0.0
    %2162 = vmatpush1.msra.mxu0 0.0
    %2163 = vmatprep.subr.mxu0 0.0
    %2164 = vmatpush1.msra.mxu0 0.0
    %2165 = vmatprep.subr.mxu0 0.0
    %2166 = vmatpush1.msra.mxu0 0.0
    %2167 = vmatprep.subr.mxu0 0.0
    %2168 = vmatpush1.msra.mxu0 0.0
    %2169 = vmatprep.subr.mxu0 0.0
    %2170 = vmatpush1.msra.mxu0 0.0
    %2171 = vmatprep.subr.mxu0 0.0
    %2172 = vmatpush1.msra.mxu0 0.0
    %2173 = vmatprep.subr.mxu0 0.0
    %2174 = vmatpush1.msra.mxu0 0.0
    %2175 = vmatprep.subr.mxu0 0.0
    %2176 = vmatpush1.msra.mxu0 0.0
    %2177 = vmatprep.subr.mxu0 0.0
    %2178 = vmatpush1.msra.mxu0 0.0
    %2179 = vmatprep.subr.mxu0 0.0
    %2180 = vmatpush1.msra.mxu0 0.0
    %2181 = vmatprep.subr.mxu0 0.0
    %2182 = vmatpush1.msra.mxu0 0.0
    %2183 = vmatprep.subr.mxu0 0.0
    %2184 = vmatpush1.msra.mxu0 0.0
    %2185 = vmatprep.mubr.f32.mxu0 0.0
    %2186 = vmatmul.mubr.f32.gmra.mrb[0].mxu0 %v1347
    %v2187 = vpop.f32.mrb[0].mxu0
    %v2188 = vadd.f32 %v2112, %v2187
    %v2189 = vpop.f32.mrb[0].mxu0
    %2190 = vmatprep.mubr.f32.mxu0 0.0
    %2191 = vmatmul.mubr.f32.gmra.mrb[0].mxu0 %v1350
    %v2192 = vpop.f32.mrb[0].mxu0
    %v2193 = vadd.f32 %v2112, %v2192
    %v2194 = vpop.f32.mrb[0].mxu0
    %2195 = vdwg.mxu0
    %v2196 = vld [vmem:[%s2 + $0x78] sm:$0xff]
    %v2197 = vld [vmem:[%s2 + $0x80] sm:$0xff]
    %v2198 = vld [vmem:[%s2 + $0x88] sm:$0xff]
    %v2199 = vld [vmem:[%s2 + $0x90] sm:$0xff]
    %v2200 = vld [vmem:[%s2 + $0x98] sm:$0xff]
    %v2201 = vld [vmem:[%s2 + $0xa0] sm:$0xff]
    %v2202 = vsel %vm1433, %v2101, 0
    %v2204 = vsel %vm1433, %v2106, 0
    %2206 = vmatprep.subr.mxu0 0.0
    %2207 = vmatpush1.msra.mxu0 %v2196
    %2208 = vmatprep.subr.mxu0 0.0
    %2209 = vmatpush1.msra.mxu0 %v2197
    %2210 = vmatprep.subr.mxu0 0.0
    %2211 = vmatpush1.msra.mxu0 %v2198
    %2212 = vmatprep.subr.mxu0 0.0
    %2213 = vmatpush1.msra.mxu0 %v2199
    %2214 = vmatprep.subr.mxu0 0.0
    %2215 = vmatpush1.msra.mxu0 %v2200
    %2216 = vmatprep.subr.mxu0 0.0
    %2217 = vmatpush1.msra.mxu0 %v2201
    %2218 = vmatprep.subr.mxu0 0.0
    %2219 = vmatpush1.msra.mxu0 0.0
    %2220 = vmatprep.subr.mxu0 0.0
    %2221 = vmatpush1.msra.mxu0 0.0
    %2222 = vmatprep.subr.mxu0 0.0
    %2223 = vmatpush1.msra.mxu0 0.0
    %2224 = vmatprep.subr.mxu0 0.0
    %2225 = vmatpush1.msra.mxu0 0.0
    %2226 = vmatprep.subr.mxu0 0.0
    %2227 = vmatpush1.msra.mxu0 0.0
    %2228 = vmatprep.subr.mxu0 0.0
    %2229 = vmatpush1.msra.mxu0 0.0
    %2230 = vmatprep.subr.mxu0 0.0
    %2231 = vmatpush1.msra.mxu0 0.0
    %2232 = vmatprep.subr.mxu0 0.0
    %2233 = vmatpush1.msra.mxu0 0.0
    %2234 = vmatprep.subr.mxu0 0.0
    %2235 = vmatpush1.msra.mxu0 0.0
    %2236 = vmatprep.subr.mxu0 0.0
    %2237 = vmatpush1.msra.mxu0 0.0
    %2238 = vmatprep.subr.mxu0 0.0
    %2239 = vmatpush1.msra.mxu0 0.0
    %2240 = vmatprep.subr.mxu0 0.0
    %2241 = vmatpush1.msra.mxu0 0.0
    %2242 = vmatprep.subr.mxu0 0.0
    %2243 = vmatpush1.msra.mxu0 0.0
    %2244 = vmatprep.subr.mxu0 0.0
    %2245 = vmatpush1.msra.mxu0 0.0
    %2246 = vmatprep.subr.mxu0 0.0
    %2247 = vmatpush1.msra.mxu0 0.0
    %2248 = vmatprep.subr.mxu0 0.0
    %2249 = vmatpush1.msra.mxu0 0.0
    %2250 = vmatprep.subr.mxu0 0.0
    %2251 = vmatpush1.msra.mxu0 0.0
    %2252 = vmatprep.subr.mxu0 0.0
    %2253 = vmatpush1.msra.mxu0 0.0
    %2254 = vmatprep.subr.mxu0 0.0
    %2255 = vmatpush1.msra.mxu0 0.0
    %2256 = vmatprep.subr.mxu0 0.0
    %2257 = vmatpush1.msra.mxu0 0.0
    %2258 = vmatprep.subr.mxu0 0.0
    %2259 = vmatpush1.msra.mxu0 0.0
    %2260 = vmatprep.subr.mxu0 0.0
    %2261 = vmatpush1.msra.mxu0 0.0
    %2262 = vmatprep.subr.mxu0 0.0
    %2263 = vmatpush1.msra.mxu0 0.0
    %2264 = vmatprep.subr.mxu0 0.0
    %2265 = vmatpush1.msra.mxu0 0.0
    %2266 = vmatprep.subr.mxu0 0.0
    %2267 = vmatpush1.msra.mxu0 0.0
    %2268 = vmatprep.subr.mxu0 0.0
    %2269 = vmatpush1.msra.mxu0 0.0
    %2270 = vmatprep.mubr.f32.mxu0 0.0
    %2271 = vmatmul.mubr.f32.gmra.mrb[0].mxu0 %v2202
    %v2272 = vpop.f32.mrb[0].mxu0
    %v2273 = vadd.f32 0.0, %v2272
    %v2274 = vpop.f32.mrb[0].mxu0
    %2275 = vmatprep.mubr.f32.mxu0 0.0
    %2276 = vmatmul.mubr.f32.gmra.mrb[0].mxu0 %v2204
    %v2277 = vpop.f32.mrb[0].mxu0
    %v2278 = vadd.f32 0.0, %v2277
    %v2279 = vpop.f32.mrb[0].mxu0
    %2280 = vdwg.mxu0
    %v2281 = vld [vmem:[%s2 + $0xa8] sm:$0x7]
    %v2283 = vsel %vm1433, %v2281, 0
    %2285 = vmatprep.subr.mxu0 0.0
    %2286 = vmatpush1.xpose.msra.mxu0 %v2202
    %2287 = vmatprep.subr.mxu0 0.0
    %2288 = vmatpush1.xpose.msra.mxu0 %v2204
    %2289 = vmatprep.subr.mxu0 0.0
    %2290 = vmatpush1.xpose.msra.mxu0 0.0
    %2291 = vmatprep.subr.mxu0 0.0
    %2292 = vmatpush1.xpose.msra.mxu0 0.0
    %2293 = vmatprep.subr.mxu0 0.0
    %2294 = vmatpush1.xpose.msra.mxu0 0.0
    %2295 = vmatprep.subr.mxu0 0.0
    %2296 = vmatpush1.xpose.msra.mxu0 0.0
    %2297 = vmatprep.subr.mxu0 0.0
    %2298 = vmatpush1.xpose.msra.mxu0 0.0
    %2299 = vmatprep.subr.mxu0 0.0
    %2300 = vmatpush1.xpose.msra.mxu0 0.0
    %2301 = vmatprep.subr.mxu0 0.0
    %2302 = vmatpush1.xpose.msra.mxu0 0.0
    %2303 = vmatprep.subr.mxu0 0.0
    %2304 = vmatpush1.xpose.msra.mxu0 0.0
    %2305 = vmatprep.subr.mxu0 0.0
    %2306 = vmatpush1.xpose.msra.mxu0 0.0
    %2307 = vmatprep.subr.mxu0 0.0
    %2308 = vmatpush1.xpose.msra.mxu0 0.0
    %2309 = vmatprep.subr.mxu0 0.0
    %2310 = vmatpush1.xpose.msra.mxu0 0.0
    %2311 = vmatprep.subr.mxu0 0.0
    %2312 = vmatpush1.xpose.msra.mxu0 0.0
    %2313 = vmatprep.subr.mxu0 0.0
    %2314 = vmatpush1.xpose.msra.mxu0 0.0
    %2315 = vmatprep.subr.mxu0 0.0
    %2316 = vmatpush1.xpose.msra.mxu0 0.0
    %2317 = vmatprep.subr.mxu0 0.0
    %2318 = vmatpush1.xpose.msra.mxu0 0.0
    %2319 = vmatprep.subr.mxu0 0.0
    %2320 = vmatpush1.xpose.msra.mxu0 0.0
    %2321 = vmatprep.subr.mxu0 0.0
    %2322 = vmatpush1.xpose.msra.mxu0 0.0
    %2323 = vmatprep.subr.mxu0 0.0
    %2324 = vmatpush1.xpose.msra.mxu0 0.0
    %2325 = vmatprep.subr.mxu0 0.0
    %2326 = vmatpush1.xpose.msra.mxu0 0.0
    %2327 = vmatprep.subr.mxu0 0.0
    %2328 = vmatpush1.xpose.msra.mxu0 0.0
    %2329 = vmatprep.subr.mxu0 0.0
    %2330 = vmatpush1.xpose.msra.mxu0 0.0
    %2331 = vmatprep.subr.mxu0 0.0
    %2332 = vmatpush1.xpose.msra.mxu0 0.0
    %2333 = vmatprep.subr.mxu0 0.0
    %2334 = vmatpush1.xpose.msra.mxu0 0.0
    %2335 = vmatprep.subr.mxu0 0.0
    %2336 = vmatpush1.xpose.msra.mxu0 0.0
    %2337 = vmatprep.subr.mxu0 0.0
    %2338 = vmatpush1.xpose.msra.mxu0 0.0
    %2339 = vmatprep.subr.mxu0 0.0
    %2340 = vmatpush1.xpose.msra.mxu0 0.0
    %2341 = vmatprep.subr.mxu0 0.0
    %2342 = vmatpush1.xpose.msra.mxu0 0.0
    %2343 = vmatprep.subr.mxu0 0.0
    %2344 = vmatpush1.xpose.msra.mxu0 0.0
    %2345 = vmatprep.subr.mxu0 0.0
    %2346 = vmatpush1.xpose.msra.mxu0 0.0
    %2347 = vmatprep.subr.mxu0 0.0
    %2348 = vmatpush1.xpose.msra.mxu0 0.0
    %2349 = vmatprep.mubr.f32.mxu0 0.0
    %2350 = vmatmul.mubr.f32.gmra.mrb[0].mxu0 %v2283
    %v2351 = vpop.f32.mrb[0].mxu0
    %v2352 = vadd.f32 0.0, %v2351
    %v2353 = vpop.f32.mrb[0].mxu0
    %2354 = vdwg.mxu0
    %2356 = vset.pattern.permute.xlu0 0
    %2357 = vperm.xlu0 %2356, %v2273
    %v2358 = vpop.permute.xlu0 %2357
    %2361 = vset.pattern.permute.xlu0 0
    %2362 = vperm.xlu0 %2361, %v2278
    %v2363 = vpop.permute.xlu0 %2362
    %v2365 = vlaneseq
    %v2366 = vshrl.u32 %v2365, 7
    %v2367 = vsub.s32 0, %v2366
    %v2368 = vrot.slane %v2352, %v2367
    %v2369 = vadd.f32 %v2358, %v2368
    %v2370 = vadd.f32 %v2363, %v2368
    %vm2371 = vcmp.ge.f32.partialorder %v2369, 0.0
    %vm2372 = vcmp.ge.f32.partialorder %v2370, 0.0
    %v2373 = vmul.f32 %v2369, 0.2
    %v2374 = vmul.f32 %v2370, 0.2
    %v2375 = vsel %vm2371, %v2369, %v2373
    %v2376 = vsel %vm2372, %v2370, %v2374
    %v2377 = vadd.f32 %v2375, %v1232
    %v2378 = vadd.f32 %v2376, %v1233
    %v2379 = vsel %vm32, %v2377, -inf
    %2380 = vmax.xlane.f32.xlu0 %v2379
    %v2381 = vpop.xlane.xlu0 %2380
    %v2382 = vsel %vm32, %v2378, -inf
    %2383 = vmax.xlane.f32.xlu0 %v2382
    %v2384 = vpop.xlane.xlu0 %2383
    %v2385 = vsub.f32 %v2377, %v2381
    %v2386 = vsub.f32 %v2378, %v2384
    %v2387 = vmul.f32 %v2385, 1.442695
    %v2388 = vpow.pop %v2387
    %v2389 = vmul.f32 %v2386, 1.442695
    %v2390 = vpow.pop %v2389
    %v2391 = vsel %vm32, %v2388, 0.0
    %2392 = vadd.xlane.f32.xlu0 %v2391
    %v2393 = vpop.xlane.xlu0 %2392
    %v2394 = vsel %vm32, %v2390, 0.0
    %2395 = vadd.xlane.f32.xlu0 %v2394
    %v2396 = vpop.xlane.xlu0 %2395
    %v2397 = vrcp.pop %v2393
    %v2398 = vrcp.pop %v2396
    %v2399 = vmul.f32 %v2388, %v2397
    %v2400 = vmul.f32 %v2390, %v2398
    %2401 = vset.pattern.permute.xlu0 1
    %2402 = vperm.xlu0 %2401, %v2273
    %v2403 = vpop.permute.xlu0 %2402
    %2405 = vset.pattern.permute.xlu0 1
    %2406 = vperm.xlu0 %2405, %v2278
    %v2407 = vpop.permute.xlu0 %2406
    %v2409 = vlaneseq
    %v2410 = vshrl.u32 %v2409, 7
    %v2411 = vsub.s32 1, %v2410
    %v2412 = vrot.slane %v2352, %v2411
    %v2413 = vadd.f32 %v2403, %v2412
    %v2414 = vadd.f32 %v2407, %v2412
    %vm2415 = vcmp.ge.f32.partialorder %v2413, 0.0
    %vm2416 = vcmp.ge.f32.partialorder %v2414, 0.0
    %v2417 = vmul.f32 %v2413, 0.2
    %v2418 = vmul.f32 %v2414, 0.2
    %v2419 = vsel %vm2415, %v2413, %v2417
    %v2420 = vsel %vm2416, %v2414, %v2418
    %v2421 = vadd.f32 %v2419, %v1232
    %v2422 = vadd.f32 %v2420, %v1233
    %v2423 = vsel %vm32, %v2421, -inf
    %2424 = vmax.xlane.f32.xlu0 %v2423
    %v2425 = vpop.xlane.xlu0 %2424
    %v2426 = vsel %vm32, %v2422, -inf
    %2427 = vmax.xlane.f32.xlu0 %v2426
    %v2428 = vpop.xlane.xlu0 %2427
    %v2429 = vsub.f32 %v2421, %v2425
    %v2430 = vsub.f32 %v2422, %v2428
    %v2431 = vmul.f32 %v2429, 1.442695
    %v2432 = vpow.pop %v2431
    %v2433 = vmul.f32 %v2430, 1.442695
    %v2434 = vpow.pop %v2433
    %v2435 = vsel %vm32, %v2432, 0.0
    %2436 = vadd.xlane.f32.xlu0 %v2435
    %v2437 = vpop.xlane.xlu0 %2436
    %v2438 = vsel %vm32, %v2434, 0.0
    %2439 = vadd.xlane.f32.xlu0 %v2438
    %v2440 = vpop.xlane.xlu0 %2439
    %v2441 = vrcp.pop %v2437
    %v2442 = vrcp.pop %v2440
    %v2443 = vmul.f32 %v2432, %v2441
    %v2444 = vmul.f32 %v2434, %v2442
    %2445 = vrot.lane.b32.xlu0 %v2101, 112
    %v2446 = vpop.permute.xlu0 %2445
    %2447 = vrot.lane.b32.xlu0 %v2106, 112
    %v2448 = vpop.permute.xlu0 %2447
    %v2452 = vsel %vm32, %v2443, 0
    %v2455 = vsel %vm32, %v2444, 0
    %2457 = vmatprep.subr.mxu0 0.0
    %2458 = vmatpush1.msra.mxu0 %v2446
    %2459 = vmatprep.subr.mxu0 0.0
    %2460 = vmatpush1.msra.mxu0 %v2448
    %2461 = vmatprep.subr.mxu0 0.0
    %2462 = vmatpush1.msra.mxu0 0.0
    %2463 = vmatprep.subr.mxu0 0.0
    %2464 = vmatpush1.msra.mxu0 0.0
    %2465 = vmatprep.subr.mxu0 0.0
    %2466 = vmatpush1.msra.mxu0 0.0
    %2467 = vmatprep.subr.mxu0 0.0
    %2468 = vmatpush1.msra.mxu0 0.0
    %2469 = vmatprep.subr.mxu0 0.0
    %2470 = vmatpush1.msra.mxu0 0.0
    %2471 = vmatprep.subr.mxu0 0.0
    %2472 = vmatpush1.msra.mxu0 0.0
    %2473 = vmatprep.subr.mxu0 0.0
    %2474 = vmatpush1.msra.mxu0 0.0
    %2475 = vmatprep.subr.mxu0 0.0
    %2476 = vmatpush1.msra.mxu0 0.0
    %2477 = vmatprep.subr.mxu0 0.0
    %2478 = vmatpush1.msra.mxu0 0.0
    %2479 = vmatprep.subr.mxu0 0.0
    %2480 = vmatpush1.msra.mxu0 0.0
    %2481 = vmatprep.subr.mxu0 0.0
    %2482 = vmatpush1.msra.mxu0 0.0
    %2483 = vmatprep.subr.mxu0 0.0
    %2484 = vmatpush1.msra.mxu0 0.0
    %2485 = vmatprep.subr.mxu0 0.0
    %2486 = vmatpush1.msra.mxu0 0.0
    %2487 = vmatprep.subr.mxu0 0.0
    %2488 = vmatpush1.msra.mxu0 0.0
    %2489 = vmatprep.subr.mxu0 0.0
    %2490 = vmatpush1.msra.mxu0 0.0
    %2491 = vmatprep.subr.mxu0 0.0
    %2492 = vmatpush1.msra.mxu0 0.0
    %2493 = vmatprep.subr.mxu0 0.0
    %2494 = vmatpush1.msra.mxu0 0.0
    %2495 = vmatprep.subr.mxu0 0.0
    %2496 = vmatpush1.msra.mxu0 0.0
    %2497 = vmatprep.subr.mxu0 0.0
    %2498 = vmatpush1.msra.mxu0 0.0
    %2499 = vmatprep.subr.mxu0 0.0
    %2500 = vmatpush1.msra.mxu0 0.0
    %2501 = vmatprep.subr.mxu0 0.0
    %2502 = vmatpush1.msra.mxu0 0.0
    %2503 = vmatprep.subr.mxu0 0.0
    %2504 = vmatpush1.msra.mxu0 0.0
    %2505 = vmatprep.subr.mxu0 0.0
    %2506 = vmatpush1.msra.mxu0 0.0
    %2507 = vmatprep.subr.mxu0 0.0
    %2508 = vmatpush1.msra.mxu0 0.0
    %2509 = vmatprep.subr.mxu0 0.0
    %2510 = vmatpush1.msra.mxu0 0.0
    %2511 = vmatprep.subr.mxu0 0.0
    %2512 = vmatpush1.msra.mxu0 0.0
    %2513 = vmatprep.subr.mxu0 0.0
    %2514 = vmatpush1.msra.mxu0 0.0
    %2515 = vmatprep.subr.mxu0 0.0
    %2516 = vmatpush1.msra.mxu0 0.0
    %2517 = vmatprep.subr.mxu0 0.0
    %2518 = vmatpush1.msra.mxu0 0.0
    %2519 = vmatprep.subr.mxu0 0.0
    %2520 = vmatpush1.msra.mxu0 0.0
    %2521 = vmatprep.mubr.f32.mxu0 0.0
    %2522 = vmatmul.mubr.f32.gmra.mrb[0].mxu0 %v2452
    %v2523 = vpop.f32.mrb[0].mxu0
    %v2524 = vadd.f32 0.0, %v2523
    %v2525 = vpop.f32.mrb[0].mxu0
    %2526 = vmatprep.mubr.f32.mxu0 0.0
    %2527 = vmatmul.mubr.f32.gmra.mrb[0].mxu0 %v2455
    %v2528 = vpop.f32.mrb[0].mxu0
    %v2529 = vadd.f32 0.0, %v2528
    %v2530 = vpop.f32.mrb[0].mxu0
    %2531 = vdwg.mxu0
    %v2533 = vsel %vm32, %v2399, 0
    %v2536 = vsel %vm32, %v2400, 0
    %2538 = vmatprep.subr.mxu0 0.0
    %2539 = vmatpush1.msra.mxu0 %v2101
    %2540 = vmatprep.subr.mxu0 0.0
    %2541 = vmatpush1.msra.mxu0 %v2106
    %2542 = vmatprep.subr.mxu0 0.0
    %2543 = vmatpush1.msra.mxu0 0.0
    %2544 = vmatprep.subr.mxu0 0.0
    %2545 = vmatpush1.msra.mxu0 0.0
    %2546 = vmatprep.subr.mxu0 0.0
    %2547 = vmatpush1.msra.mxu0 0.0
    %2548 = vmatprep.subr.mxu0 0.0
    %2549 = vmatpush1.msra.mxu0 0.0
    %2550 = vmatprep.subr.mxu0 0.0
    %2551 = vmatpush1.msra.mxu0 0.0
    %2552 = vmatprep.subr.mxu0 0.0
    %2553 = vmatpush1.msra.mxu0 0.0
    %2554 = vmatprep.subr.mxu0 0.0
    %2555 = vmatpush1.msra.mxu0 0.0
    %2556 = vmatprep.subr.mxu0 0.0
    %2557 = vmatpush1.msra.mxu0 0.0
    %2558 = vmatprep.subr.mxu0 0.0
    %2559 = vmatpush1.msra.mxu0 0.0
    %2560 = vmatprep.subr.mxu0 0.0
    %2561 = vmatpush1.msra.mxu0 0.0
    %2562 = vmatprep.subr.mxu0 0.0
    %2563 = vmatpush1.msra.mxu0 0.0
    %2564 = vmatprep.subr.mxu0 0.0
    %2565 = vmatpush1.msra.mxu0 0.0
    %2566 = vmatprep.subr.mxu0 0.0
    %2567 = vmatpush1.msra.mxu0 0.0
    %2568 = vmatprep.subr.mxu0 0.0
    %2569 = vmatpush1.msra.mxu0 0.0
    %2570 = vmatprep.subr.mxu0 0.0
    %2571 = vmatpush1.msra.mxu0 0.0
    %2572 = vmatprep.subr.mxu0 0.0
    %2573 = vmatpush1.msra.mxu0 0.0
    %2574 = vmatprep.subr.mxu0 0.0
    %2575 = vmatpush1.msra.mxu0 0.0
    %2576 = vmatprep.subr.mxu0 0.0
    %2577 = vmatpush1.msra.mxu0 0.0
    %2578 = vmatprep.subr.mxu0 0.0
    %2579 = vmatpush1.msra.mxu0 0.0
    %2580 = vmatprep.subr.mxu0 0.0
    %2581 = vmatpush1.msra.mxu0 0.0
    %2582 = vmatprep.subr.mxu0 0.0
    %2583 = vmatpush1.msra.mxu0 0.0
    %2584 = vmatprep.subr.mxu0 0.0
    %2585 = vmatpush1.msra.mxu0 0.0
    %2586 = vmatprep.subr.mxu0 0.0
    %2587 = vmatpush1.msra.mxu0 0.0
    %2588 = vmatprep.subr.mxu0 0.0
    %2589 = vmatpush1.msra.mxu0 0.0
    %2590 = vmatprep.subr.mxu0 0.0
    %2591 = vmatpush1.msra.mxu0 0.0
    %2592 = vmatprep.subr.mxu0 0.0
    %2593 = vmatpush1.msra.mxu0 0.0
    %2594 = vmatprep.subr.mxu0 0.0
    %2595 = vmatpush1.msra.mxu0 0.0
    %2596 = vmatprep.subr.mxu0 0.0
    %2597 = vmatpush1.msra.mxu0 0.0
    %2598 = vmatprep.subr.mxu0 0.0
    %2599 = vmatpush1.msra.mxu0 0.0
    %2600 = vmatprep.subr.mxu0 0.0
    %2601 = vmatpush1.msra.mxu0 0.0
    %2602 = vmatprep.mubr.f32.mxu0 0.0
    %2603 = vmatmul.mubr.f32.gmra.mrb[0].mxu0 %v2533
    %v2604 = vpop.f32.mrb[0].mxu0
    %v2605 = vadd.f32 %v2524, %v2604
    %v2606 = vpop.f32.mrb[0].mxu0
    %2607 = vmatprep.mubr.f32.mxu0 0.0
    %2608 = vmatmul.mubr.f32.gmra.mrb[0].mxu0 %v2536
    %v2609 = vpop.f32.mrb[0].mxu0
    %v2610 = vadd.f32 %v2529, %v2609
    %v2611 = vpop.f32.mrb[0].mxu0
    %2612 = vdwg.mxu0
    %2613 = vset.pattern.permute.xlu0 2
    %2614 = vperm.xlu0 %2613, %v2273
    %v2615 = vpop.permute.xlu0 %2614
    %2617 = vset.pattern.permute.xlu0 2
    %2618 = vperm.xlu0 %2617, %v2278
    %v2619 = vpop.permute.xlu0 %2618
    %v2621 = vlaneseq
    %v2622 = vshrl.u32 %v2621, 7
    %v2623 = vsub.s32 2, %v2622
    %v2624 = vrot.slane %v2352, %v2623
    %v2625 = vadd.f32 %v2615, %v2624
    %v2626 = vadd.f32 %v2619, %v2624
    %vm2627 = vcmp.ge.f32.partialorder %v2625, 0.0
    %vm2628 = vcmp.ge.f32.partialorder %v2626, 0.0
    %v2629 = vmul.f32 %v2625, 0.2
    %v2630 = vmul.f32 %v2626, 0.2
    %v2631 = vsel %vm2627, %v2625, %v2629
    %v2632 = vsel %vm2628, %v2626, %v2630
    %v2633 = vadd.f32 %v2631, %v1232
    %v2634 = vadd.f32 %v2632, %v1233
    %v2635 = vsel %vm32, %v2633, -inf
    %2636 = vmax.xlane.f32.xlu0 %v2635
    %v2637 = vpop.xlane.xlu0 %2636
    %v2638 = vsel %vm32, %v2634, -inf
    %2639 = vmax.xlane.f32.xlu0 %v2638
    %v2640 = vpop.xlane.xlu0 %2639
    %v2641 = vsub.f32 %v2633, %v2637
    %v2642 = vsub.f32 %v2634, %v2640
    %v2643 = vmul.f32 %v2641, 1.442695
    %v2644 = vpow.pop %v2643
    %v2645 = vmul.f32 %v2642, 1.442695
    %v2646 = vpow.pop %v2645
    %v2647 = vsel %vm32, %v2644, 0.0
    %2648 = vadd.xlane.f32.xlu0 %v2647
    %v2649 = vpop.xlane.xlu0 %2648
    %v2650 = vsel %vm32, %v2646, 0.0
    %2651 = vadd.xlane.f32.xlu0 %v2650
    %v2652 = vpop.xlane.xlu0 %2651
    %v2653 = vrcp.pop %v2649
    %v2654 = vrcp.pop %v2652
    %v2655 = vmul.f32 %v2644, %v2653
    %v2656 = vmul.f32 %v2646, %v2654
    %2657 = vrot.lane.b32.xlu0 %v2101, 96
    %v2658 = vpop.permute.xlu0 %2657
    %2659 = vrot.lane.b32.xlu0 %v2106, 96
    %v2660 = vpop.permute.xlu0 %2659
    %v2664 = vsel %vm32, %v2655, 0
    %v2667 = vsel %vm32, %v2656, 0
    %2669 = vmatprep.subr.mxu0 0.0
    %2670 = vmatpush1.msra.mxu0 %v2658
    %2671 = vmatprep.subr.mxu0 0.0
    %2672 = vmatpush1.msra.mxu0 %v2660
    %2673 = vmatprep.subr.mxu0 0.0
    %2674 = vmatpush1.msra.mxu0 0.0
    %2675 = vmatprep.subr.mxu0 0.0
    %2676 = vmatpush1.msra.mxu0 0.0
    %2677 = vmatprep.subr.mxu0 0.0
    %2678 = vmatpush1.msra.mxu0 0.0
    %2679 = vmatprep.subr.mxu0 0.0
    %2680 = vmatpush1.msra.mxu0 0.0
    %2681 = vmatprep.subr.mxu0 0.0
    %2682 = vmatpush1.msra.mxu0 0.0
    %2683 = vmatprep.subr.mxu0 0.0
    %2684 = vmatpush1.msra.mxu0 0.0
    %2685 = vmatprep.subr.mxu0 0.0
    %2686 = vmatpush1.msra.mxu0 0.0
    %2687 = vmatprep.subr.mxu0 0.0
    %2688 = vmatpush1.msra.mxu0 0.0
    %2689 = vmatprep.subr.mxu0 0.0
    %2690 = vmatpush1.msra.mxu0 0.0
    %2691 = vmatprep.subr.mxu0 0.0
    %2692 = vmatpush1.msra.mxu0 0.0
    %2693 = vmatprep.subr.mxu0 0.0
    %2694 = vmatpush1.msra.mxu0 0.0
    %2695 = vmatprep.subr.mxu0 0.0
    %2696 = vmatpush1.msra.mxu0 0.0
    %2697 = vmatprep.subr.mxu0 0.0
    %2698 = vmatpush1.msra.mxu0 0.0
    %2699 = vmatprep.subr.mxu0 0.0
    %2700 = vmatpush1.msra.mxu0 0.0
    %2701 = vmatprep.subr.mxu0 0.0
    %2702 = vmatpush1.msra.mxu0 0.0
    %2703 = vmatprep.subr.mxu0 0.0
    %2704 = vmatpush1.msra.mxu0 0.0
    %2705 = vmatprep.subr.mxu0 0.0
    %2706 = vmatpush1.msra.mxu0 0.0
    %2707 = vmatprep.subr.mxu0 0.0
    %2708 = vmatpush1.msra.mxu0 0.0
    %2709 = vmatprep.subr.mxu0 0.0
    %2710 = vmatpush1.msra.mxu0 0.0
    %2711 = vmatprep.subr.mxu0 0.0
    %2712 = vmatpush1.msra.mxu0 0.0
    %2713 = vmatprep.subr.mxu0 0.0
    %2714 = vmatpush1.msra.mxu0 0.0
    %2715 = vmatprep.subr.mxu0 0.0
    %2716 = vmatpush1.msra.mxu0 0.0
    %2717 = vmatprep.subr.mxu0 0.0
    %2718 = vmatpush1.msra.mxu0 0.0
    %2719 = vmatprep.subr.mxu0 0.0
    %2720 = vmatpush1.msra.mxu0 0.0
    %2721 = vmatprep.subr.mxu0 0.0
    %2722 = vmatpush1.msra.mxu0 0.0
    %2723 = vmatprep.subr.mxu0 0.0
    %2724 = vmatpush1.msra.mxu0 0.0
    %2725 = vmatprep.subr.mxu0 0.0
    %2726 = vmatpush1.msra.mxu0 0.0
    %2727 = vmatprep.subr.mxu0 0.0
    %2728 = vmatpush1.msra.mxu0 0.0
    %2729 = vmatprep.subr.mxu0 0.0
    %2730 = vmatpush1.msra.mxu0 0.0
    %2731 = vmatprep.subr.mxu0 0.0
    %2732 = vmatpush1.msra.mxu0 0.0
    %2733 = vmatprep.mubr.f32.mxu0 0.0
    %2734 = vmatmul.mubr.f32.gmra.mrb[0].mxu0 %v2664
    %v2735 = vpop.f32.mrb[0].mxu0
    %v2736 = vadd.f32 0.0, %v2735
    %v2737 = vpop.f32.mrb[0].mxu0
    %2738 = vmatprep.mubr.f32.mxu0 0.0
    %2739 = vmatmul.mubr.f32.gmra.mrb[0].mxu0 %v2667
    %v2740 = vpop.f32.mrb[0].mxu0
    %v2741 = vadd.f32 0.0, %v2740
    %v2742 = vpop.f32.mrb[0].mxu0
    %2743 = vdwg.mxu0
    %v2744 = vadd.f32 %v2605, %v2736
    %v2745 = vadd.f32 %v2610, %v2741
    %v2746 = vmul.f32 %v2744, 0.33333334
    %v2747 = vmul.f32 %v2745, 0.33333334
    %v2748 = vlaneseq
    %v2749 = vshrl.u32 %v2748, 7
    %v2750 = vsub.s32 2, %v2749
    %v2751 = vrot.slane %v1236, %v2750
    %v2752 = vadd.f32 %v2746, %v2751
    %v2753 = vadd.f32 %v2747, %v2751
    %vm2754 = vcmp.ge.f32.partialorder %v2752, 0.0
    %vm2755 = vcmp.ge.f32.partialorder %v2753, 0.0
    %v2756 = vmul.f32 %v2752, 0.01
    %v2757 = vmul.f32 %v2753, 0.01
    %v2758 = vsel %vm2754, %v2752, %v2756
    %v2759 = vsel %vm2755, %v2753, %v2757
    %v2760 = vxor.u32 %v2188, 2147483648
    %v2761 = vxor.u32 %v2193, 2147483648
    %v2762 = vmul.f32 %v2760, 1.442695
    %v2763 = vpow.pop %v2762
    %v2764 = vmul.f32 %v2761, 1.442695
    %v2765 = vpow.pop %v2764
    %v2766 = vadd.f32 %v2763, 1.0
    %v2767 = vadd.f32 %v2765, 1.0
    %v2768 = vrcp.pop %v2766
    %v2769 = vmul.f32 1.0, %v2768
    %v2770 = vrcp.pop %v2767
    %v2771 = vmul.f32 1.0, %v2770
    %v2772 = vmul.f32 %v2758, %v2769
    %v2773 = vmul.f32 %v2759, %v2771
    %v2774 = vsub.f32 1.0, %v2769
    %v2775 = vsub.f32 1.0, %v2771
    %v2776 = vmul.f32 %v2022, %v2774
    %v2777 = vmul.f32 %v2023, %v2775
    %v2778 = vadd.f32 %v2772, %v2776
    %v2779 = vadd.f32 %v2773, %v2777
    %v2780 = vmax.f32 %v2778, 0.0
    %v2781 = vmax.f32 %v2779, 0.0
    %v2782 = vld [vmem:[%s2 + $0x20] sm:$0xff]
    %v2783 = vld [vmem:[%s2 + $0x28] sm:$0xff]
    %v2785 = vsel %vm32, %v2780, 0
    %v2788 = vsel %vm32, %v2781, 0
    %2790 = vmatprep.subr.mxu0 0.0
    %2791 = vmatpush1.msra.mxu0 %v2782
    %2792 = vmatprep.subr.mxu0 0.0
    %2793 = vmatpush1.msra.mxu0 %v2783
    %2794 = vmatprep.subr.mxu0 0.0
    %2795 = vmatpush1.msra.mxu0 0.0
    %2796 = vmatprep.subr.mxu0 0.0
    %2797 = vmatpush1.msra.mxu0 0.0
    %2798 = vmatprep.subr.mxu0 0.0
    %2799 = vmatpush1.msra.mxu0 0.0
    %2800 = vmatprep.subr.mxu0 0.0
    %2801 = vmatpush1.msra.mxu0 0.0
    %2802 = vmatprep.subr.mxu0 0.0
    %2803 = vmatpush1.msra.mxu0 0.0
    %2804 = vmatprep.subr.mxu0 0.0
    %2805 = vmatpush1.msra.mxu0 0.0
    %2806 = vmatprep.subr.mxu0 0.0
    %2807 = vmatpush1.msra.mxu0 0.0
    %2808 = vmatprep.subr.mxu0 0.0
    %2809 = vmatpush1.msra.mxu0 0.0
    %2810 = vmatprep.subr.mxu0 0.0
    %2811 = vmatpush1.msra.mxu0 0.0
    %2812 = vmatprep.subr.mxu0 0.0
    %2813 = vmatpush1.msra.mxu0 0.0
    %2814 = vmatprep.subr.mxu0 0.0
    %2815 = vmatpush1.msra.mxu0 0.0
    %2816 = vmatprep.subr.mxu0 0.0
    %2817 = vmatpush1.msra.mxu0 0.0
    %2818 = vmatprep.subr.mxu0 0.0
    %2819 = vmatpush1.msra.mxu0 0.0
    %2820 = vmatprep.subr.mxu0 0.0
    %2821 = vmatpush1.msra.mxu0 0.0
    %2822 = vmatprep.subr.mxu0 0.0
    %2823 = vmatpush1.msra.mxu0 0.0
    %2824 = vmatprep.subr.mxu0 0.0
    %2825 = vmatpush1.msra.mxu0 0.0
    %2826 = vmatprep.subr.mxu0 0.0
    %2827 = vmatpush1.msra.mxu0 0.0
    %2828 = vmatprep.subr.mxu0 0.0
    %2829 = vmatpush1.msra.mxu0 0.0
    %2830 = vmatprep.subr.mxu0 0.0
    %2831 = vmatpush1.msra.mxu0 0.0
    %2832 = vmatprep.subr.mxu0 0.0
    %2833 = vmatpush1.msra.mxu0 0.0
    %2834 = vmatprep.subr.mxu0 0.0
    %2835 = vmatpush1.msra.mxu0 0.0
    %2836 = vmatprep.subr.mxu0 0.0
    %2837 = vmatpush1.msra.mxu0 0.0
    %2838 = vmatprep.subr.mxu0 0.0
    %2839 = vmatpush1.msra.mxu0 0.0
    %2840 = vmatprep.subr.mxu0 0.0
    %2841 = vmatpush1.msra.mxu0 0.0
    %2842 = vmatprep.subr.mxu0 0.0
    %2843 = vmatpush1.msra.mxu0 0.0
    %2844 = vmatprep.subr.mxu0 0.0
    %2845 = vmatpush1.msra.mxu0 0.0
    %2846 = vmatprep.subr.mxu0 0.0
    %2847 = vmatpush1.msra.mxu0 0.0
    %2848 = vmatprep.subr.mxu0 0.0
    %2849 = vmatpush1.msra.mxu0 0.0
    %2850 = vmatprep.subr.mxu0 0.0
    %2851 = vmatpush1.msra.mxu0 0.0
    %2852 = vmatprep.subr.mxu0 0.0
    %2853 = vmatpush1.msra.mxu0 0.0
    %2854 = vmatprep.mubr.f32.mxu0 0.0
    %2855 = vmatmul.mubr.f32.gmra.mrb[0].mxu0 %v2785
    %v2856 = vpop.f32.mrb[0].mxu0
    %v2857 = vadd.f32 0.0, %v2856
    %v2858 = vpop.f32.mrb[0].mxu0
    %2859 = vmatprep.mubr.f32.mxu0 0.0
    %2860 = vmatmul.mubr.f32.gmra.mrb[0].mxu0 %v2788
    %v2861 = vpop.f32.mrb[0].mxu0
    %v2862 = vadd.f32 0.0, %v2861
    %v2863 = vpop.f32.mrb[0].mxu0
    %2864 = vdwg.mxu0
    %v2865 = vlaneseq
    %v2866 = vshrl.u32 %v2865, 7
    %v2867 = vsub.s32 7, %v2866
    %v2868 = vrot.slane %v1236, %v2867
    %2871 = vrot.lane.b32.xlu0 %v2857, 80
    %v2872 = vpop.permute.xlu0 %2871
    %2873 = vrot.lane.b32.xlu0 %v2862, 80
    %v2874 = vpop.permute.xlu0 %2873
    %2877 = vmatprep.subr.mxu0 0.0
    %2878 = vmatpush1.msra.mxu0 %v2872
    %2879 = vmatprep.subr.mxu0 0.0
    %2880 = vmatpush1.msra.mxu0 %v2874
    %2881 = vmatprep.subr.mxu0 0.0
    %2882 = vmatpush1.msra.mxu0 0.0
    %2883 = vmatprep.subr.mxu0 0.0
    %2884 = vmatpush1.msra.mxu0 0.0
    %2885 = vmatprep.subr.mxu0 0.0
    %2886 = vmatpush1.msra.mxu0 0.0
    %2887 = vmatprep.subr.mxu0 0.0
    %2888 = vmatpush1.msra.mxu0 0.0
    %2889 = vmatprep.subr.mxu0 0.0
    %2890 = vmatpush1.msra.mxu0 0.0
    %2891 = vmatprep.subr.mxu0 0.0
    %2892 = vmatpush1.msra.mxu0 0.0
    %2893 = vmatprep.subr.mxu0 0.0
    %2894 = vmatpush1.msra.mxu0 0.0
    %2895 = vmatprep.subr.mxu0 0.0
    %2896 = vmatpush1.msra.mxu0 0.0
    %2897 = vmatprep.subr.mxu0 0.0
    %2898 = vmatpush1.msra.mxu0 0.0
    %2899 = vmatprep.subr.mxu0 0.0
    %2900 = vmatpush1.msra.mxu0 0.0
    %2901 = vmatprep.subr.mxu0 0.0
    %2902 = vmatpush1.msra.mxu0 0.0
    %2903 = vmatprep.subr.mxu0 0.0
    %2904 = vmatpush1.msra.mxu0 0.0
    %2905 = vmatprep.subr.mxu0 0.0
    %2906 = vmatpush1.msra.mxu0 0.0
    %2907 = vmatprep.subr.mxu0 0.0
    %2908 = vmatpush1.msra.mxu0 0.0
    %2909 = vmatprep.subr.mxu0 0.0
    %2910 = vmatpush1.msra.mxu0 0.0
    %2911 = vmatprep.subr.mxu0 0.0
    %2912 = vmatpush1.msra.mxu0 0.0
    %2913 = vmatprep.subr.mxu0 0.0
    %2914 = vmatpush1.msra.mxu0 0.0
    %2915 = vmatprep.subr.mxu0 0.0
    %2916 = vmatpush1.msra.mxu0 0.0
    %2917 = vmatprep.subr.mxu0 0.0
    %2918 = vmatpush1.msra.mxu0 0.0
    %2919 = vmatprep.subr.mxu0 0.0
    %2920 = vmatpush1.msra.mxu0 0.0
    %2921 = vmatprep.subr.mxu0 0.0
    %2922 = vmatpush1.msra.mxu0 0.0
    %2923 = vmatprep.subr.mxu0 0.0
    %2924 = vmatpush1.msra.mxu0 0.0
    %2925 = vmatprep.subr.mxu0 0.0
    %2926 = vmatpush1.msra.mxu0 0.0
    %2927 = vmatprep.subr.mxu0 0.0
    %2928 = vmatpush1.msra.mxu0 0.0
    %2929 = vmatprep.subr.mxu0 0.0
    %2930 = vmatpush1.msra.mxu0 0.0
    %2931 = vmatprep.subr.mxu0 0.0
    %2932 = vmatpush1.msra.mxu0 0.0
    %2933 = vmatprep.subr.mxu0 0.0
    %2934 = vmatpush1.msra.mxu0 0.0
    %2935 = vmatprep.subr.mxu0 0.0
    %2936 = vmatpush1.msra.mxu0 0.0
    %2937 = vmatprep.subr.mxu0 0.0
    %2938 = vmatpush1.msra.mxu0 0.0
    %2939 = vmatprep.subr.mxu0 0.0
    %2940 = vmatpush1.msra.mxu0 0.0
    %2941 = vmatprep.mubr.f32.mxu0 0.0
    %2942 = vmatmul.mubr.f32.gmra.mrb[0].mxu0 %v1347
    %v2943 = vpop.f32.mrb[0].mxu0
    %v2944 = vadd.f32 %v2868, %v2943
    %v2945 = vpop.f32.mrb[0].mxu0
    %2946 = vmatprep.mubr.f32.mxu0 0.0
    %2947 = vmatmul.mubr.f32.gmra.mrb[0].mxu0 %v1350
    %v2948 = vpop.f32.mrb[0].mxu0
    %v2949 = vadd.f32 %v2868, %v2948
    %v2950 = vpop.f32.mrb[0].mxu0
    %2951 = vdwg.mxu0
    %v2952 = vld [vmem:[%s2 + $0xb0] sm:$0xff]
    %v2953 = vld [vmem:[%s2 + $0xb8] sm:$0xff]
    %v2954 = vld [vmem:[%s2 + $0xc0] sm:$0xff]
    %v2955 = vld [vmem:[%s2 + $0xc8] sm:$0xff]
    %v2956 = vld [vmem:[%s2 + $0xd0] sm:$0xff]
    %v2957 = vld [vmem:[%s2 + $0xd8] sm:$0xff]
    %v2958 = vsel %vm1433, %v2857, 0
    %v2960 = vsel %vm1433, %v2862, 0
    %2962 = vmatprep.subr.mxu0 0.0
    %2963 = vmatpush1.msra.mxu0 %v2952
    %2964 = vmatprep.subr.mxu0 0.0
    %2965 = vmatpush1.msra.mxu0 %v2953
    %2966 = vmatprep.subr.mxu0 0.0
    %2967 = vmatpush1.msra.mxu0 %v2954
    %2968 = vmatprep.subr.mxu0 0.0
    %2969 = vmatpush1.msra.mxu0 %v2955
    %2970 = vmatprep.subr.mxu0 0.0
    %2971 = vmatpush1.msra.mxu0 %v2956
    %2972 = vmatprep.subr.mxu0 0.0
    %2973 = vmatpush1.msra.mxu0 %v2957
    %2974 = vmatprep.subr.mxu0 0.0
    %2975 = vmatpush1.msra.mxu0 0.0
    %2976 = vmatprep.subr.mxu0 0.0
    %2977 = vmatpush1.msra.mxu0 0.0
    %2978 = vmatprep.subr.mxu0 0.0
    %2979 = vmatpush1.msra.mxu0 0.0
    %2980 = vmatprep.subr.mxu0 0.0
    %2981 = vmatpush1.msra.mxu0 0.0
    %2982 = vmatprep.subr.mxu0 0.0
    %2983 = vmatpush1.msra.mxu0 0.0
    %2984 = vmatprep.subr.mxu0 0.0
    %2985 = vmatpush1.msra.mxu0 0.0
    %2986 = vmatprep.subr.mxu0 0.0
    %2987 = vmatpush1.msra.mxu0 0.0
    %2988 = vmatprep.subr.mxu0 0.0
    %2989 = vmatpush1.msra.mxu0 0.0
    %2990 = vmatprep.subr.mxu0 0.0
    %2991 = vmatpush1.msra.mxu0 0.0
    %2992 = vmatprep.subr.mxu0 0.0
    %2993 = vmatpush1.msra.mxu0 0.0
    %2994 = vmatprep.subr.mxu0 0.0
    %2995 = vmatpush1.msra.mxu0 0.0
    %2996 = vmatprep.subr.mxu0 0.0
    %2997 = vmatpush1.msra.mxu0 0.0
    %2998 = vmatprep.subr.mxu0 0.0
    %2999 = vmatpush1.msra.mxu0 0.0
    %3000 = vmatprep.subr.mxu0 0.0
    %3001 = vmatpush1.msra.mxu0 0.0
    %3002 = vmatprep.subr.mxu0 0.0
    %3003 = vmatpush1.msra.mxu0 0.0
    %3004 = vmatprep.subr.mxu0 0.0
    %3005 = vmatpush1.msra.mxu0 0.0
    %3006 = vmatprep.subr.mxu0 0.0
    %3007 = vmatpush1.msra.mxu0 0.0
    %3008 = vmatprep.subr.mxu0 0.0
    %3009 = vmatpush1.msra.mxu0 0.0
    %3010 = vmatprep.subr.mxu0 0.0
    %3011 = vmatpush1.msra.mxu0 0.0
    %3012 = vmatprep.subr.mxu0 0.0
    %3013 = vmatpush1.msra.mxu0 0.0
    %3014 = vmatprep.subr.mxu0 0.0
    %3015 = vmatpush1.msra.mxu0 0.0
    %3016 = vmatprep.subr.mxu0 0.0
    %3017 = vmatpush1.msra.mxu0 0.0
    %3018 = vmatprep.subr.mxu0 0.0
    %3019 = vmatpush1.msra.mxu0 0.0
    %3020 = vmatprep.subr.mxu0 0.0
    %3021 = vmatpush1.msra.mxu0 0.0
    %3022 = vmatprep.subr.mxu0 0.0
    %3023 = vmatpush1.msra.mxu0 0.0
    %3024 = vmatprep.subr.mxu0 0.0
    %3025 = vmatpush1.msra.mxu0 0.0
    %3026 = vmatprep.mubr.f32.mxu0 0.0
    %3027 = vmatmul.mubr.f32.gmra.mrb[0].mxu0 %v2958
    %v3028 = vpop.f32.mrb[0].mxu0
    %v3029 = vadd.f32 0.0, %v3028
    %v3030 = vpop.f32.mrb[0].mxu0
    %3031 = vmatprep.mubr.f32.mxu0 0.0
    %3032 = vmatmul.mubr.f32.gmra.mrb[0].mxu0 %v2960
    %v3033 = vpop.f32.mrb[0].mxu0
    %v3034 = vadd.f32 0.0, %v3033
    %v3035 = vpop.f32.mrb[0].mxu0
    %3036 = vdwg.mxu0
    %v3037 = vld [vmem:[%s2 + $0xe0] sm:$0x7]
    %v3039 = vsel %vm1433, %v3037, 0
    %3041 = vmatprep.subr.mxu0 0.0
    %3042 = vmatpush1.xpose.msra.mxu0 %v2958
    %3043 = vmatprep.subr.mxu0 0.0
    %3044 = vmatpush1.xpose.msra.mxu0 %v2960
    %3045 = vmatprep.subr.mxu0 0.0
    %3046 = vmatpush1.xpose.msra.mxu0 0.0
    %3047 = vmatprep.subr.mxu0 0.0
    %3048 = vmatpush1.xpose.msra.mxu0 0.0
    %3049 = vmatprep.subr.mxu0 0.0
    %3050 = vmatpush1.xpose.msra.mxu0 0.0
    %3051 = vmatprep.subr.mxu0 0.0
    %3052 = vmatpush1.xpose.msra.mxu0 0.0
    %3053 = vmatprep.subr.mxu0 0.0
    %3054 = vmatpush1.xpose.msra.mxu0 0.0
    %3055 = vmatprep.subr.mxu0 0.0
    %3056 = vmatpush1.xpose.msra.mxu0 0.0
    %3057 = vmatprep.subr.mxu0 0.0
    %3058 = vmatpush1.xpose.msra.mxu0 0.0
    %3059 = vmatprep.subr.mxu0 0.0
    %3060 = vmatpush1.xpose.msra.mxu0 0.0
    %3061 = vmatprep.subr.mxu0 0.0
    %3062 = vmatpush1.xpose.msra.mxu0 0.0
    %3063 = vmatprep.subr.mxu0 0.0
    %3064 = vmatpush1.xpose.msra.mxu0 0.0
    %3065 = vmatprep.subr.mxu0 0.0
    %3066 = vmatpush1.xpose.msra.mxu0 0.0
    %3067 = vmatprep.subr.mxu0 0.0
    %3068 = vmatpush1.xpose.msra.mxu0 0.0
    %3069 = vmatprep.subr.mxu0 0.0
    %3070 = vmatpush1.xpose.msra.mxu0 0.0
    %3071 = vmatprep.subr.mxu0 0.0
    %3072 = vmatpush1.xpose.msra.mxu0 0.0
    %3073 = vmatprep.subr.mxu0 0.0
    %3074 = vmatpush1.xpose.msra.mxu0 0.0
    %3075 = vmatprep.subr.mxu0 0.0
    %3076 = vmatpush1.xpose.msra.mxu0 0.0
    %3077 = vmatprep.subr.mxu0 0.0
    %3078 = vmatpush1.xpose.msra.mxu0 0.0
    %3079 = vmatprep.subr.mxu0 0.0
    %3080 = vmatpush1.xpose.msra.mxu0 0.0
    %3081 = vmatprep.subr.mxu0 0.0
    %3082 = vmatpush1.xpose.msra.mxu0 0.0
    %3083 = vmatprep.subr.mxu0 0.0
    %3084 = vmatpush1.xpose.msra.mxu0 0.0
    %3085 = vmatprep.subr.mxu0 0.0
    %3086 = vmatpush1.xpose.msra.mxu0 0.0
    %3087 = vmatprep.subr.mxu0 0.0
    %3088 = vmatpush1.xpose.msra.mxu0 0.0
    %3089 = vmatprep.subr.mxu0 0.0
    %3090 = vmatpush1.xpose.msra.mxu0 0.0
    %3091 = vmatprep.subr.mxu0 0.0
    %3092 = vmatpush1.xpose.msra.mxu0 0.0
    %3093 = vmatprep.subr.mxu0 0.0
    %3094 = vmatpush1.xpose.msra.mxu0 0.0
    %3095 = vmatprep.subr.mxu0 0.0
    %3096 = vmatpush1.xpose.msra.mxu0 0.0
    %3097 = vmatprep.subr.mxu0 0.0
    %3098 = vmatpush1.xpose.msra.mxu0 0.0
    %3099 = vmatprep.subr.mxu0 0.0
    %3100 = vmatpush1.xpose.msra.mxu0 0.0
    %3101 = vmatprep.subr.mxu0 0.0
    %3102 = vmatpush1.xpose.msra.mxu0 0.0
    %3103 = vmatprep.subr.mxu0 0.0
    %3104 = vmatpush1.xpose.msra.mxu0 0.0
    %3105 = vmatprep.mubr.f32.mxu0 0.0
    %3106 = vmatmul.mubr.f32.gmra.mrb[0].mxu0 %v3039
    %v3107 = vpop.f32.mrb[0].mxu0
    %v3108 = vadd.f32 0.0, %v3107
    %v3109 = vpop.f32.mrb[0].mxu0
    %3110 = vdwg.mxu0
    %3112 = vset.pattern.permute.xlu0 0
    %3113 = vperm.xlu0 %3112, %v3029
    %v3114 = vpop.permute.xlu0 %3113
    %3117 = vset.pattern.permute.xlu0 0
    %3118 = vperm.xlu0 %3117, %v3034
    %v3119 = vpop.permute.xlu0 %3118
    %v3121 = vlaneseq
    %v3122 = vshrl.u32 %v3121, 7
    %v3123 = vsub.s32 0, %v3122
    %v3124 = vrot.slane %v3108, %v3123
    %v3125 = vadd.f32 %v3114, %v3124
    %v3126 = vadd.f32 %v3119, %v3124
    %vm3127 = vcmp.ge.f32.partialorder %v3125, 0.0
    %vm3128 = vcmp.ge.f32.partialorder %v3126, 0.0
    %v3129 = vmul.f32 %v3125, 0.2
    %v3130 = vmul.f32 %v3126, 0.2
    %v3131 = vsel %vm3127, %v3125, %v3129
    %v3132 = vsel %vm3128, %v3126, %v3130
    %v3133 = vadd.f32 %v3131, %v1232
    %v3134 = vadd.f32 %v3132, %v1233
    %v3135 = vsel %vm32, %v3133, -inf
    %3136 = vmax.xlane.f32.xlu0 %v3135
    %v3137 = vpop.xlane.xlu0 %3136
    %v3138 = vsel %vm32, %v3134, -inf
    %3139 = vmax.xlane.f32.xlu0 %v3138
    %v3140 = vpop.xlane.xlu0 %3139
    %v3141 = vsub.f32 %v3133, %v3137
    %v3142 = vsub.f32 %v3134, %v3140
    %v3143 = vmul.f32 %v3141, 1.442695
    %v3144 = vpow.pop %v3143
    %v3145 = vmul.f32 %v3142, 1.442695
    %v3146 = vpow.pop %v3145
    %v3147 = vsel %vm32, %v3144, 0.0
    %3148 = vadd.xlane.f32.xlu0 %v3147
    %v3149 = vpop.xlane.xlu0 %3148
    %v3150 = vsel %vm32, %v3146, 0.0
    %3151 = vadd.xlane.f32.xlu0 %v3150
    %v3152 = vpop.xlane.xlu0 %3151
    %v3153 = vrcp.pop %v3149
    %v3154 = vrcp.pop %v3152
    %v3155 = vmul.f32 %v3144, %v3153
    %v3156 = vmul.f32 %v3146, %v3154
    %3157 = vset.pattern.permute.xlu0 1
    %3158 = vperm.xlu0 %3157, %v3029
    %v3159 = vpop.permute.xlu0 %3158
    %3161 = vset.pattern.permute.xlu0 1
    %3162 = vperm.xlu0 %3161, %v3034
    %v3163 = vpop.permute.xlu0 %3162
    %v3165 = vlaneseq
    %v3166 = vshrl.u32 %v3165, 7
    %v3167 = vsub.s32 1, %v3166
    %v3168 = vrot.slane %v3108, %v3167
    %v3169 = vadd.f32 %v3159, %v3168
    %v3170 = vadd.f32 %v3163, %v3168
    %vm3171 = vcmp.ge.f32.partialorder %v3169, 0.0
    %vm3172 = vcmp.ge.f32.partialorder %v3170, 0.0
    %v3173 = vmul.f32 %v3169, 0.2
    %v3174 = vmul.f32 %v3170, 0.2
    %v3175 = vsel %vm3171, %v3169, %v3173
    %v3176 = vsel %vm3172, %v3170, %v3174
    %v3177 = vadd.f32 %v3175, %v1232
    %v3178 = vadd.f32 %v3176, %v1233
    %v3179 = vsel %vm32, %v3177, -inf
    %3180 = vmax.xlane.f32.xlu0 %v3179
    %v3181 = vpop.xlane.xlu0 %3180
    %v3182 = vsel %vm32, %v3178, -inf
    %3183 = vmax.xlane.f32.xlu0 %v3182
    %v3184 = vpop.xlane.xlu0 %3183
    %v3185 = vsub.f32 %v3177, %v3181
    %v3186 = vsub.f32 %v3178, %v3184
    %v3187 = vmul.f32 %v3185, 1.442695
    %v3188 = vpow.pop %v3187
    %v3189 = vmul.f32 %v3186, 1.442695
    %v3190 = vpow.pop %v3189
    %v3191 = vsel %vm32, %v3188, 0.0
    %3192 = vadd.xlane.f32.xlu0 %v3191
    %v3193 = vpop.xlane.xlu0 %3192
    %v3194 = vsel %vm32, %v3190, 0.0
    %3195 = vadd.xlane.f32.xlu0 %v3194
    %v3196 = vpop.xlane.xlu0 %3195
    %v3197 = vrcp.pop %v3193
    %v3198 = vrcp.pop %v3196
    %v3199 = vmul.f32 %v3188, %v3197
    %v3200 = vmul.f32 %v3190, %v3198
    %3201 = vrot.lane.b32.xlu0 %v2857, 112
    %v3202 = vpop.permute.xlu0 %3201
    %3203 = vrot.lane.b32.xlu0 %v2862, 112
    %v3204 = vpop.permute.xlu0 %3203
    %v3208 = vsel %vm32, %v3199, 0
    %v3211 = vsel %vm32, %v3200, 0
    %3213 = vmatprep.subr.mxu0 0.0
    %3214 = vmatpush1.msra.mxu0 %v3202
    %3215 = vmatprep.subr.mxu0 0.0
    %3216 = vmatpush1.msra.mxu0 %v3204
    %3217 = vmatprep.subr.mxu0 0.0
    %3218 = vmatpush1.msra.mxu0 0.0
    %3219 = vmatprep.subr.mxu0 0.0
    %3220 = vmatpush1.msra.mxu0 0.0
    %3221 = vmatprep.subr.mxu0 0.0
    %3222 = vmatpush1.msra.mxu0 0.0
    %3223 = vmatprep.subr.mxu0 0.0
    %3224 = vmatpush1.msra.mxu0 0.0
    %3225 = vmatprep.subr.mxu0 0.0
    %3226 = vmatpush1.msra.mxu0 0.0
    %3227 = vmatprep.subr.mxu0 0.0
    %3228 = vmatpush1.msra.mxu0 0.0
    %3229 = vmatprep.subr.mxu0 0.0
    %3230 = vmatpush1.msra.mxu0 0.0
    %3231 = vmatprep.subr.mxu0 0.0
    %3232 = vmatpush1.msra.mxu0 0.0
    %3233 = vmatprep.subr.mxu0 0.0
    %3234 = vmatpush1.msra.mxu0 0.0
    %3235 = vmatprep.subr.mxu0 0.0
    %3236 = vmatpush1.msra.mxu0 0.0
    %3237 = vmatprep.subr.mxu0 0.0
    %3238 = vmatpush1.msra.mxu0 0.0
    %3239 = vmatprep.subr.mxu0 0.0
    %3240 = vmatpush1.msra.mxu0 0.0
    %3241 = vmatprep.subr.mxu0 0.0
    %3242 = vmatpush1.msra.mxu0 0.0
    %3243 = vmatprep.subr.mxu0 0.0
    %3244 = vmatpush1.msra.mxu0 0.0
    %3245 = vmatprep.subr.mxu0 0.0
    %3246 = vmatpush1.msra.mxu0 0.0
    %3247 = vmatprep.subr.mxu0 0.0
    %3248 = vmatpush1.msra.mxu0 0.0
    %3249 = vmatprep.subr.mxu0 0.0
    %3250 = vmatpush1.msra.mxu0 0.0
    %3251 = vmatprep.subr.mxu0 0.0
    %3252 = vmatpush1.msra.mxu0 0.0
    %3253 = vmatprep.subr.mxu0 0.0
    %3254 = vmatpush1.msra.mxu0 0.0
    %3255 = vmatprep.subr.mxu0 0.0
    %3256 = vmatpush1.msra.mxu0 0.0
    %3257 = vmatprep.subr.mxu0 0.0
    %3258 = vmatpush1.msra.mxu0 0.0
    %3259 = vmatprep.subr.mxu0 0.0
    %3260 = vmatpush1.msra.mxu0 0.0
    %3261 = vmatprep.subr.mxu0 0.0
    %3262 = vmatpush1.msra.mxu0 0.0
    %3263 = vmatprep.subr.mxu0 0.0
    %3264 = vmatpush1.msra.mxu0 0.0
    %3265 = vmatprep.subr.mxu0 0.0
    %3266 = vmatpush1.msra.mxu0 0.0
    %3267 = vmatprep.subr.mxu0 0.0
    %3268 = vmatpush1.msra.mxu0 0.0
    %3269 = vmatprep.subr.mxu0 0.0
    %3270 = vmatpush1.msra.mxu0 0.0
    %3271 = vmatprep.subr.mxu0 0.0
    %3272 = vmatpush1.msra.mxu0 0.0
    %3273 = vmatprep.subr.mxu0 0.0
    %3274 = vmatpush1.msra.mxu0 0.0
    %3275 = vmatprep.subr.mxu0 0.0
    %3276 = vmatpush1.msra.mxu0 0.0
    %3277 = vmatprep.mubr.f32.mxu0 0.0
    %3278 = vmatmul.mubr.f32.gmra.mrb[0].mxu0 %v3208
    %v3279 = vpop.f32.mrb[0].mxu0
    %v3280 = vadd.f32 0.0, %v3279
    %v3281 = vpop.f32.mrb[0].mxu0
    %3282 = vmatprep.mubr.f32.mxu0 0.0
    %3283 = vmatmul.mubr.f32.gmra.mrb[0].mxu0 %v3211
    %v3284 = vpop.f32.mrb[0].mxu0
    %v3285 = vadd.f32 0.0, %v3284
    %v3286 = vpop.f32.mrb[0].mxu0
    %3287 = vdwg.mxu0
    %v3289 = vsel %vm32, %v3155, 0
    %v3292 = vsel %vm32, %v3156, 0
    %3294 = vmatprep.subr.mxu0 0.0
    %3295 = vmatpush1.msra.mxu0 %v2857
    %3296 = vmatprep.subr.mxu0 0.0
    %3297 = vmatpush1.msra.mxu0 %v2862
    %3298 = vmatprep.subr.mxu0 0.0
    %3299 = vmatpush1.msra.mxu0 0.0
    %3300 = vmatprep.subr.mxu0 0.0
    %3301 = vmatpush1.msra.mxu0 0.0
    %3302 = vmatprep.subr.mxu0 0.0
    %3303 = vmatpush1.msra.mxu0 0.0
    %3304 = vmatprep.subr.mxu0 0.0
    %3305 = vmatpush1.msra.mxu0 0.0
    %3306 = vmatprep.subr.mxu0 0.0
    %3307 = vmatpush1.msra.mxu0 0.0
    %3308 = vmatprep.subr.mxu0 0.0
    %3309 = vmatpush1.msra.mxu0 0.0
    %3310 = vmatprep.subr.mxu0 0.0
    %3311 = vmatpush1.msra.mxu0 0.0
    %3312 = vmatprep.subr.mxu0 0.0
    %3313 = vmatpush1.msra.mxu0 0.0
    %3314 = vmatprep.subr.mxu0 0.0
    %3315 = vmatpush1.msra.mxu0 0.0
    %3316 = vmatprep.subr.mxu0 0.0
    %3317 = vmatpush1.msra.mxu0 0.0
    %3318 = vmatprep.subr.mxu0 0.0
    %3319 = vmatpush1.msra.mxu0 0.0
    %3320 = vmatprep.subr.mxu0 0.0
    %3321 = vmatpush1.msra.mxu0 0.0
    %3322 = vmatprep.subr.mxu0 0.0
    %3323 = vmatpush1.msra.mxu0 0.0
    %3324 = vmatprep.subr.mxu0 0.0
    %3325 = vmatpush1.msra.mxu0 0.0
    %3326 = vmatprep.subr.mxu0 0.0
    %3327 = vmatpush1.msra.mxu0 0.0
    %3328 = vmatprep.subr.mxu0 0.0
    %3329 = vmatpush1.msra.mxu0 0.0
    %3330 = vmatprep.subr.mxu0 0.0
    %3331 = vmatpush1.msra.mxu0 0.0
    %3332 = vmatprep.subr.mxu0 0.0
    %3333 = vmatpush1.msra.mxu0 0.0
    %3334 = vmatprep.subr.mxu0 0.0
    %3335 = vmatpush1.msra.mxu0 0.0
    %3336 = vmatprep.subr.mxu0 0.0
    %3337 = vmatpush1.msra.mxu0 0.0
    %3338 = vmatprep.subr.mxu0 0.0
    %3339 = vmatpush1.msra.mxu0 0.0
    %3340 = vmatprep.subr.mxu0 0.0
    %3341 = vmatpush1.msra.mxu0 0.0
    %3342 = vmatprep.subr.mxu0 0.0
    %3343 = vmatpush1.msra.mxu0 0.0
    %3344 = vmatprep.subr.mxu0 0.0
    %3345 = vmatpush1.msra.mxu0 0.0
    %3346 = vmatprep.subr.mxu0 0.0
    %3347 = vmatpush1.msra.mxu0 0.0
    %3348 = vmatprep.subr.mxu0 0.0
    %3349 = vmatpush1.msra.mxu0 0.0
    %3350 = vmatprep.subr.mxu0 0.0
    %3351 = vmatpush1.msra.mxu0 0.0
    %3352 = vmatprep.subr.mxu0 0.0
    %3353 = vmatpush1.msra.mxu0 0.0
    %3354 = vmatprep.subr.mxu0 0.0
    %3355 = vmatpush1.msra.mxu0 0.0
    %3356 = vmatprep.subr.mxu0 0.0
    %3357 = vmatpush1.msra.mxu0 0.0
    %3358 = vmatprep.mubr.f32.mxu0 0.0
    %3359 = vmatmul.mubr.f32.gmra.mrb[0].mxu0 %v3289
    %v3360 = vpop.f32.mrb[0].mxu0
    %v3361 = vadd.f32 %v3280, %v3360
    %v3362 = vpop.f32.mrb[0].mxu0
    %3363 = vmatprep.mubr.f32.mxu0 0.0
    %3364 = vmatmul.mubr.f32.gmra.mrb[0].mxu0 %v3292
    %v3365 = vpop.f32.mrb[0].mxu0
    %v3366 = vadd.f32 %v3285, %v3365
    %v3367 = vpop.f32.mrb[0].mxu0
    %3368 = vdwg.mxu0
    %3369 = vset.pattern.permute.xlu0 2
    %3370 = vperm.xlu0 %3369, %v3029
    %v3371 = vpop.permute.xlu0 %3370
    %3373 = vset.pattern.permute.xlu0 2
    %3374 = vperm.xlu0 %3373, %v3034
    %v3375 = vpop.permute.xlu0 %3374
    %v3377 = vlaneseq
    %v3378 = vshrl.u32 %v3377, 7
    %v3379 = vsub.s32 2, %v3378
    %v3380 = vrot.slane %v3108, %v3379
    %v3381 = vadd.f32 %v3371, %v3380
    %v3382 = vadd.f32 %v3375, %v3380
    %vm3383 = vcmp.ge.f32.partialorder %v3381, 0.0
    %vm3384 = vcmp.ge.f32.partialorder %v3382, 0.0
    %v3385 = vmul.f32 %v3381, 0.2
    %v3386 = vmul.f32 %v3382, 0.2
    %v3387 = vsel %vm3383, %v3381, %v3385
    %v3388 = vsel %vm3384, %v3382, %v3386
    %v3389 = vadd.f32 %v3387, %v1232
    %v3390 = vadd.f32 %v3388, %v1233
    %v3391 = vsel %vm32, %v3389, -inf
    %3392 = vmax.xlane.f32.xlu0 %v3391
    %v3393 = vpop.xlane.xlu0 %3392
    %v3394 = vsel %vm32, %v3390, -inf
    %3395 = vmax.xlane.f32.xlu0 %v3394
    %v3396 = vpop.xlane.xlu0 %3395
    %v3397 = vsub.f32 %v3389, %v3393
    %v3398 = vsub.f32 %v3390, %v3396
    %v3399 = vmul.f32 %v3397, 1.442695
    %v3400 = vpow.pop %v3399
    %v3401 = vmul.f32 %v3398, 1.442695
    %v3402 = vpow.pop %v3401
    %v3403 = vsel %vm32, %v3400, 0.0
    %3404 = vadd.xlane.f32.xlu0 %v3403
    %v3405 = vpop.xlane.xlu0 %3404
    %v3406 = vsel %vm32, %v3402, 0.0
    %3407 = vadd.xlane.f32.xlu0 %v3406
    %v3408 = vpop.xlane.xlu0 %3407
    %v3409 = vrcp.pop %v3405
    %v3410 = vrcp.pop %v3408
    %v3411 = vmul.f32 %v3400, %v3409
    %v3412 = vmul.f32 %v3402, %v3410
    %3413 = vrot.lane.b32.xlu0 %v2857, 96
    %v3414 = vpop.permute.xlu0 %3413
    %3415 = vrot.lane.b32.xlu0 %v2862, 96
    %v3416 = vpop.permute.xlu0 %3415
    %v3420 = vsel %vm32, %v3411, 0
    %v3423 = vsel %vm32, %v3412, 0
    %3425 = vmatprep.subr.mxu0 0.0
    %3426 = vmatpush1.msra.mxu0 %v3414
    %3427 = vmatprep.subr.mxu0 0.0
    %3428 = vmatpush1.msra.mxu0 %v3416
    %3429 = vmatprep.subr.mxu0 0.0
    %3430 = vmatpush1.msra.mxu0 0.0
    %3431 = vmatprep.subr.mxu0 0.0
    %3432 = vmatpush1.msra.mxu0 0.0
    %3433 = vmatprep.subr.mxu0 0.0
    %3434 = vmatpush1.msra.mxu0 0.0
    %3435 = vmatprep.subr.mxu0 0.0
    %3436 = vmatpush1.msra.mxu0 0.0
    %3437 = vmatprep.subr.mxu0 0.0
    %3438 = vmatpush1.msra.mxu0 0.0
    %3439 = vmatprep.subr.mxu0 0.0
    %3440 = vmatpush1.msra.mxu0 0.0
    %3441 = vmatprep.subr.mxu0 0.0
    %3442 = vmatpush1.msra.mxu0 0.0
    %3443 = vmatprep.subr.mxu0 0.0
    %3444 = vmatpush1.msra.mxu0 0.0
    %3445 = vmatprep.subr.mxu0 0.0
    %3446 = vmatpush1.msra.mxu0 0.0
    %3447 = vmatprep.subr.mxu0 0.0
    %3448 = vmatpush1.msra.mxu0 0.0
    %3449 = vmatprep.subr.mxu0 0.0
    %3450 = vmatpush1.msra.mxu0 0.0
    %3451 = vmatprep.subr.mxu0 0.0
    %3452 = vmatpush1.msra.mxu0 0.0
    %3453 = vmatprep.subr.mxu0 0.0
    %3454 = vmatpush1.msra.mxu0 0.0
    %3455 = vmatprep.subr.mxu0 0.0
    %3456 = vmatpush1.msra.mxu0 0.0
    %3457 = vmatprep.subr.mxu0 0.0
    %3458 = vmatpush1.msra.mxu0 0.0
    %3459 = vmatprep.subr.mxu0 0.0
    %3460 = vmatpush1.msra.mxu0 0.0
    %3461 = vmatprep.subr.mxu0 0.0
    %3462 = vmatpush1.msra.mxu0 0.0
    %3463 = vmatprep.subr.mxu0 0.0
    %3464 = vmatpush1.msra.mxu0 0.0
    %3465 = vmatprep.subr.mxu0 0.0
    %3466 = vmatpush1.msra.mxu0 0.0
    %3467 = vmatprep.subr.mxu0 0.0
    %3468 = vmatpush1.msra.mxu0 0.0
    %3469 = vmatprep.subr.mxu0 0.0
    %3470 = vmatpush1.msra.mxu0 0.0
    %3471 = vmatprep.subr.mxu0 0.0
    %3472 = vmatpush1.msra.mxu0 0.0
    %3473 = vmatprep.subr.mxu0 0.0
    %3474 = vmatpush1.msra.mxu0 0.0
    %3475 = vmatprep.subr.mxu0 0.0
    %3476 = vmatpush1.msra.mxu0 0.0
    %3477 = vmatprep.subr.mxu0 0.0
    %3478 = vmatpush1.msra.mxu0 0.0
    %3479 = vmatprep.subr.mxu0 0.0
    %3480 = vmatpush1.msra.mxu0 0.0
    %3481 = vmatprep.subr.mxu0 0.0
    %3482 = vmatpush1.msra.mxu0 0.0
    %3483 = vmatprep.subr.mxu0 0.0
    %3484 = vmatpush1.msra.mxu0 0.0
    %3485 = vmatprep.subr.mxu0 0.0
    %3486 = vmatpush1.msra.mxu0 0.0
    %3487 = vmatprep.subr.mxu0 0.0
    %3488 = vmatpush1.msra.mxu0 0.0
    %3489 = vmatprep.mubr.f32.mxu0 0.0
    %3490 = vmatmul.mubr.f32.gmra.mrb[0].mxu0 %v3420
    %v3491 = vpop.f32.mrb[0].mxu0
    %v3492 = vadd.f32 0.0, %v3491
    %v3493 = vpop.f32.mrb[0].mxu0
    %3494 = vmatprep.mubr.f32.mxu0 0.0
    %3495 = vmatmul.mubr.f32.gmra.mrb[0].mxu0 %v3423
    %v3496 = vpop.f32.mrb[0].mxu0
    %v3497 = vadd.f32 0.0, %v3496
    %v3498 = vpop.f32.mrb[0].mxu0
    %3499 = vdwg.mxu0
    %v3500 = vadd.f32 %v3361, %v3492
    %v3501 = vadd.f32 %v3366, %v3497
    %v3502 = vmul.f32 %v3500, 0.33333334
    %v3503 = vmul.f32 %v3501, 0.33333334
    %v3504 = vlaneseq
    %v3505 = vshrl.u32 %v3504, 7
    %v3506 = vsub.s32 3, %v3505
    %v3507 = vrot.slane %v1236, %v3506
    %v3508 = vadd.f32 %v3502, %v3507
    %v3509 = vadd.f32 %v3503, %v3507
    %v3510 = vmax.f32 %v3508, 0.0
    %v3511 = vmax.f32 %v3509, 0.0
    %v3512 = vxor.u32 %v2944, 2147483648
    %v3513 = vxor.u32 %v2949, 2147483648
    %v3514 = vmul.f32 %v3512, 1.442695
    %v3515 = vpow.pop %v3514
    %v3516 = vmul.f32 %v3513, 1.442695
    %v3517 = vpow.pop %v3516
    %v3518 = vadd.f32 %v3515, 1.0
    %v3519 = vadd.f32 %v3517, 1.0
    %v3520 = vrcp.pop %v3518
    %v3521 = vmul.f32 1.0, %v3520
    %v3522 = vrcp.pop %v3519
    %v3523 = vmul.f32 1.0, %v3522
    %v3524 = vmul.f32 %v3510, %v3521
    %v3525 = vmul.f32 %v3511, %v3523
    %v3526 = vsub.f32 1.0, %v3521
    %v3527 = vsub.f32 1.0, %v3523
    %v3528 = vmul.f32 %v2778, %v3526
    %v3529 = vmul.f32 %v2779, %v3527
    %v3530 = vadd.f32 %v3524, %v3528
    %v3531 = vadd.f32 %v3525, %v3529
    %v3532 = vmax.f32 %v3530, 0.0
    %v3533 = vmax.f32 %v3531, 0.0
    %v3534 = vld [vmem:[%s2 + $0x30] sm:$0xff]
    %v3535 = vld [vmem:[%s2 + $0x38] sm:$0xff]
    %v3537 = vsel %vm32, %v3532, 0
    %v3540 = vsel %vm32, %v3533, 0
    %3542 = vmatprep.subr.mxu0 0.0
    %3543 = vmatpush1.msra.mxu0 %v3534
    %3544 = vmatprep.subr.mxu0 0.0
    %3545 = vmatpush1.msra.mxu0 %v3535
    %3546 = vmatprep.subr.mxu0 0.0
    %3547 = vmatpush1.msra.mxu0 0.0
    %3548 = vmatprep.subr.mxu0 0.0
    %3549 = vmatpush1.msra.mxu0 0.0
    %3550 = vmatprep.subr.mxu0 0.0
    %3551 = vmatpush1.msra.mxu0 0.0
    %3552 = vmatprep.subr.mxu0 0.0
    %3553 = vmatpush1.msra.mxu0 0.0
    %3554 = vmatprep.subr.mxu0 0.0
    %3555 = vmatpush1.msra.mxu0 0.0
    %3556 = vmatprep.subr.mxu0 0.0
    %3557 = vmatpush1.msra.mxu0 0.0
    %3558 = vmatprep.subr.mxu0 0.0
    %3559 = vmatpush1.msra.mxu0 0.0
    %3560 = vmatprep.subr.mxu0 0.0
    %3561 = vmatpush1.msra.mxu0 0.0
    %3562 = vmatprep.subr.mxu0 0.0
    %3563 = vmatpush1.msra.mxu0 0.0
    %3564 = vmatprep.subr.mxu0 0.0
    %3565 = vmatpush1.msra.mxu0 0.0
    %3566 = vmatprep.subr.mxu0 0.0
    %3567 = vmatpush1.msra.mxu0 0.0
    %3568 = vmatprep.subr.mxu0 0.0
    %3569 = vmatpush1.msra.mxu0 0.0
    %3570 = vmatprep.subr.mxu0 0.0
    %3571 = vmatpush1.msra.mxu0 0.0
    %3572 = vmatprep.subr.mxu0 0.0
    %3573 = vmatpush1.msra.mxu0 0.0
    %3574 = vmatprep.subr.mxu0 0.0
    %3575 = vmatpush1.msra.mxu0 0.0
    %3576 = vmatprep.subr.mxu0 0.0
    %3577 = vmatpush1.msra.mxu0 0.0
    %3578 = vmatprep.subr.mxu0 0.0
    %3579 = vmatpush1.msra.mxu0 0.0
    %3580 = vmatprep.subr.mxu0 0.0
    %3581 = vmatpush1.msra.mxu0 0.0
    %3582 = vmatprep.subr.mxu0 0.0
    %3583 = vmatpush1.msra.mxu0 0.0
    %3584 = vmatprep.subr.mxu0 0.0
    %3585 = vmatpush1.msra.mxu0 0.0
    %3586 = vmatprep.subr.mxu0 0.0
    %3587 = vmatpush1.msra.mxu0 0.0
    %3588 = vmatprep.subr.mxu0 0.0
    %3589 = vmatpush1.msra.mxu0 0.0
    %3590 = vmatprep.subr.mxu0 0.0
    %3591 = vmatpush1.msra.mxu0 0.0
    %3592 = vmatprep.subr.mxu0 0.0
    %3593 = vmatpush1.msra.mxu0 0.0
    %3594 = vmatprep.subr.mxu0 0.0
    %3595 = vmatpush1.msra.mxu0 0.0
    %3596 = vmatprep.subr.mxu0 0.0
    %3597 = vmatpush1.msra.mxu0 0.0
    %3598 = vmatprep.subr.mxu0 0.0
    %3599 = vmatpush1.msra.mxu0 0.0
    %3600 = vmatprep.subr.mxu0 0.0
    %3601 = vmatpush1.msra.mxu0 0.0
    %3602 = vmatprep.subr.mxu0 0.0
    %3603 = vmatpush1.msra.mxu0 0.0
    %3604 = vmatprep.subr.mxu0 0.0
    %3605 = vmatpush1.msra.mxu0 0.0
    %3606 = vmatprep.mubr.f32.mxu0 0.0
    %3607 = vmatmul.mubr.f32.gmra.mrb[0].mxu0 %v3537
    %v3608 = vpop.f32.mrb[0].mxu0
    %v3609 = vadd.f32 0.0, %v3608
    %v3610 = vpop.f32.mrb[0].mxu0
    %3611 = vmatprep.mubr.f32.mxu0 0.0
    %3612 = vmatmul.mubr.f32.gmra.mrb[0].mxu0 %v3540
    %v3613 = vpop.f32.mrb[0].mxu0
    %v3614 = vadd.f32 0.0, %v3613
    %v3615 = vpop.f32.mrb[0].mxu0
    %3616 = vdwg.mxu0
    %v3617 = vlaneseq
    %v3618 = vshrl.u32 %v3617, 7
    %v3619 = vsub.s32 0, %v3618
    %v3620 = vrot.slane %v1237, %v3619
    %3623 = vrot.lane.b32.xlu0 %v3609, 112
    %v3624 = vpop.permute.xlu0 %3623
    %3625 = vrot.lane.b32.xlu0 %v3614, 112
    %v3626 = vpop.permute.xlu0 %3625
    %3629 = vmatprep.subr.mxu0 0.0
    %3630 = vmatpush1.msra.mxu0 %v3624
    %3631 = vmatprep.subr.mxu0 0.0
    %3632 = vmatpush1.msra.mxu0 %v3626
    %3633 = vmatprep.subr.mxu0 0.0
    %3634 = vmatpush1.msra.mxu0 0.0
    %3635 = vmatprep.subr.mxu0 0.0
    %3636 = vmatpush1.msra.mxu0 0.0
    %3637 = vmatprep.subr.mxu0 0.0
    %3638 = vmatpush1.msra.mxu0 0.0
    %3639 = vmatprep.subr.mxu0 0.0
    %3640 = vmatpush1.msra.mxu0 0.0
    %3641 = vmatprep.subr.mxu0 0.0
    %3642 = vmatpush1.msra.mxu0 0.0
    %3643 = vmatprep.subr.mxu0 0.0
    %3644 = vmatpush1.msra.mxu0 0.0
    %3645 = vmatprep.subr.mxu0 0.0
    %3646 = vmatpush1.msra.mxu0 0.0
    %3647 = vmatprep.subr.mxu0 0.0
    %3648 = vmatpush1.msra.mxu0 0.0
    %3649 = vmatprep.subr.mxu0 0.0
    %3650 = vmatpush1.msra.mxu0 0.0
    %3651 = vmatprep.subr.mxu0 0.0
    %3652 = vmatpush1.msra.mxu0 0.0
    %3653 = vmatprep.subr.mxu0 0.0
    %3654 = vmatpush1.msra.mxu0 0.0
    %3655 = vmatprep.subr.mxu0 0.0
    %3656 = vmatpush1.msra.mxu0 0.0
    %3657 = vmatprep.subr.mxu0 0.0
    %3658 = vmatpush1.msra.mxu0 0.0
    %3659 = vmatprep.subr.mxu0 0.0
    %3660 = vmatpush1.msra.mxu0 0.0
    %3661 = vmatprep.subr.mxu0 0.0
    %3662 = vmatpush1.msra.mxu0 0.0
    %3663 = vmatprep.subr.mxu0 0.0
    %3664 = vmatpush1.msra.mxu0 0.0
    %3665 = vmatprep.subr.mxu0 0.0
    %3666 = vmatpush1.msra.mxu0 0.0
    %3667 = vmatprep.subr.mxu0 0.0
    %3668 = vmatpush1.msra.mxu0 0.0
    %3669 = vmatprep.subr.mxu0 0.0
    %3670 = vmatpush1.msra.mxu0 0.0
    %3671 = vmatprep.subr.mxu0 0.0
    %3672 = vmatpush1.msra.mxu0 0.0
    %3673 = vmatprep.subr.mxu0 0.0
    %3674 = vmatpush1.msra.mxu0 0.0
    %3675 = vmatprep.subr.mxu0 0.0
    %3676 = vmatpush1.msra.mxu0 0.0
    %3677 = vmatprep.subr.mxu0 0.0
    %3678 = vmatpush1.msra.mxu0 0.0
    %3679 = vmatprep.subr.mxu0 0.0
    %3680 = vmatpush1.msra.mxu0 0.0
    %3681 = vmatprep.subr.mxu0 0.0
    %3682 = vmatpush1.msra.mxu0 0.0
    %3683 = vmatprep.subr.mxu0 0.0
    %3684 = vmatpush1.msra.mxu0 0.0
    %3685 = vmatprep.subr.mxu0 0.0
    %3686 = vmatpush1.msra.mxu0 0.0
    %3687 = vmatprep.subr.mxu0 0.0
    %3688 = vmatpush1.msra.mxu0 0.0
    %3689 = vmatprep.subr.mxu0 0.0
    %3690 = vmatpush1.msra.mxu0 0.0
    %3691 = vmatprep.subr.mxu0 0.0
    %3692 = vmatpush1.msra.mxu0 0.0
    %3693 = vmatprep.mubr.f32.mxu0 0.0
    %3694 = vmatmul.mubr.f32.gmra.mrb[0].mxu0 %v1347
    %v3695 = vpop.f32.mrb[0].mxu0
    %v3696 = vadd.f32 %v3620, %v3695
    %v3697 = vpop.f32.mrb[0].mxu0
    %3698 = vmatprep.mubr.f32.mxu0 0.0
    %3699 = vmatmul.mubr.f32.gmra.mrb[0].mxu0 %v1350
    %v3700 = vpop.f32.mrb[0].mxu0
    %v3701 = vadd.f32 %v3620, %v3700
    %v3702 = vpop.f32.mrb[0].mxu0
    %3703 = vdwg.mxu0
    %v3704 = vld [vmem:[%s2 + $0xe8] sm:$0xff]
    %v3705 = vld [vmem:[%s2 + $0xf0] sm:$0xff]
    %v3706 = vsel %vm32, %v3609, 0
    %v3708 = vsel %vm32, %v3614, 0
    %3710 = vmatprep.subr.mxu0 0.0
    %3711 = vmatpush1.msra.mxu0 %v3704
    %3712 = vmatprep.subr.mxu0 0.0
    %3713 = vmatpush1.msra.mxu0 %v3705
    %3714 = vmatprep.subr.mxu0 0.0
    %3715 = vmatpush1.msra.mxu0 0.0
    %3716 = vmatprep.subr.mxu0 0.0
    %3717 = vmatpush1.msra.mxu0 0.0
    %3718 = vmatprep.subr.mxu0 0.0
    %3719 = vmatpush1.msra.mxu0 0.0
    %3720 = vmatprep.subr.mxu0 0.0
    %3721 = vmatpush1.msra.mxu0 0.0
    %3722 = vmatprep.subr.mxu0 0.0
    %3723 = vmatpush1.msra.mxu0 0.0
    %3724 = vmatprep.subr.mxu0 0.0
    %3725 = vmatpush1.msra.mxu0 0.0
    %3726 = vmatprep.subr.mxu0 0.0
    %3727 = vmatpush1.msra.mxu0 0.0
    %3728 = vmatprep.subr.mxu0 0.0
    %3729 = vmatpush1.msra.mxu0 0.0
    %3730 = vmatprep.subr.mxu0 0.0
    %3731 = vmatpush1.msra.mxu0 0.0
    %3732 = vmatprep.subr.mxu0 0.0
    %3733 = vmatpush1.msra.mxu0 0.0
    %3734 = vmatprep.subr.mxu0 0.0
    %3735 = vmatpush1.msra.mxu0 0.0
    %3736 = vmatprep.subr.mxu0 0.0
    %3737 = vmatpush1.msra.mxu0 0.0
    %3738 = vmatprep.subr.mxu0 0.0
    %3739 = vmatpush1.msra.mxu0 0.0
    %3740 = vmatprep.subr.mxu0 0.0
    %3741 = vmatpush1.msra.mxu0 0.0
    %3742 = vmatprep.subr.mxu0 0.0
    %3743 = vmatpush1.msra.mxu0 0.0
    %3744 = vmatprep.subr.mxu0 0.0
    %3745 = vmatpush1.msra.mxu0 0.0
    %3746 = vmatprep.subr.mxu0 0.0
    %3747 = vmatpush1.msra.mxu0 0.0
    %3748 = vmatprep.subr.mxu0 0.0
    %3749 = vmatpush1.msra.mxu0 0.0
    %3750 = vmatprep.subr.mxu0 0.0
    %3751 = vmatpush1.msra.mxu0 0.0
    %3752 = vmatprep.subr.mxu0 0.0
    %3753 = vmatpush1.msra.mxu0 0.0
    %3754 = vmatprep.subr.mxu0 0.0
    %3755 = vmatpush1.msra.mxu0 0.0
    %3756 = vmatprep.subr.mxu0 0.0
    %3757 = vmatpush1.msra.mxu0 0.0
    %3758 = vmatprep.subr.mxu0 0.0
    %3759 = vmatpush1.msra.mxu0 0.0
    %3760 = vmatprep.subr.mxu0 0.0
    %3761 = vmatpush1.msra.mxu0 0.0
    %3762 = vmatprep.subr.mxu0 0.0
    %3763 = vmatpush1.msra.mxu0 0.0
    %3764 = vmatprep.subr.mxu0 0.0
    %3765 = vmatpush1.msra.mxu0 0.0
    %3766 = vmatprep.subr.mxu0 0.0
    %3767 = vmatpush1.msra.mxu0 0.0
    %3768 = vmatprep.subr.mxu0 0.0
    %3769 = vmatpush1.msra.mxu0 0.0
    %3770 = vmatprep.subr.mxu0 0.0
    %3771 = vmatpush1.msra.mxu0 0.0
    %3772 = vmatprep.subr.mxu0 0.0
    %3773 = vmatpush1.msra.mxu0 0.0
    %3774 = vmatprep.mubr.f32.mxu0 0.0
    %3775 = vmatmul.mubr.f32.gmra.mrb[0].mxu0 %v3706
    %v3776 = vpop.f32.mrb[0].mxu0
    %v3777 = vadd.f32 0.0, %v3776
    %v3778 = vpop.f32.mrb[0].mxu0
    %3779 = vmatprep.mubr.f32.mxu0 0.0
    %3780 = vmatmul.mubr.f32.gmra.mrb[0].mxu0 %v3708
    %v3781 = vpop.f32.mrb[0].mxu0
    %v3782 = vadd.f32 0.0, %v3781
    %v3783 = vpop.f32.mrb[0].mxu0
    %3784 = vdwg.mxu0
    %v3785 = vld [vmem:[%s2 + $0xf8] sm:$0x1]
    %v3787 = vsel %vm32, %v3785, 0
    %3789 = vmatprep.subr.mxu0 0.0
    %3790 = vmatpush1.xpose.msra.mxu0 %v3706
    %3791 = vmatprep.subr.mxu0 0.0
    %3792 = vmatpush1.xpose.msra.mxu0 %v3708
    %3793 = vmatprep.subr.mxu0 0.0
    %3794 = vmatpush1.xpose.msra.mxu0 0.0
    %3795 = vmatprep.subr.mxu0 0.0
    %3796 = vmatpush1.xpose.msra.mxu0 0.0
    %3797 = vmatprep.subr.mxu0 0.0
    %3798 = vmatpush1.xpose.msra.mxu0 0.0
    %3799 = vmatprep.subr.mxu0 0.0
    %3800 = vmatpush1.xpose.msra.mxu0 0.0
    %3801 = vmatprep.subr.mxu0 0.0
    %3802 = vmatpush1.xpose.msra.mxu0 0.0
    %3803 = vmatprep.subr.mxu0 0.0
    %3804 = vmatpush1.xpose.msra.mxu0 0.0
    %3805 = vmatprep.subr.mxu0 0.0
    %3806 = vmatpush1.xpose.msra.mxu0 0.0
    %3807 = vmatprep.subr.mxu0 0.0
    %3808 = vmatpush1.xpose.msra.mxu0 0.0
    %3809 = vmatprep.subr.mxu0 0.0
    %3810 = vmatpush1.xpose.msra.mxu0 0.0
    %3811 = vmatprep.subr.mxu0 0.0
    %3812 = vmatpush1.xpose.msra.mxu0 0.0
    %3813 = vmatprep.subr.mxu0 0.0
    %3814 = vmatpush1.xpose.msra.mxu0 0.0
    %3815 = vmatprep.subr.mxu0 0.0
    %3816 = vmatpush1.xpose.msra.mxu0 0.0
    %3817 = vmatprep.subr.mxu0 0.0
    %3818 = vmatpush1.xpose.msra.mxu0 0.0
    %3819 = vmatprep.subr.mxu0 0.0
    %3820 = vmatpush1.xpose.msra.mxu0 0.0
    %3821 = vmatprep.subr.mxu0 0.0
    %3822 = vmatpush1.xpose.msra.mxu0 0.0
    %3823 = vmatprep.subr.mxu0 0.0
    %3824 = vmatpush1.xpose.msra.mxu0 0.0
    %3825 = vmatprep.subr.mxu0 0.0
    %3826 = vmatpush1.xpose.msra.mxu0 0.0
    %3827 = vmatprep.subr.mxu0 0.0
    %3828 = vmatpush1.xpose.msra.mxu0 0.0
    %3829 = vmatprep.subr.mxu0 0.0
    %3830 = vmatpush1.xpose.msra.mxu0 0.0
    %3831 = vmatprep.subr.mxu0 0.0
    %3832 = vmatpush1.xpose.msra.mxu0 0.0
    %3833 = vmatprep.subr.mxu0 0.0
    %3834 = vmatpush1.xpose.msra.mxu0 0.0
    %3835 = vmatprep.subr.mxu0 0.0
    %3836 = vmatpush1.xpose.msra.mxu0 0.0
    %3837 = vmatprep.subr.mxu0 0.0
    %3838 = vmatpush1.xpose.msra.mxu0 0.0
    %3839 = vmatprep.subr.mxu0 0.0
    %3840 = vmatpush1.xpose.msra.mxu0 0.0
    %3841 = vmatprep.subr.mxu0 0.0
    %3842 = vmatpush1.xpose.msra.mxu0 0.0
    %3843 = vmatprep.subr.mxu0 0.0
    %3844 = vmatpush1.xpose.msra.mxu0 0.0
    %3845 = vmatprep.subr.mxu0 0.0
    %3846 = vmatpush1.xpose.msra.mxu0 0.0
    %3847 = vmatprep.subr.mxu0 0.0
    %3848 = vmatpush1.xpose.msra.mxu0 0.0
    %3849 = vmatprep.subr.mxu0 0.0
    %3850 = vmatpush1.xpose.msra.mxu0 0.0
    %3851 = vmatprep.subr.mxu0 0.0
    %3852 = vmatpush1.xpose.msra.mxu0 0.0
    %3853 = vmatprep.mubr.f32.mxu0 0.0
    %3854 = vmatmul.mubr.f32.gmra.mrb[0].mxu0 %v3787
    %v3855 = vpop.f32.mrb[0].mxu0
    %v3856 = vadd.f32 0.0, %v3855
    %v3857 = vpop.f32.mrb[0].mxu0
    %3858 = vdwg.mxu0
    %3860 = vset.pattern.permute.xlu0 0
    %3861 = vperm.xlu0 %3860, %v3777
    %v3862 = vpop.permute.xlu0 %3861
    %3865 = vset.pattern.permute.xlu0 0
    %3866 = vperm.xlu0 %3865, %v3782
    %v3867 = vpop.permute.xlu0 %3866
    %v3869 = vlaneseq
    %v3870 = vshrl.u32 %v3869, 7
    %v3871 = vsub.s32 0, %v3870
    %v3872 = vrot.slane %v3856, %v3871
    %v3873 = vadd.f32 %v3862, %v3872
    %v3874 = vadd.f32 %v3867, %v3872
    %vm3875 = vcmp.ge.f32.partialorder %v3873, 0.0
    %vm3876 = vcmp.ge.f32.partialorder %v3874, 0.0
    %v3877 = vmul.f32 %v3873, 0.2
    %v3878 = vmul.f32 %v3874, 0.2
    %v3879 = vsel %vm3875, %v3873, %v3877
    %v3880 = vsel %vm3876, %v3874, %v3878
    %v3881 = vadd.f32 %v3879, %v1232
    %v3882 = vadd.f32 %v3880, %v1233
    %v3883 = vsel %vm32, %v3881, -inf
    %3884 = vmax.xlane.f32.xlu0 %v3883
    %v3885 = vpop.xlane.xlu0 %3884
    %v3886 = vsel %vm32, %v3882, -inf
    %3887 = vmax.xlane.f32.xlu0 %v3886
    %v3888 = vpop.xlane.xlu0 %3887
    %v3889 = vsub.f32 %v3881, %v3885
    %v3890 = vsub.f32 %v3882, %v3888
    %v3891 = vmul.f32 %v3889, 1.442695
    %v3892 = vpow.pop %v3891
    %v3893 = vmul.f32 %v3890, 1.442695
    %v3894 = vpow.pop %v3893
    %v3895 = vsel %vm32, %v3892, 0.0
    %3896 = vadd.xlane.f32.xlu0 %v3895
    %v3897 = vpop.xlane.xlu0 %3896
    %v3898 = vsel %vm32, %v3894, 0.0
    %3899 = vadd.xlane.f32.xlu0 %v3898
    %v3900 = vpop.xlane.xlu0 %3899
    %v3901 = vrcp.pop %v3897
    %v3902 = vrcp.pop %v3900
    %v3903 = vmul.f32 %v3892, %v3901
    %v3904 = vmul.f32 %v3894, %v3902
    %v3905 = vlaneseq
    %v3906 = vshrl.u32 %v3905, 7
    %v3907 = vsub.s32 4, %v3906
    %v3908 = vrot.slane %v1236, %v3907
    %v3910 = vsel %vm32, %v3903, 0
    %v3913 = vsel %vm32, %v3904, 0
    %3915 = vmatprep.subr.mxu0 0.0
    %3916 = vmatpush1.msra.mxu0 %v3609
    %3917 = vmatprep.subr.mxu0 0.0
    %3918 = vmatpush1.msra.mxu0 %v3614
    %3919 = vmatprep.subr.mxu0 0.0
    %3920 = vmatpush1.msra.mxu0 0.0
    %3921 = vmatprep.subr.mxu0 0.0
    %3922 = vmatpush1.msra.mxu0 0.0
    %3923 = vmatprep.subr.mxu0 0.0
    %3924 = vmatpush1.msra.mxu0 0.0
    %3925 = vmatprep.subr.mxu0 0.0
    %3926 = vmatpush1.msra.mxu0 0.0
    %3927 = vmatprep.subr.mxu0 0.0
    %3928 = vmatpush1.msra.mxu0 0.0
    %3929 = vmatprep.subr.mxu0 0.0
    %3930 = vmatpush1.msra.mxu0 0.0
    %3931 = vmatprep.subr.mxu0 0.0
    %3932 = vmatpush1.msra.mxu0 0.0
    %3933 = vmatprep.subr.mxu0 0.0
    %3934 = vmatpush1.msra.mxu0 0.0
    %3935 = vmatprep.subr.mxu0 0.0
    %3936 = vmatpush1.msra.mxu0 0.0
    %3937 = vmatprep.subr.mxu0 0.0
    %3938 = vmatpush1.msra.mxu0 0.0
    %3939 = vmatprep.subr.mxu0 0.0
    %3940 = vmatpush1.msra.mxu0 0.0
    %3941 = vmatprep.subr.mxu0 0.0
    %3942 = vmatpush1.msra.mxu0 0.0
    %3943 = vmatprep.subr.mxu0 0.0
    %3944 = vmatpush1.msra.mxu0 0.0
    %3945 = vmatprep.subr.mxu0 0.0
    %3946 = vmatpush1.msra.mxu0 0.0
    %3947 = vmatprep.subr.mxu0 0.0
    %3948 = vmatpush1.msra.mxu0 0.0
    %3949 = vmatprep.subr.mxu0 0.0
    %3950 = vmatpush1.msra.mxu0 0.0
    %3951 = vmatprep.subr.mxu0 0.0
    %3952 = vmatpush1.msra.mxu0 0.0
    %3953 = vmatprep.subr.mxu0 0.0
    %3954 = vmatpush1.msra.mxu0 0.0
    %3955 = vmatprep.subr.mxu0 0.0
    %3956 = vmatpush1.msra.mxu0 0.0
    %3957 = vmatprep.subr.mxu0 0.0
    %3958 = vmatpush1.msra.mxu0 0.0
    %3959 = vmatprep.subr.mxu0 0.0
    %3960 = vmatpush1.msra.mxu0 0.0
    %3961 = vmatprep.subr.mxu0 0.0
    %3962 = vmatpush1.msra.mxu0 0.0
    %3963 = vmatprep.subr.mxu0 0.0
    %3964 = vmatpush1.msra.mxu0 0.0
    %3965 = vmatprep.subr.mxu0 0.0
    %3966 = vmatpush1.msra.mxu0 0.0
    %3967 = vmatprep.subr.mxu0 0.0
    %3968 = vmatpush1.msra.mxu0 0.0
    %3969 = vmatprep.subr.mxu0 0.0
    %3970 = vmatpush1.msra.mxu0 0.0
    %3971 = vmatprep.subr.mxu0 0.0
    %3972 = vmatpush1.msra.mxu0 0.0
    %3973 = vmatprep.subr.mxu0 0.0
    %3974 = vmatpush1.msra.mxu0 0.0
    %3975 = vmatprep.subr.mxu0 0.0
    %3976 = vmatpush1.msra.mxu0 0.0
    %3977 = vmatprep.subr.mxu0 0.0
    %3978 = vmatpush1.msra.mxu0 0.0
    %3979 = vmatprep.mubr.f32.mxu0 0.0
    %3980 = vmatmul.mubr.f32.gmra.mrb[0].mxu0 %v3910
    %v3981 = vpop.f32.mrb[0].mxu0
    %v3982 = vadd.f32 %v3908, %v3981
    %v3983 = vpop.f32.mrb[0].mxu0
    %3984 = vmatprep.mubr.f32.mxu0 0.0
    %3985 = vmatmul.mubr.f32.gmra.mrb[0].mxu0 %v3913
    %v3986 = vpop.f32.mrb[0].mxu0
    %v3987 = vadd.f32 %v3908, %v3986
    %v3988 = vpop.f32.mrb[0].mxu0
    %3989 = vdwg.mxu0
    %v3990 = vmax.f32 %v3982, 0.0
    %v3991 = vmax.f32 %v3987, 0.0
    %v3992 = vxor.u32 %v3696, 2147483648
    %v3993 = vxor.u32 %v3701, 2147483648
    %v3994 = vmul.f32 %v3992, 1.442695
    %v3995 = vpow.pop %v3994
    %v3996 = vmul.f32 %v3993, 1.442695
    %v3997 = vpow.pop %v3996
    %v3998 = vadd.f32 %v3995, 1.0
    %v3999 = vadd.f32 %v3997, 1.0
    %v4000 = vrcp.pop %v3998
    %v4001 = vmul.f32 1.0, %v4000
    %v4002 = vrcp.pop %v3999
    %v4003 = vmul.f32 1.0, %v4002
    %v4004 = vmul.f32 %v3990, %v4001
    %v4005 = vmul.f32 %v3991, %v4003
    %v4006 = vsub.f32 1.0, %v4001
    %v4007 = vsub.f32 1.0, %v4003
    %v4008 = vmul.f32 %v3530, %v4006
    %v4009 = vmul.f32 %v3531, %v4007
    %v4010 = vadd.f32 %v4004, %v4008
    %v4011 = vadd.f32 %v4005, %v4009
    %v4012 = vld [vmem:[%s0 + $0x20] sm:$0xff]
    %v4013 = vld [vmem:[%s0 + $0x28] sm:$0xff]
    %v4014 = vld [vmem:[%s0 + $0x40] sm:$0xff]
    %v4015 = vld [vmem:[%s0 + $0x48] sm:$0xff]
    %v4016 = vld [vmem:[%s3 + $0x120] sm:$0xff]
    %v4017 = vld [vmem:[%s3 + $0x128] sm:$0x1]
    %v4018 = vld [vmem:[%s3] sm:$0xff]
    %v4019 = vld [vmem:[%s3 + $0x8] sm:$0xf]
    %v4021 = vsel %vm262, %v1224, 0
    %v4024 = vsel %vm262, %v1229, 0
    %v4027 = vsel %vm681, %v4019, 0
    %4029 = vmatprep.subr.mxu0 0.0
    %4030 = vmatpush1.msra.mxu0 %v4018
    %4031 = vmatprep.subr.mxu0 0.0
    %4032 = vmatpush1.msra.mxu0 %v4027
    %4033 = vmatprep.subr.mxu0 0.0
    %4034 = vmatpush1.msra.mxu0 0.0
    %4035 = vmatprep.subr.mxu0 0.0
    %4036 = vmatpush1.msra.mxu0 0.0
    %4037 = vmatprep.subr.mxu0 0.0
    %4038 = vmatpush1.msra.mxu0 0.0
    %4039 = vmatprep.subr.mxu0 0.0
    %4040 = vmatpush1.msra.mxu0 0.0
    %4041 = vmatprep.subr.mxu0 0.0
    %4042 = vmatpush1.msra.mxu0 0.0
    %4043 = vmatprep.subr.mxu0 0.0
    %4044 = vmatpush1.msra.mxu0 0.0
    %4045 = vmatprep.subr.mxu0 0.0
    %4046 = vmatpush1.msra.mxu0 0.0
    %4047 = vmatprep.subr.mxu0 0.0
    %4048 = vmatpush1.msra.mxu0 0.0
    %4049 = vmatprep.subr.mxu0 0.0
    %4050 = vmatpush1.msra.mxu0 0.0
    %4051 = vmatprep.subr.mxu0 0.0
    %4052 = vmatpush1.msra.mxu0 0.0
    %4053 = vmatprep.subr.mxu0 0.0
    %4054 = vmatpush1.msra.mxu0 0.0
    %4055 = vmatprep.subr.mxu0 0.0
    %4056 = vmatpush1.msra.mxu0 0.0
    %4057 = vmatprep.subr.mxu0 0.0
    %4058 = vmatpush1.msra.mxu0 0.0
    %4059 = vmatprep.subr.mxu0 0.0
    %4060 = vmatpush1.msra.mxu0 0.0
    %4061 = vmatprep.subr.mxu0 0.0
    %4062 = vmatpush1.msra.mxu0 0.0
    %4063 = vmatprep.subr.mxu0 0.0
    %4064 = vmatpush1.msra.mxu0 0.0
    %4065 = vmatprep.subr.mxu0 0.0
    %4066 = vmatpush1.msra.mxu0 0.0
    %4067 = vmatprep.subr.mxu0 0.0
    %4068 = vmatpush1.msra.mxu0 0.0
    %4069 = vmatprep.subr.mxu0 0.0
    %4070 = vmatpush1.msra.mxu0 0.0
    %4071 = vmatprep.subr.mxu0 0.0
    %4072 = vmatpush1.msra.mxu0 0.0
    %4073 = vmatprep.subr.mxu0 0.0
    %4074 = vmatpush1.msra.mxu0 0.0
    %4075 = vmatprep.subr.mxu0 0.0
    %4076 = vmatpush1.msra.mxu0 0.0
    %4077 = vmatprep.subr.mxu0 0.0
    %4078 = vmatpush1.msra.mxu0 0.0
    %4079 = vmatprep.subr.mxu0 0.0
    %4080 = vmatpush1.msra.mxu0 0.0
    %4081 = vmatprep.subr.mxu0 0.0
    %4082 = vmatpush1.msra.mxu0 0.0
    %4083 = vmatprep.subr.mxu0 0.0
    %4084 = vmatpush1.msra.mxu0 0.0
    %4085 = vmatprep.subr.mxu0 0.0
    %4086 = vmatpush1.msra.mxu0 0.0
    %4087 = vmatprep.subr.mxu0 0.0
    %4088 = vmatpush1.msra.mxu0 0.0
    %4089 = vmatprep.subr.mxu0 0.0
    %4090 = vmatpush1.msra.mxu0 0.0
    %4091 = vmatprep.subr.mxu0 0.0
    %4092 = vmatpush1.msra.mxu0 0.0
    %4093 = vmatprep.mubr.f32.mxu0 0.0
    %4094 = vmatmul.mubr.f32.gmra.mrb[0].mxu0 %v4021
    %v4095 = vpop.f32.mrb[0].mxu0
    %v4096 = vadd.f32 0.0, %v4095
    %v4097 = vpop.f32.mrb[0].mxu0
    %4098 = vmatprep.mubr.f32.mxu0 0.0
    %4099 = vmatmul.mubr.f32.gmra.mrb[0].mxu0 %v4024
    %v4100 = vpop.f32.mrb[0].mxu0
    %v4101 = vadd.f32 0.0, %v4100
    %v4102 = vpop.f32.mrb[0].mxu0
    %4103 = vdwg.mxu0
    %v4104 = vlaneseq
    %v4105 = vshrl.u32 %v4104, 7
    %v4106 = vsub.s32 0, %v4105
    %v4107 = vrot.slane %v4016, %v4106
    %4109 = vrot.lane.b32.xlu0 %v4107, 48
    %v4110 = vpop.permute.xlu0 %4109
    %v4112 = vadd.f32 %v4096, %v4110
    %v4113 = vadd.f32 %v4101, %v4110
    %v4114 = vlaneseq
    %v4115 = vshrl.u32 %v4114, 7
    %v4116 = vsub.s32 5, %v4115
    %v4117 = vrot.slane %v4016, %v4116
    %4120 = vrot.lane.b32.xlu0 %v4096, 64
    %v4121 = vpop.permute.xlu0 %4120
    %4122 = vrot.lane.b32.xlu0 %v4101, 64
    %v4123 = vpop.permute.xlu0 %4122
    %v4127 = vsel %vm32, %v4014, 0
    %v4130 = vsel %vm32, %v4015, 0
    %4132 = vmatprep.subr.mxu0 0.0
    %4133 = vmatpush1.msra.mxu0 %v4121
    %4134 = vmatprep.subr.mxu0 0.0
    %4135 = vmatpush1.msra.mxu0 %v4123
    %4136 = vmatprep.subr.mxu0 0.0
    %4137 = vmatpush1.msra.mxu0 0.0
    %4138 = vmatprep.subr.mxu0 0.0
    %4139 = vmatpush1.msra.mxu0 0.0
    %4140 = vmatprep.subr.mxu0 0.0
    %4141 = vmatpush1.msra.mxu0 0.0
    %4142 = vmatprep.subr.mxu0 0.0
    %4143 = vmatpush1.msra.mxu0 0.0
    %4144 = vmatprep.subr.mxu0 0.0
    %4145 = vmatpush1.msra.mxu0 0.0
    %4146 = vmatprep.subr.mxu0 0.0
    %4147 = vmatpush1.msra.mxu0 0.0
    %4148 = vmatprep.subr.mxu0 0.0
    %4149 = vmatpush1.msra.mxu0 0.0
    %4150 = vmatprep.subr.mxu0 0.0
    %4151 = vmatpush1.msra.mxu0 0.0
    %4152 = vmatprep.subr.mxu0 0.0
    %4153 = vmatpush1.msra.mxu0 0.0
    %4154 = vmatprep.subr.mxu0 0.0
    %4155 = vmatpush1.msra.mxu0 0.0
    %4156 = vmatprep.subr.mxu0 0.0
    %4157 = vmatpush1.msra.mxu0 0.0
    %4158 = vmatprep.subr.mxu0 0.0
    %4159 = vmatpush1.msra.mxu0 0.0
    %4160 = vmatprep.subr.mxu0 0.0
    %4161 = vmatpush1.msra.mxu0 0.0
    %4162 = vmatprep.subr.mxu0 0.0
    %4163 = vmatpush1.msra.mxu0 0.0
    %4164 = vmatprep.subr.mxu0 0.0
    %4165 = vmatpush1.msra.mxu0 0.0
    %4166 = vmatprep.subr.mxu0 0.0
    %4167 = vmatpush1.msra.mxu0 0.0
    %4168 = vmatprep.subr.mxu0 0.0
    %4169 = vmatpush1.msra.mxu0 0.0
    %4170 = vmatprep.subr.mxu0 0.0
    %4171 = vmatpush1.msra.mxu0 0.0
    %4172 = vmatprep.subr.mxu0 0.0
    %4173 = vmatpush1.msra.mxu0 0.0
    %4174 = vmatprep.subr.mxu0 0.0
    %4175 = vmatpush1.msra.mxu0 0.0
    %4176 = vmatprep.subr.mxu0 0.0
    %4177 = vmatpush1.msra.mxu0 0.0
    %4178 = vmatprep.subr.mxu0 0.0
    %4179 = vmatpush1.msra.mxu0 0.0
    %4180 = vmatprep.subr.mxu0 0.0
    %4181 = vmatpush1.msra.mxu0 0.0
    %4182 = vmatprep.subr.mxu0 0.0
    %4183 = vmatpush1.msra.mxu0 0.0
    %4184 = vmatprep.subr.mxu0 0.0
    %4185 = vmatpush1.msra.mxu0 0.0
    %4186 = vmatprep.subr.mxu0 0.0
    %4187 = vmatpush1.msra.mxu0 0.0
    %4188 = vmatprep.subr.mxu0 0.0
    %4189 = vmatpush1.msra.mxu0 0.0
    %4190 = vmatprep.subr.mxu0 0.0
    %4191 = vmatpush1.msra.mxu0 0.0
    %4192 = vmatprep.subr.mxu0 0.0
    %4193 = vmatpush1.msra.mxu0 0.0
    %4194 = vmatprep.subr.mxu0 0.0
    %4195 = vmatpush1.msra.mxu0 0.0
    %4196 = vmatprep.mubr.f32.mxu0 0.0
    %4197 = vmatmul.mubr.f32.gmra.mrb[0].mxu0 %v4127
    %v4198 = vpop.f32.mrb[0].mxu0
    %v4199 = vadd.f32 %v4117, %v4198
    %v4200 = vpop.f32.mrb[0].mxu0
    %4201 = vmatprep.mubr.f32.mxu0 0.0
    %4202 = vmatmul.mubr.f32.gmra.mrb[0].mxu0 %v4130
    %v4203 = vpop.f32.mrb[0].mxu0
    %v4204 = vadd.f32 %v4117, %v4203
    %v4205 = vpop.f32.mrb[0].mxu0
    %4206 = vdwg.mxu0
    %v4207 = vld [vmem:[%s3 + $0x40] sm:$0xff]
    %v4208 = vld [vmem:[%s3 + $0x48] sm:$0xff]
    %v4209 = vld [vmem:[%s3 + $0x50] sm:$0xff]
    %v4210 = vld [vmem:[%s3 + $0x58] sm:$0xff]
    %v4211 = vld [vmem:[%s3 + $0x60] sm:$0xff]
    %v4212 = vld [vmem:[%s3 + $0x68] sm:$0xff]
    %v4213 = vsel %vm1433, %v4096, 0
    %v4215 = vsel %vm1433, %v4101, 0
    %4217 = vmatprep.subr.mxu0 0.0
    %4218 = vmatpush1.msra.mxu0 %v4207
    %4219 = vmatprep.subr.mxu0 0.0
    %4220 = vmatpush1.msra.mxu0 %v4208
    %4221 = vmatprep.subr.mxu0 0.0
    %4222 = vmatpush1.msra.mxu0 %v4209
    %4223 = vmatprep.subr.mxu0 0.0
    %4224 = vmatpush1.msra.mxu0 %v4210
    %4225 = vmatprep.subr.mxu0 0.0
    %4226 = vmatpush1.msra.mxu0 %v4211
    %4227 = vmatprep.subr.mxu0 0.0
    %4228 = vmatpush1.msra.mxu0 %v4212
    %4229 = vmatprep.subr.mxu0 0.0
    %4230 = vmatpush1.msra.mxu0 0.0
    %4231 = vmatprep.subr.mxu0 0.0
    %4232 = vmatpush1.msra.mxu0 0.0
    %4233 = vmatprep.subr.mxu0 0.0
    %4234 = vmatpush1.msra.mxu0 0.0
    %4235 = vmatprep.subr.mxu0 0.0
    %4236 = vmatpush1.msra.mxu0 0.0
    %4237 = vmatprep.subr.mxu0 0.0
    %4238 = vmatpush1.msra.mxu0 0.0
    %4239 = vmatprep.subr.mxu0 0.0
    %4240 = vmatpush1.msra.mxu0 0.0
    %4241 = vmatprep.subr.mxu0 0.0
    %4242 = vmatpush1.msra.mxu0 0.0
    %4243 = vmatprep.subr.mxu0 0.0
    %4244 = vmatpush1.msra.mxu0 0.0
    %4245 = vmatprep.subr.mxu0 0.0
    %4246 = vmatpush1.msra.mxu0 0.0
    %4247 = vmatprep.subr.mxu0 0.0
    %4248 = vmatpush1.msra.mxu0 0.0
    %4249 = vmatprep.subr.mxu0 0.0
    %4250 = vmatpush1.msra.mxu0 0.0
    %4251 = vmatprep.subr.mxu0 0.0
    %4252 = vmatpush1.msra.mxu0 0.0
    %4253 = vmatprep.subr.mxu0 0.0
    %4254 = vmatpush1.msra.mxu0 0.0
    %4255 = vmatprep.subr.mxu0 0.0
    %4256 = vmatpush1.msra.mxu0 0.0
    %4257 = vmatprep.subr.mxu0 0.0
    %4258 = vmatpush1.msra.mxu0 0.0
    %4259 = vmatprep.subr.mxu0 0.0
    %4260 = vmatpush1.msra.mxu0 0.0
    %4261 = vmatprep.subr.mxu0 0.0
    %4262 = vmatpush1.msra.mxu0 0.0
    %4263 = vmatprep.subr.mxu0 0.0
    %4264 = vmatpush1.msra.mxu0 0.0
    %4265 = vmatprep.subr.mxu0 0.0
    %4266 = vmatpush1.msra.mxu0 0.0
    %4267 = vmatprep.subr.mxu0 0.0
    %4268 = vmatpush1.msra.mxu0 0.0
    %4269 = vmatprep.subr.mxu0 0.0
    %4270 = vmatpush1.msra.mxu0 0.0
    %4271 = vmatprep.subr.mxu0 0.0
    %4272 = vmatpush1.msra.mxu0 0.0
    %4273 = vmatprep.subr.mxu0 0.0
    %4274 = vmatpush1.msra.mxu0 0.0
    %4275 = vmatprep.subr.mxu0 0.0
    %4276 = vmatpush1.msra.mxu0 0.0
    %4277 = vmatprep.subr.mxu0 0.0
    %4278 = vmatpush1.msra.mxu0 0.0
    %4279 = vmatprep.subr.mxu0 0.0
    %4280 = vmatpush1.msra.mxu0 0.0
    %4281 = vmatprep.mubr.f32.mxu0 0.0
    %4282 = vmatmul.mubr.f32.gmra.mrb[0].mxu0 %v4213
    %v4283 = vpop.f32.mrb[0].mxu0
    %v4284 = vadd.f32 0.0, %v4283
    %v4285 = vpop.f32.mrb[0].mxu0
    %4286 = vmatprep.mubr.f32.mxu0 0.0
    %4287 = vmatmul.mubr.f32.gmra.mrb[0].mxu0 %v4215
    %v4288 = vpop.f32.mrb[0].mxu0
    %v4289 = vadd.f32 0.0, %v4288
    %v4290 = vpop.f32.mrb[0].mxu0
    %4291 = vdwg.mxu0
    %v4292 = vld [vmem:[%s3 + $0x70] sm:$0x7]
    %v4294 = vsel %vm1433, %v4292, 0
    %4296 = vmatprep.subr.mxu0 0.0
    %4297 = vmatpush1.xpose.msra.mxu0 %v4213
    %4298 = vmatprep.subr.mxu0 0.0
    %4299 = vmatpush1.xpose.msra.mxu0 %v4215
    %4300 = vmatprep.subr.mxu0 0.0
    %4301 = vmatpush1.xpose.msra.mxu0 0.0
    %4302 = vmatprep.subr.mxu0 0.0
    %4303 = vmatpush1.xpose.msra.mxu0 0.0
    %4304 = vmatprep.subr.mxu0 0.0
    %4305 = vmatpush1.xpose.msra.mxu0 0.0
    %4306 = vmatprep.subr.mxu0 0.0
    %4307 = vmatpush1.xpose.msra.mxu0 0.0
    %4308 = vmatprep.subr.mxu0 0.0
    %4309 = vmatpush1.xpose.msra.mxu0 0.0
    %4310 = vmatprep.subr.mxu0 0.0
    %4311 = vmatpush1.xpose.msra.mxu0 0.0
    %4312 = vmatprep.subr.mxu0 0.0
    %4313 = vmatpush1.xpose.msra.mxu0 0.0
    %4314 = vmatprep.subr.mxu0 0.0
    %4315 = vmatpush1.xpose.msra.mxu0 0.0
    %4316 = vmatprep.subr.mxu0 0.0
    %4317 = vmatpush1.xpose.msra.mxu0 0.0
    %4318 = vmatprep.subr.mxu0 0.0
    %4319 = vmatpush1.xpose.msra.mxu0 0.0
    %4320 = vmatprep.subr.mxu0 0.0
    %4321 = vmatpush1.xpose.msra.mxu0 0.0
    %4322 = vmatprep.subr.mxu0 0.0
    %4323 = vmatpush1.xpose.msra.mxu0 0.0
    %4324 = vmatprep.subr.mxu0 0.0
    %4325 = vmatpush1.xpose.msra.mxu0 0.0
    %4326 = vmatprep.subr.mxu0 0.0
    %4327 = vmatpush1.xpose.msra.mxu0 0.0
    %4328 = vmatprep.subr.mxu0 0.0
    %4329 = vmatpush1.xpose.msra.mxu0 0.0
    %4330 = vmatprep.subr.mxu0 0.0
    %4331 = vmatpush1.xpose.msra.mxu0 0.0
    %4332 = vmatprep.subr.mxu0 0.0
    %4333 = vmatpush1.xpose.msra.mxu0 0.0
    %4334 = vmatprep.subr.mxu0 0.0
    %4335 = vmatpush1.xpose.msra.mxu0 0.0
    %4336 = vmatprep.subr.mxu0 0.0
    %4337 = vmatpush1.xpose.msra.mxu0 0.0
    %4338 = vmatprep.subr.mxu0 0.0
    %4339 = vmatpush1.xpose.msra.mxu0 0.0
    %4340 = vmatprep.subr.mxu0 0.0
    %4341 = vmatpush1.xpose.msra.mxu0 0.0
    %4342 = vmatprep.subr.mxu0 0.0
    %4343 = vmatpush1.xpose.msra.mxu0 0.0
    %4344 = vmatprep.subr.mxu0 0.0
    %4345 = vmatpush1.xpose.msra.mxu0 0.0
    %4346 = vmatprep.subr.mxu0 0.0
    %4347 = vmatpush1.xpose.msra.mxu0 0.0
    %4348 = vmatprep.subr.mxu0 0.0
    %4349 = vmatpush1.xpose.msra.mxu0 0.0
    %4350 = vmatprep.subr.mxu0 0.0
    %4351 = vmatpush1.xpose.msra.mxu0 0.0
    %4352 = vmatprep.subr.mxu0 0.0
    %4353 = vmatpush1.xpose.msra.mxu0 0.0
    %4354 = vmatprep.subr.mxu0 0.0
    %4355 = vmatpush1.xpose.msra.mxu0 0.0
    %4356 = vmatprep.subr.mxu0 0.0
    %4357 = vmatpush1.xpose.msra.mxu0 0.0
    %4358 = vmatprep.subr.mxu0 0.0
    %4359 = vmatpush1.xpose.msra.mxu0 0.0
    %4360 = vmatprep.mubr.f32.mxu0 0.0
    %4361 = vmatmul.mubr.f32.gmra.mrb[0].mxu0 %v4294
    %v4362 = vpop.f32.mrb[0].mxu0
    %v4363 = vadd.f32 0.0, %v4362
    %v4364 = vpop.f32.mrb[0].mxu0
    %4365 = vdwg.mxu0
    %4367 = vset.pattern.permute.xlu0 0
    %4368 = vperm.xlu0 %4367, %v4284
    %v4369 = vpop.permute.xlu0 %4368
    %4372 = vset.pattern.permute.xlu0 0
    %4373 = vperm.xlu0 %4372, %v4289
    %v4374 = vpop.permute.xlu0 %4373
    %v4376 = vlaneseq
    %v4377 = vshrl.u32 %v4376, 7
    %v4378 = vsub.s32 0, %v4377
    %v4379 = vrot.slane %v4363, %v4378
    %v4380 = vadd.f32 %v4369, %v4379
    %v4381 = vadd.f32 %v4374, %v4379
    %vm4382 = vcmp.ge.f32.partialorder %v4380, 0.0
    %vm4383 = vcmp.ge.f32.partialorder %v4381, 0.0
    %v4384 = vmul.f32 %v4380, 0.2
    %v4385 = vmul.f32 %v4381, 0.2
    %v4386 = vsel %vm4382, %v4380, %v4384
    %v4387 = vsel %vm4383, %v4381, %v4385
    %v4388 = vadd.f32 %v4386, %v4012
    %v4389 = vadd.f32 %v4387, %v4013
    %v4390 = vsel %vm32, %v4388, -inf
    %4391 = vmax.xlane.f32.xlu0 %v4390
    %v4392 = vpop.xlane.xlu0 %4391
    %v4393 = vsel %vm32, %v4389, -inf
    %4394 = vmax.xlane.f32.xlu0 %v4393
    %v4395 = vpop.xlane.xlu0 %4394
    %v4396 = vsub.f32 %v4388, %v4392
    %v4397 = vsub.f32 %v4389, %v4395
    %v4398 = vmul.f32 %v4396, 1.442695
    %v4399 = vpow.pop %v4398
    %v4400 = vmul.f32 %v4397, 1.442695
    %v4401 = vpow.pop %v4400
    %v4402 = vsel %vm32, %v4399, 0.0
    %4403 = vadd.xlane.f32.xlu0 %v4402
    %v4404 = vpop.xlane.xlu0 %4403
    %v4405 = vsel %vm32, %v4401, 0.0
    %4406 = vadd.xlane.f32.xlu0 %v4405
    %v4407 = vpop.xlane.xlu0 %4406
    %v4408 = vrcp.pop %v4404
    %v4409 = vrcp.pop %v4407
    %v4410 = vmul.f32 %v4399, %v4408
    %v4411 = vmul.f32 %v4401, %v4409
    %4412 = vset.pattern.permute.xlu0 1
    %4413 = vperm.xlu0 %4412, %v4284
    %v4414 = vpop.permute.xlu0 %4413
    %4416 = vset.pattern.permute.xlu0 1
    %4417 = vperm.xlu0 %4416, %v4289
    %v4418 = vpop.permute.xlu0 %4417
    %v4420 = vlaneseq
    %v4421 = vshrl.u32 %v4420, 7
    %v4422 = vsub.s32 1, %v4421
    %v4423 = vrot.slane %v4363, %v4422
    %v4424 = vadd.f32 %v4414, %v4423
    %v4425 = vadd.f32 %v4418, %v4423
    %vm4426 = vcmp.ge.f32.partialorder %v4424, 0.0
    %vm4427 = vcmp.ge.f32.partialorder %v4425, 0.0
    %v4428 = vmul.f32 %v4424, 0.2
    %v4429 = vmul.f32 %v4425, 0.2
    %v4430 = vsel %vm4426, %v4424, %v4428
    %v4431 = vsel %vm4427, %v4425, %v4429
    %v4432 = vadd.f32 %v4430, %v4012
    %v4433 = vadd.f32 %v4431, %v4013
    %v4434 = vsel %vm32, %v4432, -inf
    %4435 = vmax.xlane.f32.xlu0 %v4434
    %v4436 = vpop.xlane.xlu0 %4435
    %v4437 = vsel %vm32, %v4433, -inf
    %4438 = vmax.xlane.f32.xlu0 %v4437
    %v4439 = vpop.xlane.xlu0 %4438
    %v4440 = vsub.f32 %v4432, %v4436
    %v4441 = vsub.f32 %v4433, %v4439
    %v4442 = vmul.f32 %v4440, 1.442695
    %v4443 = vpow.pop %v4442
    %v4444 = vmul.f32 %v4441, 1.442695
    %v4445 = vpow.pop %v4444
    %v4446 = vsel %vm32, %v4443, 0.0
    %4447 = vadd.xlane.f32.xlu0 %v4446
    %v4448 = vpop.xlane.xlu0 %4447
    %v4449 = vsel %vm32, %v4445, 0.0
    %4450 = vadd.xlane.f32.xlu0 %v4449
    %v4451 = vpop.xlane.xlu0 %4450
    %v4452 = vrcp.pop %v4448
    %v4453 = vrcp.pop %v4451
    %v4454 = vmul.f32 %v4443, %v4452
    %v4455 = vmul.f32 %v4445, %v4453
    %4456 = vrot.lane.b32.xlu0 %v4096, 112
    %v4457 = vpop.permute.xlu0 %4456
    %4458 = vrot.lane.b32.xlu0 %v4101, 112
    %v4459 = vpop.permute.xlu0 %4458
    %v4463 = vsel %vm32, %v4454, 0
    %v4466 = vsel %vm32, %v4455, 0
    %4468 = vmatprep.subr.mxu0 0.0
    %4469 = vmatpush1.msra.mxu0 %v4457
    %4470 = vmatprep.subr.mxu0 0.0
    %4471 = vmatpush1.msra.mxu0 %v4459
    %4472 = vmatprep.subr.mxu0 0.0
    %4473 = vmatpush1.msra.mxu0 0.0
    %4474 = vmatprep.subr.mxu0 0.0
    %4475 = vmatpush1.msra.mxu0 0.0
    %4476 = vmatprep.subr.mxu0 0.0
    %4477 = vmatpush1.msra.mxu0 0.0
    %4478 = vmatprep.subr.mxu0 0.0
    %4479 = vmatpush1.msra.mxu0 0.0
    %4480 = vmatprep.subr.mxu0 0.0
    %4481 = vmatpush1.msra.mxu0 0.0
    %4482 = vmatprep.subr.mxu0 0.0
    %4483 = vmatpush1.msra.mxu0 0.0
    %4484 = vmatprep.subr.mxu0 0.0
    %4485 = vmatpush1.msra.mxu0 0.0
    %4486 = vmatprep.subr.mxu0 0.0
    %4487 = vmatpush1.msra.mxu0 0.0
    %4488 = vmatprep.subr.mxu0 0.0
    %4489 = vmatpush1.msra.mxu0 0.0
    %4490 = vmatprep.subr.mxu0 0.0
    %4491 = vmatpush1.msra.mxu0 0.0
    %4492 = vmatprep.subr.mxu0 0.0
    %4493 = vmatpush1.msra.mxu0 0.0
    %4494 = vmatprep.subr.mxu0 0.0
    %4495 = vmatpush1.msra.mxu0 0.0
    %4496 = vmatprep.subr.mxu0 0.0
    %4497 = vmatpush1.msra.mxu0 0.0
    %4498 = vmatprep.subr.mxu0 0.0
    %4499 = vmatpush1.msra.mxu0 0.0
    %4500 = vmatprep.subr.mxu0 0.0
    %4501 = vmatpush1.msra.mxu0 0.0
    %4502 = vmatprep.subr.mxu0 0.0
    %4503 = vmatpush1.msra.mxu0 0.0
    %4504 = vmatprep.subr.mxu0 0.0
    %4505 = vmatpush1.msra.mxu0 0.0
    %4506 = vmatprep.subr.mxu0 0.0
    %4507 = vmatpush1.msra.mxu0 0.0
    %4508 = vmatprep.subr.mxu0 0.0
    %4509 = vmatpush1.msra.mxu0 0.0
    %4510 = vmatprep.subr.mxu0 0.0
    %4511 = vmatpush1.msra.mxu0 0.0
    %4512 = vmatprep.subr.mxu0 0.0
    %4513 = vmatpush1.msra.mxu0 0.0
    %4514 = vmatprep.subr.mxu0 0.0
    %4515 = vmatpush1.msra.mxu0 0.0
    %4516 = vmatprep.subr.mxu0 0.0
    %4517 = vmatpush1.msra.mxu0 0.0
    %4518 = vmatprep.subr.mxu0 0.0
    %4519 = vmatpush1.msra.mxu0 0.0
    %4520 = vmatprep.subr.mxu0 0.0
    %4521 = vmatpush1.msra.mxu0 0.0
    %4522 = vmatprep.subr.mxu0 0.0
    %4523 = vmatpush1.msra.mxu0 0.0
    %4524 = vmatprep.subr.mxu0 0.0
    %4525 = vmatpush1.msra.mxu0 0.0
    %4526 = vmatprep.subr.mxu0 0.0
    %4527 = vmatpush1.msra.mxu0 0.0
    %4528 = vmatprep.subr.mxu0 0.0
    %4529 = vmatpush1.msra.mxu0 0.0
    %4530 = vmatprep.subr.mxu0 0.0
    %4531 = vmatpush1.msra.mxu0 0.0
    %4532 = vmatprep.mubr.f32.mxu0 0.0
    %4533 = vmatmul.mubr.f32.gmra.mrb[0].mxu0 %v4463
    %v4534 = vpop.f32.mrb[0].mxu0
    %v4535 = vadd.f32 0.0, %v4534
    %v4536 = vpop.f32.mrb[0].mxu0
    %4537 = vmatprep.mubr.f32.mxu0 0.0
    %4538 = vmatmul.mubr.f32.gmra.mrb[0].mxu0 %v4466
    %v4539 = vpop.f32.mrb[0].mxu0
    %v4540 = vadd.f32 0.0, %v4539
    %v4541 = vpop.f32.mrb[0].mxu0
    %4542 = vdwg.mxu0
    %v4544 = vsel %vm32, %v4410, 0
    %v4547 = vsel %vm32, %v4411, 0
    %4549 = vmatprep.subr.mxu0 0.0
    %4550 = vmatpush1.msra.mxu0 %v4096
    %4551 = vmatprep.subr.mxu0 0.0
    %4552 = vmatpush1.msra.mxu0 %v4101
    %4553 = vmatprep.subr.mxu0 0.0
    %4554 = vmatpush1.msra.mxu0 0.0
    %4555 = vmatprep.subr.mxu0 0.0
    %4556 = vmatpush1.msra.mxu0 0.0
    %4557 = vmatprep.subr.mxu0 0.0
    %4558 = vmatpush1.msra.mxu0 0.0
    %4559 = vmatprep.subr.mxu0 0.0
    %4560 = vmatpush1.msra.mxu0 0.0
    %4561 = vmatprep.subr.mxu0 0.0
    %4562 = vmatpush1.msra.mxu0 0.0
    %4563 = vmatprep.subr.mxu0 0.0
    %4564 = vmatpush1.msra.mxu0 0.0
    %4565 = vmatprep.subr.mxu0 0.0
    %4566 = vmatpush1.msra.mxu0 0.0
    %4567 = vmatprep.subr.mxu0 0.0
    %4568 = vmatpush1.msra.mxu0 0.0
    %4569 = vmatprep.subr.mxu0 0.0
    %4570 = vmatpush1.msra.mxu0 0.0
    %4571 = vmatprep.subr.mxu0 0.0
    %4572 = vmatpush1.msra.mxu0 0.0
    %4573 = vmatprep.subr.mxu0 0.0
    %4574 = vmatpush1.msra.mxu0 0.0
    %4575 = vmatprep.subr.mxu0 0.0
    %4576 = vmatpush1.msra.mxu0 0.0
    %4577 = vmatprep.subr.mxu0 0.0
    %4578 = vmatpush1.msra.mxu0 0.0
    %4579 = vmatprep.subr.mxu0 0.0
    %4580 = vmatpush1.msra.mxu0 0.0
    %4581 = vmatprep.subr.mxu0 0.0
    %4582 = vmatpush1.msra.mxu0 0.0
    %4583 = vmatprep.subr.mxu0 0.0
    %4584 = vmatpush1.msra.mxu0 0.0
    %4585 = vmatprep.subr.mxu0 0.0
    %4586 = vmatpush1.msra.mxu0 0.0
    %4587 = vmatprep.subr.mxu0 0.0
    %4588 = vmatpush1.msra.mxu0 0.0
    %4589 = vmatprep.subr.mxu0 0.0
    %4590 = vmatpush1.msra.mxu0 0.0
    %4591 = vmatprep.subr.mxu0 0.0
    %4592 = vmatpush1.msra.mxu0 0.0
    %4593 = vmatprep.subr.mxu0 0.0
    %4594 = vmatpush1.msra.mxu0 0.0
    %4595 = vmatprep.subr.mxu0 0.0
    %4596 = vmatpush1.msra.mxu0 0.0
    %4597 = vmatprep.subr.mxu0 0.0
    %4598 = vmatpush1.msra.mxu0 0.0
    %4599 = vmatprep.subr.mxu0 0.0
    %4600 = vmatpush1.msra.mxu0 0.0
    %4601 = vmatprep.subr.mxu0 0.0
    %4602 = vmatpush1.msra.mxu0 0.0
    %4603 = vmatprep.subr.mxu0 0.0
    %4604 = vmatpush1.msra.mxu0 0.0
    %4605 = vmatprep.subr.mxu0 0.0
    %4606 = vmatpush1.msra.mxu0 0.0
    %4607 = vmatprep.subr.mxu0 0.0
    %4608 = vmatpush1.msra.mxu0 0.0
    %4609 = vmatprep.subr.mxu0 0.0
    %4610 = vmatpush1.msra.mxu0 0.0
    %4611 = vmatprep.subr.mxu0 0.0
    %4612 = vmatpush1.msra.mxu0 0.0
    %4613 = vmatprep.mubr.f32.mxu0 0.0
    %4614 = vmatmul.mubr.f32.gmra.mrb[0].mxu0 %v4544
    %v4615 = vpop.f32.mrb[0].mxu0
    %v4616 = vadd.f32 %v4535, %v4615
    %v4617 = vpop.f32.mrb[0].mxu0
    %4618 = vmatprep.mubr.f32.mxu0 0.0
    %4619 = vmatmul.mubr.f32.gmra.mrb[0].mxu0 %v4547
    %v4620 = vpop.f32.mrb[0].mxu0
    %v4621 = vadd.f32 %v4540, %v4620
    %v4622 = vpop.f32.mrb[0].mxu0
    %4623 = vdwg.mxu0
    %4624 = vset.pattern.permute.xlu0 2
    %4625 = vperm.xlu0 %4624, %v4284
    %v4626 = vpop.permute.xlu0 %4625
    %4628 = vset.pattern.permute.xlu0 2
    %4629 = vperm.xlu0 %4628, %v4289
    %v4630 = vpop.permute.xlu0 %4629
    %v4632 = vlaneseq
    %v4633 = vshrl.u32 %v4632, 7
    %v4634 = vsub.s32 2, %v4633
    %v4635 = vrot.slane %v4363, %v4634
    %v4636 = vadd.f32 %v4626, %v4635
    %v4637 = vadd.f32 %v4630, %v4635
    %vm4638 = vcmp.ge.f32.partialorder %v4636, 0.0
    %vm4639 = vcmp.ge.f32.partialorder %v4637, 0.0
    %v4640 = vmul.f32 %v4636, 0.2
    %v4641 = vmul.f32 %v4637, 0.2
    %v4642 = vsel %vm4638, %v4636, %v4640
    %v4643 = vsel %vm4639, %v4637, %v4641
    %v4644 = vadd.f32 %v4642, %v4012
    %v4645 = vadd.f32 %v4643, %v4013
    %v4646 = vsel %vm32, %v4644, -inf
    %4647 = vmax.xlane.f32.xlu0 %v4646
    %v4648 = vpop.xlane.xlu0 %4647
    %v4649 = vsel %vm32, %v4645, -inf
    %4650 = vmax.xlane.f32.xlu0 %v4649
    %v4651 = vpop.xlane.xlu0 %4650
    %v4652 = vsub.f32 %v4644, %v4648
    %v4653 = vsub.f32 %v4645, %v4651
    %v4654 = vmul.f32 %v4652, 1.442695
    %v4655 = vpow.pop %v4654
    %v4656 = vmul.f32 %v4653, 1.442695
    %v4657 = vpow.pop %v4656
    %v4658 = vsel %vm32, %v4655, 0.0
    %4659 = vadd.xlane.f32.xlu0 %v4658
    %v4660 = vpop.xlane.xlu0 %4659
    %v4661 = vsel %vm32, %v4657, 0.0
    %4662 = vadd.xlane.f32.xlu0 %v4661
    %v4663 = vpop.xlane.xlu0 %4662
    %v4664 = vrcp.pop %v4660
    %v4665 = vrcp.pop %v4663
    %v4666 = vmul.f32 %v4655, %v4664
    %v4667 = vmul.f32 %v4657, %v4665
    %4668 = vrot.lane.b32.xlu0 %v4096, 96
    %v4669 = vpop.permute.xlu0 %4668
    %4670 = vrot.lane.b32.xlu0 %v4101, 96
    %v4671 = vpop.permute.xlu0 %4670
    %v4675 = vsel %vm32, %v4666, 0
    %v4678 = vsel %vm32, %v4667, 0
    %4680 = vmatprep.subr.mxu0 0.0
    %4681 = vmatpush1.msra.mxu0 %v4669
    %4682 = vmatprep.subr.mxu0 0.0
    %4683 = vmatpush1.msra.mxu0 %v4671
    %4684 = vmatprep.subr.mxu0 0.0
    %4685 = vmatpush1.msra.mxu0 0.0
    %4686 = vmatprep.subr.mxu0 0.0
    %4687 = vmatpush1.msra.mxu0 0.0
    %4688 = vmatprep.subr.mxu0 0.0
    %4689 = vmatpush1.msra.mxu0 0.0
    %4690 = vmatprep.subr.mxu0 0.0
    %4691 = vmatpush1.msra.mxu0 0.0
    %4692 = vmatprep.subr.mxu0 0.0
    %4693 = vmatpush1.msra.mxu0 0.0
    %4694 = vmatprep.subr.mxu0 0.0
    %4695 = vmatpush1.msra.mxu0 0.0
    %4696 = vmatprep.subr.mxu0 0.0
    %4697 = vmatpush1.msra.mxu0 0.0
    %4698 = vmatprep.subr.mxu0 0.0
    %4699 = vmatpush1.msra.mxu0 0.0
    %4700 = vmatprep.subr.mxu0 0.0
    %4701 = vmatpush1.msra.mxu0 0.0
    %4702 = vmatprep.subr.mxu0 0.0
    %4703 = vmatpush1.msra.mxu0 0.0
    %4704 = vmatprep.subr.mxu0 0.0
    %4705 = vmatpush1.msra.mxu0 0.0
    %4706 = vmatprep.subr.mxu0 0.0
    %4707 = vmatpush1.msra.mxu0 0.0
    %4708 = vmatprep.subr.mxu0 0.0
    %4709 = vmatpush1.msra.mxu0 0.0
    %4710 = vmatprep.subr.mxu0 0.0
    %4711 = vmatpush1.msra.mxu0 0.0
    %4712 = vmatprep.subr.mxu0 0.0
    %4713 = vmatpush1.msra.mxu0 0.0
    %4714 = vmatprep.subr.mxu0 0.0
    %4715 = vmatpush1.msra.mxu0 0.0
    %4716 = vmatprep.subr.mxu0 0.0
    %4717 = vmatpush1.msra.mxu0 0.0
    %4718 = vmatprep.subr.mxu0 0.0
    %4719 = vmatpush1.msra.mxu0 0.0
    %4720 = vmatprep.subr.mxu0 0.0
    %4721 = vmatpush1.msra.mxu0 0.0
    %4722 = vmatprep.subr.mxu0 0.0
    %4723 = vmatpush1.msra.mxu0 0.0
    %4724 = vmatprep.subr.mxu0 0.0
    %4725 = vmatpush1.msra.mxu0 0.0
    %4726 = vmatprep.subr.mxu0 0.0
    %4727 = vmatpush1.msra.mxu0 0.0
    %4728 = vmatprep.subr.mxu0 0.0
    %4729 = vmatpush1.msra.mxu0 0.0
    %4730 = vmatprep.subr.mxu0 0.0
    %4731 = vmatpush1.msra.mxu0 0.0
    %4732 = vmatprep.subr.mxu0 0.0
    %4733 = vmatpush1.msra.mxu0 0.0
    %4734 = vmatprep.subr.mxu0 0.0
    %4735 = vmatpush1.msra.mxu0 0.0
    %4736 = vmatprep.subr.mxu0 0.0
    %4737 = vmatpush1.msra.mxu0 0.0
    %4738 = vmatprep.subr.mxu0 0.0
    %4739 = vmatpush1.msra.mxu0 0.0
    %4740 = vmatprep.subr.mxu0 0.0
    %4741 = vmatpush1.msra.mxu0 0.0
    %4742 = vmatprep.subr.mxu0 0.0
    %4743 = vmatpush1.msra.mxu0 0.0
    %4744 = vmatprep.mubr.f32.mxu0 0.0
    %4745 = vmatmul.mubr.f32.gmra.mrb[0].mxu0 %v4675
    %v4746 = vpop.f32.mrb[0].mxu0
    %v4747 = vadd.f32 0.0, %v4746
    %v4748 = vpop.f32.mrb[0].mxu0
    %4749 = vmatprep.mubr.f32.mxu0 0.0
    %4750 = vmatmul.mubr.f32.gmra.mrb[0].mxu0 %v4678
    %v4751 = vpop.f32.mrb[0].mxu0
    %v4752 = vadd.f32 0.0, %v4751
    %v4753 = vpop.f32.mrb[0].mxu0
    %4754 = vdwg.mxu0
    %v4755 = vadd.f32 %v4616, %v4747
    %v4756 = vadd.f32 %v4621, %v4752
    %v4757 = vmul.f32 %v4755, 0.33333334
    %v4758 = vmul.f32 %v4756, 0.33333334
    %v4759 = vlaneseq
    %v4760 = vshrl.u32 %v4759, 7
    %v4761 = vsub.s32 1, %v4760
    %v4762 = vrot.slane %v4016, %v4761
    %v4763 = vadd.f32 %v4757, %v4762
    %v4764 = vadd.f32 %v4758, %v4762
    %v4765 = vtanh.pop %v4763
    %v4766 = vtanh.pop %v4764
    %v4767 = vxor.u32 %v4199, 2147483648
    %v4768 = vxor.u32 %v4204, 2147483648
    %v4769 = vmul.f32 %v4767, 1.442695
    %v4770 = vpow.pop %v4769
    %v4771 = vmul.f32 %v4768, 1.442695
    %v4772 = vpow.pop %v4771
    %v4773 = vadd.f32 %v4770, 1.0
    %v4774 = vadd.f32 %v4772, 1.0
    %v4775 = vrcp.pop %v4773
    %v4776 = vmul.f32 1.0, %v4775
    %v4777 = vrcp.pop %v4774
    %v4778 = vmul.f32 1.0, %v4777
    %v4779 = vmul.f32 %v4765, %v4776
    %v4780 = vmul.f32 %v4766, %v4778
    %v4781 = vsub.f32 1.0, %v4776
    %v4782 = vsub.f32 1.0, %v4778
    %4785 = vrot.lane.b32.xlu0 %v4781, 48
    %v4786 = vpop.permute.xlu0 %4785
    %4787 = vrot.lane.b32.xlu0 %v4782, 48
    %v4788 = vpop.permute.xlu0 %4787
    %v4791 = vmul.f32 %v4112, %v4786
    %v4792 = vmul.f32 %v4113, %v4788
    %4795 = vrot.lane.b32.xlu0 %v4791, 80
    %v4796 = vpop.permute.xlu0 %4795
    %4797 = vrot.lane.b32.xlu0 %v4792, 80
    %v4798 = vpop.permute.xlu0 %4797
    %v4801 = vadd.f32 %v4779, %v4796
    %v4802 = vadd.f32 %v4780, %v4798
    %v4803 = vtanh.pop %v4801
    %v4804 = vtanh.pop %v4802
    %v4805 = vld [vmem:[%s3 + $0x10] sm:$0xff]
    %v4806 = vld [vmem:[%s3 + $0x18] sm:$0xff]
    %v4808 = vsel %vm32, %v4803, 0
    %v4811 = vsel %vm32, %v4804, 0
    %4813 = vmatprep.subr.mxu0 0.0
    %4814 = vmatpush1.msra.mxu0 %v4805
    %4815 = vmatprep.subr.mxu0 0.0
    %4816 = vmatpush1.msra.mxu0 %v4806
    %4817 = vmatprep.subr.mxu0 0.0
    %4818 = vmatpush1.msra.mxu0 0.0
    %4819 = vmatprep.subr.mxu0 0.0
    %4820 = vmatpush1.msra.mxu0 0.0
    %4821 = vmatprep.subr.mxu0 0.0
    %4822 = vmatpush1.msra.mxu0 0.0
    %4823 = vmatprep.subr.mxu0 0.0
    %4824 = vmatpush1.msra.mxu0 0.0
    %4825 = vmatprep.subr.mxu0 0.0
    %4826 = vmatpush1.msra.mxu0 0.0
    %4827 = vmatprep.subr.mxu0 0.0
    %4828 = vmatpush1.msra.mxu0 0.0
    %4829 = vmatprep.subr.mxu0 0.0
    %4830 = vmatpush1.msra.mxu0 0.0
    %4831 = vmatprep.subr.mxu0 0.0
    %4832 = vmatpush1.msra.mxu0 0.0
    %4833 = vmatprep.subr.mxu0 0.0
    %4834 = vmatpush1.msra.mxu0 0.0
    %4835 = vmatprep.subr.mxu0 0.0
    %4836 = vmatpush1.msra.mxu0 0.0
    %4837 = vmatprep.subr.mxu0 0.0
    %4838 = vmatpush1.msra.mxu0 0.0
    %4839 = vmatprep.subr.mxu0 0.0
    %4840 = vmatpush1.msra.mxu0 0.0
    %4841 = vmatprep.subr.mxu0 0.0
    %4842 = vmatpush1.msra.mxu0 0.0
    %4843 = vmatprep.subr.mxu0 0.0
    %4844 = vmatpush1.msra.mxu0 0.0
    %4845 = vmatprep.subr.mxu0 0.0
    %4846 = vmatpush1.msra.mxu0 0.0
    %4847 = vmatprep.subr.mxu0 0.0
    %4848 = vmatpush1.msra.mxu0 0.0
    %4849 = vmatprep.subr.mxu0 0.0
    %4850 = vmatpush1.msra.mxu0 0.0
    %4851 = vmatprep.subr.mxu0 0.0
    %4852 = vmatpush1.msra.mxu0 0.0
    %4853 = vmatprep.subr.mxu0 0.0
    %4854 = vmatpush1.msra.mxu0 0.0
    %4855 = vmatprep.subr.mxu0 0.0
    %4856 = vmatpush1.msra.mxu0 0.0
    %4857 = vmatprep.subr.mxu0 0.0
    %4858 = vmatpush1.msra.mxu0 0.0
    %4859 = vmatprep.subr.mxu0 0.0
    %4860 = vmatpush1.msra.mxu0 0.0
    %4861 = vmatprep.subr.mxu0 0.0
    %4862 = vmatpush1.msra.mxu0 0.0
    %4863 = vmatprep.subr.mxu0 0.0
    %4864 = vmatpush1.msra.mxu0 0.0
    %4865 = vmatprep.subr.mxu0 0.0
    %4866 = vmatpush1.msra.mxu0 0.0
    %4867 = vmatprep.subr.mxu0 0.0
    %4868 = vmatpush1.msra.mxu0 0.0
    %4869 = vmatprep.subr.mxu0 0.0
    %4870 = vmatpush1.msra.mxu0 0.0
    %4871 = vmatprep.subr.mxu0 0.0
    %4872 = vmatpush1.msra.mxu0 0.0
    %4873 = vmatprep.subr.mxu0 0.0
    %4874 = vmatpush1.msra.mxu0 0.0
    %4875 = vmatprep.subr.mxu0 0.0
    %4876 = vmatpush1.msra.mxu0 0.0
    %4877 = vmatprep.mubr.f32.mxu0 0.0
    %4878 = vmatmul.mubr.f32.gmra.mrb[0].mxu0 %v4808
    %v4879 = vpop.f32.mrb[0].mxu0
    %v4880 = vadd.f32 0.0, %v4879
    %v4881 = vpop.f32.mrb[0].mxu0
    %4882 = vmatprep.mubr.f32.mxu0 0.0
    %4883 = vmatmul.mubr.f32.gmra.mrb[0].mxu0 %v4811
    %v4884 = vpop.f32.mrb[0].mxu0
    %v4885 = vadd.f32 0.0, %v4884
    %v4886 = vpop.f32.mrb[0].mxu0
    %4887 = vdwg.mxu0
    %v4888 = vlaneseq
    %v4889 = vshrl.u32 %v4888, 7
    %v4890 = vsub.s32 6, %v4889
    %v4891 = vrot.slane %v4016, %v4890
    %4894 = vrot.lane.b32.xlu0 %v4880, 80
    %v4895 = vpop.permute.xlu0 %4894
    %4896 = vrot.lane.b32.xlu0 %v4885, 80
    %v4897 = vpop.permute.xlu0 %4896
    %4900 = vmatprep.subr.mxu0 0.0
    %4901 = vmatpush1.msra.mxu0 %v4895
    %4902 = vmatprep.subr.mxu0 0.0
    %4903 = vmatpush1.msra.mxu0 %v4897
    %4904 = vmatprep.subr.mxu0 0.0
    %4905 = vmatpush1.msra.mxu0 0.0
    %4906 = vmatprep.subr.mxu0 0.0
    %4907 = vmatpush1.msra.mxu0 0.0
    %4908 = vmatprep.subr.mxu0 0.0
    %4909 = vmatpush1.msra.mxu0 0.0
    %4910 = vmatprep.subr.mxu0 0.0
    %4911 = vmatpush1.msra.mxu0 0.0
    %4912 = vmatprep.subr.mxu0 0.0
    %4913 = vmatpush1.msra.mxu0 0.0
    %4914 = vmatprep.subr.mxu0 0.0
    %4915 = vmatpush1.msra.mxu0 0.0
    %4916 = vmatprep.subr.mxu0 0.0
    %4917 = vmatpush1.msra.mxu0 0.0
    %4918 = vmatprep.subr.mxu0 0.0
    %4919 = vmatpush1.msra.mxu0 0.0
    %4920 = vmatprep.subr.mxu0 0.0
    %4921 = vmatpush1.msra.mxu0 0.0
    %4922 = vmatprep.subr.mxu0 0.0
    %4923 = vmatpush1.msra.mxu0 0.0
    %4924 = vmatprep.subr.mxu0 0.0
    %4925 = vmatpush1.msra.mxu0 0.0
    %4926 = vmatprep.subr.mxu0 0.0
    %4927 = vmatpush1.msra.mxu0 0.0
    %4928 = vmatprep.subr.mxu0 0.0
    %4929 = vmatpush1.msra.mxu0 0.0
    %4930 = vmatprep.subr.mxu0 0.0
    %4931 = vmatpush1.msra.mxu0 0.0
    %4932 = vmatprep.subr.mxu0 0.0
    %4933 = vmatpush1.msra.mxu0 0.0
    %4934 = vmatprep.subr.mxu0 0.0
    %4935 = vmatpush1.msra.mxu0 0.0
    %4936 = vmatprep.subr.mxu0 0.0
    %4937 = vmatpush1.msra.mxu0 0.0
    %4938 = vmatprep.subr.mxu0 0.0
    %4939 = vmatpush1.msra.mxu0 0.0
    %4940 = vmatprep.subr.mxu0 0.0
    %4941 = vmatpush1.msra.mxu0 0.0
    %4942 = vmatprep.subr.mxu0 0.0
    %4943 = vmatpush1.msra.mxu0 0.0
    %4944 = vmatprep.subr.mxu0 0.0
    %4945 = vmatpush1.msra.mxu0 0.0
    %4946 = vmatprep.subr.mxu0 0.0
    %4947 = vmatpush1.msra.mxu0 0.0
    %4948 = vmatprep.subr.mxu0 0.0
    %4949 = vmatpush1.msra.mxu0 0.0
    %4950 = vmatprep.subr.mxu0 0.0
    %4951 = vmatpush1.msra.mxu0 0.0
    %4952 = vmatprep.subr.mxu0 0.0
    %4953 = vmatpush1.msra.mxu0 0.0
    %4954 = vmatprep.subr.mxu0 0.0
    %4955 = vmatpush1.msra.mxu0 0.0
    %4956 = vmatprep.subr.mxu0 0.0
    %4957 = vmatpush1.msra.mxu0 0.0
    %4958 = vmatprep.subr.mxu0 0.0
    %4959 = vmatpush1.msra.mxu0 0.0
    %4960 = vmatprep.subr.mxu0 0.0
    %4961 = vmatpush1.msra.mxu0 0.0
    %4962 = vmatprep.subr.mxu0 0.0
    %4963 = vmatpush1.msra.mxu0 0.0
    %4964 = vmatprep.mubr.f32.mxu0 0.0
    %4965 = vmatmul.mubr.f32.gmra.mrb[0].mxu0 %v4127
    %v4966 = vpop.f32.mrb[0].mxu0
    %v4967 = vadd.f32 %v4891, %v4966
    %v4968 = vpop.f32.mrb[0].mxu0
    %4969 = vmatprep.mubr.f32.mxu0 0.0
    %4970 = vmatmul.mubr.f32.gmra.mrb[0].mxu0 %v4130
    %v4971 = vpop.f32.mrb[0].mxu0
    %v4972 = vadd.f32 %v4891, %v4971
    %v4973 = vpop.f32.mrb[0].mxu0
    %4974 = vdwg.mxu0
    %v4975 = vld [vmem:[%s3 + $0x78] sm:$0xff]
    %v4976 = vld [vmem:[%s3 + $0x80] sm:$0xff]
    %v4977 = vld [vmem:[%s3 + $0x88] sm:$0xff]
    %v4978 = vld [vmem:[%s3 + $0x90] sm:$0xff]
    %v4979 = vld [vmem:[%s3 + $0x98] sm:$0xff]
    %v4980 = vld [vmem:[%s3 + $0xa0] sm:$0xff]
    %v4981 = vsel %vm1433, %v4880, 0
    %v4983 = vsel %vm1433, %v4885, 0
    %4985 = vmatprep.subr.mxu0 0.0
    %4986 = vmatpush1.msra.mxu0 %v4975
    %4987 = vmatprep.subr.mxu0 0.0
    %4988 = vmatpush1.msra.mxu0 %v4976
    %4989 = vmatprep.subr.mxu0 0.0
    %4990 = vmatpush1.msra.mxu0 %v4977
    %4991 = vmatprep.subr.mxu0 0.0
    %4992 = vmatpush1.msra.mxu0 %v4978
    %4993 = vmatprep.subr.mxu0 0.0
    %4994 = vmatpush1.msra.mxu0 %v4979
    %4995 = vmatprep.subr.mxu0 0.0
    %4996 = vmatpush1.msra.mxu0 %v4980
    %4997 = vmatprep.subr.mxu0 0.0
    %4998 = vmatpush1.msra.mxu0 0.0
    %4999 = vmatprep.subr.mxu0 0.0
    %5000 = vmatpush1.msra.mxu0 0.0
    %5001 = vmatprep.subr.mxu0 0.0
    %5002 = vmatpush1.msra.mxu0 0.0
    %5003 = vmatprep.subr.mxu0 0.0
    %5004 = vmatpush1.msra.mxu0 0.0
    %5005 = vmatprep.subr.mxu0 0.0
    %5006 = vmatpush1.msra.mxu0 0.0
    %5007 = vmatprep.subr.mxu0 0.0
    %5008 = vmatpush1.msra.mxu0 0.0
    %5009 = vmatprep.subr.mxu0 0.0
    %5010 = vmatpush1.msra.mxu0 0.0
    %5011 = vmatprep.subr.mxu0 0.0
    %5012 = vmatpush1.msra.mxu0 0.0
    %5013 = vmatprep.subr.mxu0 0.0
    %5014 = vmatpush1.msra.mxu0 0.0
    %5015 = vmatprep.subr.mxu0 0.0
    %5016 = vmatpush1.msra.mxu0 0.0
    %5017 = vmatprep.subr.mxu0 0.0
    %5018 = vmatpush1.msra.mxu0 0.0
    %5019 = vmatprep.subr.mxu0 0.0
    %5020 = vmatpush1.msra.mxu0 0.0
    %5021 = vmatprep.subr.mxu0 0.0
    %5022 = vmatpush1.msra.mxu0 0.0
    %5023 = vmatprep.subr.mxu0 0.0
    %5024 = vmatpush1.msra.mxu0 0.0
    %5025 = vmatprep.subr.mxu0 0.0
    %5026 = vmatpush1.msra.mxu0 0.0
    %5027 = vmatprep.subr.mxu0 0.0
    %5028 = vmatpush1.msra.mxu0 0.0
    %5029 = vmatprep.subr.mxu0 0.0
    %5030 = vmatpush1.msra.mxu0 0.0
    %5031 = vmatprep.subr.mxu0 0.0
    %5032 = vmatpush1.msra.mxu0 0.0
    %5033 = vmatprep.subr.mxu0 0.0
    %5034 = vmatpush1.msra.mxu0 0.0
    %5035 = vmatprep.subr.mxu0 0.0
    %5036 = vmatpush1.msra.mxu0 0.0
    %5037 = vmatprep.subr.mxu0 0.0
    %5038 = vmatpush1.msra.mxu0 0.0
    %5039 = vmatprep.subr.mxu0 0.0
    %5040 = vmatpush1.msra.mxu0 0.0
    %5041 = vmatprep.subr.mxu0 0.0
    %5042 = vmatpush1.msra.mxu0 0.0
    %5043 = vmatprep.subr.mxu0 0.0
    %5044 = vmatpush1.msra.mxu0 0.0
    %5045 = vmatprep.subr.mxu0 0.0
    %5046 = vmatpush1.msra.mxu0 0.0
    %5047 = vmatprep.subr.mxu0 0.0
    %5048 = vmatpush1.msra.mxu0 0.0
    %5049 = vmatprep.mubr.f32.mxu0 0.0
    %5050 = vmatmul.mubr.f32.gmra.mrb[0].mxu0 %v4981
    %v5051 = vpop.f32.mrb[0].mxu0
    %v5052 = vadd.f32 0.0, %v5051
    %v5053 = vpop.f32.mrb[0].mxu0
    %5054 = vmatprep.mubr.f32.mxu0 0.0
    %5055 = vmatmul.mubr.f32.gmra.mrb[0].mxu0 %v4983
    %v5056 = vpop.f32.mrb[0].mxu0
    %v5057 = vadd.f32 0.0, %v5056
    %v5058 = vpop.f32.mrb[0].mxu0
    %5059 = vdwg.mxu0
    %v5060 = vld [vmem:[%s3 + $0xa8] sm:$0x7]
    %v5062 = vsel %vm1433, %v5060, 0
    %5064 = vmatprep.subr.mxu0 0.0
    %5065 = vmatpush1.xpose.msra.mxu0 %v4981
    %5066 = vmatprep.subr.mxu0 0.0
    %5067 = vmatpush1.xpose.msra.mxu0 %v4983
    %5068 = vmatprep.subr.mxu0 0.0
    %5069 = vmatpush1.xpose.msra.mxu0 0.0
    %5070 = vmatprep.subr.mxu0 0.0
    %5071 = vmatpush1.xpose.msra.mxu0 0.0
    %5072 = vmatprep.subr.mxu0 0.0
    %5073 = vmatpush1.xpose.msra.mxu0 0.0
    %5074 = vmatprep.subr.mxu0 0.0
    %5075 = vmatpush1.xpose.msra.mxu0 0.0
    %5076 = vmatprep.subr.mxu0 0.0
    %5077 = vmatpush1.xpose.msra.mxu0 0.0
    %5078 = vmatprep.subr.mxu0 0.0
    %5079 = vmatpush1.xpose.msra.mxu0 0.0
    %5080 = vmatprep.subr.mxu0 0.0
    %5081 = vmatpush1.xpose.msra.mxu0 0.0
    %5082 = vmatprep.subr.mxu0 0.0
    %5083 = vmatpush1.xpose.msra.mxu0 0.0
    %5084 = vmatprep.subr.mxu0 0.0
    %5085 = vmatpush1.xpose.msra.mxu0 0.0
    %5086 = vmatprep.subr.mxu0 0.0
    %5087 = vmatpush1.xpose.msra.mxu0 0.0
    %5088 = vmatprep.subr.mxu0 0.0
    %5089 = vmatpush1.xpose.msra.mxu0 0.0
    %5090 = vmatprep.subr.mxu0 0.0
    %5091 = vmatpush1.xpose.msra.mxu0 0.0
    %5092 = vmatprep.subr.mxu0 0.0
    %5093 = vmatpush1.xpose.msra.mxu0 0.0
    %5094 = vmatprep.subr.mxu0 0.0
    %5095 = vmatpush1.xpose.msra.mxu0 0.0
    %5096 = vmatprep.subr.mxu0 0.0
    %5097 = vmatpush1.xpose.msra.mxu0 0.0
    %5098 = vmatprep.subr.mxu0 0.0
    %5099 = vmatpush1.xpose.msra.mxu0 0.0
    %5100 = vmatprep.subr.mxu0 0.0
    %5101 = vmatpush1.xpose.msra.mxu0 0.0
    %5102 = vmatprep.subr.mxu0 0.0
    %5103 = vmatpush1.xpose.msra.mxu0 0.0
    %5104 = vmatprep.subr.mxu0 0.0
    %5105 = vmatpush1.xpose.msra.mxu0 0.0
    %5106 = vmatprep.subr.mxu0 0.0
    %5107 = vmatpush1.xpose.msra.mxu0 0.0
    %5108 = vmatprep.subr.mxu0 0.0
    %5109 = vmatpush1.xpose.msra.mxu0 0.0
    %5110 = vmatprep.subr.mxu0 0.0
    %5111 = vmatpush1.xpose.msra.mxu0 0.0
    %5112 = vmatprep.subr.mxu0 0.0
    %5113 = vmatpush1.xpose.msra.mxu0 0.0
    %5114 = vmatprep.subr.mxu0 0.0
    %5115 = vmatpush1.xpose.msra.mxu0 0.0
    %5116 = vmatprep.subr.mxu0 0.0
    %5117 = vmatpush1.xpose.msra.mxu0 0.0
    %5118 = vmatprep.subr.mxu0 0.0
    %5119 = vmatpush1.xpose.msra.mxu0 0.0
    %5120 = vmatprep.subr.mxu0 0.0
    %5121 = vmatpush1.xpose.msra.mxu0 0.0
    %5122 = vmatprep.subr.mxu0 0.0
    %5123 = vmatpush1.xpose.msra.mxu0 0.0
    %5124 = vmatprep.subr.mxu0 0.0
    %5125 = vmatpush1.xpose.msra.mxu0 0.0
    %5126 = vmatprep.subr.mxu0 0.0
    %5127 = vmatpush1.xpose.msra.mxu0 0.0
    %5128 = vmatprep.mubr.f32.mxu0 0.0
    %5129 = vmatmul.mubr.f32.gmra.mrb[0].mxu0 %v5062
    %v5130 = vpop.f32.mrb[0].mxu0
    %v5131 = vadd.f32 0.0, %v5130
    %v5132 = vpop.f32.mrb[0].mxu0
    %5133 = vdwg.mxu0
    %5135 = vset.pattern.permute.xlu0 0
    %5136 = vperm.xlu0 %5135, %v5052
    %v5137 = vpop.permute.xlu0 %5136
    %5140 = vset.pattern.permute.xlu0 0
    %5141 = vperm.xlu0 %5140, %v5057
    %v5142 = vpop.permute.xlu0 %5141
    %v5144 = vlaneseq
    %v5145 = vshrl.u32 %v5144, 7
    %v5146 = vsub.s32 0, %v5145
    %v5147 = vrot.slane %v5131, %v5146
    %v5148 = vadd.f32 %v5137, %v5147
    %v5149 = vadd.f32 %v5142, %v5147
    %vm5150 = vcmp.ge.f32.partialorder %v5148, 0.0
    %vm5151 = vcmp.ge.f32.partialorder %v5149, 0.0
    %v5152 = vmul.f32 %v5148, 0.2
    %v5153 = vmul.f32 %v5149, 0.2
    %v5154 = vsel %vm5150, %v5148, %v5152
    %v5155 = vsel %vm5151, %v5149, %v5153
    %v5156 = vadd.f32 %v5154, %v4012
    %v5157 = vadd.f32 %v5155, %v4013
    %v5158 = vsel %vm32, %v5156, -inf
    %5159 = vmax.xlane.f32.xlu0 %v5158
    %v5160 = vpop.xlane.xlu0 %5159
    %v5161 = vsel %vm32, %v5157, -inf
    %5162 = vmax.xlane.f32.xlu0 %v5161
    %v5163 = vpop.xlane.xlu0 %5162
    %v5164 = vsub.f32 %v5156, %v5160
    %v5165 = vsub.f32 %v5157, %v5163
    %v5166 = vmul.f32 %v5164, 1.442695
    %v5167 = vpow.pop %v5166
    %v5168 = vmul.f32 %v5165, 1.442695
    %v5169 = vpow.pop %v5168
    %v5170 = vsel %vm32, %v5167, 0.0
    %5171 = vadd.xlane.f32.xlu0 %v5170
    %v5172 = vpop.xlane.xlu0 %5171
    %v5173 = vsel %vm32, %v5169, 0.0
    %5174 = vadd.xlane.f32.xlu0 %v5173
    %v5175 = vpop.xlane.xlu0 %5174
    %v5176 = vrcp.pop %v5172
    %v5177 = vrcp.pop %v5175
    %v5178 = vmul.f32 %v5167, %v5176
    %v5179 = vmul.f32 %v5169, %v5177
    %5180 = vset.pattern.permute.xlu0 1
    %5181 = vperm.xlu0 %5180, %v5052
    %v5182 = vpop.permute.xlu0 %5181
    %5184 = vset.pattern.permute.xlu0 1
    %5185 = vperm.xlu0 %5184, %v5057
    %v5186 = vpop.permute.xlu0 %5185
    %v5188 = vlaneseq
    %v5189 = vshrl.u32 %v5188, 7
    %v5190 = vsub.s32 1, %v5189
    %v5191 = vrot.slane %v5131, %v5190
    %v5192 = vadd.f32 %v5182, %v5191
    %v5193 = vadd.f32 %v5186, %v5191
    %vm5194 = vcmp.ge.f32.partialorder %v5192, 0.0
    %vm5195 = vcmp.ge.f32.partialorder %v5193, 0.0
    %v5196 = vmul.f32 %v5192, 0.2
    %v5197 = vmul.f32 %v5193, 0.2
    %v5198 = vsel %vm5194, %v5192, %v5196
    %v5199 = vsel %vm5195, %v5193, %v5197
    %v5200 = vadd.f32 %v5198, %v4012
    %v5201 = vadd.f32 %v5199, %v4013
    %v5202 = vsel %vm32, %v5200, -inf
    %5203 = vmax.xlane.f32.xlu0 %v5202
    %v5204 = vpop.xlane.xlu0 %5203
    %v5205 = vsel %vm32, %v5201, -inf
    %5206 = vmax.xlane.f32.xlu0 %v5205
    %v5207 = vpop.xlane.xlu0 %5206
    %v5208 = vsub.f32 %v5200, %v5204
    %v5209 = vsub.f32 %v5201, %v5207
    %v5210 = vmul.f32 %v5208, 1.442695
    %v5211 = vpow.pop %v5210
    %v5212 = vmul.f32 %v5209, 1.442695
    %v5213 = vpow.pop %v5212
    %v5214 = vsel %vm32, %v5211, 0.0
    %5215 = vadd.xlane.f32.xlu0 %v5214
    %v5216 = vpop.xlane.xlu0 %5215
    %v5217 = vsel %vm32, %v5213, 0.0
    %5218 = vadd.xlane.f32.xlu0 %v5217
    %v5219 = vpop.xlane.xlu0 %5218
    %v5220 = vrcp.pop %v5216
    %v5221 = vrcp.pop %v5219
    %v5222 = vmul.f32 %v5211, %v5220
    %v5223 = vmul.f32 %v5213, %v5221
    %5224 = vrot.lane.b32.xlu0 %v4880, 112
    %v5225 = vpop.permute.xlu0 %5224
    %5226 = vrot.lane.b32.xlu0 %v4885, 112
    %v5227 = vpop.permute.xlu0 %5226
    %v5231 = vsel %vm32, %v5222, 0
    %v5234 = vsel %vm32, %v5223, 0
    %5236 = vmatprep.subr.mxu0 0.0
    %5237 = vmatpush1.msra.mxu0 %v5225
    %5238 = vmatprep.subr.mxu0 0.0
    %5239 = vmatpush1.msra.mxu0 %v5227
    %5240 = vmatprep.subr.mxu0 0.0
    %5241 = vmatpush1.msra.mxu0 0.0
    %5242 = vmatprep.subr.mxu0 0.0
    %5243 = vmatpush1.msra.mxu0 0.0
    %5244 = vmatprep.subr.mxu0 0.0
    %5245 = vmatpush1.msra.mxu0 0.0
    %5246 = vmatprep.subr.mxu0 0.0
    %5247 = vmatpush1.msra.mxu0 0.0
    %5248 = vmatprep.subr.mxu0 0.0
    %5249 = vmatpush1.msra.mxu0 0.0
    %5250 = vmatprep.subr.mxu0 0.0
    %5251 = vmatpush1.msra.mxu0 0.0
    %5252 = vmatprep.subr.mxu0 0.0
    %5253 = vmatpush1.msra.mxu0 0.0
    %5254 = vmatprep.subr.mxu0 0.0
    %5255 = vmatpush1.msra.mxu0 0.0
    %5256 = vmatprep.subr.mxu0 0.0
    %5257 = vmatpush1.msra.mxu0 0.0
    %5258 = vmatprep.subr.mxu0 0.0
    %5259 = vmatpush1.msra.mxu0 0.0
    %5260 = vmatprep.subr.mxu0 0.0
    %5261 = vmatpush1.msra.mxu0 0.0
    %5262 = vmatprep.subr.mxu0 0.0
    %5263 = vmatpush1.msra.mxu0 0.0
    %5264 = vmatprep.subr.mxu0 0.0
    %5265 = vmatpush1.msra.mxu0 0.0
    %5266 = vmatprep.subr.mxu0 0.0
    %5267 = vmatpush1.msra.mxu0 0.0
    %5268 = vmatprep.subr.mxu0 0.0
    %5269 = vmatpush1.msra.mxu0 0.0
    %5270 = vmatprep.subr.mxu0 0.0
    %5271 = vmatpush1.msra.mxu0 0.0
    %5272 = vmatprep.subr.mxu0 0.0
    %5273 = vmatpush1.msra.mxu0 0.0
    %5274 = vmatprep.subr.mxu0 0.0
    %5275 = vmatpush1.msra.mxu0 0.0
    %5276 = vmatprep.subr.mxu0 0.0
    %5277 = vmatpush1.msra.mxu0 0.0
    %5278 = vmatprep.subr.mxu0 0.0
    %5279 = vmatpush1.msra.mxu0 0.0
    %5280 = vmatprep.subr.mxu0 0.0
    %5281 = vmatpush1.msra.mxu0 0.0
    %5282 = vmatprep.subr.mxu0 0.0
    %5283 = vmatpush1.msra.mxu0 0.0
    %5284 = vmatprep.subr.mxu0 0.0
    %5285 = vmatpush1.msra.mxu0 0.0
    %5286 = vmatprep.subr.mxu0 0.0
    %5287 = vmatpush1.msra.mxu0 0.0
    %5288 = vmatprep.subr.mxu0 0.0
    %5289 = vmatpush1.msra.mxu0 0.0
    %5290 = vmatprep.subr.mxu0 0.0
    %5291 = vmatpush1.msra.mxu0 0.0
    %5292 = vmatprep.subr.mxu0 0.0
    %5293 = vmatpush1.msra.mxu0 0.0
    %5294 = vmatprep.subr.mxu0 0.0
    %5295 = vmatpush1.msra.mxu0 0.0
    %5296 = vmatprep.subr.mxu0 0.0
    %5297 = vmatpush1.msra.mxu0 0.0
    %5298 = vmatprep.subr.mxu0 0.0
    %5299 = vmatpush1.msra.mxu0 0.0
    %5300 = vmatprep.mubr.f32.mxu0 0.0
    %5301 = vmatmul.mubr.f32.gmra.mrb[0].mxu0 %v5231
    %v5302 = vpop.f32.mrb[0].mxu0
    %v5303 = vadd.f32 0.0, %v5302
    %v5304 = vpop.f32.mrb[0].mxu0
    %5305 = vmatprep.mubr.f32.mxu0 0.0
    %5306 = vmatmul.mubr.f32.gmra.mrb[0].mxu0 %v5234
    %v5307 = vpop.f32.mrb[0].mxu0
    %v5308 = vadd.f32 0.0, %v5307
    %v5309 = vpop.f32.mrb[0].mxu0
    %5310 = vdwg.mxu0
    %v5312 = vsel %vm32, %v5178, 0
    %v5315 = vsel %vm32, %v5179, 0
    %5317 = vmatprep.subr.mxu0 0.0
    %5318 = vmatpush1.msra.mxu0 %v4880
    %5319 = vmatprep.subr.mxu0 0.0
    %5320 = vmatpush1.msra.mxu0 %v4885
    %5321 = vmatprep.subr.mxu0 0.0
    %5322 = vmatpush1.msra.mxu0 0.0
    %5323 = vmatprep.subr.mxu0 0.0
    %5324 = vmatpush1.msra.mxu0 0.0
    %5325 = vmatprep.subr.mxu0 0.0
    %5326 = vmatpush1.msra.mxu0 0.0
    %5327 = vmatprep.subr.mxu0 0.0
    %5328 = vmatpush1.msra.mxu0 0.0
    %5329 = vmatprep.subr.mxu0 0.0
    %5330 = vmatpush1.msra.mxu0 0.0
    %5331 = vmatprep.subr.mxu0 0.0
    %5332 = vmatpush1.msra.mxu0 0.0
    %5333 = vmatprep.subr.mxu0 0.0
    %5334 = vmatpush1.msra.mxu0 0.0
    %5335 = vmatprep.subr.mxu0 0.0
    %5336 = vmatpush1.msra.mxu0 0.0
    %5337 = vmatprep.subr.mxu0 0.0
    %5338 = vmatpush1.msra.mxu0 0.0
    %5339 = vmatprep.subr.mxu0 0.0
    %5340 = vmatpush1.msra.mxu0 0.0
    %5341 = vmatprep.subr.mxu0 0.0
    %5342 = vmatpush1.msra.mxu0 0.0
    %5343 = vmatprep.subr.mxu0 0.0
    %5344 = vmatpush1.msra.mxu0 0.0
    %5345 = vmatprep.subr.mxu0 0.0
    %5346 = vmatpush1.msra.mxu0 0.0
    %5347 = vmatprep.subr.mxu0 0.0
    %5348 = vmatpush1.msra.mxu0 0.0
    %5349 = vmatprep.subr.mxu0 0.0
    %5350 = vmatpush1.msra.mxu0 0.0
    %5351 = vmatprep.subr.mxu0 0.0
    %5352 = vmatpush1.msra.mxu0 0.0
    %5353 = vmatprep.subr.mxu0 0.0
    %5354 = vmatpush1.msra.mxu0 0.0
    %5355 = vmatprep.subr.mxu0 0.0
    %5356 = vmatpush1.msra.mxu0 0.0
    %5357 = vmatprep.subr.mxu0 0.0
    %5358 = vmatpush1.msra.mxu0 0.0
    %5359 = vmatprep.subr.mxu0 0.0
    %5360 = vmatpush1.msra.mxu0 0.0
    %5361 = vmatprep.subr.mxu0 0.0
    %5362 = vmatpush1.msra.mxu0 0.0
    %5363 = vmatprep.subr.mxu0 0.0
    %5364 = vmatpush1.msra.mxu0 0.0
    %5365 = vmatprep.subr.mxu0 0.0
    %5366 = vmatpush1.msra.mxu0 0.0
    %5367 = vmatprep.subr.mxu0 0.0
    %5368 = vmatpush1.msra.mxu0 0.0
    %5369 = vmatprep.subr.mxu0 0.0
    %5370 = vmatpush1.msra.mxu0 0.0
    %5371 = vmatprep.subr.mxu0 0.0
    %5372 = vmatpush1.msra.mxu0 0.0
    %5373 = vmatprep.subr.mxu0 0.0
    %5374 = vmatpush1.msra.mxu0 0.0
    %5375 = vmatprep.subr.mxu0 0.0
    %5376 = vmatpush1.msra.mxu0 0.0
    %5377 = vmatprep.subr.mxu0 0.0
    %5378 = vmatpush1.msra.mxu0 0.0
    %5379 = vmatprep.subr.mxu0 0.0
    %5380 = vmatpush1.msra.mxu0 0.0
    %5381 = vmatprep.mubr.f32.mxu0 0.0
    %5382 = vmatmul.mubr.f32.gmra.mrb[0].mxu0 %v5312
    %v5383 = vpop.f32.mrb[0].mxu0
    %v5384 = vadd.f32 %v5303, %v5383
    %v5385 = vpop.f32.mrb[0].mxu0
    %5386 = vmatprep.mubr.f32.mxu0 0.0
    %5387 = vmatmul.mubr.f32.gmra.mrb[0].mxu0 %v5315
    %v5388 = vpop.f32.mrb[0].mxu0
    %v5389 = vadd.f32 %v5308, %v5388
    %v5390 = vpop.f32.mrb[0].mxu0
    %5391 = vdwg.mxu0
    %5392 = vset.pattern.permute.xlu0 2
    %5393 = vperm.xlu0 %5392, %v5052
    %v5394 = vpop.permute.xlu0 %5393
    %5396 = vset.pattern.permute.xlu0 2
    %5397 = vperm.xlu0 %5396, %v5057
    %v5398 = vpop.permute.xlu0 %5397
    %v5400 = vlaneseq
    %v5401 = vshrl.u32 %v5400, 7
    %v5402 = vsub.s32 2, %v5401
    %v5403 = vrot.slane %v5131, %v5402
    %v5404 = vadd.f32 %v5394, %v5403
    %v5405 = vadd.f32 %v5398, %v5403
    %vm5406 = vcmp.ge.f32.partialorder %v5404, 0.0
    %vm5407 = vcmp.ge.f32.partialorder %v5405, 0.0
    %v5408 = vmul.f32 %v5404, 0.2
    %v5409 = vmul.f32 %v5405, 0.2
    %v5410 = vsel %vm5406, %v5404, %v5408
    %v5411 = vsel %vm5407, %v5405, %v5409
    %v5412 = vadd.f32 %v5410, %v4012
    %v5413 = vadd.f32 %v5411, %v4013
    %v5414 = vsel %vm32, %v5412, -inf
    %5415 = vmax.xlane.f32.xlu0 %v5414
    %v5416 = vpop.xlane.xlu0 %5415
    %v5417 = vsel %vm32, %v5413, -inf
    %5418 = vmax.xlane.f32.xlu0 %v5417
    %v5419 = vpop.xlane.xlu0 %5418
    %v5420 = vsub.f32 %v5412, %v5416
    %v5421 = vsub.f32 %v5413, %v5419
    %v5422 = vmul.f32 %v5420, 1.442695
    %v5423 = vpow.pop %v5422
    %v5424 = vmul.f32 %v5421, 1.442695
    %v5425 = vpow.pop %v5424
    %v5426 = vsel %vm32, %v5423, 0.0
    %5427 = vadd.xlane.f32.xlu0 %v5426
    %v5428 = vpop.xlane.xlu0 %5427
    %v5429 = vsel %vm32, %v5425, 0.0
    %5430 = vadd.xlane.f32.xlu0 %v5429
    %v5431 = vpop.xlane.xlu0 %5430
    %v5432 = vrcp.pop %v5428
    %v5433 = vrcp.pop %v5431
    %v5434 = vmul.f32 %v5423, %v5432
    %v5435 = vmul.f32 %v5425, %v5433
    %5436 = vrot.lane.b32.xlu0 %v4880, 96
    %v5437 = vpop.permute.xlu0 %5436
    %5438 = vrot.lane.b32.xlu0 %v4885, 96
    %v5439 = vpop.permute.xlu0 %5438
    %v5443 = vsel %vm32, %v5434, 0
    %v5446 = vsel %vm32, %v5435, 0
    %5448 = vmatprep.subr.mxu0 0.0
    %5449 = vmatpush1.msra.mxu0 %v5437
    %5450 = vmatprep.subr.mxu0 0.0
    %5451 = vmatpush1.msra.mxu0 %v5439
    %5452 = vmatprep.subr.mxu0 0.0
    %5453 = vmatpush1.msra.mxu0 0.0
    %5454 = vmatprep.subr.mxu0 0.0
    %5455 = vmatpush1.msra.mxu0 0.0
    %5456 = vmatprep.subr.mxu0 0.0
    %5457 = vmatpush1.msra.mxu0 0.0
    %5458 = vmatprep.subr.mxu0 0.0
    %5459 = vmatpush1.msra.mxu0 0.0
    %5460 = vmatprep.subr.mxu0 0.0
    %5461 = vmatpush1.msra.mxu0 0.0
    %5462 = vmatprep.subr.mxu0 0.0
    %5463 = vmatpush1.msra.mxu0 0.0
    %5464 = vmatprep.subr.mxu0 0.0
    %5465 = vmatpush1.msra.mxu0 0.0
    %5466 = vmatprep.subr.mxu0 0.0
    %5467 = vmatpush1.msra.mxu0 0.0
    %5468 = vmatprep.subr.mxu0 0.0
    %5469 = vmatpush1.msra.mxu0 0.0
    %5470 = vmatprep.subr.mxu0 0.0
    %5471 = vmatpush1.msra.mxu0 0.0
    %5472 = vmatprep.subr.mxu0 0.0
    %5473 = vmatpush1.msra.mxu0 0.0
    %5474 = vmatprep.subr.mxu0 0.0
    %5475 = vmatpush1.msra.mxu0 0.0
    %5476 = vmatprep.subr.mxu0 0.0
    %5477 = vmatpush1.msra.mxu0 0.0
    %5478 = vmatprep.subr.mxu0 0.0
    %5479 = vmatpush1.msra.mxu0 0.0
    %5480 = vmatprep.subr.mxu0 0.0
    %5481 = vmatpush1.msra.mxu0 0.0
    %5482 = vmatprep.subr.mxu0 0.0
    %5483 = vmatpush1.msra.mxu0 0.0
    %5484 = vmatprep.subr.mxu0 0.0
    %5485 = vmatpush1.msra.mxu0 0.0
    %5486 = vmatprep.subr.mxu0 0.0
    %5487 = vmatpush1.msra.mxu0 0.0
    %5488 = vmatprep.subr.mxu0 0.0
    %5489 = vmatpush1.msra.mxu0 0.0
    %5490 = vmatprep.subr.mxu0 0.0
    %5491 = vmatpush1.msra.mxu0 0.0
    %5492 = vmatprep.subr.mxu0 0.0
    %5493 = vmatpush1.msra.mxu0 0.0
    %5494 = vmatprep.subr.mxu0 0.0
    %5495 = vmatpush1.msra.mxu0 0.0
    %5496 = vmatprep.subr.mxu0 0.0
    %5497 = vmatpush1.msra.mxu0 0.0
    %5498 = vmatprep.subr.mxu0 0.0
    %5499 = vmatpush1.msra.mxu0 0.0
    %5500 = vmatprep.subr.mxu0 0.0
    %5501 = vmatpush1.msra.mxu0 0.0
    %5502 = vmatprep.subr.mxu0 0.0
    %5503 = vmatpush1.msra.mxu0 0.0
    %5504 = vmatprep.subr.mxu0 0.0
    %5505 = vmatpush1.msra.mxu0 0.0
    %5506 = vmatprep.subr.mxu0 0.0
    %5507 = vmatpush1.msra.mxu0 0.0
    %5508 = vmatprep.subr.mxu0 0.0
    %5509 = vmatpush1.msra.mxu0 0.0
    %5510 = vmatprep.subr.mxu0 0.0
    %5511 = vmatpush1.msra.mxu0 0.0
    %5512 = vmatprep.mubr.f32.mxu0 0.0
    %5513 = vmatmul.mubr.f32.gmra.mrb[0].mxu0 %v5443
    %v5514 = vpop.f32.mrb[0].mxu0
    %v5515 = vadd.f32 0.0, %v5514
    %v5516 = vpop.f32.mrb[0].mxu0
    %5517 = vmatprep.mubr.f32.mxu0 0.0
    %5518 = vmatmul.mubr.f32.gmra.mrb[0].mxu0 %v5446
    %v5519 = vpop.f32.mrb[0].mxu0
    %v5520 = vadd.f32 0.0, %v5519
    %v5521 = vpop.f32.mrb[0].mxu0
    %5522 = vdwg.mxu0
    %v5523 = vadd.f32 %v5384, %v5515
    %v5524 = vadd.f32 %v5389, %v5520
    %v5525 = vmul.f32 %v5523, 0.33333334
    %v5526 = vmul.f32 %v5524, 0.33333334
    %v5527 = vlaneseq
    %v5528 = vshrl.u32 %v5527, 7
    %v5529 = vsub.s32 2, %v5528
    %v5530 = vrot.slane %v4016, %v5529
    %v5531 = vadd.f32 %v5525, %v5530
    %v5532 = vadd.f32 %v5526, %v5530
    %vm5533 = vcmp.ge.f32.partialorder %v5531, 0.0
    %vm5534 = vcmp.ge.f32.partialorder %v5532, 0.0
    %v5535 = vmul.f32 %v5531, 0.01
    %v5536 = vmul.f32 %v5532, 0.01
    %v5537 = vsel %vm5533, %v5531, %v5535
    %v5538 = vsel %vm5534, %v5532, %v5536
    %v5539 = vxor.u32 %v4967, 2147483648
    %v5540 = vxor.u32 %v4972, 2147483648
    %v5541 = vmul.f32 %v5539, 1.442695
    %v5542 = vpow.pop %v5541
    %v5543 = vmul.f32 %v5540, 1.442695
    %v5544 = vpow.pop %v5543
    %v5545 = vadd.f32 %v5542, 1.0
    %v5546 = vadd.f32 %v5544, 1.0
    %v5547 = vrcp.pop %v5545
    %v5548 = vmul.f32 1.0, %v5547
    %v5549 = vrcp.pop %v5546
    %v5550 = vmul.f32 1.0, %v5549
    %v5551 = vmul.f32 %v5537, %v5548
    %v5552 = vmul.f32 %v5538, %v5550
    %v5553 = vsub.f32 1.0, %v5548
    %v5554 = vsub.f32 1.0, %v5550
    %v5555 = vmul.f32 %v4801, %v5553
    %v5556 = vmul.f32 %v4802, %v5554
    %v5557 = vadd.f32 %v5551, %v5555
    %v5558 = vadd.f32 %v5552, %v5556
    %v5559 = vmax.f32 %v5557, 0.0
    %v5560 = vmax.f32 %v5558, 0.0
    %v5561 = vld [vmem:[%s3 + $0x20] sm:$0xff]
    %v5562 = vld [vmem:[%s3 + $0x28] sm:$0xff]
    %v5564 = vsel %vm32, %v5559, 0
    %v5567 = vsel %vm32, %v5560, 0
    %5569 = vmatprep.subr.mxu0 0.0
    %5570 = vmatpush1.msra.mxu0 %v5561
    %5571 = vmatprep.subr.mxu0 0.0
    %5572 = vmatpush1.msra.mxu0 %v5562
    %5573 = vmatprep.subr.mxu0 0.0
    %5574 = vmatpush1.msra.mxu0 0.0
    %5575 = vmatprep.subr.mxu0 0.0
    %5576 = vmatpush1.msra.mxu0 0.0
    %5577 = vmatprep.subr.mxu0 0.0
    %5578 = vmatpush1.msra.mxu0 0.0
    %5579 = vmatprep.subr.mxu0 0.0
    %5580 = vmatpush1.msra.mxu0 0.0
    %5581 = vmatprep.subr.mxu0 0.0
    %5582 = vmatpush1.msra.mxu0 0.0
    %5583 = vmatprep.subr.mxu0 0.0
    %5584 = vmatpush1.msra.mxu0 0.0
    %5585 = vmatprep.subr.mxu0 0.0
    %5586 = vmatpush1.msra.mxu0 0.0
    %5587 = vmatprep.subr.mxu0 0.0
    %5588 = vmatpush1.msra.mxu0 0.0
    %5589 = vmatprep.subr.mxu0 0.0
    %5590 = vmatpush1.msra.mxu0 0.0
    %5591 = vmatprep.subr.mxu0 0.0
    %5592 = vmatpush1.msra.mxu0 0.0
    %5593 = vmatprep.subr.mxu0 0.0
    %5594 = vmatpush1.msra.mxu0 0.0
    %5595 = vmatprep.subr.mxu0 0.0
    %5596 = vmatpush1.msra.mxu0 0.0
    %5597 = vmatprep.subr.mxu0 0.0
    %5598 = vmatpush1.msra.mxu0 0.0
    %5599 = vmatprep.subr.mxu0 0.0
    %5600 = vmatpush1.msra.mxu0 0.0
    %5601 = vmatprep.subr.mxu0 0.0
    %5602 = vmatpush1.msra.mxu0 0.0
    %5603 = vmatprep.subr.mxu0 0.0
    %5604 = vmatpush1.msra.mxu0 0.0
    %5605 = vmatprep.subr.mxu0 0.0
    %5606 = vmatpush1.msra.mxu0 0.0
    %5607 = vmatprep.subr.mxu0 0.0
    %5608 = vmatpush1.msra.mxu0 0.0
    %5609 = vmatprep.subr.mxu0 0.0
    %5610 = vmatpush1.msra.mxu0 0.0
    %5611 = vmatprep.subr.mxu0 0.0
    %5612 = vmatpush1.msra.mxu0 0.0
    %5613 = vmatprep.subr.mxu0 0.0
    %5614 = vmatpush1.msra.mxu0 0.0
    %5615 = vmatprep.subr.mxu0 0.0
    %5616 = vmatpush1.msra.mxu0 0.0
    %5617 = vmatprep.subr.mxu0 0.0
    %5618 = vmatpush1.msra.mxu0 0.0
    %5619 = vmatprep.subr.mxu0 0.0
    %5620 = vmatpush1.msra.mxu0 0.0
    %5621 = vmatprep.subr.mxu0 0.0
    %5622 = vmatpush1.msra.mxu0 0.0
    %5623 = vmatprep.subr.mxu0 0.0
    %5624 = vmatpush1.msra.mxu0 0.0
    %5625 = vmatprep.subr.mxu0 0.0
    %5626 = vmatpush1.msra.mxu0 0.0
    %5627 = vmatprep.subr.mxu0 0.0
    %5628 = vmatpush1.msra.mxu0 0.0
    %5629 = vmatprep.subr.mxu0 0.0
    %5630 = vmatpush1.msra.mxu0 0.0
    %5631 = vmatprep.subr.mxu0 0.0
    %5632 = vmatpush1.msra.mxu0 0.0
    %5633 = vmatprep.mubr.f32.mxu0 0.0
    %5634 = vmatmul.mubr.f32.gmra.mrb[0].mxu0 %v5564
    %v5635 = vpop.f32.mrb[0].mxu0
    %v5636 = vadd.f32 0.0, %v5635
    %v5637 = vpop.f32.mrb[0].mxu0
    %5638 = vmatprep.mubr.f32.mxu0 0.0
    %5639 = vmatmul.mubr.f32.gmra.mrb[0].mxu0 %v5567
    %v5640 = vpop.f32.mrb[0].mxu0
    %v5641 = vadd.f32 0.0, %v5640
    %v5642 = vpop.f32.mrb[0].mxu0
    %5643 = vdwg.mxu0
    %v5644 = vlaneseq
    %v5645 = vshrl.u32 %v5644, 7
    %v5646 = vsub.s32 7, %v5645
    %v5647 = vrot.slane %v4016, %v5646
    %5650 = vrot.lane.b32.xlu0 %v5636, 80
    %v5651 = vpop.permute.xlu0 %5650
    %5652 = vrot.lane.b32.xlu0 %v5641, 80
    %v5653 = vpop.permute.xlu0 %5652
    %5656 = vmatprep.subr.mxu0 0.0
    %5657 = vmatpush1.msra.mxu0 %v5651
    %5658 = vmatprep.subr.mxu0 0.0
    %5659 = vmatpush1.msra.mxu0 %v5653
    %5660 = vmatprep.subr.mxu0 0.0
    %5661 = vmatpush1.msra.mxu0 0.0
    %5662 = vmatprep.subr.mxu0 0.0
    %5663 = vmatpush1.msra.mxu0 0.0
    %5664 = vmatprep.subr.mxu0 0.0
    %5665 = vmatpush1.msra.mxu0 0.0
    %5666 = vmatprep.subr.mxu0 0.0
    %5667 = vmatpush1.msra.mxu0 0.0
    %5668 = vmatprep.subr.mxu0 0.0
    %5669 = vmatpush1.msra.mxu0 0.0
    %5670 = vmatprep.subr.mxu0 0.0
    %5671 = vmatpush1.msra.mxu0 0.0
    %5672 = vmatprep.subr.mxu0 0.0
    %5673 = vmatpush1.msra.mxu0 0.0
    %5674 = vmatprep.subr.mxu0 0.0
    %5675 = vmatpush1.msra.mxu0 0.0
    %5676 = vmatprep.subr.mxu0 0.0
    %5677 = vmatpush1.msra.mxu0 0.0
    %5678 = vmatprep.subr.mxu0 0.0
    %5679 = vmatpush1.msra.mxu0 0.0
    %5680 = vmatprep.subr.mxu0 0.0
    %5681 = vmatpush1.msra.mxu0 0.0
    %5682 = vmatprep.subr.mxu0 0.0
    %5683 = vmatpush1.msra.mxu0 0.0
    %5684 = vmatprep.subr.mxu0 0.0
    %5685 = vmatpush1.msra.mxu0 0.0
    %5686 = vmatprep.subr.mxu0 0.0
    %5687 = vmatpush1.msra.mxu0 0.0
    %5688 = vmatprep.subr.mxu0 0.0
    %5689 = vmatpush1.msra.mxu0 0.0
    %5690 = vmatprep.subr.mxu0 0.0
    %5691 = vmatpush1.msra.mxu0 0.0
    %5692 = vmatprep.subr.mxu0 0.0
    %5693 = vmatpush1.msra.mxu0 0.0
    %5694 = vmatprep.subr.mxu0 0.0
    %5695 = vmatpush1.msra.mxu0 0.0
    %5696 = vmatprep.subr.mxu0 0.0
    %5697 = vmatpush1.msra.mxu0 0.0
    %5698 = vmatprep.subr.mxu0 0.0
    %5699 = vmatpush1.msra.mxu0 0.0
    %5700 = vmatprep.subr.mxu0 0.0
    %5701 = vmatpush1.msra.mxu0 0.0
    %5702 = vmatprep.subr.mxu0 0.0
    %5703 = vmatpush1.msra.mxu0 0.0
    %5704 = vmatprep.subr.mxu0 0.0
    %5705 = vmatpush1.msra.mxu0 0.0
    %5706 = vmatprep.subr.mxu0 0.0
    %5707 = vmatpush1.msra.mxu0 0.0
    %5708 = vmatprep.subr.mxu0 0.0
    %5709 = vmatpush1.msra.mxu0 0.0
    %5710 = vmatprep.subr.mxu0 0.0
    %5711 = vmatpush1.msra.mxu0 0.0
    %5712 = vmatprep.subr.mxu0 0.0
    %5713 = vmatpush1.msra.mxu0 0.0
    %5714 = vmatprep.subr.mxu0 0.0
    %5715 = vmatpush1.msra.mxu0 0.0
    %5716 = vmatprep.subr.mxu0 0.0
    %5717 = vmatpush1.msra.mxu0 0.0
    %5718 = vmatprep.subr.mxu0 0.0
    %5719 = vmatpush1.msra.mxu0 0.0
    %5720 = vmatprep.mubr.f32.mxu0 0.0
    %5721 = vmatmul.mubr.f32.gmra.mrb[0].mxu0 %v4127
    %v5722 = vpop.f32.mrb[0].mxu0
    %v5723 = vadd.f32 %v5647, %v5722
    %v5724 = vpop.f32.mrb[0].mxu0
    %5725 = vmatprep.mubr.f32.mxu0 0.0
    %5726 = vmatmul.mubr.f32.gmra.mrb[0].mxu0 %v4130
    %v5727 = vpop.f32.mrb[0].mxu0
    %v5728 = vadd.f32 %v5647, %v5727
    %v5729 = vpop.f32.mrb[0].mxu0
    %5730 = vdwg.mxu0
    %v5731 = vld [vmem:[%s3 + $0xb0] sm:$0xff]
    %v5732 = vld [vmem:[%s3 + $0xb8] sm:$0xff]
    %v5733 = vld [vmem:[%s3 + $0xc0] sm:$0xff]
    %v5734 = vld [vmem:[%s3 + $0xc8] sm:$0xff]
    %v5735 = vld [vmem:[%s3 + $0xd0] sm:$0xff]
    %v5736 = vld [vmem:[%s3 + $0xd8] sm:$0xff]
    %v5737 = vsel %vm1433, %v5636, 0
    %v5739 = vsel %vm1433, %v5641, 0
    %5741 = vmatprep.subr.mxu0 0.0
    %5742 = vmatpush1.msra.mxu0 %v5731
    %5743 = vmatprep.subr.mxu0 0.0
    %5744 = vmatpush1.msra.mxu0 %v5732
    %5745 = vmatprep.subr.mxu0 0.0
    %5746 = vmatpush1.msra.mxu0 %v5733
    %5747 = vmatprep.subr.mxu0 0.0
    %5748 = vmatpush1.msra.mxu0 %v5734
    %5749 = vmatprep.subr.mxu0 0.0
    %5750 = vmatpush1.msra.mxu0 %v5735
    %5751 = vmatprep.subr.mxu0 0.0
    %5752 = vmatpush1.msra.mxu0 %v5736
    %5753 = vmatprep.subr.mxu0 0.0
    %5754 = vmatpush1.msra.mxu0 0.0
    %5755 = vmatprep.subr.mxu0 0.0
    %5756 = vmatpush1.msra.mxu0 0.0
    %5757 = vmatprep.subr.mxu0 0.0
    %5758 = vmatpush1.msra.mxu0 0.0
    %5759 = vmatprep.subr.mxu0 0.0
    %5760 = vmatpush1.msra.mxu0 0.0
    %5761 = vmatprep.subr.mxu0 0.0
    %5762 = vmatpush1.msra.mxu0 0.0
    %5763 = vmatprep.subr.mxu0 0.0
    %5764 = vmatpush1.msra.mxu0 0.0
    %5765 = vmatprep.subr.mxu0 0.0
    %5766 = vmatpush1.msra.mxu0 0.0
    %5767 = vmatprep.subr.mxu0 0.0
    %5768 = vmatpush1.msra.mxu0 0.0
    %5769 = vmatprep.subr.mxu0 0.0
    %5770 = vmatpush1.msra.mxu0 0.0
    %5771 = vmatprep.subr.mxu0 0.0
    %5772 = vmatpush1.msra.mxu0 0.0
    %5773 = vmatprep.subr.mxu0 0.0
    %5774 = vmatpush1.msra.mxu0 0.0
    %5775 = vmatprep.subr.mxu0 0.0
    %5776 = vmatpush1.msra.mxu0 0.0
    %5777 = vmatprep.subr.mxu0 0.0
    %5778 = vmatpush1.msra.mxu0 0.0
    %5779 = vmatprep.subr.mxu0 0.0
    %5780 = vmatpush1.msra.mxu0 0.0
    %5781 = vmatprep.subr.mxu0 0.0
    %5782 = vmatpush1.msra.mxu0 0.0
    %5783 = vmatprep.subr.mxu0 0.0
    %5784 = vmatpush1.msra.mxu0 0.0
    %5785 = vmatprep.subr.mxu0 0.0
    %5786 = vmatpush1.msra.mxu0 0.0
    %5787 = vmatprep.subr.mxu0 0.0
    %5788 = vmatpush1.msra.mxu0 0.0
    %5789 = vmatprep.subr.mxu0 0.0
    %5790 = vmatpush1.msra.mxu0 0.0
    %5791 = vmatprep.subr.mxu0 0.0
    %5792 = vmatpush1.msra.mxu0 0.0
    %5793 = vmatprep.subr.mxu0 0.0
    %5794 = vmatpush1.msra.mxu0 0.0
    %5795 = vmatprep.subr.mxu0 0.0
    %5796 = vmatpush1.msra.mxu0 0.0
    %5797 = vmatprep.subr.mxu0 0.0
    %5798 = vmatpush1.msra.mxu0 0.0
    %5799 = vmatprep.subr.mxu0 0.0
    %5800 = vmatpush1.msra.mxu0 0.0
    %5801 = vmatprep.subr.mxu0 0.0
    %5802 = vmatpush1.msra.mxu0 0.0
    %5803 = vmatprep.subr.mxu0 0.0
    %5804 = vmatpush1.msra.mxu0 0.0
    %5805 = vmatprep.mubr.f32.mxu0 0.0
    %5806 = vmatmul.mubr.f32.gmra.mrb[0].mxu0 %v5737
    %v5807 = vpop.f32.mrb[0].mxu0
    %v5808 = vadd.f32 0.0, %v5807
    %v5809 = vpop.f32.mrb[0].mxu0
    %5810 = vmatprep.mubr.f32.mxu0 0.0
    %5811 = vmatmul.mubr.f32.gmra.mrb[0].mxu0 %v5739
    %v5812 = vpop.f32.mrb[0].mxu0
    %v5813 = vadd.f32 0.0, %v5812
    %v5814 = vpop.f32.mrb[0].mxu0
    %5815 = vdwg.mxu0
    %v5816 = vld [vmem:[%s3 + $0xe0] sm:$0x7]
    %v5818 = vsel %vm1433, %v5816, 0
    %5820 = vmatprep.subr.mxu0 0.0
    %5821 = vmatpush1.xpose.msra.mxu0 %v5737
    %5822 = vmatprep.subr.mxu0 0.0
    %5823 = vmatpush1.xpose.msra.mxu0 %v5739
    %5824 = vmatprep.subr.mxu0 0.0
    %5825 = vmatpush1.xpose.msra.mxu0 0.0
    %5826 = vmatprep.subr.mxu0 0.0
    %5827 = vmatpush1.xpose.msra.mxu0 0.0
    %5828 = vmatprep.subr.mxu0 0.0
    %5829 = vmatpush1.xpose.msra.mxu0 0.0
    %5830 = vmatprep.subr.mxu0 0.0
    %5831 = vmatpush1.xpose.msra.mxu0 0.0
    %5832 = vmatprep.subr.mxu0 0.0
    %5833 = vmatpush1.xpose.msra.mxu0 0.0
    %5834 = vmatprep.subr.mxu0 0.0
    %5835 = vmatpush1.xpose.msra.mxu0 0.0
    %5836 = vmatprep.subr.mxu0 0.0
    %5837 = vmatpush1.xpose.msra.mxu0 0.0
    %5838 = vmatprep.subr.mxu0 0.0
    %5839 = vmatpush1.xpose.msra.mxu0 0.0
    %5840 = vmatprep.subr.mxu0 0.0
    %5841 = vmatpush1.xpose.msra.mxu0 0.0
    %5842 = vmatprep.subr.mxu0 0.0
    %5843 = vmatpush1.xpose.msra.mxu0 0.0
    %5844 = vmatprep.subr.mxu0 0.0
    %5845 = vmatpush1.xpose.msra.mxu0 0.0
    %5846 = vmatprep.subr.mxu0 0.0
    %5847 = vmatpush1.xpose.msra.mxu0 0.0
    %5848 = vmatprep.subr.mxu0 0.0
    %5849 = vmatpush1.xpose.msra.mxu0 0.0
    %5850 = vmatprep.subr.mxu0 0.0
    %5851 = vmatpush1.xpose.msra.mxu0 0.0
    %5852 = vmatprep.subr.mxu0 0.0
    %5853 = vmatpush1.xpose.msra.mxu0 0.0
    %5854 = vmatprep.subr.mxu0 0.0
    %5855 = vmatpush1.xpose.msra.mxu0 0.0
    %5856 = vmatprep.subr.mxu0 0.0
    %5857 = vmatpush1.xpose.msra.mxu0 0.0
    %5858 = vmatprep.subr.mxu0 0.0
    %5859 = vmatpush1.xpose.msra.mxu0 0.0
    %5860 = vmatprep.subr.mxu0 0.0
    %5861 = vmatpush1.xpose.msra.mxu0 0.0
    %5862 = vmatprep.subr.mxu0 0.0
    %5863 = vmatpush1.xpose.msra.mxu0 0.0
    %5864 = vmatprep.subr.mxu0 0.0
    %5865 = vmatpush1.xpose.msra.mxu0 0.0
    %5866 = vmatprep.subr.mxu0 0.0
    %5867 = vmatpush1.xpose.msra.mxu0 0.0
    %5868 = vmatprep.subr.mxu0 0.0
    %5869 = vmatpush1.xpose.msra.mxu0 0.0
    %5870 = vmatprep.subr.mxu0 0.0
    %5871 = vmatpush1.xpose.msra.mxu0 0.0
    %5872 = vmatprep.subr.mxu0 0.0
    %5873 = vmatpush1.xpose.msra.mxu0 0.0
    %5874 = vmatprep.subr.mxu0 0.0
    %5875 = vmatpush1.xpose.msra.mxu0 0.0
    %5876 = vmatprep.subr.mxu0 0.0
    %5877 = vmatpush1.xpose.msra.mxu0 0.0
    %5878 = vmatprep.subr.mxu0 0.0
    %5879 = vmatpush1.xpose.msra.mxu0 0.0
    %5880 = vmatprep.subr.mxu0 0.0
    %5881 = vmatpush1.xpose.msra.mxu0 0.0
    %5882 = vmatprep.subr.mxu0 0.0
    %5883 = vmatpush1.xpose.msra.mxu0 0.0
    %5884 = vmatprep.mubr.f32.mxu0 0.0
    %5885 = vmatmul.mubr.f32.gmra.mrb[0].mxu0 %v5818
    %v5886 = vpop.f32.mrb[0].mxu0
    %v5887 = vadd.f32 0.0, %v5886
    %v5888 = vpop.f32.mrb[0].mxu0
    %5889 = vdwg.mxu0
    %5891 = vset.pattern.permute.xlu0 0
    %5892 = vperm.xlu0 %5891, %v5808
    %v5893 = vpop.permute.xlu0 %5892
    %5896 = vset.pattern.permute.xlu0 0
    %5897 = vperm.xlu0 %5896, %v5813
    %v5898 = vpop.permute.xlu0 %5897
    %v5900 = vlaneseq
    %v5901 = vshrl.u32 %v5900, 7
    %v5902 = vsub.s32 0, %v5901
    %v5903 = vrot.slane %v5887, %v5902
    %v5904 = vadd.f32 %v5893, %v5903
    %v5905 = vadd.f32 %v5898, %v5903
    %vm5906 = vcmp.ge.f32.partialorder %v5904, 0.0
    %vm5907 = vcmp.ge.f32.partialorder %v5905, 0.0
    %v5908 = vmul.f32 %v5904, 0.2
    %v5909 = vmul.f32 %v5905, 0.2
    %v5910 = vsel %vm5906, %v5904, %v5908
    %v5911 = vsel %vm5907, %v5905, %v5909
    %v5912 = vadd.f32 %v5910, %v4012
    %v5913 = vadd.f32 %v5911, %v4013
    %v5914 = vsel %vm32, %v5912, -inf
    %5915 = vmax.xlane.f32.xlu0 %v5914
    %v5916 = vpop.xlane.xlu0 %5915
    %v5917 = vsel %vm32, %v5913, -inf
    %5918 = vmax.xlane.f32.xlu0 %v5917
    %v5919 = vpop.xlane.xlu0 %5918
    %v5920 = vsub.f32 %v5912, %v5916
    %v5921 = vsub.f32 %v5913, %v5919
    %v5922 = vmul.f32 %v5920, 1.442695
    %v5923 = vpow.pop %v5922
    %v5924 = vmul.f32 %v5921, 1.442695
    %v5925 = vpow.pop %v5924
    %v5926 = vsel %vm32, %v5923, 0.0
    %5927 = vadd.xlane.f32.xlu0 %v5926
    %v5928 = vpop.xlane.xlu0 %5927
    %v5929 = vsel %vm32, %v5925, 0.0
    %5930 = vadd.xlane.f32.xlu0 %v5929
    %v5931 = vpop.xlane.xlu0 %5930
    %v5932 = vrcp.pop %v5928
    %v5933 = vrcp.pop %v5931
    %v5934 = vmul.f32 %v5923, %v5932
    %v5935 = vmul.f32 %v5925, %v5933
    %5936 = vset.pattern.permute.xlu0 1
    %5937 = vperm.xlu0 %5936, %v5808
    %v5938 = vpop.permute.xlu0 %5937
    %5940 = vset.pattern.permute.xlu0 1
    %5941 = vperm.xlu0 %5940, %v5813
    %v5942 = vpop.permute.xlu0 %5941
    %v5944 = vlaneseq
    %v5945 = vshrl.u32 %v5944, 7
    %v5946 = vsub.s32 1, %v5945
    %v5947 = vrot.slane %v5887, %v5946
    %v5948 = vadd.f32 %v5938, %v5947
    %v5949 = vadd.f32 %v5942, %v5947
    %vm5950 = vcmp.ge.f32.partialorder %v5948, 0.0
    %vm5951 = vcmp.ge.f32.partialorder %v5949, 0.0
    %v5952 = vmul.f32 %v5948, 0.2
    %v5953 = vmul.f32 %v5949, 0.2
    %v5954 = vsel %vm5950, %v5948, %v5952
    %v5955 = vsel %vm5951, %v5949, %v5953
    %v5956 = vadd.f32 %v5954, %v4012
    %v5957 = vadd.f32 %v5955, %v4013
    %v5958 = vsel %vm32, %v5956, -inf
    %5959 = vmax.xlane.f32.xlu0 %v5958
    %v5960 = vpop.xlane.xlu0 %5959
    %v5961 = vsel %vm32, %v5957, -inf
    %5962 = vmax.xlane.f32.xlu0 %v5961
    %v5963 = vpop.xlane.xlu0 %5962
    %v5964 = vsub.f32 %v5956, %v5960
    %v5965 = vsub.f32 %v5957, %v5963
    %v5966 = vmul.f32 %v5964, 1.442695
    %v5967 = vpow.pop %v5966
    %v5968 = vmul.f32 %v5965, 1.442695
    %v5969 = vpow.pop %v5968
    %v5970 = vsel %vm32, %v5967, 0.0
    %5971 = vadd.xlane.f32.xlu0 %v5970
    %v5972 = vpop.xlane.xlu0 %5971
    %v5973 = vsel %vm32, %v5969, 0.0
    %5974 = vadd.xlane.f32.xlu0 %v5973
    %v5975 = vpop.xlane.xlu0 %5974
    %v5976 = vrcp.pop %v5972
    %v5977 = vrcp.pop %v5975
    %v5978 = vmul.f32 %v5967, %v5976
    %v5979 = vmul.f32 %v5969, %v5977
    %5980 = vrot.lane.b32.xlu0 %v5636, 112
    %v5981 = vpop.permute.xlu0 %5980
    %5982 = vrot.lane.b32.xlu0 %v5641, 112
    %v5983 = vpop.permute.xlu0 %5982
    %v5987 = vsel %vm32, %v5978, 0
    %v5990 = vsel %vm32, %v5979, 0
    %5992 = vmatprep.subr.mxu0 0.0
    %5993 = vmatpush1.msra.mxu0 %v5981
    %5994 = vmatprep.subr.mxu0 0.0
    %5995 = vmatpush1.msra.mxu0 %v5983
    %5996 = vmatprep.subr.mxu0 0.0
    %5997 = vmatpush1.msra.mxu0 0.0
    %5998 = vmatprep.subr.mxu0 0.0
    %5999 = vmatpush1.msra.mxu0 0.0
    %6000 = vmatprep.subr.mxu0 0.0
    %6001 = vmatpush1.msra.mxu0 0.0
    %6002 = vmatprep.subr.mxu0 0.0
    %6003 = vmatpush1.msra.mxu0 0.0
    %6004 = vmatprep.subr.mxu0 0.0
    %6005 = vmatpush1.msra.mxu0 0.0
    %6006 = vmatprep.subr.mxu0 0.0
    %6007 = vmatpush1.msra.mxu0 0.0
    %6008 = vmatprep.subr.mxu0 0.0
    %6009 = vmatpush1.msra.mxu0 0.0
    %6010 = vmatprep.subr.mxu0 0.0
    %6011 = vmatpush1.msra.mxu0 0.0
    %6012 = vmatprep.subr.mxu0 0.0
    %6013 = vmatpush1.msra.mxu0 0.0
    %6014 = vmatprep.subr.mxu0 0.0
    %6015 = vmatpush1.msra.mxu0 0.0
    %6016 = vmatprep.subr.mxu0 0.0
    %6017 = vmatpush1.msra.mxu0 0.0
    %6018 = vmatprep.subr.mxu0 0.0
    %6019 = vmatpush1.msra.mxu0 0.0
    %6020 = vmatprep.subr.mxu0 0.0
    %6021 = vmatpush1.msra.mxu0 0.0
    %6022 = vmatprep.subr.mxu0 0.0
    %6023 = vmatpush1.msra.mxu0 0.0
    %6024 = vmatprep.subr.mxu0 0.0
    %6025 = vmatpush1.msra.mxu0 0.0
    %6026 = vmatprep.subr.mxu0 0.0
    %6027 = vmatpush1.msra.mxu0 0.0
    %6028 = vmatprep.subr.mxu0 0.0
    %6029 = vmatpush1.msra.mxu0 0.0
    %6030 = vmatprep.subr.mxu0 0.0
    %6031 = vmatpush1.msra.mxu0 0.0
    %6032 = vmatprep.subr.mxu0 0.0
    %6033 = vmatpush1.msra.mxu0 0.0
    %6034 = vmatprep.subr.mxu0 0.0
    %6035 = vmatpush1.msra.mxu0 0.0
    %6036 = vmatprep.subr.mxu0 0.0
    %6037 = vmatpush1.msra.mxu0 0.0
    %6038 = vmatprep.subr.mxu0 0.0
    %6039 = vmatpush1.msra.mxu0 0.0
    %6040 = vmatprep.subr.mxu0 0.0
    %6041 = vmatpush1.msra.mxu0 0.0
    %6042 = vmatprep.subr.mxu0 0.0
    %6043 = vmatpush1.msra.mxu0 0.0
    %6044 = vmatprep.subr.mxu0 0.0
    %6045 = vmatpush1.msra.mxu0 0.0
    %6046 = vmatprep.subr.mxu0 0.0
    %6047 = vmatpush1.msra.mxu0 0.0
    %6048 = vmatprep.subr.mxu0 0.0
    %6049 = vmatpush1.msra.mxu0 0.0
    %6050 = vmatprep.subr.mxu0 0.0
    %6051 = vmatpush1.msra.mxu0 0.0
    %6052 = vmatprep.subr.mxu0 0.0
    %6053 = vmatpush1.msra.mxu0 0.0
    %6054 = vmatprep.subr.mxu0 0.0
    %6055 = vmatpush1.msra.mxu0 0.0
    %6056 = vmatprep.mubr.f32.mxu0 0.0
    %6057 = vmatmul.mubr.f32.gmra.mrb[0].mxu0 %v5987
    %v6058 = vpop.f32.mrb[0].mxu0
    %v6059 = vadd.f32 0.0, %v6058
    %v6060 = vpop.f32.mrb[0].mxu0
    %6061 = vmatprep.mubr.f32.mxu0 0.0
    %6062 = vmatmul.mubr.f32.gmra.mrb[0].mxu0 %v5990
    %v6063 = vpop.f32.mrb[0].mxu0
    %v6064 = vadd.f32 0.0, %v6063
    %v6065 = vpop.f32.mrb[0].mxu0
    %6066 = vdwg.mxu0
    %v6068 = vsel %vm32, %v5934, 0
    %v6071 = vsel %vm32, %v5935, 0
    %6073 = vmatprep.subr.mxu0 0.0
    %6074 = vmatpush1.msra.mxu0 %v5636
    %6075 = vmatprep.subr.mxu0 0.0
    %6076 = vmatpush1.msra.mxu0 %v5641
    %6077 = vmatprep.subr.mxu0 0.0
    %6078 = vmatpush1.msra.mxu0 0.0
    %6079 = vmatprep.subr.mxu0 0.0
    %6080 = vmatpush1.msra.mxu0 0.0
    %6081 = vmatprep.subr.mxu0 0.0
    %6082 = vmatpush1.msra.mxu0 0.0
    %6083 = vmatprep.subr.mxu0 0.0
    %6084 = vmatpush1.msra.mxu0 0.0
    %6085 = vmatprep.subr.mxu0 0.0
    %6086 = vmatpush1.msra.mxu0 0.0
    %6087 = vmatprep.subr.mxu0 0.0
    %6088 = vmatpush1.msra.mxu0 0.0
    %6089 = vmatprep.subr.mxu0 0.0
    %6090 = vmatpush1.msra.mxu0 0.0
    %6091 = vmatprep.subr.mxu0 0.0
    %6092 = vmatpush1.msra.mxu0 0.0
    %6093 = vmatprep.subr.mxu0 0.0
    %6094 = vmatpush1.msra.mxu0 0.0
    %6095 = vmatprep.subr.mxu0 0.0
    %6096 = vmatpush1.msra.mxu0 0.0
    %6097 = vmatprep.subr.mxu0 0.0
    %6098 = vmatpush1.msra.mxu0 0.0
    %6099 = vmatprep.subr.mxu0 0.0
    %6100 = vmatpush1.msra.mxu0 0.0
    %6101 = vmatprep.subr.mxu0 0.0
    %6102 = vmatpush1.msra.mxu0 0.0
    %6103 = vmatprep.subr.mxu0 0.0
    %6104 = vmatpush1.msra.mxu0 0.0
    %6105 = vmatprep.subr.mxu0 0.0
    %6106 = vmatpush1.msra.mxu0 0.0
    %6107 = vmatprep.subr.mxu0 0.0
    %6108 = vmatpush1.msra.mxu0 0.0
    %6109 = vmatprep.subr.mxu0 0.0
    %6110 = vmatpush1.msra.mxu0 0.0
    %6111 = vmatprep.subr.mxu0 0.0
    %6112 = vmatpush1.msra.mxu0 0.0
    %6113 = vmatprep.subr.mxu0 0.0
    %6114 = vmatpush1.msra.mxu0 0.0
    %6115 = vmatprep.subr.mxu0 0.0
    %6116 = vmatpush1.msra.mxu0 0.0
    %6117 = vmatprep.subr.mxu0 0.0
    %6118 = vmatpush1.msra.mxu0 0.0
    %6119 = vmatprep.subr.mxu0 0.0
    %6120 = vmatpush1.msra.mxu0 0.0
    %6121 = vmatprep.subr.mxu0 0.0
    %6122 = vmatpush1.msra.mxu0 0.0
    %6123 = vmatprep.subr.mxu0 0.0
    %6124 = vmatpush1.msra.mxu0 0.0
    %6125 = vmatprep.subr.mxu0 0.0
    %6126 = vmatpush1.msra.mxu0 0.0
    %6127 = vmatprep.subr.mxu0 0.0
    %6128 = vmatpush1.msra.mxu0 0.0
    %6129 = vmatprep.subr.mxu0 0.0
    %6130 = vmatpush1.msra.mxu0 0.0
    %6131 = vmatprep.subr.mxu0 0.0
    %6132 = vmatpush1.msra.mxu0 0.0
    %6133 = vmatprep.subr.mxu0 0.0
    %6134 = vmatpush1.msra.mxu0 0.0
    %6135 = vmatprep.subr.mxu0 0.0
    %6136 = vmatpush1.msra.mxu0 0.0
    %6137 = vmatprep.mubr.f32.mxu0 0.0
    %6138 = vmatmul.mubr.f32.gmra.mrb[0].mxu0 %v6068
    %v6139 = vpop.f32.mrb[0].mxu0
    %v6140 = vadd.f32 %v6059, %v6139
    %v6141 = vpop.f32.mrb[0].mxu0
    %6142 = vmatprep.mubr.f32.mxu0 0.0
    %6143 = vmatmul.mubr.f32.gmra.mrb[0].mxu0 %v6071
    %v6144 = vpop.f32.mrb[0].mxu0
    %v6145 = vadd.f32 %v6064, %v6144
    %v6146 = vpop.f32.mrb[0].mxu0
    %6147 = vdwg.mxu0
    %6148 = vset.pattern.permute.xlu0 2
    %6149 = vperm.xlu0 %6148, %v5808
    %v6150 = vpop.permute.xlu0 %6149
    %6152 = vset.pattern.permute.xlu0 2
    %6153 = vperm.xlu0 %6152, %v5813
    %v6154 = vpop.permute.xlu0 %6153
    %v6156 = vlaneseq
    %v6157 = vshrl.u32 %v6156, 7
    %v6158 = vsub.s32 2, %v6157
    %v6159 = vrot.slane %v5887, %v6158
    %v6160 = vadd.f32 %v6150, %v6159
    %v6161 = vadd.f32 %v6154, %v6159
    %vm6162 = vcmp.ge.f32.partialorder %v6160, 0.0
    %vm6163 = vcmp.ge.f32.partialorder %v6161, 0.0
    %v6164 = vmul.f32 %v6160, 0.2
    %v6165 = vmul.f32 %v6161, 0.2
    %v6166 = vsel %vm6162, %v6160, %v6164
    %v6167 = vsel %vm6163, %v6161, %v6165
    %v6168 = vadd.f32 %v6166, %v4012
    %v6169 = vadd.f32 %v6167, %v4013
    %v6170 = vsel %vm32, %v6168, -inf
    %6171 = vmax.xlane.f32.xlu0 %v6170
    %v6172 = vpop.xlane.xlu0 %6171
    %v6173 = vsel %vm32, %v6169, -inf
    %6174 = vmax.xlane.f32.xlu0 %v6173
    %v6175 = vpop.xlane.xlu0 %6174
    %v6176 = vsub.f32 %v6168, %v6172
    %v6177 = vsub.f32 %v6169, %v6175
    %v6178 = vmul.f32 %v6176, 1.442695
    %v6179 = vpow.pop %v6178
    %v6180 = vmul.f32 %v6177, 1.442695
    %v6181 = vpow.pop %v6180
    %v6182 = vsel %vm32, %v6179, 0.0
    %6183 = vadd.xlane.f32.xlu0 %v6182
    %v6184 = vpop.xlane.xlu0 %6183
    %v6185 = vsel %vm32, %v6181, 0.0
    %6186 = vadd.xlane.f32.xlu0 %v6185
    %v6187 = vpop.xlane.xlu0 %6186
    %v6188 = vrcp.pop %v6184
    %v6189 = vrcp.pop %v6187
    %v6190 = vmul.f32 %v6179, %v6188
    %v6191 = vmul.f32 %v6181, %v6189
    %6192 = vrot.lane.b32.xlu0 %v5636, 96
    %v6193 = vpop.permute.xlu0 %6192
    %6194 = vrot.lane.b32.xlu0 %v5641, 96
    %v6195 = vpop.permute.xlu0 %6194
    %v6199 = vsel %vm32, %v6190, 0
    %v6202 = vsel %vm32, %v6191, 0
    %6204 = vmatprep.subr.mxu0 0.0
    %6205 = vmatpush1.msra.mxu0 %v6193
    %6206 = vmatprep.subr.mxu0 0.0
    %6207 = vmatpush1.msra.mxu0 %v6195
    %6208 = vmatprep.subr.mxu0 0.0
    %6209 = vmatpush1.msra.mxu0 0.0
    %6210 = vmatprep.subr.mxu0 0.0
    %6211 = vmatpush1.msra.mxu0 0.0
    %6212 = vmatprep.subr.mxu0 0.0
    %6213 = vmatpush1.msra.mxu0 0.0
    %6214 = vmatprep.subr.mxu0 0.0
    %6215 = vmatpush1.msra.mxu0 0.0
    %6216 = vmatprep.subr.mxu0 0.0
    %6217 = vmatpush1.msra.mxu0 0.0
    %6218 = vmatprep.subr.mxu0 0.0
    %6219 = vmatpush1.msra.mxu0 0.0
    %6220 = vmatprep.subr.mxu0 0.0
    %6221 = vmatpush1.msra.mxu0 0.0
    %6222 = vmatprep.subr.mxu0 0.0
    %6223 = vmatpush1.msra.mxu0 0.0
    %6224 = vmatprep.subr.mxu0 0.0
    %6225 = vmatpush1.msra.mxu0 0.0
    %6226 = vmatprep.subr.mxu0 0.0
    %6227 = vmatpush1.msra.mxu0 0.0
    %6228 = vmatprep.subr.mxu0 0.0
    %6229 = vmatpush1.msra.mxu0 0.0
    %6230 = vmatprep.subr.mxu0 0.0
    %6231 = vmatpush1.msra.mxu0 0.0
    %6232 = vmatprep.subr.mxu0 0.0
    %6233 = vmatpush1.msra.mxu0 0.0
    %6234 = vmatprep.subr.mxu0 0.0
    %6235 = vmatpush1.msra.mxu0 0.0
    %6236 = vmatprep.subr.mxu0 0.0
    %6237 = vmatpush1.msra.mxu0 0.0
    %6238 = vmatprep.subr.mxu0 0.0
    %6239 = vmatpush1.msra.mxu0 0.0
    %6240 = vmatprep.subr.mxu0 0.0
    %6241 = vmatpush1.msra.mxu0 0.0
    %6242 = vmatprep.subr.mxu0 0.0
    %6243 = vmatpush1.msra.mxu0 0.0
    %6244 = vmatprep.subr.mxu0 0.0
    %6245 = vmatpush1.msra.mxu0 0.0
    %6246 = vmatprep.subr.mxu0 0.0
    %6247 = vmatpush1.msra.mxu0 0.0
    %6248 = vmatprep.subr.mxu0 0.0
    %6249 = vmatpush1.msra.mxu0 0.0
    %6250 = vmatprep.subr.mxu0 0.0
    %6251 = vmatpush1.msra.mxu0 0.0
    %6252 = vmatprep.subr.mxu0 0.0
    %6253 = vmatpush1.msra.mxu0 0.0
    %6254 = vmatprep.subr.mxu0 0.0
    %6255 = vmatpush1.msra.mxu0 0.0
    %6256 = vmatprep.subr.mxu0 0.0
    %6257 = vmatpush1.msra.mxu0 0.0
    %6258 = vmatprep.subr.mxu0 0.0
    %6259 = vmatpush1.msra.mxu0 0.0
    %6260 = vmatprep.subr.mxu0 0.0
    %6261 = vmatpush1.msra.mxu0 0.0
    %6262 = vmatprep.subr.mxu0 0.0
    %6263 = vmatpush1.msra.mxu0 0.0
    %6264 = vmatprep.subr.mxu0 0.0
    %6265 = vmatpush1.msra.mxu0 0.0
    %6266 = vmatprep.subr.mxu0 0.0
    %6267 = vmatpush1.msra.mxu0 0.0
    %6268 = vmatprep.mubr.f32.mxu0 0.0
    %6269 = vmatmul.mubr.f32.gmra.mrb[0].mxu0 %v6199
    %v6270 = vpop.f32.mrb[0].mxu0
    %v6271 = vadd.f32 0.0, %v6270
    %v6272 = vpop.f32.mrb[0].mxu0
    %6273 = vmatprep.mubr.f32.mxu0 0.0
    %6274 = vmatmul.mubr.f32.gmra.mrb[0].mxu0 %v6202
    %v6275 = vpop.f32.mrb[0].mxu0
    %v6276 = vadd.f32 0.0, %v6275
    %v6277 = vpop.f32.mrb[0].mxu0
    %6278 = vdwg.mxu0
    %v6279 = vadd.f32 %v6140, %v6271
    %v6280 = vadd.f32 %v6145, %v6276
    %v6281 = vmul.f32 %v6279, 0.33333334
    %v6282 = vmul.f32 %v6280, 0.33333334
    %v6283 = vlaneseq
    %v6284 = vshrl.u32 %v6283, 7
    %v6285 = vsub.s32 3, %v6284
    %v6286 = vrot.slane %v4016, %v6285
    %v6287 = vadd.f32 %v6281, %v6286
    %v6288 = vadd.f32 %v6282, %v6286
    %v6289 = vmax.f32 %v6287, 0.0
    %v6290 = vmax.f32 %v6288, 0.0
    %v6291 = vxor.u32 %v5723, 2147483648
    %v6292 = vxor.u32 %v5728, 2147483648
    %v6293 = vmul.f32 %v6291, 1.442695
    %v6294 = vpow.pop %v6293
    %v6295 = vmul.f32 %v6292, 1.442695
    %v6296 = vpow.pop %v6295
    %v6297 = vadd.f32 %v6294, 1.0
    %v6298 = vadd.f32 %v6296, 1.0
    %v6299 = vrcp.pop %v6297
    %v6300 = vmul.f32 1.0, %v6299
    %v6301 = vrcp.pop %v6298
    %v6302 = vmul.f32 1.0, %v6301
    %v6303 = vmul.f32 %v6289, %v6300
    %v6304 = vmul.f32 %v6290, %v6302
    %v6305 = vsub.f32 1.0, %v6300
    %v6306 = vsub.f32 1.0, %v6302
    %v6307 = vmul.f32 %v5557, %v6305
    %v6308 = vmul.f32 %v5558, %v6306
    %v6309 = vadd.f32 %v6303, %v6307
    %v6310 = vadd.f32 %v6304, %v6308
    %v6311 = vmax.f32 %v6309, 0.0
    %v6312 = vmax.f32 %v6310, 0.0
    %v6313 = vld [vmem:[%s3 + $0x30] sm:$0xff]
    %v6314 = vld [vmem:[%s3 + $0x38] sm:$0xff]
    %v6316 = vsel %vm32, %v6311, 0
    %v6319 = vsel %vm32, %v6312, 0
    %6321 = vmatprep.subr.mxu0 0.0
    %6322 = vmatpush1.msra.mxu0 %v6313
    %6323 = vmatprep.subr.mxu0 0.0
    %6324 = vmatpush1.msra.mxu0 %v6314
    %6325 = vmatprep.subr.mxu0 0.0
    %6326 = vmatpush1.msra.mxu0 0.0
    %6327 = vmatprep.subr.mxu0 0.0
    %6328 = vmatpush1.msra.mxu0 0.0
    %6329 = vmatprep.subr.mxu0 0.0
    %6330 = vmatpush1.msra.mxu0 0.0
    %6331 = vmatprep.subr.mxu0 0.0
    %6332 = vmatpush1.msra.mxu0 0.0
    %6333 = vmatprep.subr.mxu0 0.0
    %6334 = vmatpush1.msra.mxu0 0.0
    %6335 = vmatprep.subr.mxu0 0.0
    %6336 = vmatpush1.msra.mxu0 0.0
    %6337 = vmatprep.subr.mxu0 0.0
    %6338 = vmatpush1.msra.mxu0 0.0
    %6339 = vmatprep.subr.mxu0 0.0
    %6340 = vmatpush1.msra.mxu0 0.0
    %6341 = vmatprep.subr.mxu0 0.0
    %6342 = vmatpush1.msra.mxu0 0.0
    %6343 = vmatprep.subr.mxu0 0.0
    %6344 = vmatpush1.msra.mxu0 0.0
    %6345 = vmatprep.subr.mxu0 0.0
    %6346 = vmatpush1.msra.mxu0 0.0
    %6347 = vmatprep.subr.mxu0 0.0
    %6348 = vmatpush1.msra.mxu0 0.0
    %6349 = vmatprep.subr.mxu0 0.0
    %6350 = vmatpush1.msra.mxu0 0.0
    %6351 = vmatprep.subr.mxu0 0.0
    %6352 = vmatpush1.msra.mxu0 0.0
    %6353 = vmatprep.subr.mxu0 0.0
    %6354 = vmatpush1.msra.mxu0 0.0
    %6355 = vmatprep.subr.mxu0 0.0
    %6356 = vmatpush1.msra.mxu0 0.0
    %6357 = vmatprep.subr.mxu0 0.0
    %6358 = vmatpush1.msra.mxu0 0.0
    %6359 = vmatprep.subr.mxu0 0.0
    %6360 = vmatpush1.msra.mxu0 0.0
    %6361 = vmatprep.subr.mxu0 0.0
    %6362 = vmatpush1.msra.mxu0 0.0
    %6363 = vmatprep.subr.mxu0 0.0
    %6364 = vmatpush1.msra.mxu0 0.0
    %6365 = vmatprep.subr.mxu0 0.0
    %6366 = vmatpush1.msra.mxu0 0.0
    %6367 = vmatprep.subr.mxu0 0.0
    %6368 = vmatpush1.msra.mxu0 0.0
    %6369 = vmatprep.subr.mxu0 0.0
    %6370 = vmatpush1.msra.mxu0 0.0
    %6371 = vmatprep.subr.mxu0 0.0
    %6372 = vmatpush1.msra.mxu0 0.0
    %6373 = vmatprep.subr.mxu0 0.0
    %6374 = vmatpush1.msra.mxu0 0.0
    %6375 = vmatprep.subr.mxu0 0.0
    %6376 = vmatpush1.msra.mxu0 0.0
    %6377 = vmatprep.subr.mxu0 0.0
    %6378 = vmatpush1.msra.mxu0 0.0
    %6379 = vmatprep.subr.mxu0 0.0
    %6380 = vmatpush1.msra.mxu0 0.0
    %6381 = vmatprep.subr.mxu0 0.0
    %6382 = vmatpush1.msra.mxu0 0.0
    %6383 = vmatprep.subr.mxu0 0.0
    %6384 = vmatpush1.msra.mxu0 0.0
    %6385 = vmatprep.mubr.f32.mxu0 0.0
    %6386 = vmatmul.mubr.f32.gmra.mrb[0].mxu0 %v6316
    %v6387 = vpop.f32.mrb[0].mxu0
    %v6388 = vadd.f32 0.0, %v6387
    %v6389 = vpop.f32.mrb[0].mxu0
    %6390 = vmatprep.mubr.f32.mxu0 0.0
    %6391 = vmatmul.mubr.f32.gmra.mrb[0].mxu0 %v6319
    %v6392 = vpop.f32.mrb[0].mxu0
    %v6393 = vadd.f32 0.0, %v6392
    %v6394 = vpop.f32.mrb[0].mxu0
    %6395 = vdwg.mxu0
    %v6396 = vlaneseq
    %v6397 = vshrl.u32 %v6396, 7
    %v6398 = vsub.s32 0, %v6397
    %v6399 = vrot.slane %v4017, %v6398
    %6402 = vrot.lane.b32.xlu0 %v6388, 80
    %v6403 = vpop.permute.xlu0 %6402
    %6404 = vrot.lane.b32.xlu0 %v6393, 80
    %v6405 = vpop.permute.xlu0 %6404
    %6408 = vmatprep.subr.mxu0 0.0
    %6409 = vmatpush1.msra.mxu0 %v6403
    %6410 = vmatprep.subr.mxu0 0.0
    %6411 = vmatpush1.msra.mxu0 %v6405
    %6412 = vmatprep.subr.mxu0 0.0
    %6413 = vmatpush1.msra.mxu0 0.0
    %6414 = vmatprep.subr.mxu0 0.0
    %6415 = vmatpush1.msra.mxu0 0.0
    %6416 = vmatprep.subr.mxu0 0.0
    %6417 = vmatpush1.msra.mxu0 0.0
    %6418 = vmatprep.subr.mxu0 0.0
    %6419 = vmatpush1.msra.mxu0 0.0
    %6420 = vmatprep.subr.mxu0 0.0
    %6421 = vmatpush1.msra.mxu0 0.0
    %6422 = vmatprep.subr.mxu0 0.0
    %6423 = vmatpush1.msra.mxu0 0.0
    %6424 = vmatprep.subr.mxu0 0.0
    %6425 = vmatpush1.msra.mxu0 0.0
    %6426 = vmatprep.subr.mxu0 0.0
    %6427 = vmatpush1.msra.mxu0 0.0
    %6428 = vmatprep.subr.mxu0 0.0
    %6429 = vmatpush1.msra.mxu0 0.0
    %6430 = vmatprep.subr.mxu0 0.0
    %6431 = vmatpush1.msra.mxu0 0.0
    %6432 = vmatprep.subr.mxu0 0.0
    %6433 = vmatpush1.msra.mxu0 0.0
    %6434 = vmatprep.subr.mxu0 0.0
    %6435 = vmatpush1.msra.mxu0 0.0
    %6436 = vmatprep.subr.mxu0 0.0
    %6437 = vmatpush1.msra.mxu0 0.0
    %6438 = vmatprep.subr.mxu0 0.0
    %6439 = vmatpush1.msra.mxu0 0.0
    %6440 = vmatprep.subr.mxu0 0.0
    %6441 = vmatpush1.msra.mxu0 0.0
    %6442 = vmatprep.subr.mxu0 0.0
    %6443 = vmatpush1.msra.mxu0 0.0
    %6444 = vmatprep.subr.mxu0 0.0
    %6445 = vmatpush1.msra.mxu0 0.0
    %6446 = vmatprep.subr.mxu0 0.0
    %6447 = vmatpush1.msra.mxu0 0.0
    %6448 = vmatprep.subr.mxu0 0.0
    %6449 = vmatpush1.msra.mxu0 0.0
    %6450 = vmatprep.subr.mxu0 0.0
    %6451 = vmatpush1.msra.mxu0 0.0
    %6452 = vmatprep.subr.mxu0 0.0
    %6453 = vmatpush1.msra.mxu0 0.0
    %6454 = vmatprep.subr.mxu0 0.0
    %6455 = vmatpush1.msra.mxu0 0.0
    %6456 = vmatprep.subr.mxu0 0.0
    %6457 = vmatpush1.msra.mxu0 0.0
    %6458 = vmatprep.subr.mxu0 0.0
    %6459 = vmatpush1.msra.mxu0 0.0
    %6460 = vmatprep.subr.mxu0 0.0
    %6461 = vmatpush1.msra.mxu0 0.0
    %6462 = vmatprep.subr.mxu0 0.0
    %6463 = vmatpush1.msra.mxu0 0.0
    %6464 = vmatprep.subr.mxu0 0.0
    %6465 = vmatpush1.msra.mxu0 0.0
    %6466 = vmatprep.subr.mxu0 0.0
    %6467 = vmatpush1.msra.mxu0 0.0
    %6468 = vmatprep.subr.mxu0 0.0
    %6469 = vmatpush1.msra.mxu0 0.0
    %6470 = vmatprep.subr.mxu0 0.0
    %6471 = vmatpush1.msra.mxu0 0.0
    %6472 = vmatprep.mubr.f32.mxu0 0.0
    %6473 = vmatmul.mubr.f32.gmra.mrb[0].mxu0 %v4127
    %v6474 = vpop.f32.mrb[0].mxu0
    %v6475 = vadd.f32 %v6399, %v6474
    %v6476 = vpop.f32.mrb[0].mxu0
    %6477 = vmatprep.mubr.f32.mxu0 0.0
    %6478 = vmatmul.mubr.f32.gmra.mrb[0].mxu0 %v4130
    %v6479 = vpop.f32.mrb[0].mxu0
    %v6480 = vadd.f32 %v6399, %v6479
    %v6481 = vpop.f32.mrb[0].mxu0
    %6482 = vdwg.mxu0
    %v6483 = vld [vmem:[%s3 + $0xe8] sm:$0xff]
    %v6484 = vld [vmem:[%s3 + $0xf0] sm:$0xff]
    %v6485 = vld [vmem:[%s3 + $0xf8] sm:$0xff]
    %v6486 = vld [vmem:[%s3 + $0x100] sm:$0xff]
    %v6487 = vld [vmem:[%s3 + $0x108] sm:$0xff]
    %v6488 = vld [vmem:[%s3 + $0x110] sm:$0xff]
    %v6489 = vsel %vm1433, %v6388, 0
    %v6491 = vsel %vm1433, %v6393, 0
    %6493 = vmatprep.subr.mxu0 0.0
    %6494 = vmatpush1.msra.mxu0 %v6483
    %6495 = vmatprep.subr.mxu0 0.0
    %6496 = vmatpush1.msra.mxu0 %v6484
    %6497 = vmatprep.subr.mxu0 0.0
    %6498 = vmatpush1.msra.mxu0 %v6485
    %6499 = vmatprep.subr.mxu0 0.0
    %6500 = vmatpush1.msra.mxu0 %v6486
    %6501 = vmatprep.subr.mxu0 0.0
    %6502 = vmatpush1.msra.mxu0 %v6487
    %6503 = vmatprep.subr.mxu0 0.0
    %6504 = vmatpush1.msra.mxu0 %v6488
    %6505 = vmatprep.subr.mxu0 0.0
    %6506 = vmatpush1.msra.mxu0 0.0
    %6507 = vmatprep.subr.mxu0 0.0
    %6508 = vmatpush1.msra.mxu0 0.0
    %6509 = vmatprep.subr.mxu0 0.0
    %6510 = vmatpush1.msra.mxu0 0.0
    %6511 = vmatprep.subr.mxu0 0.0
    %6512 = vmatpush1.msra.mxu0 0.0
    %6513 = vmatprep.subr.mxu0 0.0
    %6514 = vmatpush1.msra.mxu0 0.0
    %6515 = vmatprep.subr.mxu0 0.0
    %6516 = vmatpush1.msra.mxu0 0.0
    %6517 = vmatprep.subr.mxu0 0.0
    %6518 = vmatpush1.msra.mxu0 0.0
    %6519 = vmatprep.subr.mxu0 0.0
    %6520 = vmatpush1.msra.mxu0 0.0
    %6521 = vmatprep.subr.mxu0 0.0
    %6522 = vmatpush1.msra.mxu0 0.0
    %6523 = vmatprep.subr.mxu0 0.0
    %6524 = vmatpush1.msra.mxu0 0.0
    %6525 = vmatprep.subr.mxu0 0.0
    %6526 = vmatpush1.msra.mxu0 0.0
    %6527 = vmatprep.subr.mxu0 0.0
    %6528 = vmatpush1.msra.mxu0 0.0
    %6529 = vmatprep.subr.mxu0 0.0
    %6530 = vmatpush1.msra.mxu0 0.0
    %6531 = vmatprep.subr.mxu0 0.0
    %6532 = vmatpush1.msra.mxu0 0.0
    %6533 = vmatprep.subr.mxu0 0.0
    %6534 = vmatpush1.msra.mxu0 0.0
    %6535 = vmatprep.subr.mxu0 0.0
    %6536 = vmatpush1.msra.mxu0 0.0
    %6537 = vmatprep.subr.mxu0 0.0
    %6538 = vmatpush1.msra.mxu0 0.0
    %6539 = vmatprep.subr.mxu0 0.0
    %6540 = vmatpush1.msra.mxu0 0.0
    %6541 = vmatprep.subr.mxu0 0.0
    %6542 = vmatpush1.msra.mxu0 0.0
    %6543 = vmatprep.subr.mxu0 0.0
    %6544 = vmatpush1.msra.mxu0 0.0
    %6545 = vmatprep.subr.mxu0 0.0
    %6546 = vmatpush1.msra.mxu0 0.0
    %6547 = vmatprep.subr.mxu0 0.0
    %6548 = vmatpush1.msra.mxu0 0.0
    %6549 = vmatprep.subr.mxu0 0.0
    %6550 = vmatpush1.msra.mxu0 0.0
    %6551 = vmatprep.subr.mxu0 0.0
    %6552 = vmatpush1.msra.mxu0 0.0
    %6553 = vmatprep.subr.mxu0 0.0
    %6554 = vmatpush1.msra.mxu0 0.0
    %6555 = vmatprep.subr.mxu0 0.0
    %6556 = vmatpush1.msra.mxu0 0.0
    %6557 = vmatprep.mubr.f32.mxu0 0.0
    %6558 = vmatmul.mubr.f32.gmra.mrb[0].mxu0 %v6489
    %v6559 = vpop.f32.mrb[0].mxu0
    %v6560 = vadd.f32 0.0, %v6559
    %v6561 = vpop.f32.mrb[0].mxu0
    %6562 = vmatprep.mubr.f32.mxu0 0.0
    %6563 = vmatmul.mubr.f32.gmra.mrb[0].mxu0 %v6491
    %v6564 = vpop.f32.mrb[0].mxu0
    %v6565 = vadd.f32 0.0, %v6564
    %v6566 = vpop.f32.mrb[0].mxu0
    %6567 = vdwg.mxu0
    %v6568 = vld [vmem:[%s3 + $0x118] sm:$0x7]
    %v6570 = vsel %vm1433, %v6568, 0
    %6572 = vmatprep.subr.mxu0 0.0
    %6573 = vmatpush1.xpose.msra.mxu0 %v6489
    %6574 = vmatprep.subr.mxu0 0.0
    %6575 = vmatpush1.xpose.msra.mxu0 %v6491
    %6576 = vmatprep.subr.mxu0 0.0
    %6577 = vmatpush1.xpose.msra.mxu0 0.0
    %6578 = vmatprep.subr.mxu0 0.0
    %6579 = vmatpush1.xpose.msra.mxu0 0.0
    %6580 = vmatprep.subr.mxu0 0.0
    %6581 = vmatpush1.xpose.msra.mxu0 0.0
    %6582 = vmatprep.subr.mxu0 0.0
    %6583 = vmatpush1.xpose.msra.mxu0 0.0
    %6584 = vmatprep.subr.mxu0 0.0
    %6585 = vmatpush1.xpose.msra.mxu0 0.0
    %6586 = vmatprep.subr.mxu0 0.0
    %6587 = vmatpush1.xpose.msra.mxu0 0.0
    %6588 = vmatprep.subr.mxu0 0.0
    %6589 = vmatpush1.xpose.msra.mxu0 0.0
    %6590 = vmatprep.subr.mxu0 0.0
    %6591 = vmatpush1.xpose.msra.mxu0 0.0
    %6592 = vmatprep.subr.mxu0 0.0
    %6593 = vmatpush1.xpose.msra.mxu0 0.0
    %6594 = vmatprep.subr.mxu0 0.0
    %6595 = vmatpush1.xpose.msra.mxu0 0.0
    %6596 = vmatprep.subr.mxu0 0.0
    %6597 = vmatpush1.xpose.msra.mxu0 0.0
    %6598 = vmatprep.subr.mxu0 0.0
    %6599 = vmatpush1.xpose.msra.mxu0 0.0
    %6600 = vmatprep.subr.mxu0 0.0
    %6601 = vmatpush1.xpose.msra.mxu0 0.0
    %6602 = vmatprep.subr.mxu0 0.0
    %6603 = vmatpush1.xpose.msra.mxu0 0.0
    %6604 = vmatprep.subr.mxu0 0.0
    %6605 = vmatpush1.xpose.msra.mxu0 0.0
    %6606 = vmatprep.subr.mxu0 0.0
    %6607 = vmatpush1.xpose.msra.mxu0 0.0
    %6608 = vmatprep.subr.mxu0 0.0
    %6609 = vmatpush1.xpose.msra.mxu0 0.0
    %6610 = vmatprep.subr.mxu0 0.0
    %6611 = vmatpush1.xpose.msra.mxu0 0.0
    %6612 = vmatprep.subr.mxu0 0.0
    %6613 = vmatpush1.xpose.msra.mxu0 0.0
    %6614 = vmatprep.subr.mxu0 0.0
    %6615 = vmatpush1.xpose.msra.mxu0 0.0
    %6616 = vmatprep.subr.mxu0 0.0
    %6617 = vmatpush1.xpose.msra.mxu0 0.0
    %6618 = vmatprep.subr.mxu0 0.0
    %6619 = vmatpush1.xpose.msra.mxu0 0.0
    %6620 = vmatprep.subr.mxu0 0.0
    %6621 = vmatpush1.xpose.msra.mxu0 0.0
    %6622 = vmatprep.subr.mxu0 0.0
    %6623 = vmatpush1.xpose.msra.mxu0 0.0
    %6624 = vmatprep.subr.mxu0 0.0
    %6625 = vmatpush1.xpose.msra.mxu0 0.0
    %6626 = vmatprep.subr.mxu0 0.0
    %6627 = vmatpush1.xpose.msra.mxu0 0.0
    %6628 = vmatprep.subr.mxu0 0.0
    %6629 = vmatpush1.xpose.msra.mxu0 0.0
    %6630 = vmatprep.subr.mxu0 0.0
    %6631 = vmatpush1.xpose.msra.mxu0 0.0
    %6632 = vmatprep.subr.mxu0 0.0
    %6633 = vmatpush1.xpose.msra.mxu0 0.0
    %6634 = vmatprep.subr.mxu0 0.0
    %6635 = vmatpush1.xpose.msra.mxu0 0.0
    %6636 = vmatprep.mubr.f32.mxu0 0.0
    %6637 = vmatmul.mubr.f32.gmra.mrb[0].mxu0 %v6570
    %v6638 = vpop.f32.mrb[0].mxu0
    %v6639 = vadd.f32 0.0, %v6638
    %v6640 = vpop.f32.mrb[0].mxu0
    %6641 = vdwg.mxu0
    %6643 = vset.pattern.permute.xlu0 0
    %6644 = vperm.xlu0 %6643, %v6560
    %v6645 = vpop.permute.xlu0 %6644
    %6648 = vset.pattern.permute.xlu0 0
    %6649 = vperm.xlu0 %6648, %v6565
    %v6650 = vpop.permute.xlu0 %6649
    %v6652 = vlaneseq
    %v6653 = vshrl.u32 %v6652, 7
    %v6654 = vsub.s32 0, %v6653
    %v6655 = vrot.slane %v6639, %v6654
    %v6656 = vadd.f32 %v6645, %v6655
    %v6657 = vadd.f32 %v6650, %v6655
    %vm6658 = vcmp.ge.f32.partialorder %v6656, 0.0
    %vm6659 = vcmp.ge.f32.partialorder %v6657, 0.0
    %v6660 = vmul.f32 %v6656, 0.2
    %v6661 = vmul.f32 %v6657, 0.2
    %v6662 = vsel %vm6658, %v6656, %v6660
    %v6663 = vsel %vm6659, %v6657, %v6661
    %v6664 = vadd.f32 %v6662, %v4012
    %v6665 = vadd.f32 %v6663, %v4013
    %v6666 = vsel %vm32, %v6664, -inf
    %6667 = vmax.xlane.f32.xlu0 %v6666
    %v6668 = vpop.xlane.xlu0 %6667
    %v6669 = vsel %vm32, %v6665, -inf
    %6670 = vmax.xlane.f32.xlu0 %v6669
    %v6671 = vpop.xlane.xlu0 %6670
    %v6672 = vsub.f32 %v6664, %v6668
    %v6673 = vsub.f32 %v6665, %v6671
    %v6674 = vmul.f32 %v6672, 1.442695
    %v6675 = vpow.pop %v6674
    %v6676 = vmul.f32 %v6673, 1.442695
    %v6677 = vpow.pop %v6676
    %v6678 = vsel %vm32, %v6675, 0.0
    %6679 = vadd.xlane.f32.xlu0 %v6678
    %v6680 = vpop.xlane.xlu0 %6679
    %v6681 = vsel %vm32, %v6677, 0.0
    %6682 = vadd.xlane.f32.xlu0 %v6681
    %v6683 = vpop.xlane.xlu0 %6682
    %v6684 = vrcp.pop %v6680
    %v6685 = vrcp.pop %v6683
    %v6686 = vmul.f32 %v6675, %v6684
    %v6687 = vmul.f32 %v6677, %v6685
    %6688 = vset.pattern.permute.xlu0 1
    %6689 = vperm.xlu0 %6688, %v6560
    %v6690 = vpop.permute.xlu0 %6689
    %6692 = vset.pattern.permute.xlu0 1
    %6693 = vperm.xlu0 %6692, %v6565
    %v6694 = vpop.permute.xlu0 %6693
    %v6696 = vlaneseq
    %v6697 = vshrl.u32 %v6696, 7
    %v6698 = vsub.s32 1, %v6697
    %v6699 = vrot.slane %v6639, %v6698
    %v6700 = vadd.f32 %v6690, %v6699
    %v6701 = vadd.f32 %v6694, %v6699
    %vm6702 = vcmp.ge.f32.partialorder %v6700, 0.0
    %vm6703 = vcmp.ge.f32.partialorder %v6701, 0.0
    %v6704 = vmul.f32 %v6700, 0.2
    %v6705 = vmul.f32 %v6701, 0.2
    %v6706 = vsel %vm6702, %v6700, %v6704
    %v6707 = vsel %vm6703, %v6701, %v6705
    %v6708 = vadd.f32 %v6706, %v4012
    %v6709 = vadd.f32 %v6707, %v4013
    %v6710 = vsel %vm32, %v6708, -inf
    %6711 = vmax.xlane.f32.xlu0 %v6710
    %v6712 = vpop.xlane.xlu0 %6711
    %v6713 = vsel %vm32, %v6709, -inf
    %6714 = vmax.xlane.f32.xlu0 %v6713
    %v6715 = vpop.xlane.xlu0 %6714
    %v6716 = vsub.f32 %v6708, %v6712
    %v6717 = vsub.f32 %v6709, %v6715
    %v6718 = vmul.f32 %v6716, 1.442695
    %v6719 = vpow.pop %v6718
    %v6720 = vmul.f32 %v6717, 1.442695
    %v6721 = vpow.pop %v6720
    %v6722 = vsel %vm32, %v6719, 0.0
    %6723 = vadd.xlane.f32.xlu0 %v6722
    %v6724 = vpop.xlane.xlu0 %6723
    %v6725 = vsel %vm32, %v6721, 0.0
    %6726 = vadd.xlane.f32.xlu0 %v6725
    %v6727 = vpop.xlane.xlu0 %6726
    %v6728 = vrcp.pop %v6724
    %v6729 = vrcp.pop %v6727
    %v6730 = vmul.f32 %v6719, %v6728
    %v6731 = vmul.f32 %v6721, %v6729
    %6732 = vrot.lane.b32.xlu0 %v6388, 112
    %v6733 = vpop.permute.xlu0 %6732
    %6734 = vrot.lane.b32.xlu0 %v6393, 112
    %v6735 = vpop.permute.xlu0 %6734
    %v6739 = vsel %vm32, %v6730, 0
    %v6742 = vsel %vm32, %v6731, 0
    %6744 = vmatprep.subr.mxu0 0.0
    %6745 = vmatpush1.msra.mxu0 %v6733
    %6746 = vmatprep.subr.mxu0 0.0
    %6747 = vmatpush1.msra.mxu0 %v6735
    %6748 = vmatprep.subr.mxu0 0.0
    %6749 = vmatpush1.msra.mxu0 0.0
    %6750 = vmatprep.subr.mxu0 0.0
    %6751 = vmatpush1.msra.mxu0 0.0
    %6752 = vmatprep.subr.mxu0 0.0
    %6753 = vmatpush1.msra.mxu0 0.0
    %6754 = vmatprep.subr.mxu0 0.0
    %6755 = vmatpush1.msra.mxu0 0.0
    %6756 = vmatprep.subr.mxu0 0.0
    %6757 = vmatpush1.msra.mxu0 0.0
    %6758 = vmatprep.subr.mxu0 0.0
    %6759 = vmatpush1.msra.mxu0 0.0
    %6760 = vmatprep.subr.mxu0 0.0
    %6761 = vmatpush1.msra.mxu0 0.0
    %6762 = vmatprep.subr.mxu0 0.0
    %6763 = vmatpush1.msra.mxu0 0.0
    %6764 = vmatprep.subr.mxu0 0.0
    %6765 = vmatpush1.msra.mxu0 0.0
    %6766 = vmatprep.subr.mxu0 0.0
    %6767 = vmatpush1.msra.mxu0 0.0
    %6768 = vmatprep.subr.mxu0 0.0
    %6769 = vmatpush1.msra.mxu0 0.0
    %6770 = vmatprep.subr.mxu0 0.0
    %6771 = vmatpush1.msra.mxu0 0.0
    %6772 = vmatprep.subr.mxu0 0.0
    %6773 = vmatpush1.msra.mxu0 0.0
    %6774 = vmatprep.subr.mxu0 0.0
    %6775 = vmatpush1.msra.mxu0 0.0
    %6776 = vmatprep.subr.mxu0 0.0
    %6777 = vmatpush1.msra.mxu0 0.0
    %6778 = vmatprep.subr.mxu0 0.0
    %6779 = vmatpush1.msra.mxu0 0.0
    %6780 = vmatprep.subr.mxu0 0.0
    %6781 = vmatpush1.msra.mxu0 0.0
    %6782 = vmatprep.subr.mxu0 0.0
    %6783 = vmatpush1.msra.mxu0 0.0
    %6784 = vmatprep.subr.mxu0 0.0
    %6785 = vmatpush1.msra.mxu0 0.0
    %6786 = vmatprep.subr.mxu0 0.0
    %6787 = vmatpush1.msra.mxu0 0.0
    %6788 = vmatprep.subr.mxu0 0.0
    %6789 = vmatpush1.msra.mxu0 0.0
    %6790 = vmatprep.subr.mxu0 0.0
    %6791 = vmatpush1.msra.mxu0 0.0
    %6792 = vmatprep.subr.mxu0 0.0
    %6793 = vmatpush1.msra.mxu0 0.0
    %6794 = vmatprep.subr.mxu0 0.0
    %6795 = vmatpush1.msra.mxu0 0.0
    %6796 = vmatprep.subr.mxu0 0.0
    %6797 = vmatpush1.msra.mxu0 0.0
    %6798 = vmatprep.subr.mxu0 0.0
    %6799 = vmatpush1.msra.mxu0 0.0
    %6800 = vmatprep.subr.mxu0 0.0
    %6801 = vmatpush1.msra.mxu0 0.0
    %6802 = vmatprep.subr.mxu0 0.0
    %6803 = vmatpush1.msra.mxu0 0.0
    %6804 = vmatprep.subr.mxu0 0.0
    %6805 = vmatpush1.msra.mxu0 0.0
    %6806 = vmatprep.subr.mxu0 0.0
    %6807 = vmatpush1.msra.mxu0 0.0
    %6808 = vmatprep.mubr.f32.mxu0 0.0
    %6809 = vmatmul.mubr.f32.gmra.mrb[0].mxu0 %v6739
    %v6810 = vpop.f32.mrb[0].mxu0
    %v6811 = vadd.f32 0.0, %v6810
    %v6812 = vpop.f32.mrb[0].mxu0
    %6813 = vmatprep.mubr.f32.mxu0 0.0
    %6814 = vmatmul.mubr.f32.gmra.mrb[0].mxu0 %v6742
    %v6815 = vpop.f32.mrb[0].mxu0
    %v6816 = vadd.f32 0.0, %v6815
    %v6817 = vpop.f32.mrb[0].mxu0
    %6818 = vdwg.mxu0
    %v6820 = vsel %vm32, %v6686, 0
    %v6823 = vsel %vm32, %v6687, 0
    %6825 = vmatprep.subr.mxu0 0.0
    %6826 = vmatpush1.msra.mxu0 %v6388
    %6827 = vmatprep.subr.mxu0 0.0
    %6828 = vmatpush1.msra.mxu0 %v6393
    %6829 = vmatprep.subr.mxu0 0.0
    %6830 = vmatpush1.msra.mxu0 0.0
    %6831 = vmatprep.subr.mxu0 0.0
    %6832 = vmatpush1.msra.mxu0 0.0
    %6833 = vmatprep.subr.mxu0 0.0
    %6834 = vmatpush1.msra.mxu0 0.0
    %6835 = vmatprep.subr.mxu0 0.0
    %6836 = vmatpush1.msra.mxu0 0.0
    %6837 = vmatprep.subr.mxu0 0.0
    %6838 = vmatpush1.msra.mxu0 0.0
    %6839 = vmatprep.subr.mxu0 0.0
    %6840 = vmatpush1.msra.mxu0 0.0
    %6841 = vmatprep.subr.mxu0 0.0
    %6842 = vmatpush1.msra.mxu0 0.0
    %6843 = vmatprep.subr.mxu0 0.0
    %6844 = vmatpush1.msra.mxu0 0.0
    %6845 = vmatprep.subr.mxu0 0.0
    %6846 = vmatpush1.msra.mxu0 0.0
    %6847 = vmatprep.subr.mxu0 0.0
    %6848 = vmatpush1.msra.mxu0 0.0
    %6849 = vmatprep.subr.mxu0 0.0
    %6850 = vmatpush1.msra.mxu0 0.0
    %6851 = vmatprep.subr.mxu0 0.0
    %6852 = vmatpush1.msra.mxu0 0.0
    %6853 = vmatprep.subr.mxu0 0.0
    %6854 = vmatpush1.msra.mxu0 0.0
    %6855 = vmatprep.subr.mxu0 0.0
    %6856 = vmatpush1.msra.mxu0 0.0
    %6857 = vmatprep.subr.mxu0 0.0
    %6858 = vmatpush1.msra.mxu0 0.0
    %6859 = vmatprep.subr.mxu0 0.0
    %6860 = vmatpush1.msra.mxu0 0.0
    %6861 = vmatprep.subr.mxu0 0.0
    %6862 = vmatpush1.msra.mxu0 0.0
    %6863 = vmatprep.subr.mxu0 0.0
    %6864 = vmatpush1.msra.mxu0 0.0
    %6865 = vmatprep.subr.mxu0 0.0
    %6866 = vmatpush1.msra.mxu0 0.0
    %6867 = vmatprep.subr.mxu0 0.0
    %6868 = vmatpush1.msra.mxu0 0.0
    %6869 = vmatprep.subr.mxu0 0.0
    %6870 = vmatpush1.msra.mxu0 0.0
    %6871 = vmatprep.subr.mxu0 0.0
    %6872 = vmatpush1.msra.mxu0 0.0
    %6873 = vmatprep.subr.mxu0 0.0
    %6874 = vmatpush1.msra.mxu0 0.0
    %6875 = vmatprep.subr.mxu0 0.0
    %6876 = vmatpush1.msra.mxu0 0.0
    %6877 = vmatprep.subr.mxu0 0.0
    %6878 = vmatpush1.msra.mxu0 0.0
    %6879 = vmatprep.subr.mxu0 0.0
    %6880 = vmatpush1.msra.mxu0 0.0
    %6881 = vmatprep.subr.mxu0 0.0
    %6882 = vmatpush1.msra.mxu0 0.0
    %6883 = vmatprep.subr.mxu0 0.0
    %6884 = vmatpush1.msra.mxu0 0.0
    %6885 = vmatprep.subr.mxu0 0.0
    %6886 = vmatpush1.msra.mxu0 0.0
    %6887 = vmatprep.subr.mxu0 0.0
    %6888 = vmatpush1.msra.mxu0 0.0
    %6889 = vmatprep.mubr.f32.mxu0 0.0
    %6890 = vmatmul.mubr.f32.gmra.mrb[0].mxu0 %v6820
    %v6891 = vpop.f32.mrb[0].mxu0
    %v6892 = vadd.f32 %v6811, %v6891
    %v6893 = vpop.f32.mrb[0].mxu0
    %6894 = vmatprep.mubr.f32.mxu0 0.0
    %6895 = vmatmul.mubr.f32.gmra.mrb[0].mxu0 %v6823
    %v6896 = vpop.f32.mrb[0].mxu0
    %v6897 = vadd.f32 %v6816, %v6896
    %v6898 = vpop.f32.mrb[0].mxu0
    %6899 = vdwg.mxu0
    %6900 = vset.pattern.permute.xlu0 2
    %6901 = vperm.xlu0 %6900, %v6560
    %v6902 = vpop.permute.xlu0 %6901
    %6904 = vset.pattern.permute.xlu0 2
    %6905 = vperm.xlu0 %6904, %v6565
    %v6906 = vpop.permute.xlu0 %6905
    %v6908 = vlaneseq
    %v6909 = vshrl.u32 %v6908, 7
    %v6910 = vsub.s32 2, %v6909
    %v6911 = vrot.slane %v6639, %v6910
    %v6912 = vadd.f32 %v6902, %v6911
    %v6913 = vadd.f32 %v6906, %v6911
    %vm6914 = vcmp.ge.f32.partialorder %v6912, 0.0
    %vm6915 = vcmp.ge.f32.partialorder %v6913, 0.0
    %v6916 = vmul.f32 %v6912, 0.2
    %v6917 = vmul.f32 %v6913, 0.2
    %v6918 = vsel %vm6914, %v6912, %v6916
    %v6919 = vsel %vm6915, %v6913, %v6917
    %v6920 = vadd.f32 %v6918, %v4012
    %v6921 = vadd.f32 %v6919, %v4013
    %v6922 = vsel %vm32, %v6920, -inf
    %6923 = vmax.xlane.f32.xlu0 %v6922
    %v6924 = vpop.xlane.xlu0 %6923
    %v6925 = vsel %vm32, %v6921, -inf
    %6926 = vmax.xlane.f32.xlu0 %v6925
    %v6927 = vpop.xlane.xlu0 %6926
    %v6928 = vsub.f32 %v6920, %v6924
    %v6929 = vsub.f32 %v6921, %v6927
    %v6930 = vmul.f32 %v6928, 1.442695
    %v6931 = vpow.pop %v6930
    %v6932 = vmul.f32 %v6929, 1.442695
    %v6933 = vpow.pop %v6932
    %v6934 = vsel %vm32, %v6931, 0.0
    %6935 = vadd.xlane.f32.xlu0 %v6934
    %v6936 = vpop.xlane.xlu0 %6935
    %v6937 = vsel %vm32, %v6933, 0.0
    %6938 = vadd.xlane.f32.xlu0 %v6937
    %v6939 = vpop.xlane.xlu0 %6938
    %v6940 = vrcp.pop %v6936
    %v6941 = vrcp.pop %v6939
    %v6942 = vmul.f32 %v6931, %v6940
    %v6943 = vmul.f32 %v6933, %v6941
    %6944 = vrot.lane.b32.xlu0 %v6388, 96
    %v6945 = vpop.permute.xlu0 %6944
    %6946 = vrot.lane.b32.xlu0 %v6393, 96
    %v6947 = vpop.permute.xlu0 %6946
    %v6951 = vsel %vm32, %v6942, 0
    %v6954 = vsel %vm32, %v6943, 0
    %6956 = vmatprep.subr.mxu0 0.0
    %6957 = vmatpush1.msra.mxu0 %v6945
    %6958 = vmatprep.subr.mxu0 0.0
    %6959 = vmatpush1.msra.mxu0 %v6947
    %6960 = vmatprep.subr.mxu0 0.0
    %6961 = vmatpush1.msra.mxu0 0.0
    %6962 = vmatprep.subr.mxu0 0.0
    %6963 = vmatpush1.msra.mxu0 0.0
    %6964 = vmatprep.subr.mxu0 0.0
    %6965 = vmatpush1.msra.mxu0 0.0
    %6966 = vmatprep.subr.mxu0 0.0
    %6967 = vmatpush1.msra.mxu0 0.0
    %6968 = vmatprep.subr.mxu0 0.0
    %6969 = vmatpush1.msra.mxu0 0.0
    %6970 = vmatprep.subr.mxu0 0.0
    %6971 = vmatpush1.msra.mxu0 0.0
    %6972 = vmatprep.subr.mxu0 0.0
    %6973 = vmatpush1.msra.mxu0 0.0
    %6974 = vmatprep.subr.mxu0 0.0
    %6975 = vmatpush1.msra.mxu0 0.0
    %6976 = vmatprep.subr.mxu0 0.0
    %6977 = vmatpush1.msra.mxu0 0.0
    %6978 = vmatprep.subr.mxu0 0.0
    %6979 = vmatpush1.msra.mxu0 0.0
    %6980 = vmatprep.subr.mxu0 0.0
    %6981 = vmatpush1.msra.mxu0 0.0
    %6982 = vmatprep.subr.mxu0 0.0
    %6983 = vmatpush1.msra.mxu0 0.0
    %6984 = vmatprep.subr.mxu0 0.0
    %6985 = vmatpush1.msra.mxu0 0.0
    %6986 = vmatprep.subr.mxu0 0.0
    %6987 = vmatpush1.msra.mxu0 0.0
    %6988 = vmatprep.subr.mxu0 0.0
    %6989 = vmatpush1.msra.mxu0 0.0
    %6990 = vmatprep.subr.mxu0 0.0
    %6991 = vmatpush1.msra.mxu0 0.0
    %6992 = vmatprep.subr.mxu0 0.0
    %6993 = vmatpush1.msra.mxu0 0.0
    %6994 = vmatprep.subr.mxu0 0.0
    %6995 = vmatpush1.msra.mxu0 0.0
    %6996 = vmatprep.subr.mxu0 0.0
    %6997 = vmatpush1.msra.mxu0 0.0
    %6998 = vmatprep.subr.mxu0 0.0
    %6999 = vmatpush1.msra.mxu0 0.0
    %7000 = vmatprep.subr.mxu0 0.0
    %7001 = vmatpush1.msra.mxu0 0.0
    %7002 = vmatprep.subr.mxu0 0.0
    %7003 = vmatpush1.msra.mxu0 0.0
    %7004 = vmatprep.subr.mxu0 0.0
    %7005 = vmatpush1.msra.mxu0 0.0
    %7006 = vmatprep.subr.mxu0 0.0
    %7007 = vmatpush1.msra.mxu0 0.0
    %7008 = vmatprep.subr.mxu0 0.0
    %7009 = vmatpush1.msra.mxu0 0.0
    %7010 = vmatprep.subr.mxu0 0.0
    %7011 = vmatpush1.msra.mxu0 0.0
    %7012 = vmatprep.subr.mxu0 0.0
    %7013 = vmatpush1.msra.mxu0 0.0
    %7014 = vmatprep.subr.mxu0 0.0
    %7015 = vmatpush1.msra.mxu0 0.0
    %7016 = vmatprep.subr.mxu0 0.0
    %7017 = vmatpush1.msra.mxu0 0.0
    %7018 = vmatprep.subr.mxu0 0.0
    %7019 = vmatpush1.msra.mxu0 0.0
    %7020 = vmatprep.mubr.f32.mxu0 0.0
    %7021 = vmatmul.mubr.f32.gmra.mrb[0].mxu0 %v6951
    %v7022 = vpop.f32.mrb[0].mxu0
    %v7023 = vadd.f32 0.0, %v7022
    %v7024 = vpop.f32.mrb[0].mxu0
    %7025 = vmatprep.mubr.f32.mxu0 0.0
    %7026 = vmatmul.mubr.f32.gmra.mrb[0].mxu0 %v6954
    %v7027 = vpop.f32.mrb[0].mxu0
    %v7028 = vadd.f32 0.0, %v7027
    %v7029 = vpop.f32.mrb[0].mxu0
    %7030 = vdwg.mxu0
    %v7031 = vadd.f32 %v6892, %v7023
    %v7032 = vadd.f32 %v6897, %v7028
    %v7033 = vmul.f32 %v7031, 0.33333334
    %v7034 = vmul.f32 %v7032, 0.33333334
    %v7035 = vlaneseq
    %v7036 = vshrl.u32 %v7035, 7
    %v7037 = vsub.s32 4, %v7036
    %v7038 = vrot.slane %v4016, %v7037
    %v7039 = vadd.f32 %v7033, %v7038
    %v7040 = vadd.f32 %v7034, %v7038
    %v7041 = vmax.f32 %v7039, 0.0
    %v7042 = vmax.f32 %v7040, 0.0
    %v7043 = vxor.u32 %v6475, 2147483648
    %v7044 = vxor.u32 %v6480, 2147483648
    %v7045 = vmul.f32 %v7043, 1.442695
    %v7046 = vpow.pop %v7045
    %v7047 = vmul.f32 %v7044, 1.442695
    %v7048 = vpow.pop %v7047
    %v7049 = vadd.f32 %v7046, 1.0
    %v7050 = vadd.f32 %v7048, 1.0
    %v7051 = vrcp.pop %v7049
    %v7052 = vmul.f32 1.0, %v7051
    %v7053 = vrcp.pop %v7050
    %v7054 = vmul.f32 1.0, %v7053
    %v7055 = vmul.f32 %v7041, %v7052
    %v7056 = vmul.f32 %v7042, %v7054
    %v7057 = vsub.f32 1.0, %v7052
    %v7058 = vsub.f32 1.0, %v7054
    %v7059 = vmul.f32 %v6309, %v7057
    %v7060 = vmul.f32 %v6310, %v7058
    %v7061 = vadd.f32 %v7055, %v7059
    %v7062 = vadd.f32 %v7056, %v7060
    %7065 = vrot.lane.b32.xlu0 %v4010, 16
    %v7066 = vpop.permute.xlu0 %7065
    %7067 = vrot.lane.b32.xlu0 %v4011, 16
    %v7068 = vpop.permute.xlu0 %7067
    %7073 = vrot.lane.b32.xlu0 %v7061, 32
    %v7074 = vpop.permute.xlu0 %7073
    %7075 = vrot.lane.b32.xlu0 %v7062, 32
    %v7076 = vpop.permute.xlu0 %7075
    %v7079 = vsel %vm32, %v1048, %v7066
    %v7080 = vsel %vm32, %v1053, %v7068
    %vm7081 = vcmask 261120
    %v7082 = vsel %vm7081, %v7079, %v7074
    %v7083 = vsel %vm7081, %v7080, %v7076
    %v7084 = vsel %vm1433, %v7082, 0.0
    %v7085 = vsel %vm1433, %v7083, 0.0
    %7086 = vst [vmem:[#allocation2] sm:$0xff] %v7084
    %7087 = vst [vmem:[#allocation2 + $0x8] sm:$0xff] %v7085
    // Predicated region
    $region18: #{stcell_forward.1} parent=1 // pred_check
      _
    $region19: #{stcell_forward.1} parent=1 // pred_check_branch
      %7089 = sbr.rel (0) target = $region21
    $region20: #{stcell_forward.1} parent=1 // pred_region
      %s7091 = ssub.s32 256, 256
      %7092 = vsyncadd [#allocation3], %s7091
      %s7093 = sshll.u32 [#allocation2], 4
      %s7094 = int_to_ptr.vmem [resolvable:$true] %s7093
      %7099 = dma.vmem_to_hbm [thread:$0]  %s7094, 256, %s4, [#allocation3], 128, 128, 8
    $region21: #{stcell_forward.1} parent=1 // pred_fallthru
      _
    // Predicated region
    $region22: #{stcell_forward.1} parent=1 // pred_check
      _
    $region23: #{stcell_forward.1} parent=1 // pred_check_branch
      %7101 = sbr.rel (0) target = $region25
    $region24: #{stcell_forward.1} parent=1 // pred_region
      %7102 = dma.done [#allocation3], 256
    $region25: #{stcell_forward.1} parent=1 // pred_fallthru
      _
    %7103 = vsyncpa [#allocation3], 1

</llo_original>
